<compile_context>
chip_gen: v7x
topology: tpu7x:2x2x1
jax: 0.10.0
libtpu: 0.0.40
codegen_flags: <defaults>
</compile_context>

<pallas_src>
import functools

import jax
import jax.numpy as jnp
from jax.experimental import pallas as pl
from jax.experimental.pallas import tpu as pltpu


_BN_EPS = 1e-5
_LANE = 128      # lane width
_SUBLANE = 8     # f32 sublane height
_TILE_N = 512    # weight-column tile width for the streamed layers


def _round_up(n, m):
    return ((n + m - 1) // m) * m


# ------------------------------ fused kernel ------------------------------- #

def _ember_fused_kernel(x_ref, w1_ref, e1_ref, w2_ref, e2_ref,
                        w3_ref, b3_ref, w4_ref, b4_ref,
                        o_ref, h1_ref, h2_ref, *, n1, n2, tn):
    """Whole EmberNN forward in one kernel.

    Grid steps 0..n1-1     : layer 1, one (Mp, tn) output tile per step
                             (contiguous int8 W1 tile streamed from HBM).
    Grid steps n1..n1+n2-1 : layer 2, same pattern against the resident h1 scratch.
    Last grid step         : layers 3 + 4 (weights resident in VMEM) + sigmoid.
    """
    s = pl.program_id(0)

    @pl.when(s < n1)
    def _layer1():
        w = w1_ref[0].astype(jnp.bfloat16)           # int8 -> bf16 (int values exact in bf16)
        y = jnp.dot(x_ref[...], w, preferred_element_type=jnp.float32)
        y = jnp.maximum(y * e1_ref[0:1, :] + e1_ref[1:2, :], 0.0)   # dequant + bias + ReLU
        col = pl.multiple_of(s * tn, tn)
        h1_ref[:, pl.ds(col, tn)] = y

    @pl.when(s >= n1)
    def _layer2():
        j = s - n1
        w = w2_ref[0].astype(jnp.bfloat16)
        y = jnp.dot(h1_ref[...].astype(jnp.bfloat16), w,
                    preferred_element_type=jnp.float32)
        y = jnp.maximum(y * e2_ref[0:1, :] + e2_ref[1:2, :], 0.0)
        col = pl.multiple_of(j * tn, tn)
        h2_ref[:, pl.ds(col, tn)] = y

    @pl.when(s == n1 + n2 - 1)
    def _tail():
        h = jnp.dot(h2_ref[...].astype(jnp.bfloat16), w3_ref[...],
                    preferred_element_type=jnp.float32)
        h = jnp.maximum(h + b3_ref[...], 0.0)                       # BN2 already folded into W3/b3
        z = jnp.dot(h.astype(jnp.bfloat16), w4_ref[...],
                    preferred_element_type=jnp.float32)
        o_ref[...] = jax.nn.sigmoid(z + b4_ref[...]).astype(o_ref.dtype)


# ----------------------- parameter init & preparation ---------------------- #

_LAYER_DIMS = [(None, 4000), (4000, 2000), (2000, 100), (100, 1)]  # None -> n_features


def init_params(key, n_features=2351):
    """Deterministic synthetic parameters matching EmberNN's shapes (f32, unpadded)."""
    dims = [(n_features if fin is None else fin, fout) for fin, fout in _LAYER_DIMS]
    params = {}
    for idx, (fin, fout) in enumerate(dims, start=1):
        key, kw, kb = jax.random.split(key, 3)
        bound = 1.0 / jnp.sqrt(jnp.float32(fin))
        params[f"w{idx}"] = jax.random.uniform(kw, (fin, fout), jnp.float32, -bound, bound)
        params[f"b{idx}"] = jax.random.uniform(kb, (fout,), jnp.float32, -bound, bound)
    for idx, dim in enumerate([4000, 2000, 100], start=1):
        key, kg, kb, km, kv = jax.random.split(key, 5)
        params[f"gamma{idx}"] = 1.0 + 0.1 * jax.random.normal(kg, (dim,), jnp.float32)
        params[f"beta{idx}"] = 0.1 * jax.random.normal(kb, (dim,), jnp.float32)
        params[f"mean{idx}"] = 0.1 * jax.random.normal(km, (dim,), jnp.float32)
        params[f"var{idx}"] = 1.0 + 0.1 * jax.random.uniform(kv, (dim,), jnp.float32)
    return params


def _fold_bn(params, idx):
    inv_std = jax.lax.rsqrt(params[f"var{idx}"] + _BN_EPS)
    scale = params[f"gamma{idx}"] * inv_std
    shift = params[f"beta{idx}"] - params[f"mean{idx}"] * scale
    return scale, shift


def _quantize_int8(w, k_pad, n_pad, tn):
    """Per-output-column symmetric int8 quantization, zero-padded and pre-tiled.

    Returns (n_pad//tn, k_pad, tn) int8 weight tiles (each a contiguous HBM block)
    and the (n_pad,) f32 dequantization scale (exactly 0 in padded columns, so the
    zero-padding correctness chain is preserved).
    """
    k, n = w.shape
    absmax = jnp.max(jnp.abs(w), axis=0)
    qscale = jnp.maximum(absmax, 1e-12) / 127.0
    wq = jnp.clip(jnp.round(w / qscale), -127.0, 127.0).astype(jnp.int8)
    wq = jnp.zeros((k_pad, n_pad), jnp.int8).at[:k, :n].set(wq)
    wq = wq.reshape(k_pad, n_pad // tn, tn).transpose(1, 0, 2)
    qscale = jnp.zeros((n_pad,), jnp.float32).at[:n].set(qscale)
    return wq, qscale


def prepare_params(params, n_features, tile_n=_TILE_N):
    """One-time prep: fold eval-mode BN into the next layer, int8-quantize W1/W2,
    zero-pad everything and pre-tile the streamed weights.

    tile_n=512 keeps the double-buffered weight blocks inside every chip's default
    scoped-VMEM budget; on v6e tile_n=1024 halves the grid-step count (optional).
    """
    s1, t1 = _fold_bn(params, 1)
    s2, t2 = _fold_bn(params, 2)
    s3, t3 = _fold_bn(params, 3)

    # BN_i (after ReLU) folded into layer i+1:  (r*s + t) @ W = r @ (diag(s) W) + t @ W
    w1, b1 = params["w1"], params["b1"]
    w2 = params["w2"] * s1[:, None]
    b2 = params["b2"] + t1 @ params["w2"]
    w3 = params["w3"] * s2[:, None]
    b3 = params["b3"] + t2 @ params["w3"]
    w4 = params["w4"] * s3[:, None]
    b4 = params["b4"] + t3 @ params["w4"]

    k1 = _round_up(n_features, _LANE)
    n1 = _round_up(w1.shape[1], tile_n)      # 4000 -> 4096
    n2 = _round_up(w2.shape[1], tile_n)      # 2000 -> 2048
    n3 = _round_up(w3.shape[1], _LANE)       # 100  -> 128
    n4 = _round_up(w4.shape[1], _LANE)       # 1    -> 128

    w1q, q1 = _quantize_int8(w1, k1, n1, tile_n)
    w2q, q2 = _quantize_int8(w2, n1, n2, tile_n)

    def _pad_vec(v, n):
        return jnp.zeros((n,), jnp.float32).at[:v.shape[0]].set(v)

    return {
        "w1": w1q,                                            # (n1/tn, k1, tn) int8
        "e1": jnp.stack([q1, _pad_vec(b1, n1)]),              # (2, n1): dequant scale ; bias
        "w2": w2q,                                            # (n2/tn, n1, tn) int8
        "e2": jnp.stack([q2, _pad_vec(b2, n2)]),              # (2, n2)
        "w3": jnp.zeros((n2, n3), jnp.bfloat16)
                 .at[:w3.shape[0], :w3.shape[1]].set(w3.astype(jnp.bfloat16)),
        "b3": _pad_vec(b3, n3)[None, :],
        "w4": jnp.zeros((n3, n4), jnp.bfloat16)
                 .at[:w4.shape[0], :w4.shape[1]].set(w4.astype(jnp.bfloat16)),
        "b4": _pad_vec(b4, n4)[None, :],
    }


# -------------------------- EmberNN forward pass --------------------------- #

@jax.jit
def ember_nn_forward(x, prep):
    """Pallas-backed eval-mode forward of EmberNN. Returns shape (batch,)."""
    m, f = x.shape
    mp = _round_up(max(m, _SUBLANE), _SUBLANE)

    n1_tiles, k1, tn = prep["w1"].shape
    n2_tiles, k2, tn2 = prep["w2"].shape
    n1_cols = prep["e1"].shape[1]
    n2_cols = prep["e2"].shape[1]
    n3 = prep["w3"].shape[1]
    n4 = prep["w4"].shape[1]
    assert tn == tn2 and k2 == n1_cols == n1_tiles * tn and n2_cols == n2_tiles * tn

    # Pad + cast the (tiny) activation once per call; padded lanes stay exactly 0.
    xp = jnp.zeros((mp, k1), jnp.bfloat16).at[:m, :f].set(x.astype(jnp.bfloat16))

    kernel = functools.partial(_ember_fused_kernel, n1=n1_tiles, n2=n2_tiles, tn=tn)

    out = pl.pallas_call(
        kernel,
        out_shape=jax.ShapeDtypeStruct((mp, n4), jnp.float32),
        grid_spec=pltpu.PrefetchScalarGridSpec(
            num_scalar_prefetch=0,
            grid=(n1_tiles + n2_tiles,),
            in_specs=[
                pl.BlockSpec((mp, k1), lambda s: (0, 0)),                 # x: resident
                pl.BlockSpec((1, k1, tn),                                 # W1 tiles (stream)
                             lambda s: (jnp.minimum(s, n1_tiles - 1), 0, 0)),
                pl.BlockSpec((2, tn),                                     # [scale; bias] layer 1
                             lambda s: (0, jnp.minimum(s, n1_tiles - 1))),
                pl.BlockSpec((1, k2, tn),                                 # W2 tiles (stream)
                             lambda s: (jnp.maximum(s - n1_tiles, 0), 0, 0)),
                pl.BlockSpec((2, tn),                                     # [scale; bias] layer 2
                             lambda s: (0, jnp.maximum(s - n1_tiles, 0))),
                pl.BlockSpec((n2_cols, n3), lambda s: (0, 0)),            # W3: resident
                pl.BlockSpec((1, n3), lambda s: (0, 0)),                  # b3 (BN2 folded)
                pl.BlockSpec((n3, n4), lambda s: (0, 0)),                 # W4: resident
                pl.BlockSpec((1, n4), lambda s: (0, 0)),                  # b4 (BN3 folded)
            ],
            out_specs=pl.BlockSpec((mp, n4), lambda s: (0, 0)),           # written at last step
            scratch_shapes=[
                pltpu.VMEM((mp, n1_cols), jnp.float32),                   # h1 (VMEM only)
                pltpu.VMEM((mp, n2_cols), jnp.float32),                   # h2 (VMEM only)
            ],
        ),
        compiler_params=pltpu.CompilerParams(
            dimension_semantics=("arbitrary",),     # sequential: layer 2 needs all of h1
            vmem_limit_bytes=32 * 1024 * 1024,      # ~14 MB used; safe on v5e/v6e/v7x
        ),
    )(xp, prep["w1"], prep["e1"], prep["w2"], prep["e2"],
      prep["w3"], prep["b3"], prep["w4"], prep["b4"])
    return out[:m, 0]


def ember_nn_reference(x, params):
    """Pure-JAX f32 reference for correctness checking (eval-mode semantics)."""
    h = x
    for idx in (1, 2, 3):
        h = h @ params[f"w{idx}"] + params[f"b{idx}"]
        h = jnp.maximum(h, 0.0)
        h = ((h - params[f"mean{idx}"]) * jax.lax.rsqrt(params[f"var{idx}"] + _BN_EPS)
             * params[f"gamma{idx}"] + params[f"beta{idx}"])
    h = h @ params["w4"] + params["b4"]
    return jax.nn.sigmoid(h).reshape(-1)


# --------------------------------- main ------------------------------------ #

if __name__ == "__main__":
    key = jax.random.PRNGKey(0)
    key, kx, kp = jax.random.split(key, 3)

    batch, n_features = 8, 2351
    x = jax.random.normal(kx, (batch, n_features), jnp.float32)
    params = init_params(kp, n_features=n_features)
    prep = prepare_params(params, n_features)   # BN folding + int8 quant + padding, done once

    out = jax.block_until_ready(ember_nn_forward(x, prep))
    ref = jax.block_until_ready(ember_nn_reference(x, params))

    assert out.shape == (batch,), out.shape
    # Tolerance reflects int8 weight-only quantization of W1/W2 (+ bf16 activations)
    # against the f32 reference; measured diffs are well below this bound.
    err = float(jnp.max(jnp.abs(out - ref)))
    assert err < 2e-2, (err, out, ref)
    print("KERNEL_OK")
</pallas_src>

<mosaic_0001>
module attributes {stable_mosaic.version = 11 : i64} {
  func.func @_ember_fused_kernel(%arg0: i32, %arg1: memref<8x2432xbf16, #tpu.memory_space<vmem>>, %arg2: memref<1x2432x512xi8, #tpu.memory_space<vmem>>, %arg3: memref<2x512xf32, #tpu.memory_space<vmem>>, %arg4: memref<1x4096x512xi8, #tpu.memory_space<vmem>>, %arg5: memref<2x512xf32, #tpu.memory_space<vmem>>, %arg6: memref<2048x128xbf16, #tpu.memory_space<vmem>>, %arg7: memref<1x128xf32, #tpu.memory_space<vmem>>, %arg8: memref<128x128xbf16, #tpu.memory_space<vmem>>, %arg9: memref<1x128xf32, #tpu.memory_space<vmem>>, %arg10: memref<8x128xf32, #tpu.memory_space<vmem>>, %arg11: memref<8x4096xf32, #tpu.memory_space<vmem>>, %arg12: memref<8x2048xf32, #tpu.memory_space<vmem>>) attributes {dimension_semantics = [#tpu.dimension_semantics<arbitrary>], iteration_bounds = array<i64: 12>, scalar_prefetch = 0 : i64, scratch_operands = 2 : i64, tpu.core_type = #tpu.core_type<tc>, window_params = [{pipeline_mode = #tpu.pipeline_mode<synchronous>, transform_indices = @transform_0, window_bounds = array<i64: 8, 2432>}, {transform_indices = @transform_1, window_bounds = array<i64: 1, 2432, 512>}, {transform_indices = @transform_2, window_bounds = array<i64: 2, 512>}, {transform_indices = @transform_3, window_bounds = array<i64: 1, 4096, 512>}, {transform_indices = @transform_4, window_bounds = array<i64: 2, 512>}, {pipeline_mode = #tpu.pipeline_mode<synchronous>, transform_indices = @transform_5, window_bounds = array<i64: 2048, 128>}, {pipeline_mode = #tpu.pipeline_mode<synchronous>, transform_indices = @transform_6, window_bounds = array<i64: 1, 128>}, {pipeline_mode = #tpu.pipeline_mode<synchronous>, transform_indices = @transform_7, window_bounds = array<i64: 128, 128>}, {pipeline_mode = #tpu.pipeline_mode<synchronous>, transform_indices = @transform_8, window_bounds = array<i64: 1, 128>}, {pipeline_mode = #tpu.pipeline_mode<synchronous>, transform_indices = @transform_9, window_bounds = array<i64: 8, 128>}]} {
    %c8_i32 = arith.constant 8 : i32
    %0 = arith.cmpi slt, %arg0, %c8_i32 : i32
    %1 = arith.extui %0 : i1 to i32
    %c0_i32 = arith.constant 0 : i32
    %2 = arith.cmpi ne, %1, %c0_i32 : i32
    scf.if %2 {
      %c0 = arith.constant 0 : index
      %c0_3 = arith.constant 0 : index
      %c0_4 = arith.constant 0 : index
      %9 = vector.load %arg2[%c0, %c0_3, %c0_4] : memref<1x2432x512xi8, #tpu.memory_space<vmem>>, vector<1x2432x512xi8>
      %10 = vector.shape_cast %9 : vector<1x2432x512xi8> to vector<2432x512xi8>
      %11 = arith.sitofp %10 : vector<2432x512xi8> to vector<2432x512xbf16>
      %c0_5 = arith.constant 0 : index
      %c0_6 = arith.constant 0 : index
      %12 = vector.load %arg1[%c0_5, %c0_6] : memref<8x2432xbf16, #tpu.memory_space<vmem>>, vector<8x2432xbf16>
      %cst = arith.constant dense<0.000000e+00> : vector<8x512xf32>
      %13 = tpu.matmul %12, %11, %cst {dimension_numbers = #tpu.dot_dimension_numbers<[1], [0], [0], [1], [0, 0, 1, 1], [], []>} : vector<8x2432xbf16>, vector<2432x512xbf16>, vector<8x512xf32> -> vector<8x512xf32>
      %c0_7 = arith.constant 0 : index
      %c0_8 = arith.constant 0 : index
      %14 = vector.load %arg3[%c0_7, %c0_8] : memref<2x512xf32, #tpu.memory_space<vmem>>, vector<1x512xf32>
      %15 = vector.broadcast %14 : vector<1x512xf32> to vector<8x512xf32>
      %16 = arith.mulf %13, %15 : vector<8x512xf32>
      %c1 = arith.constant 1 : index
      %c0_9 = arith.constant 0 : index
      %17 = vector.load %arg3[%c1, %c0_9] : memref<2x512xf32, #tpu.memory_space<vmem>>, vector<1x512xf32>
      %18 = vector.broadcast %17 : vector<1x512xf32> to vector<8x512xf32>
      %19 = arith.addf %16, %18 : vector<8x512xf32>
      %cst_10 = arith.constant 0.000000e+00 : f32
      %20 = vector.broadcast %cst_10 : f32 to vector<8x512xf32>
      %21 = arith.maximumf %19, %20 : vector<8x512xf32>
      %c512_i32 = arith.constant 512 : i32
      %22 = arith.muli %arg0, %c512_i32 : i32
      %23 = tpu.assume_multiple %22, 512 : i32
      %c0_11 = arith.constant 0 : index
      %24 = arith.index_cast %23 : i32 to index
      %25 = vector.load %arg11[%c0_11, %24] : memref<8x4096xf32, #tpu.memory_space<vmem>>, vector<8x512xf32>
      tpu.vector_store %arg11[%c0_11, %24], %21 {strides = array<i32>} : memref<8x4096xf32, #tpu.memory_space<vmem>>, vector<8x512xf32>,
    } else {
    }
    %c8_i32_0 = arith.constant 8 : i32
    %3 = arith.cmpi sge, %arg0, %c8_i32_0 : i32
    %4 = arith.extui %3 : i1 to i32
    %c0_i32_1 = arith.constant 0 : i32
    %5 = arith.cmpi ne, %4, %c0_i32_1 : i32
    scf.if %5 {
      %c8_i32_3 = arith.constant 8 : i32
      %9 = arith.subi %arg0, %c8_i32_3 : i32
      %c0 = arith.constant 0 : index
      %c0_4 = arith.constant 0 : index
      %c0_5 = arith.constant 0 : index
      %10 = vector.load %arg4[%c0, %c0_4, %c0_5] : memref<1x4096x512xi8, #tpu.memory_space<vmem>>, vector<1x4096x512xi8>
      %11 = vector.shape_cast %10 : vector<1x4096x512xi8> to vector<4096x512xi8>
      %12 = arith.sitofp %11 : vector<4096x512xi8> to vector<4096x512xbf16>
      %c0_6 = arith.constant 0 : index
      %c0_7 = arith.constant 0 : index
      %13 = vector.load %arg11[%c0_6, %c0_7] : memref<8x4096xf32, #tpu.memory_space<vmem>>, vector<8x4096xf32>
      %14 = arith.truncf %13 : vector<8x4096xf32> to vector<8x4096xbf16>
      %cst = arith.constant dense<0.000000e+00> : vector<8x512xf32>
      %15 = tpu.matmul %14, %12, %cst {dimension_numbers = #tpu.dot_dimension_numbers<[1], [0], [0], [1], [0, 0, 1, 1], [], []>} : vector<8x4096xbf16>, vector<4096x512xbf16>, vector<8x512xf32> -> vector<8x512xf32>
      %c0_8 = arith.constant 0 : index
      %c0_9 = arith.constant 0 : index
      %16 = vector.load %arg5[%c0_8, %c0_9] : memref<2x512xf32, #tpu.memory_space<vmem>>, vector<1x512xf32>
      %17 = vector.broadcast %16 : vector<1x512xf32> to vector<8x512xf32>
      %18 = arith.mulf %15, %17 : vector<8x512xf32>
      %c1 = arith.constant 1 : index
      %c0_10 = arith.constant 0 : index
      %19 = vector.load %arg5[%c1, %c0_10] : memref<2x512xf32, #tpu.memory_space<vmem>>, vector<1x512xf32>
      %20 = vector.broadcast %19 : vector<1x512xf32> to vector<8x512xf32>
      %21 = arith.addf %18, %20 : vector<8x512xf32>
      %cst_11 = arith.constant 0.000000e+00 : f32
      %22 = vector.broadcast %cst_11 : f32 to vector<8x512xf32>
      %23 = arith.maximumf %21, %22 : vector<8x512xf32>
      %c512_i32 = arith.constant 512 : i32
      %24 = arith.muli %9, %c512_i32 : i32
      %25 = tpu.assume_multiple %24, 512 : i32
      %c0_12 = arith.constant 0 : index
      %26 = arith.index_cast %25 : i32 to index
      %27 = vector.load %arg12[%c0_12, %26] : memref<8x2048xf32, #tpu.memory_space<vmem>>, vector<8x512xf32>
      tpu.vector_store %arg12[%c0_12, %26], %23 {strides = array<i32>} : memref<8x2048xf32, #tpu.memory_space<vmem>>, vector<8x512xf32>,
    } else {
    }
    %c11_i32 = arith.constant 11 : i32
    %6 = arith.cmpi eq, %arg0, %c11_i32 : i32
    %7 = arith.extui %6 : i1 to i32
    %c0_i32_2 = arith.constant 0 : i32
    %8 = arith.cmpi ne, %7, %c0_i32_2 : i32
    scf.if %8 {
      %c0 = arith.constant 0 : index
      %c0_3 = arith.constant 0 : index
      %9 = vector.load %arg12[%c0, %c0_3] : memref<8x2048xf32, #tpu.memory_space<vmem>>, vector<8x2048xf32>
      %10 = arith.truncf %9 : vector<8x2048xf32> to vector<8x2048xbf16>
      %c0_4 = arith.constant 0 : index
      %c0_5 = arith.constant 0 : index
      %11 = vector.load %arg6[%c0_4, %c0_5] : memref<2048x128xbf16, #tpu.memory_space<vmem>>, vector<2048x128xbf16>
      %cst = arith.constant dense<0.000000e+00> : vector<8x128xf32>
      %12 = tpu.matmul %10, %11, %cst {dimension_numbers = #tpu.dot_dimension_numbers<[1], [0], [0], [1], [0, 0, 1, 1], [], []>} : vector<8x2048xbf16>, vector<2048x128xbf16>, vector<8x128xf32> -> vector<8x128xf32>
      %c0_6 = arith.constant 0 : index
      %c0_7 = arith.constant 0 : index
      %13 = vector.load %arg7[%c0_6, %c0_7] : memref<1x128xf32, #tpu.memory_space<vmem>>, vector<1x128xf32>
      %14 = vector.broadcast %13 : vector<1x128xf32> to vector<8x128xf32>
      %15 = arith.addf %12, %14 : vector<8x128xf32>
      %cst_8 = arith.constant 0.000000e+00 : f32
      %16 = vector.broadcast %cst_8 : f32 to vector<8x128xf32>
      %17 = arith.maximumf %15, %16 : vector<8x128xf32>
      %18 = arith.truncf %17 : vector<8x128xf32> to vector<8x128xbf16>
      %c0_9 = arith.constant 0 : index
      %c0_10 = arith.constant 0 : index
      %19 = vector.load %arg8[%c0_9, %c0_10] : memref<128x128xbf16, #tpu.memory_space<vmem>>, vector<128x128xbf16>
      %cst_11 = arith.constant dense<0.000000e+00> : vector<8x128xf32>
      %20 = tpu.matmul %18, %19, %cst_11 {dimension_numbers = #tpu.dot_dimension_numbers<[1], [0], [0], [1], [0, 0, 1, 1], [], []>} : vector<8x128xbf16>, vector<128x128xbf16>, vector<8x128xf32> -> vector<8x128xf32>
      %c0_12 = arith.constant 0 : index
      %c0_13 = arith.constant 0 : index
      %21 = vector.load %arg9[%c0_12, %c0_13] : memref<1x128xf32, #tpu.memory_space<vmem>>, vector<1x128xf32>
      %22 = vector.broadcast %21 : vector<1x128xf32> to vector<8x128xf32>
      %23 = arith.addf %20, %22 : vector<8x128xf32>
      %24 = arith.negf %23 : vector<8x128xf32>
      %25 = math.exp %24 : vector<8x128xf32>
      %cst_14 = arith.constant 1.000000e+00 : f32
      %26 = vector.broadcast %cst_14 : f32 to vector<8x128xf32>
      %27 = arith.addf %26, %25 : vector<8x128xf32>
      %28 = arith.divf %26, %27 : vector<8x128xf32>
      %c0_15 = arith.constant 0 : index
      %c0_16 = arith.constant 0 : index
      %29 = vector.load %arg10[%c0_15, %c0_16] : memref<8x128xf32, #tpu.memory_space<vmem>>, vector<8x128xf32>
      tpu.vector_store %arg10[%c0_15, %c0_16], %28 {strides = array<i32>} : memref<8x128xf32, #tpu.memory_space<vmem>>, vector<8x128xf32>,
    } else {
    }
    return
  }
  func.func @transform_0(%arg0: i32) -> (i32, i32) {
    %c0_i32 = arith.constant 0 : i32
    %c0_i32_0 = arith.constant 0 : i32
    %c0_i32_1 = arith.constant 0 : i32
    return %c0_i32, %c0_i32_0 : i32, i32
  }
  func.func @transform_1(%arg0: i32) -> (i32, i32, i32) {
    %c7_i32 = arith.constant 7 : i32
    %0 = arith.minsi %arg0, %c7_i32 : i32
    %c0_i32 = arith.constant 0 : i32
    %c0_i32_0 = arith.constant 0 : i32
    %c0_i32_1 = arith.constant 0 : i32
    return %0, %c0_i32, %c0_i32_0 : i32, i32, i32
  }
  func.func @transform_2(%arg0: i32) -> (i32, i32) {
    %c7_i32 = arith.constant 7 : i32
    %0 = arith.minsi %arg0, %c7_i32 : i32
    %c0_i32 = arith.constant 0 : i32
    %c0_i32_0 = arith.constant 0 : i32
    return %c0_i32, %0 : i32, i32
  }
  func.func @transform_3(%arg0: i32) -> (i32, i32, i32) {
    %c8_i32 = arith.constant 8 : i32
    %0 = arith.subi %arg0, %c8_i32 : i32
    %c0_i32 = arith.constant 0 : i32
    %1 = arith.maxsi %0, %c0_i32 : i32
    %c0_i32_0 = arith.constant 0 : i32
    %c0_i32_1 = arith.constant 0 : i32
    %c0_i32_2 = arith.constant 0 : i32
    return %1, %c0_i32_0, %c0_i32_1 : i32, i32, i32
  }
  func.func @transform_4(%arg0: i32) -> (i32, i32) {
    %c8_i32 = arith.constant 8 : i32
    %0 = arith.subi %arg0, %c8_i32 : i32
    %c0_i32 = arith.constant 0 : i32
    %1 = arith.maxsi %0, %c0_i32 : i32
    %c0_i32_0 = arith.constant 0 : i32
    %c0_i32_1 = arith.constant 0 : i32
    return %c0_i32_0, %1 : i32, i32
  }
  func.func @transform_5(%arg0: i32) -> (i32, i32) {
    %c0_i32 = arith.constant 0 : i32
    %c0_i32_0 = arith.constant 0 : i32
    %c0_i32_1 = arith.constant 0 : i32
    return %c0_i32, %c0_i32_0 : i32, i32
  }
  func.func @transform_6(%arg0: i32) -> (i32, i32) {
    %c0_i32 = arith.constant 0 : i32
    %c0_i32_0 = arith.constant 0 : i32
    %c0_i32_1 = arith.constant 0 : i32
    return %c0_i32, %c0_i32_0 : i32, i32
  }
  func.func @transform_7(%arg0: i32) -> (i32, i32) {
    %c0_i32 = arith.constant 0 : i32
    %c0_i32_0 = arith.constant 0 : i32
    %c0_i32_1 = arith.constant 0 : i32
    return %c0_i32, %c0_i32_0 : i32, i32
  }
  func.func @transform_8(%arg0: i32) -> (i32, i32) {
    %c0_i32 = arith.constant 0 : i32
    %c0_i32_0 = arith.constant 0 : i32
    %c0_i32_1 = arith.constant 0 : i32
    return %c0_i32, %c0_i32_0 : i32, i32
  }
  func.func @transform_9(%arg0: i32) -> (i32, i32) {
    %c0_i32 = arith.constant 0 : i32
    %c0_i32_0 = arith.constant 0 : i32
    %c0_i32_1 = arith.constant 0 : i32
    return %c0_i32, %c0_i32_0 : i32, i32
  }
}

</mosaic_0001>

<llo_original>
// kernel: ember_nn_forward.1
$region0: #{ember_nn_forward.1}
  #allocation0 [shape = 'u32[]', space=smem, size = 0x4, offset = 0x4, fixed_abs, tag = 'smem constant byte address 0x4 - core index']
  #allocation1 [shape = 'u32[144,128]{1,0:T(1,128)}', space=vmem, size = 0x12000, scoped, tag = 'internal scratch']
  #allocation2 [shape = 'f32[8,4096]{1,0:T(8,128)}', space=vmem, size = 0x20000, scoped, tag = 'scratch operand']
  #allocation3 [shape = 'f32[8,2048]{1,0:T(8,128)}', space=vmem, size = 0x10000, scoped, tag = 'scratch operand']
  %s0 = inlined_call_operand.vmem [shape: bf16[8,2432], index: 0, kind: input, shape index: {}]
  %s1 = inlined_call_operand.hbm [shape: s8[8,2432,512], index: 1, kind: input, shape index: {}]
  %s2 = inlined_call_operand.hbm [shape: f32[2,4096], index: 2, kind: input, shape index: {}]
  %s3 = inlined_call_operand.hbm [shape: s8[4,4096,512], index: 3, kind: input, shape index: {}]
  %s4 = inlined_call_operand.hbm [shape: f32[2,2048], index: 4, kind: input, shape index: {}]
  %s5 = inlined_call_operand.hbm [shape: bf16[2048,128], index: 5, kind: input, shape index: {}]
  %s6 = inlined_call_operand.hbm [shape: f32[1,128], index: 6, kind: input, shape index: {}]
  %s7 = inlined_call_operand.hbm [shape: bf16[128,128], index: 7, kind: input, shape index: {}]
  %s8 = inlined_call_operand.hbm [shape: f32[1,128], index: 8, kind: input, shape index: {}]
  %s9 = inlined_call_operand.vmem [shape: f32[8,128], index: 9, kind: output, shape index: {}]
  %s10 = sld [smem:[#allocation0]]
  $region113: #{ember_nn_forward.1} parent=0
    _
  %s12 = ssub.s32 1, %s10
  %s13 = scalar_select 0, %s12, %s10
  $region1: #{ember_nn_forward.1} parent=0
    #allocation4 [shape = 'u8[2490368]{0}', space=vmem, size = 0x260000, scoped, tag = 'input window, operand 1']
    #allocation5 [shape = 's32[2]{0}', space=sflag, size = 0x8, scoped, tag = 'scoped memory for ember_nn_forward.1']
    #allocation6 [shape = 'u8[8192]{0}', space=vmem, size = 0x2000, scoped, tag = 'input window, operand 2']
    #allocation7 [shape = 's32[2]{0}', space=sflag, size = 0x8, scoped, tag = 'scoped memory for ember_nn_forward.1']
    #allocation8 [shape = 'u8[4194304]{0}', space=vmem, size = 0x400000, scoped, tag = 'input window, operand 3']
    #allocation9 [shape = 'u8[8192]{0}', space=vmem, size = 0x2000, scoped, tag = 'input window, operand 4']
    #allocation10 [shape = 's32[2]{0}', space=sflag, size = 0x8, scoped, tag = 'scoped memory for ember_nn_forward.1']
    #allocation11 [shape = 'u8[524288]{0}', space=vmem, size = 0x80000, scoped, tag = 'input window, operand 5, single buffered']
    #allocation12 [shape = 'u8[512]{0}', space=vmem, size = 0x400, scoped, tag = 'input window, operand 6, single buffered']
    #allocation13 [shape = 's32[1]{0}', space=sflag, size = 0x4, scoped, tag = 'scoped memory for ember_nn_forward.1']
    #allocation14 [shape = 'u8[32768]{0}', space=vmem, size = 0x8000, scoped, tag = 'input window, operand 7, single buffered']
    #allocation15 [shape = 'u8[512]{0}', space=vmem, size = 0x400, scoped, tag = 'input window, operand 8, single buffered']
    #allocation16 [shape = 's32[1]{0}', space=sflag, size = 0x4, scoped, tag = 'scoped memory for ember_nn_forward.1']
    %14 = vsyncpa [#allocation5], 0
    %s15 = scalar_lea.sflag [#allocation5], 1
    %16 = vsyncpa %s15, 0
    %17 = vsyncpa [#allocation7], 0
    %s18 = scalar_lea.sflag [#allocation7], 1
    %19 = vsyncpa %s18, 0
    %20 = vsyncpa [#allocation10], 0
    %s21 = scalar_lea.sflag [#allocation10], 1
    %22 = vsyncpa %s21, 0
    %23 = vsyncpa [#allocation13], 0
    %24 = vsyncpa [#allocation16], 0
    loop: start=0, step=1, limit=14
    $region2: #{ember_nn_forward.1} parent=1 // loop_pre_header
      _
    $region3: #{ember_nn_forward.1} parent=1 // loop_header
      %s26 = sphi 0, %s30
      %p27 = scmp.ge.s32.totalorder %s26, 14
      %s34 = sphi 0, %s34
      %s36 = sphi 0, %s34
      %s37 = sphi 0, %s36
      %s51 = sphi 0, %s37
      %s61 = sphi 0, %s63
      %s64 = sphi 0, %s61
      %s65 = sphi 0, %s64
      %s81 = sphi 0, %s65
      %s91 = sphi 0, %s93
      %s94 = sphi 0, %s91
      %s95 = sphi 0, %s94
      %s111 = sphi 0, %s95
      %s123 = sphi 0, %s125
      %s126 = sphi 0, %s123
      %s127 = sphi 0, %s126
      %s143 = sphi 0, %s127
      %s155 = sphi 0, %s157
      %s158 = sphi 0, %s155
      %s159 = sphi 0, %s158
      %s175 = sphi 0, %s159
      %s179 = sphi 0, %s179
      %s181 = sphi 0, %s179
      %s182 = sphi 0, %s181
      %s196 = sphi 0, %s182
      %s200 = sphi 0, %s200
      %s202 = sphi 0, %s200
      %s203 = sphi 0, %s202
      %s217 = sphi 0, %s203
      %s221 = sphi 0, %s221
      %s223 = sphi 0, %s221
      %s224 = sphi 0, %s223
      %s238 = sphi 0, %s224
      %s242 = sphi 0, %s242
      %s244 = sphi 0, %s242
      %s245 = sphi 0, %s244
      %s259 = sphi 0, %s245
      %s263 = sphi 0, %s263
      %s265 = sphi 0, %s263
      %s266 = sphi 0, %s265
      %s280 = sphi 0, %s266
    $region4: #{ember_nn_forward.1} parent=1 // loop_header_branch
      %29 = sbr.rel (%p27) target = $region8
    $region5: #{ember_nn_forward.1} parent=1 // loop_body
      %s31 = ssub.s32 %s26, 1
      %s32 = ssub.s32 %s26, 2
      %s33 = sadd.s32 %s26, 1
      %s35 = sadd.s32 %s34, 1
      %p38 = scmp.eq.s32.totalorder %s26, 11
      %p39 = scmp.ne.s32.totalorder %s34, %s36
      %p40 = scmp.eq.s32.totalorder %s26, 0
      %p41 = por %p39, %p40
      %p42 = scmp.ne.s32.totalorder %s34, %s36
      %p43 = scmp.eq.s32.totalorder %s31, 11
      %p44 = por %p42, %p43
      %p45 = scmp.ne.s32.totalorder %s36, %s37
      %p46 = scmp.eq.s32.totalorder %s31, 0
      %p47 = por %p45, %p46
      %p48 = scmp.ne.s32.totalorder %s36, %s37
      %p49 = scmp.eq.s32.totalorder %s32, 11
      %p50 = por %p48, %p49
      %p52 = scmp.ne.s32.totalorder %s37, %s51
      %p53 = scmp.eq.s32.totalorder %s32, 0
      %p54 = por %p52, %p53
      %p55 = scmp.lt.s32.totalorder %s26, 7
      %s56 = scalar_select %p55, %s26, 7
      %p57 = scmp.lt.s32.totalorder %s33, 7
      %s58 = scalar_select %p57, %s33, 7
      %s59 = ssub.s32 %s56, %s58
      %p60 = scmp.eq.s32.totalorder %s59, 0
      %s62 = sadd.s32 %s61, 1
      %s63 = scalar_select %p60, %s61, %s62
      %p66 = pneg %p60
      %p67 = scmp.eq.s32.totalorder %s26, 11
      %p68 = por %p66, %p67
      %p69 = scmp.ne.s32.totalorder %s61, %s64
      %p70 = scmp.eq.s32.totalorder %s26, 0
      %p71 = por %p69, %p70
      %p72 = scmp.ne.s32.totalorder %s61, %s64
      %p73 = scmp.eq.s32.totalorder %s31, 11
      %p74 = por %p72, %p73
      %p75 = scmp.ne.s32.totalorder %s64, %s65
      %p76 = scmp.eq.s32.totalorder %s31, 0
      %p77 = por %p75, %p76
      %p78 = scmp.ne.s32.totalorder %s64, %s65
      %p79 = scmp.eq.s32.totalorder %s32, 11
      %p80 = por %p78, %p79
      %p82 = scmp.ne.s32.totalorder %s65, %s81
      %p83 = scmp.eq.s32.totalorder %s32, 0
      %p84 = por %p82, %p83
      %p85 = scmp.lt.s32.totalorder %s26, 7
      %s86 = scalar_select %p85, %s26, 7
      %p87 = scmp.lt.s32.totalorder %s33, 7
      %s88 = scalar_select %p87, %s33, 7
      %s89 = ssub.s32 %s86, %s88
      %p90 = scmp.eq.s32.totalorder %s89, 0
      %s92 = sadd.s32 %s91, 1
      %s93 = scalar_select %p90, %s91, %s92
      %p96 = pneg %p90
      %p97 = scmp.eq.s32.totalorder %s26, 11
      %p98 = por %p96, %p97
      %p99 = scmp.ne.s32.totalorder %s91, %s94
      %p100 = scmp.eq.s32.totalorder %s26, 0
      %p101 = por %p99, %p100
      %p102 = scmp.ne.s32.totalorder %s91, %s94
      %p103 = scmp.eq.s32.totalorder %s31, 11
      %p104 = por %p102, %p103
      %p105 = scmp.ne.s32.totalorder %s94, %s95
      %p106 = scmp.eq.s32.totalorder %s31, 0
      %p107 = por %p105, %p106
      %p108 = scmp.ne.s32.totalorder %s94, %s95
      %p109 = scmp.eq.s32.totalorder %s32, 11
      %p110 = por %p108, %p109
      %p112 = scmp.ne.s32.totalorder %s95, %s111
      %p113 = scmp.eq.s32.totalorder %s32, 0
      %p114 = por %p112, %p113
      %s115 = ssub.s32 %s26, 8
      %p116 = scmp.gt.s32.totalorder %s115, 0
      %s117 = scalar_select %p116, %s115, 0
      %s118 = ssub.s32 %s33, 8
      %p119 = scmp.gt.s32.totalorder %s118, 0
      %s120 = scalar_select %p119, %s118, 0
      %s121 = ssub.s32 %s117, %s120
      %p122 = scmp.eq.s32.totalorder %s121, 0
      %s124 = sadd.s32 %s123, 1
      %s125 = scalar_select %p122, %s123, %s124
      %p128 = pneg %p122
      %p129 = scmp.eq.s32.totalorder %s26, 11
      %p130 = por %p128, %p129
      %p131 = scmp.ne.s32.totalorder %s123, %s126
      %p132 = scmp.eq.s32.totalorder %s26, 0
      %p133 = por %p131, %p132
      %p134 = scmp.ne.s32.totalorder %s123, %s126
      %p135 = scmp.eq.s32.totalorder %s31, 11
      %p136 = por %p134, %p135
      %p137 = scmp.ne.s32.totalorder %s126, %s127
      %p138 = scmp.eq.s32.totalorder %s31, 0
      %p139 = por %p137, %p138
      %p140 = scmp.ne.s32.totalorder %s126, %s127
      %p141 = scmp.eq.s32.totalorder %s32, 11
      %p142 = por %p140, %p141
      %p144 = scmp.ne.s32.totalorder %s127, %s143
      %p145 = scmp.eq.s32.totalorder %s32, 0
      %p146 = por %p144, %p145
      %s147 = ssub.s32 %s26, 8
      %p148 = scmp.gt.s32.totalorder %s147, 0
      %s149 = scalar_select %p148, %s147, 0
      %s150 = ssub.s32 %s33, 8
      %p151 = scmp.gt.s32.totalorder %s150, 0
      %s152 = scalar_select %p151, %s150, 0
      %s153 = ssub.s32 %s149, %s152
      %p154 = scmp.eq.s32.totalorder %s153, 0
      %s156 = sadd.s32 %s155, 1
      %s157 = scalar_select %p154, %s155, %s156
      %p160 = pneg %p154
      %p161 = scmp.eq.s32.totalorder %s26, 11
      %p162 = por %p160, %p161
      %p163 = scmp.ne.s32.totalorder %s155, %s158
      %p164 = scmp.eq.s32.totalorder %s26, 0
      %p165 = por %p163, %p164
      %p166 = scmp.ne.s32.totalorder %s155, %s158
      %p167 = scmp.eq.s32.totalorder %s31, 11
      %p168 = por %p166, %p167
      %p169 = scmp.ne.s32.totalorder %s158, %s159
      %p170 = scmp.eq.s32.totalorder %s31, 0
      %p171 = por %p169, %p170
      %p172 = scmp.ne.s32.totalorder %s158, %s159
      %p173 = scmp.eq.s32.totalorder %s32, 11
      %p174 = por %p172, %p173
      %p176 = scmp.ne.s32.totalorder %s159, %s175
      %p177 = scmp.eq.s32.totalorder %s32, 0
      %p178 = por %p176, %p177
      %s180 = sadd.s32 %s179, 1
      %p183 = scmp.eq.s32.totalorder %s26, 11
      %p184 = scmp.ne.s32.totalorder %s179, %s181
      %p185 = scmp.eq.s32.totalorder %s26, 0
      %p186 = por %p184, %p185
      %p187 = scmp.ne.s32.totalorder %s179, %s181
      %p188 = scmp.eq.s32.totalorder %s31, 11
      %p189 = por %p187, %p188
      %p190 = scmp.ne.s32.totalorder %s181, %s182
      %p191 = scmp.eq.s32.totalorder %s31, 0
      %p192 = por %p190, %p191
      %p193 = scmp.ne.s32.totalorder %s181, %s182
      %p194 = scmp.eq.s32.totalorder %s32, 11
      %p195 = por %p193, %p194
      %p197 = scmp.ne.s32.totalorder %s182, %s196
      %p198 = scmp.eq.s32.totalorder %s32, 0
      %p199 = por %p197, %p198
      %s201 = sadd.s32 %s200, 1
      %p204 = scmp.eq.s32.totalorder %s26, 11
      %p205 = scmp.ne.s32.totalorder %s200, %s202
      %p206 = scmp.eq.s32.totalorder %s26, 0
      %p207 = por %p205, %p206
      %p208 = scmp.ne.s32.totalorder %s200, %s202
      %p209 = scmp.eq.s32.totalorder %s31, 11
      %p210 = por %p208, %p209
      %p211 = scmp.ne.s32.totalorder %s202, %s203
      %p212 = scmp.eq.s32.totalorder %s31, 0
      %p213 = por %p211, %p212
      %p214 = scmp.ne.s32.totalorder %s202, %s203
      %p215 = scmp.eq.s32.totalorder %s32, 11
      %p216 = por %p214, %p215
      %p218 = scmp.ne.s32.totalorder %s203, %s217
      %p219 = scmp.eq.s32.totalorder %s32, 0
      %p220 = por %p218, %p219
      %s222 = sadd.s32 %s221, 1
      %p225 = scmp.eq.s32.totalorder %s26, 11
      %p226 = scmp.ne.s32.totalorder %s221, %s223
      %p227 = scmp.eq.s32.totalorder %s26, 0
      %p228 = por %p226, %p227
      %p229 = scmp.ne.s32.totalorder %s221, %s223
      %p230 = scmp.eq.s32.totalorder %s31, 11
      %p231 = por %p229, %p230
      %p232 = scmp.ne.s32.totalorder %s223, %s224
      %p233 = scmp.eq.s32.totalorder %s31, 0
      %p234 = por %p232, %p233
      %p235 = scmp.ne.s32.totalorder %s223, %s224
      %p236 = scmp.eq.s32.totalorder %s32, 11
      %p237 = por %p235, %p236
      %p239 = scmp.ne.s32.totalorder %s224, %s238
      %p240 = scmp.eq.s32.totalorder %s32, 0
      %p241 = por %p239, %p240
      %s243 = sadd.s32 %s242, 1
      %p246 = scmp.eq.s32.totalorder %s26, 11
      %p247 = scmp.ne.s32.totalorder %s242, %s244
      %p248 = scmp.eq.s32.totalorder %s26, 0
      %p249 = por %p247, %p248
      %p250 = scmp.ne.s32.totalorder %s242, %s244
      %p251 = scmp.eq.s32.totalorder %s31, 11
      %p252 = por %p250, %p251
      %p253 = scmp.ne.s32.totalorder %s244, %s245
      %p254 = scmp.eq.s32.totalorder %s31, 0
      %p255 = por %p253, %p254
      %p256 = scmp.ne.s32.totalorder %s244, %s245
      %p257 = scmp.eq.s32.totalorder %s32, 11
      %p258 = por %p256, %p257
      %p260 = scmp.ne.s32.totalorder %s245, %s259
      %p261 = scmp.eq.s32.totalorder %s32, 0
      %p262 = por %p260, %p261
      %s264 = sadd.s32 %s263, 1
      %p267 = scmp.eq.s32.totalorder %s26, 11
      %p268 = scmp.ne.s32.totalorder %s263, %s265
      %p269 = scmp.eq.s32.totalorder %s26, 0
      %p270 = por %p268, %p269
      %p271 = scmp.ne.s32.totalorder %s263, %s265
      %p272 = scmp.eq.s32.totalorder %s31, 11
      %p273 = por %p271, %p272
      %p274 = scmp.ne.s32.totalorder %s265, %s266
      %p275 = scmp.eq.s32.totalorder %s31, 0
      %p276 = por %p274, %p275
      %p277 = scmp.ne.s32.totalorder %s265, %s266
      %p278 = scmp.eq.s32.totalorder %s32, 11
      %p279 = por %p277, %p278
      %p281 = scmp.ne.s32.totalorder %s266, %s280
      %p282 = scmp.eq.s32.totalorder %s32, 0
      %p283 = por %p281, %p282
      %p284 = scmp.le.s32.totalorder 1, %s26
      %p285 = scmp.lt.s32.totalorder %s26, 13
      %p286 = pnand %p284, %p285
      %p287 = pneg %p286
      // Predicated region
      $region9: #{ember_nn_forward.1} parent=5 // pred_check
        _
      $region10: #{ember_nn_forward.1} parent=5 // pred_check_branch
        %289 = sbr.rel (%p286) target = $region12
      $region11: #{ember_nn_forward.1} parent=5 // pred_region
        %s290 = ssub.s32 %s26, 1
        // Predicated region
        $region13: #{ember_nn_forward.1} parent=11 // pred_check
          %p291 = pneg %p47
        $region14: #{ember_nn_forward.1} parent=11 // pred_check_branch
          %293 = sbr.rel (%p291) target = $region16
        $region15: #{ember_nn_forward.1} parent=11 // pred_region
          _
        $region16: #{ember_nn_forward.1} parent=11 // pred_fallthru
          _
        // Predicated region
        $region17: #{ember_nn_forward.1} parent=11 // pred_check
          %p294 = pneg %p192
        $region18: #{ember_nn_forward.1} parent=11 // pred_check_branch
          %296 = sbr.rel (%p294) target = $region20
        $region19: #{ember_nn_forward.1} parent=11 // pred_region
          %s298 = ssub.s32 16384, 16384
          %299 = vsyncadd [#allocation10], %s298
          %s300 = sshll.u32 [#allocation11], 4
          %s301 = int_to_ptr.vmem [resolvable:$true] %s300
          %306 = dma.hbm_to_vmem [thread:$0]  %s5, 16384, %s301, [#allocation10], 64, 64, 4
        $region20: #{ember_nn_forward.1} parent=11 // pred_fallthru
          _
        // Predicated region
        $region21: #{ember_nn_forward.1} parent=11 // pred_check
          %p307 = pneg %p213
        $region22: #{ember_nn_forward.1} parent=11 // pred_check_branch
          %309 = sbr.rel (%p307) target = $region24
        $region23: #{ember_nn_forward.1} parent=11 // pred_region
          %s311 = ssub.s32 16, 16
          %312 = vsyncadd [#allocation13], %s311
          %s314 = sshll.u32 [#allocation12], 4
          %s315 = int_to_ptr.vmem [resolvable:$true] %s314
          %317 = dma.hbm_to_vmem [thread:$0]  %s6, 16, %s315, [#allocation13]
        $region24: #{ember_nn_forward.1} parent=11 // pred_fallthru
          _
        // Predicated region
        $region25: #{ember_nn_forward.1} parent=11 // pred_check
          %p318 = pneg %p234
        $region26: #{ember_nn_forward.1} parent=11 // pred_check_branch
          %320 = sbr.rel (%p318) target = $region28
        $region27: #{ember_nn_forward.1} parent=11 // pred_region
          %s322 = ssub.s32 1024, 1024
          %323 = vsyncadd [#allocation13], %s322
          %s324 = sshll.u32 [#allocation14], 4
          %s325 = int_to_ptr.vmem [resolvable:$true] %s324
          %330 = dma.hbm_to_vmem [thread:$0]  %s7, 1024, %s325, [#allocation13], 64, 64, 4
        $region28: #{ember_nn_forward.1} parent=11 // pred_fallthru
          _
        // Predicated region
        $region29: #{ember_nn_forward.1} parent=11 // pred_check
          %p331 = pneg %p255
        $region30: #{ember_nn_forward.1} parent=11 // pred_check_branch
          %333 = sbr.rel (%p331) target = $region32
        $region31: #{ember_nn_forward.1} parent=11 // pred_region
          %s335 = ssub.s32 16, 16
          %336 = vsyncadd [#allocation16], %s335
          %s338 = sshll.u32 [#allocation15], 4
          %s339 = int_to_ptr.vmem [resolvable:$true] %s338
          %341 = dma.hbm_to_vmem [thread:$0]  %s8, 16, %s339, [#allocation16]
        $region32: #{ember_nn_forward.1} parent=11 // pred_fallthru
          _
      $region12: #{ember_nn_forward.1} parent=5 // pred_fallthru
        _
      %p342 = scmp.lt.s32.totalorder %s26, 12
      // Predicated region
      $region33: #{ember_nn_forward.1} parent=5 // pred_check
        %p343 = pneg %p342
      $region34: #{ember_nn_forward.1} parent=5 // pred_check_branch
        %345 = sbr.rel (%p343) target = $region36
      $region35: #{ember_nn_forward.1} parent=5 // pred_region
        // Predicated region
        $region37: #{ember_nn_forward.1} parent=35 // pred_check
          %p346 = pneg %p71
        $region38: #{ember_nn_forward.1} parent=35 // pred_check_branch
          %348 = sbr.rel (%p346) target = $region40
        $region39: #{ember_nn_forward.1} parent=35 // pred_region
          %s349 = sand.u32 %s61, 1
          %s350 = scalar_lea.sflag [#allocation5], %s349
          %s351 = sand.u32 %s61, 1
          %s352 = smul.addr %s351, 2432
          %s353 = scalar_lea.vmem [#allocation4], %s352
          %p354 = scmp.lt.s32.totalorder %s26, 7
          %s355 = scalar_select %p354, %s26, 7
          %s357 = ssub.s32 38912, 38912
          %358 = vsyncadd %s350, %s357
          %s359 = smul.addr %s355, 304
          %s360 = smul.addr %s359, 128
          %s361 = scalar_lea.hbm %s1, %s360
          %s362 = sshll.u32 %s353, 4
          %s363 = int_to_ptr.vmem [resolvable:$true] %s362
          %368 = dma.hbm_to_vmem [thread:$0]  %s361, 38912, %s363, %s350, 512, 512, 32
        $region40: #{ember_nn_forward.1} parent=35 // pred_fallthru
          _
        // Predicated region
        $region41: #{ember_nn_forward.1} parent=35 // pred_check
          %p369 = pneg %p101
        $region42: #{ember_nn_forward.1} parent=35 // pred_check_branch
          %371 = sbr.rel (%p369) target = $region44
        $region43: #{ember_nn_forward.1} parent=35 // pred_region
          %s372 = sand.u32 %s26, 1
          %s373 = scalar_lea.sflag [#allocation7], %s372
          %s374 = sand.u32 %s91, 1
          %s375 = smul.addr %s374, 8
          %s376 = scalar_lea.vmem [#allocation6], %s375
          %p377 = scmp.lt.s32.totalorder %s26, 7
          %s378 = scalar_select %p377, %s26, 7
          %s379 = smul.u32 4, %s378
          %s381 = ssub.s32 128, 128
          %382 = vsyncadd %s373, %s381
          %s383 = smul.addr %s379, 32
          %s384 = scalar_lea.hbm %s2, %s383
          %s386 = sshll.u32 %s376, 4
          %s387 = int_to_ptr.vmem [resolvable:$true] %s386
          %389 = dma.hbm_to_vmem [thread:$0]  %s384, 128, %s387, %s373
        $region44: #{ember_nn_forward.1} parent=35 // pred_fallthru
          _
        // Predicated region
        $region45: #{ember_nn_forward.1} parent=35 // pred_check
          %p390 = pneg %p133
        $region46: #{ember_nn_forward.1} parent=35 // pred_check_branch
          %392 = sbr.rel (%p390) target = $region48
        $region47: #{ember_nn_forward.1} parent=35 // pred_region
          %s393 = sand.u32 %s26, 1
          %s394 = scalar_lea.sflag [#allocation7], %s393
          %s395 = sand.u32 %s123, 1
          %s396 = smul.addr %s395, 4096
          %s397 = scalar_lea.vmem [#allocation8], %s396
          %s398 = ssub.s32 %s26, 8
          %p399 = scmp.gt.s32.totalorder %s398, 0
          %s400 = scalar_select %p399, %s398, 0
          %s402 = ssub.s32 65536, 65536
          %403 = vsyncadd %s394, %s402
          %s404 = smul.addr %s400, 512
          %s405 = smul.addr %s404, 128
          %s406 = scalar_lea.hbm %s3, %s405
          %s407 = sshll.u32 %s397, 4
          %s408 = int_to_ptr.vmem [resolvable:$true] %s407
          %413 = dma.hbm_to_vmem [thread:$0]  %s406, 65536, %s408, %s394, 512, 512, 32
        $region48: #{ember_nn_forward.1} parent=35 // pred_fallthru
          _
        // Predicated region
        $region49: #{ember_nn_forward.1} parent=35 // pred_check
          %p414 = pneg %p165
        $region50: #{ember_nn_forward.1} parent=35 // pred_check_branch
          %416 = sbr.rel (%p414) target = $region52
        $region51: #{ember_nn_forward.1} parent=35 // pred_region
          %s417 = sand.u32 %s26, 1
          %s418 = scalar_lea.sflag [#allocation10], %s417
          %s419 = sand.u32 %s155, 1
          %s420 = smul.addr %s419, 8
          %s421 = scalar_lea.vmem [#allocation9], %s420
          %s422 = ssub.s32 %s26, 8
          %p423 = scmp.gt.s32.totalorder %s422, 0
          %s424 = scalar_select %p423, %s422, 0
          %s425 = smul.u32 4, %s424
          %s427 = ssub.s32 128, 128
          %428 = vsyncadd %s418, %s427
          %s429 = smul.addr %s425, 32
          %s430 = scalar_lea.hbm %s4, %s429
          %s432 = sshll.u32 %s421, 4
          %s433 = int_to_ptr.vmem [resolvable:$true] %s432
          %435 = dma.hbm_to_vmem [thread:$0]  %s430, 128, %s433, %s418
        $region52: #{ember_nn_forward.1} parent=35 // pred_fallthru
          _
      $region36: #{ember_nn_forward.1} parent=5 // pred_fallthru
        _
      %p436 = scmp.le.s32.totalorder 1, %s26
      %p437 = scmp.lt.s32.totalorder %s26, 13
      %p438 = pnand %p436, %p437
      %p439 = pneg %p438
      // Predicated region
      $region53: #{ember_nn_forward.1} parent=5 // pred_check
        _
      $region54: #{ember_nn_forward.1} parent=5 // pred_check_branch
        %441 = sbr.rel (%p438) target = $region56
      $region55: #{ember_nn_forward.1} parent=5 // pred_region
        %s442 = ssub.s32 %s26, 1
        %s443 = sand.u32 %s64, 1
        %s444 = scalar_lea.sflag [#allocation5], %s443
        %s445 = sand.u32 %s64, 1
        %s446 = smul.addr %s445, 2432
        %s447 = scalar_lea.vmem [#allocation4], %s446
        // Predicated region
        $region57: #{ember_nn_forward.1} parent=55 // pred_check
          %p448 = pneg %p77
        $region58: #{ember_nn_forward.1} parent=55 // pred_check_branch
          %450 = sbr.rel (%p448) target = $region60
        $region59: #{ember_nn_forward.1} parent=55 // pred_region
          %451 = dma.done %s444, 38912
        $region60: #{ember_nn_forward.1} parent=55 // pred_fallthru
          _
        %s452 = sand.u32 %s31, 1
        %s453 = scalar_lea.sflag [#allocation7], %s452
        %s454 = sand.u32 %s94, 1
        %s455 = smul.addr %s454, 8
        %s456 = scalar_lea.vmem [#allocation6], %s455
        // Predicated region
        $region61: #{ember_nn_forward.1} parent=55 // pred_check
          %p457 = pneg %p107
        $region62: #{ember_nn_forward.1} parent=55 // pred_check_branch
          %459 = sbr.rel (%p457) target = $region64
        $region63: #{ember_nn_forward.1} parent=55 // pred_region
          %460 = dma.done %s453, 128
        $region64: #{ember_nn_forward.1} parent=55 // pred_fallthru
          _
        %s461 = sand.u32 %s31, 1
        %s462 = scalar_lea.sflag [#allocation7], %s461
        %s463 = sand.u32 %s126, 1
        %s464 = smul.addr %s463, 4096
        %s465 = scalar_lea.vmem [#allocation8], %s464
        // Predicated region
        $region65: #{ember_nn_forward.1} parent=55 // pred_check
          %p466 = pneg %p139
        $region66: #{ember_nn_forward.1} parent=55 // pred_check_branch
          %468 = sbr.rel (%p466) target = $region68
        $region67: #{ember_nn_forward.1} parent=55 // pred_region
          %469 = dma.done %s462, 65536
        $region68: #{ember_nn_forward.1} parent=55 // pred_fallthru
          _
        %s470 = sand.u32 %s31, 1
        %s471 = scalar_lea.sflag [#allocation10], %s470
        %s472 = sand.u32 %s158, 1
        %s473 = smul.addr %s472, 8
        %s474 = scalar_lea.vmem [#allocation9], %s473
        // Predicated region
        $region69: #{ember_nn_forward.1} parent=55 // pred_check
          %p475 = pneg %p171
        $region70: #{ember_nn_forward.1} parent=55 // pred_check_branch
          %477 = sbr.rel (%p475) target = $region72
        $region71: #{ember_nn_forward.1} parent=55 // pred_region
          %478 = dma.done %s471, 128
        $region72: #{ember_nn_forward.1} parent=55 // pred_fallthru
          _
        // Predicated region
        $region73: #{ember_nn_forward.1} parent=55 // pred_check
          %p479 = pneg %p192
        $region74: #{ember_nn_forward.1} parent=55 // pred_check_branch
          %481 = sbr.rel (%p479) target = $region76
        $region75: #{ember_nn_forward.1} parent=55 // pred_region
          %482 = dma.done [#allocation10], 16384
        $region76: #{ember_nn_forward.1} parent=55 // pred_fallthru
          _
        // Predicated region
        $region77: #{ember_nn_forward.1} parent=55 // pred_check
          %p483 = pneg %p213
        $region78: #{ember_nn_forward.1} parent=55 // pred_check_branch
          %485 = sbr.rel (%p483) target = $region80
        $region79: #{ember_nn_forward.1} parent=55 // pred_region
          %486 = dma.done [#allocation13], 16
        $region80: #{ember_nn_forward.1} parent=55 // pred_fallthru
          _
        // Predicated region
        $region81: #{ember_nn_forward.1} parent=55 // pred_check
          %p487 = pneg %p234
        $region82: #{ember_nn_forward.1} parent=55 // pred_check_branch
          %489 = sbr.rel (%p487) target = $region84
        $region83: #{ember_nn_forward.1} parent=55 // pred_region
          %490 = dma.done [#allocation13], 1024
        $region84: #{ember_nn_forward.1} parent=55 // pred_fallthru
          _
        // Predicated region
        $region85: #{ember_nn_forward.1} parent=55 // pred_check
          %p491 = pneg %p255
        $region86: #{ember_nn_forward.1} parent=55 // pred_check_branch
          %493 = sbr.rel (%p491) target = $region88
        $region87: #{ember_nn_forward.1} parent=55 // pred_region
          %494 = dma.done [#allocation16], 16
        $region88: #{ember_nn_forward.1} parent=55 // pred_fallthru
          _
        %p495 = pneg %p47
        %p496 = pneg %p44
        %s497 = sand.u32 %s64, 1
        %s498 = scalar_lea.sflag [#allocation5], %s497
        %s499 = sand.u32 %s64, 1
        %s500 = smul.addr %s499, 2432
        %s501 = scalar_lea.vmem [#allocation4], %s500
        %p502 = pneg %p77
        %p503 = pneg %p74
        %s504 = sand.u32 %s31, 1
        %s505 = scalar_lea.sflag [#allocation7], %s504
        %s506 = sand.u32 %s94, 1
        %s507 = smul.addr %s506, 8
        %s508 = scalar_lea.vmem [#allocation6], %s507
        %p509 = pneg %p107
        %p510 = pneg %p104
        %s511 = sand.u32 %s31, 1
        %s512 = scalar_lea.sflag [#allocation7], %s511
        %s513 = sand.u32 %s126, 1
        %s514 = smul.addr %s513, 4096
        %s515 = scalar_lea.vmem [#allocation8], %s514
        %p516 = pneg %p139
        %p517 = pneg %p136
        %s518 = sand.u32 %s31, 1
        %s519 = scalar_lea.sflag [#allocation10], %s518
        %s520 = sand.u32 %s158, 1
        %s521 = smul.addr %s520, 8
        %s522 = scalar_lea.vmem [#allocation9], %s521
        %p523 = pneg %p171
        %p524 = pneg %p168
        %p525 = pneg %p192
        %p526 = pneg %p189
        %p527 = pneg %p213
        %p528 = pneg %p210
        %p529 = pneg %p234
        %p530 = pneg %p231
        %p531 = pneg %p255
        %p532 = pneg %p252
        %p533 = pneg %p276
        %p534 = pneg %p273
        %p535 = scmp.lt.s32.totalorder %s31, 7
        %s536 = scalar_select %p535, %s31, 7
        %p537 = scmp.lt.s32.totalorder %s31, 7
        %s538 = scalar_select %p537, %s31, 7
        %s539 = smul.u32 4, %s538
        %s540 = ssub.s32 %s31, 8
        %p541 = scmp.gt.s32.totalorder %s540, 0
        %s542 = scalar_select %p541, %s540, 0
        %s543 = ssub.s32 %s31, 8
        %p544 = scmp.gt.s32.totalorder %s543, 0
        %s545 = scalar_select %p544, %s543, 0
        %s546 = smul.u32 4, %s545
        %p548 = scmp.lt.s32.totalorder %s31, 8
        // Predicated region
        $region89: #{ember_nn_forward.1} parent=55 // pred_check
          %p549 = pneg %p548
        $region90: #{ember_nn_forward.1} parent=55 // pred_check_branch
          %551 = sbr.rel (%p549) target = $region92
        $region91: #{ember_nn_forward.1} parent=55 // pred_region
          %v552 = vld [vmem:[%s447] sm:$0xff]
          %v553 = vld [vmem:[%s447 + $0x8] sm:$0xff]
          %v554 = vld [vmem:[%s447 + $0x10] sm:$0xff]
          %v555 = vld [vmem:[%s447 + $0x18] sm:$0xff]
          %v556 = vld [vmem:[%s447 + $0x20] sm:$0xff]
          %v557 = vld [vmem:[%s447 + $0x28] sm:$0xff]
          %v558 = vld [vmem:[%s447 + $0x30] sm:$0xff]
          %v559 = vld [vmem:[%s447 + $0x38] sm:$0xff]
          %v560 = vld [vmem:[%s447 + $0x40] sm:$0xff]
          %v561 = vld [vmem:[%s447 + $0x48] sm:$0xff]
          %v562 = vld [vmem:[%s447 + $0x50] sm:$0xff]
          %v563 = vld [vmem:[%s447 + $0x58] sm:$0xff]
          %v564 = vld [vmem:[%s447 + $0x60] sm:$0xff]
          %v565 = vld [vmem:[%s447 + $0x68] sm:$0xff]
          %v566 = vld [vmem:[%s447 + $0x70] sm:$0xff]
          %v567 = vld [vmem:[%s447 + $0x78] sm:$0xff]
          %v568 = vld [vmem:[%s447 + $0x80] sm:$0xff]
          %v569 = vld [vmem:[%s447 + $0x88] sm:$0xff]
          %v570 = vld [vmem:[%s447 + $0x90] sm:$0xff]
          %v571 = vld [vmem:[%s447 + $0x98] sm:$0xff]
          %v572 = vld [vmem:[%s447 + $0xa0] sm:$0xff]
          %v573 = vld [vmem:[%s447 + $0xa8] sm:$0xff]
          %v574 = vld [vmem:[%s447 + $0xb0] sm:$0xff]
          %v575 = vld [vmem:[%s447 + $0xb8] sm:$0xff]
          %v576 = vld [vmem:[%s447 + $0xc0] sm:$0xff]
          %v577 = vld [vmem:[%s447 + $0xc8] sm:$0xff]
          %v578 = vld [vmem:[%s447 + $0xd0] sm:$0xff]
          %v579 = vld [vmem:[%s447 + $0xd8] sm:$0xff]
          %v580 = vld [vmem:[%s447 + $0xe0] sm:$0xff]
          %v581 = vld [vmem:[%s447 + $0xe8] sm:$0xff]
          %v582 = vld [vmem:[%s447 + $0xf0] sm:$0xff]
          %v583 = vld [vmem:[%s447 + $0xf8] sm:$0xff]
          %v584 = vld [vmem:[%s447 + $0x100] sm:$0xff]
          %v585 = vld [vmem:[%s447 + $0x108] sm:$0xff]
          %v586 = vld [vmem:[%s447 + $0x110] sm:$0xff]
          %v587 = vld [vmem:[%s447 + $0x118] sm:$0xff]
          %v588 = vld [vmem:[%s447 + $0x120] sm:$0xff]
          %v589 = vld [vmem:[%s447 + $0x128] sm:$0xff]
          %v590 = vld [vmem:[%s447 + $0x130] sm:$0xff]
          %v591 = vld [vmem:[%s447 + $0x138] sm:$0xff]
          %v592 = vld [vmem:[%s447 + $0x140] sm:$0xff]
          %v593 = vld [vmem:[%s447 + $0x148] sm:$0xff]
          %v594 = vld [vmem:[%s447 + $0x150] sm:$0xff]
          %v595 = vld [vmem:[%s447 + $0x158] sm:$0xff]
          %v596 = vld [vmem:[%s447 + $0x160] sm:$0xff]
          %v597 = vld [vmem:[%s447 + $0x168] sm:$0xff]
          %v598 = vld [vmem:[%s447 + $0x170] sm:$0xff]
          %v599 = vld [vmem:[%s447 + $0x178] sm:$0xff]
          %v600 = vld [vmem:[%s447 + $0x180] sm:$0xff]
          %v601 = vld [vmem:[%s447 + $0x188] sm:$0xff]
          %v602 = vld [vmem:[%s447 + $0x190] sm:$0xff]
          %v603 = vld [vmem:[%s447 + $0x198] sm:$0xff]
          %v604 = vld [vmem:[%s447 + $0x1a0] sm:$0xff]
          %v605 = vld [vmem:[%s447 + $0x1a8] sm:$0xff]
          %v606 = vld [vmem:[%s447 + $0x1b0] sm:$0xff]
          %v607 = vld [vmem:[%s447 + $0x1b8] sm:$0xff]
          %v608 = vld [vmem:[%s447 + $0x1c0] sm:$0xff]
          %v609 = vld [vmem:[%s447 + $0x1c8] sm:$0xff]
          %v610 = vld [vmem:[%s447 + $0x1d0] sm:$0xff]
          %v611 = vld [vmem:[%s447 + $0x1d8] sm:$0xff]
          %v612 = vld [vmem:[%s447 + $0x1e0] sm:$0xff]
          %v613 = vld [vmem:[%s447 + $0x1e8] sm:$0xff]
          %v614 = vld [vmem:[%s447 + $0x1f0] sm:$0xff]
          %v615 = vld [vmem:[%s447 + $0x1f8] sm:$0xff]
          %v616 = vld [vmem:[%s447 + $0x200] sm:$0xff]
          %v617 = vld [vmem:[%s447 + $0x208] sm:$0xff]
          %v618 = vld [vmem:[%s447 + $0x210] sm:$0xff]
          %v619 = vld [vmem:[%s447 + $0x218] sm:$0xff]
          %v620 = vld [vmem:[%s447 + $0x220] sm:$0xff]
          %v621 = vld [vmem:[%s447 + $0x228] sm:$0xff]
          %v622 = vld [vmem:[%s447 + $0x230] sm:$0xff]
          %v623 = vld [vmem:[%s447 + $0x238] sm:$0xff]
          %v624 = vld [vmem:[%s447 + $0x240] sm:$0xff]
          %v625 = vld [vmem:[%s447 + $0x248] sm:$0xff]
          %v626 = vld [vmem:[%s447 + $0x250] sm:$0xff]
          %v627 = vld [vmem:[%s447 + $0x258] sm:$0xff]
          %v628 = vld [vmem:[%s447 + $0x260] sm:$0xff]
          %v629 = vld [vmem:[%s447 + $0x268] sm:$0xff]
          %v630 = vld [vmem:[%s447 + $0x270] sm:$0xff]
          %v631 = vld [vmem:[%s447 + $0x278] sm:$0xff]
          %v632 = vld [vmem:[%s447 + $0x280] sm:$0xff]
          %v633 = vld [vmem:[%s447 + $0x288] sm:$0xff]
          %v634 = vld [vmem:[%s447 + $0x290] sm:$0xff]
          %v635 = vld [vmem:[%s447 + $0x298] sm:$0xff]
          %v636 = vld [vmem:[%s447 + $0x2a0] sm:$0xff]
          %v637 = vld [vmem:[%s447 + $0x2a8] sm:$0xff]
          %v638 = vld [vmem:[%s447 + $0x2b0] sm:$0xff]
          %v639 = vld [vmem:[%s447 + $0x2b8] sm:$0xff]
          %v640 = vld [vmem:[%s447 + $0x2c0] sm:$0xff]
          %v641 = vld [vmem:[%s447 + $0x2c8] sm:$0xff]
          %v642 = vld [vmem:[%s447 + $0x2d0] sm:$0xff]
          %v643 = vld [vmem:[%s447 + $0x2d8] sm:$0xff]
          %v644 = vld [vmem:[%s447 + $0x2e0] sm:$0xff]
          %v645 = vld [vmem:[%s447 + $0x2e8] sm:$0xff]
          %v646 = vld [vmem:[%s447 + $0x2f0] sm:$0xff]
          %v647 = vld [vmem:[%s447 + $0x2f8] sm:$0xff]
          %v648 = vld [vmem:[%s447 + $0x300] sm:$0xff]
          %v649 = vld [vmem:[%s447 + $0x308] sm:$0xff]
          %v650 = vld [vmem:[%s447 + $0x310] sm:$0xff]
          %v651 = vld [vmem:[%s447 + $0x318] sm:$0xff]
          %v652 = vld [vmem:[%s447 + $0x320] sm:$0xff]
          %v653 = vld [vmem:[%s447 + $0x328] sm:$0xff]
          %v654 = vld [vmem:[%s447 + $0x330] sm:$0xff]
          %v655 = vld [vmem:[%s447 + $0x338] sm:$0xff]
          %v656 = vld [vmem:[%s447 + $0x340] sm:$0xff]
          %v657 = vld [vmem:[%s447 + $0x348] sm:$0xff]
          %v658 = vld [vmem:[%s447 + $0x350] sm:$0xff]
          %v659 = vld [vmem:[%s447 + $0x358] sm:$0xff]
          %v660 = vld [vmem:[%s447 + $0x360] sm:$0xff]
          %v661 = vld [vmem:[%s447 + $0x368] sm:$0xff]
          %v662 = vld [vmem:[%s447 + $0x370] sm:$0xff]
          %v663 = vld [vmem:[%s447 + $0x378] sm:$0xff]
          %v664 = vld [vmem:[%s447 + $0x380] sm:$0xff]
          %v665 = vld [vmem:[%s447 + $0x388] sm:$0xff]
          %v666 = vld [vmem:[%s447 + $0x390] sm:$0xff]
          %v667 = vld [vmem:[%s447 + $0x398] sm:$0xff]
          %v668 = vld [vmem:[%s447 + $0x3a0] sm:$0xff]
          %v669 = vld [vmem:[%s447 + $0x3a8] sm:$0xff]
          %v670 = vld [vmem:[%s447 + $0x3b0] sm:$0xff]
          %v671 = vld [vmem:[%s447 + $0x3b8] sm:$0xff]
          %v672 = vld [vmem:[%s447 + $0x3c0] sm:$0xff]
          %v673 = vld [vmem:[%s447 + $0x3c8] sm:$0xff]
          %v674 = vld [vmem:[%s447 + $0x3d0] sm:$0xff]
          %v675 = vld [vmem:[%s447 + $0x3d8] sm:$0xff]
          %v676 = vld [vmem:[%s447 + $0x3e0] sm:$0xff]
          %v677 = vld [vmem:[%s447 + $0x3e8] sm:$0xff]
          %v678 = vld [vmem:[%s447 + $0x3f0] sm:$0xff]
          %v679 = vld [vmem:[%s447 + $0x3f8] sm:$0xff]
          %v680 = vld [vmem:[%s447 + $0x400] sm:$0xff]
          %v681 = vld [vmem:[%s447 + $0x408] sm:$0xff]
          %v682 = vld [vmem:[%s447 + $0x410] sm:$0xff]
          %v683 = vld [vmem:[%s447 + $0x418] sm:$0xff]
          %v684 = vld [vmem:[%s447 + $0x420] sm:$0xff]
          %v685 = vld [vmem:[%s447 + $0x428] sm:$0xff]
          %v686 = vld [vmem:[%s447 + $0x430] sm:$0xff]
          %v687 = vld [vmem:[%s447 + $0x438] sm:$0xff]
          %v688 = vld [vmem:[%s447 + $0x440] sm:$0xff]
          %v689 = vld [vmem:[%s447 + $0x448] sm:$0xff]
          %v690 = vld [vmem:[%s447 + $0x450] sm:$0xff]
          %v691 = vld [vmem:[%s447 + $0x458] sm:$0xff]
          %v692 = vld [vmem:[%s447 + $0x460] sm:$0xff]
          %v693 = vld [vmem:[%s447 + $0x468] sm:$0xff]
          %v694 = vld [vmem:[%s447 + $0x470] sm:$0xff]
          %v695 = vld [vmem:[%s447 + $0x478] sm:$0xff]
          %v696 = vld [vmem:[%s447 + $0x480] sm:$0xff]
          %v697 = vld [vmem:[%s447 + $0x488] sm:$0xff]
          %v698 = vld [vmem:[%s447 + $0x490] sm:$0xff]
          %v699 = vld [vmem:[%s447 + $0x498] sm:$0xff]
          %v700 = vld [vmem:[%s447 + $0x4a0] sm:$0xff]
          %v701 = vld [vmem:[%s447 + $0x4a8] sm:$0xff]
          %v702 = vld [vmem:[%s447 + $0x4b0] sm:$0xff]
          %v703 = vld [vmem:[%s447 + $0x4b8] sm:$0xff]
          %v704 = vld [vmem:[%s447 + $0x4c0] sm:$0xff]
          %v705 = vld [vmem:[%s447 + $0x4c8] sm:$0xff]
          %v706 = vld [vmem:[%s447 + $0x4d0] sm:$0xff]
          %v707 = vld [vmem:[%s447 + $0x4d8] sm:$0xff]
          %v708 = vld [vmem:[%s447 + $0x4e0] sm:$0xff]
          %v709 = vld [vmem:[%s447 + $0x4e8] sm:$0xff]
          %v710 = vld [vmem:[%s447 + $0x4f0] sm:$0xff]
          %v711 = vld [vmem:[%s447 + $0x4f8] sm:$0xff]
          %v712 = vld [vmem:[%s447 + $0x500] sm:$0xff]
          %v713 = vld [vmem:[%s447 + $0x508] sm:$0xff]
          %v714 = vld [vmem:[%s447 + $0x510] sm:$0xff]
          %v715 = vld [vmem:[%s447 + $0x518] sm:$0xff]
          %v716 = vld [vmem:[%s447 + $0x520] sm:$0xff]
          %v717 = vld [vmem:[%s447 + $0x528] sm:$0xff]
          %v718 = vld [vmem:[%s447 + $0x530] sm:$0xff]
          %v719 = vld [vmem:[%s447 + $0x538] sm:$0xff]
          %v720 = vld [vmem:[%s447 + $0x540] sm:$0xff]
          %v721 = vld [vmem:[%s447 + $0x548] sm:$0xff]
          %v722 = vld [vmem:[%s447 + $0x550] sm:$0xff]
          %v723 = vld [vmem:[%s447 + $0x558] sm:$0xff]
          %v724 = vld [vmem:[%s447 + $0x560] sm:$0xff]
          %v725 = vld [vmem:[%s447 + $0x568] sm:$0xff]
          %v726 = vld [vmem:[%s447 + $0x570] sm:$0xff]
          %v727 = vld [vmem:[%s447 + $0x578] sm:$0xff]
          %v728 = vld [vmem:[%s447 + $0x580] sm:$0xff]
          %v729 = vld [vmem:[%s447 + $0x588] sm:$0xff]
          %v730 = vld [vmem:[%s447 + $0x590] sm:$0xff]
          %v731 = vld [vmem:[%s447 + $0x598] sm:$0xff]
          %v732 = vld [vmem:[%s447 + $0x5a0] sm:$0xff]
          %v733 = vld [vmem:[%s447 + $0x5a8] sm:$0xff]
          %v734 = vld [vmem:[%s447 + $0x5b0] sm:$0xff]
          %v735 = vld [vmem:[%s447 + $0x5b8] sm:$0xff]
          %v736 = vld [vmem:[%s447 + $0x5c0] sm:$0xff]
          %v737 = vld [vmem:[%s447 + $0x5c8] sm:$0xff]
          %v738 = vld [vmem:[%s447 + $0x5d0] sm:$0xff]
          %v739 = vld [vmem:[%s447 + $0x5d8] sm:$0xff]
          %v740 = vld [vmem:[%s447 + $0x5e0] sm:$0xff]
          %v741 = vld [vmem:[%s447 + $0x5e8] sm:$0xff]
          %v742 = vld [vmem:[%s447 + $0x5f0] sm:$0xff]
          %v743 = vld [vmem:[%s447 + $0x5f8] sm:$0xff]
          %v744 = vld [vmem:[%s447 + $0x600] sm:$0xff]
          %v745 = vld [vmem:[%s447 + $0x608] sm:$0xff]
          %v746 = vld [vmem:[%s447 + $0x610] sm:$0xff]
          %v747 = vld [vmem:[%s447 + $0x618] sm:$0xff]
          %v748 = vld [vmem:[%s447 + $0x620] sm:$0xff]
          %v749 = vld [vmem:[%s447 + $0x628] sm:$0xff]
          %v750 = vld [vmem:[%s447 + $0x630] sm:$0xff]
          %v751 = vld [vmem:[%s447 + $0x638] sm:$0xff]
          %v752 = vld [vmem:[%s447 + $0x640] sm:$0xff]
          %v753 = vld [vmem:[%s447 + $0x648] sm:$0xff]
          %v754 = vld [vmem:[%s447 + $0x650] sm:$0xff]
          %v755 = vld [vmem:[%s447 + $0x658] sm:$0xff]
          %v756 = vld [vmem:[%s447 + $0x660] sm:$0xff]
          %v757 = vld [vmem:[%s447 + $0x668] sm:$0xff]
          %v758 = vld [vmem:[%s447 + $0x670] sm:$0xff]
          %v759 = vld [vmem:[%s447 + $0x678] sm:$0xff]
          %v760 = vld [vmem:[%s447 + $0x680] sm:$0xff]
          %v761 = vld [vmem:[%s447 + $0x688] sm:$0xff]
          %v762 = vld [vmem:[%s447 + $0x690] sm:$0xff]
          %v763 = vld [vmem:[%s447 + $0x698] sm:$0xff]
          %v764 = vld [vmem:[%s447 + $0x6a0] sm:$0xff]
          %v765 = vld [vmem:[%s447 + $0x6a8] sm:$0xff]
          %v766 = vld [vmem:[%s447 + $0x6b0] sm:$0xff]
          %v767 = vld [vmem:[%s447 + $0x6b8] sm:$0xff]
          %v768 = vld [vmem:[%s447 + $0x6c0] sm:$0xff]
          %v769 = vld [vmem:[%s447 + $0x6c8] sm:$0xff]
          %v770 = vld [vmem:[%s447 + $0x6d0] sm:$0xff]
          %v771 = vld [vmem:[%s447 + $0x6d8] sm:$0xff]
          %v772 = vld [vmem:[%s447 + $0x6e0] sm:$0xff]
          %v773 = vld [vmem:[%s447 + $0x6e8] sm:$0xff]
          %v774 = vld [vmem:[%s447 + $0x6f0] sm:$0xff]
          %v775 = vld [vmem:[%s447 + $0x6f8] sm:$0xff]
          %v776 = vld [vmem:[%s447 + $0x700] sm:$0xff]
          %v777 = vld [vmem:[%s447 + $0x708] sm:$0xff]
          %v778 = vld [vmem:[%s447 + $0x710] sm:$0xff]
          %v779 = vld [vmem:[%s447 + $0x718] sm:$0xff]
          %v780 = vld [vmem:[%s447 + $0x720] sm:$0xff]
          %v781 = vld [vmem:[%s447 + $0x728] sm:$0xff]
          %v782 = vld [vmem:[%s447 + $0x730] sm:$0xff]
          %v783 = vld [vmem:[%s447 + $0x738] sm:$0xff]
          %v784 = vld [vmem:[%s447 + $0x740] sm:$0xff]
          %v785 = vld [vmem:[%s447 + $0x748] sm:$0xff]
          %v786 = vld [vmem:[%s447 + $0x750] sm:$0xff]
          %v787 = vld [vmem:[%s447 + $0x758] sm:$0xff]
          %v788 = vld [vmem:[%s447 + $0x760] sm:$0xff]
          %v789 = vld [vmem:[%s447 + $0x768] sm:$0xff]
          %v790 = vld [vmem:[%s447 + $0x770] sm:$0xff]
          %v791 = vld [vmem:[%s447 + $0x778] sm:$0xff]
          %v792 = vld [vmem:[%s447 + $0x780] sm:$0xff]
          %v793 = vld [vmem:[%s447 + $0x788] sm:$0xff]
          %v794 = vld [vmem:[%s447 + $0x790] sm:$0xff]
          %v795 = vld [vmem:[%s447 + $0x798] sm:$0xff]
          %v796 = vld [vmem:[%s447 + $0x7a0] sm:$0xff]
          %v797 = vld [vmem:[%s447 + $0x7a8] sm:$0xff]
          %v798 = vld [vmem:[%s447 + $0x7b0] sm:$0xff]
          %v799 = vld [vmem:[%s447 + $0x7b8] sm:$0xff]
          %v800 = vld [vmem:[%s447 + $0x7c0] sm:$0xff]
          %v801 = vld [vmem:[%s447 + $0x7c8] sm:$0xff]
          %v802 = vld [vmem:[%s447 + $0x7d0] sm:$0xff]
          %v803 = vld [vmem:[%s447 + $0x7d8] sm:$0xff]
          %v804 = vld [vmem:[%s447 + $0x7e0] sm:$0xff]
          %v805 = vld [vmem:[%s447 + $0x7e8] sm:$0xff]
          %v806 = vld [vmem:[%s447 + $0x7f0] sm:$0xff]
          %v807 = vld [vmem:[%s447 + $0x7f8] sm:$0xff]
          %v808 = vld [vmem:[%s447 + $0x800] sm:$0xff]
          %v809 = vld [vmem:[%s447 + $0x808] sm:$0xff]
          %v810 = vld [vmem:[%s447 + $0x810] sm:$0xff]
          %v811 = vld [vmem:[%s447 + $0x818] sm:$0xff]
          %v812 = vld [vmem:[%s447 + $0x820] sm:$0xff]
          %v813 = vld [vmem:[%s447 + $0x828] sm:$0xff]
          %v814 = vld [vmem:[%s447 + $0x830] sm:$0xff]
          %v815 = vld [vmem:[%s447 + $0x838] sm:$0xff]
          %v816 = vld [vmem:[%s447 + $0x840] sm:$0xff]
          %v817 = vld [vmem:[%s447 + $0x848] sm:$0xff]
          %v818 = vld [vmem:[%s447 + $0x850] sm:$0xff]
          %v819 = vld [vmem:[%s447 + $0x858] sm:$0xff]
          %v820 = vld [vmem:[%s447 + $0x860] sm:$0xff]
          %v821 = vld [vmem:[%s447 + $0x868] sm:$0xff]
          %v822 = vld [vmem:[%s447 + $0x870] sm:$0xff]
          %v823 = vld [vmem:[%s447 + $0x878] sm:$0xff]
          %v824 = vld [vmem:[%s447 + $0x880] sm:$0xff]
          %v825 = vld [vmem:[%s447 + $0x888] sm:$0xff]
          %v826 = vld [vmem:[%s447 + $0x890] sm:$0xff]
          %v827 = vld [vmem:[%s447 + $0x898] sm:$0xff]
          %v828 = vld [vmem:[%s447 + $0x8a0] sm:$0xff]
          %v829 = vld [vmem:[%s447 + $0x8a8] sm:$0xff]
          %v830 = vld [vmem:[%s447 + $0x8b0] sm:$0xff]
          %v831 = vld [vmem:[%s447 + $0x8b8] sm:$0xff]
          %v832 = vld [vmem:[%s447 + $0x8c0] sm:$0xff]
          %v833 = vld [vmem:[%s447 + $0x8c8] sm:$0xff]
          %v834 = vld [vmem:[%s447 + $0x8d0] sm:$0xff]
          %v835 = vld [vmem:[%s447 + $0x8d8] sm:$0xff]
          %v836 = vld [vmem:[%s447 + $0x8e0] sm:$0xff]
          %v837 = vld [vmem:[%s447 + $0x8e8] sm:$0xff]
          %v838 = vld [vmem:[%s447 + $0x8f0] sm:$0xff]
          %v839 = vld [vmem:[%s447 + $0x8f8] sm:$0xff]
          %v840 = vld [vmem:[%s447 + $0x900] sm:$0xff]
          %v841 = vld [vmem:[%s447 + $0x908] sm:$0xff]
          %v842 = vld [vmem:[%s447 + $0x910] sm:$0xff]
          %v843 = vld [vmem:[%s447 + $0x918] sm:$0xff]
          %v844 = vld [vmem:[%s447 + $0x920] sm:$0xff]
          %v845 = vld [vmem:[%s447 + $0x928] sm:$0xff]
          %v846 = vld [vmem:[%s447 + $0x930] sm:$0xff]
          %v847 = vld [vmem:[%s447 + $0x938] sm:$0xff]
          %v848 = vld [vmem:[%s447 + $0x940] sm:$0xff]
          %v849 = vld [vmem:[%s447 + $0x948] sm:$0xff]
          %v850 = vld [vmem:[%s447 + $0x950] sm:$0xff]
          %v851 = vld [vmem:[%s447 + $0x958] sm:$0xff]
          %v852 = vld [vmem:[%s447 + $0x960] sm:$0xff]
          %v853 = vld [vmem:[%s447 + $0x968] sm:$0xff]
          %v854 = vld [vmem:[%s447 + $0x970] sm:$0xff]
          %v855 = vld [vmem:[%s447 + $0x978] sm:$0xff]
          %v856 = vunpack.c.l.s8.bf16 %v552
          %v857 = vunpack.c.l.s8.bf16 %v553
          %v858 = vunpack.c.l.s8.bf16 %v554
          %v859 = vunpack.c.l.s8.bf16 %v555
          %v860 = vunpack.c.h.s8.bf16 %v552
          %v861 = vunpack.c.h.s8.bf16 %v553
          %v862 = vunpack.c.h.s8.bf16 %v554
          %v863 = vunpack.c.h.s8.bf16 %v555
          %v864 = vunpack.c.l.s8.bf16 %v556
          %v865 = vunpack.c.l.s8.bf16 %v557
          %v866 = vunpack.c.l.s8.bf16 %v558
          %v867 = vunpack.c.l.s8.bf16 %v559
          %v868 = vunpack.c.h.s8.bf16 %v556
          %v869 = vunpack.c.h.s8.bf16 %v557
          %v870 = vunpack.c.h.s8.bf16 %v558
          %v871 = vunpack.c.h.s8.bf16 %v559
          %v872 = vunpack.c.l.s8.bf16 %v560
          %v873 = vunpack.c.l.s8.bf16 %v561
          %v874 = vunpack.c.l.s8.bf16 %v562
          %v875 = vunpack.c.l.s8.bf16 %v563
          %v876 = vunpack.c.h.s8.bf16 %v560
          %v877 = vunpack.c.h.s8.bf16 %v561
          %v878 = vunpack.c.h.s8.bf16 %v562
          %v879 = vunpack.c.h.s8.bf16 %v563
          %v880 = vunpack.c.l.s8.bf16 %v564
          %v881 = vunpack.c.l.s8.bf16 %v565
          %v882 = vunpack.c.l.s8.bf16 %v566
          %v883 = vunpack.c.l.s8.bf16 %v567
          %v884 = vunpack.c.h.s8.bf16 %v564
          %v885 = vunpack.c.h.s8.bf16 %v565
          %v886 = vunpack.c.h.s8.bf16 %v566
          %v887 = vunpack.c.h.s8.bf16 %v567
          %v888 = vunpack.c.l.s8.bf16 %v568
          %v889 = vunpack.c.l.s8.bf16 %v569
          %v890 = vunpack.c.l.s8.bf16 %v570
          %v891 = vunpack.c.l.s8.bf16 %v571
          %v892 = vunpack.c.h.s8.bf16 %v568
          %v893 = vunpack.c.h.s8.bf16 %v569
          %v894 = vunpack.c.h.s8.bf16 %v570
          %v895 = vunpack.c.h.s8.bf16 %v571
          %v896 = vunpack.c.l.s8.bf16 %v572
          %v897 = vunpack.c.l.s8.bf16 %v573
          %v898 = vunpack.c.l.s8.bf16 %v574
          %v899 = vunpack.c.l.s8.bf16 %v575
          %v900 = vunpack.c.h.s8.bf16 %v572
          %v901 = vunpack.c.h.s8.bf16 %v573
          %v902 = vunpack.c.h.s8.bf16 %v574
          %v903 = vunpack.c.h.s8.bf16 %v575
          %v904 = vunpack.c.l.s8.bf16 %v576
          %v905 = vunpack.c.l.s8.bf16 %v577
          %v906 = vunpack.c.l.s8.bf16 %v578
          %v907 = vunpack.c.l.s8.bf16 %v579
          %v908 = vunpack.c.h.s8.bf16 %v576
          %v909 = vunpack.c.h.s8.bf16 %v577
          %v910 = vunpack.c.h.s8.bf16 %v578
          %v911 = vunpack.c.h.s8.bf16 %v579
          %v912 = vunpack.c.l.s8.bf16 %v580
          %v913 = vunpack.c.l.s8.bf16 %v581
          %v914 = vunpack.c.l.s8.bf16 %v582
          %v915 = vunpack.c.l.s8.bf16 %v583
          %v916 = vunpack.c.h.s8.bf16 %v580
          %v917 = vunpack.c.h.s8.bf16 %v581
          %v918 = vunpack.c.h.s8.bf16 %v582
          %v919 = vunpack.c.h.s8.bf16 %v583
          %v920 = vunpack.c.l.s8.bf16 %v584
          %v921 = vunpack.c.l.s8.bf16 %v585
          %v922 = vunpack.c.l.s8.bf16 %v586
          %v923 = vunpack.c.l.s8.bf16 %v587
          %v924 = vunpack.c.h.s8.bf16 %v584
          %v925 = vunpack.c.h.s8.bf16 %v585
          %v926 = vunpack.c.h.s8.bf16 %v586
          %v927 = vunpack.c.h.s8.bf16 %v587
          %v928 = vunpack.c.l.s8.bf16 %v588
          %v929 = vunpack.c.l.s8.bf16 %v589
          %v930 = vunpack.c.l.s8.bf16 %v590
          %v931 = vunpack.c.l.s8.bf16 %v591
          %v932 = vunpack.c.h.s8.bf16 %v588
          %v933 = vunpack.c.h.s8.bf16 %v589
          %v934 = vunpack.c.h.s8.bf16 %v590
          %v935 = vunpack.c.h.s8.bf16 %v591
          %v936 = vunpack.c.l.s8.bf16 %v592
          %v937 = vunpack.c.l.s8.bf16 %v593
          %v938 = vunpack.c.l.s8.bf16 %v594
          %v939 = vunpack.c.l.s8.bf16 %v595
          %v940 = vunpack.c.h.s8.bf16 %v592
          %v941 = vunpack.c.h.s8.bf16 %v593
          %v942 = vunpack.c.h.s8.bf16 %v594
          %v943 = vunpack.c.h.s8.bf16 %v595
          %v944 = vunpack.c.l.s8.bf16 %v596
          %v945 = vunpack.c.l.s8.bf16 %v597
          %v946 = vunpack.c.l.s8.bf16 %v598
          %v947 = vunpack.c.l.s8.bf16 %v599
          %v948 = vunpack.c.h.s8.bf16 %v596
          %v949 = vunpack.c.h.s8.bf16 %v597
          %v950 = vunpack.c.h.s8.bf16 %v598
          %v951 = vunpack.c.h.s8.bf16 %v599
          %v952 = vunpack.c.l.s8.bf16 %v600
          %v953 = vunpack.c.l.s8.bf16 %v601
          %v954 = vunpack.c.l.s8.bf16 %v602
          %v955 = vunpack.c.l.s8.bf16 %v603
          %v956 = vunpack.c.h.s8.bf16 %v600
          %v957 = vunpack.c.h.s8.bf16 %v601
          %v958 = vunpack.c.h.s8.bf16 %v602
          %v959 = vunpack.c.h.s8.bf16 %v603
          %v960 = vunpack.c.l.s8.bf16 %v604
          %v961 = vunpack.c.l.s8.bf16 %v605
          %v962 = vunpack.c.l.s8.bf16 %v606
          %v963 = vunpack.c.l.s8.bf16 %v607
          %v964 = vunpack.c.h.s8.bf16 %v604
          %v965 = vunpack.c.h.s8.bf16 %v605
          %v966 = vunpack.c.h.s8.bf16 %v606
          %v967 = vunpack.c.h.s8.bf16 %v607
          %v968 = vunpack.c.l.s8.bf16 %v608
          %v969 = vunpack.c.l.s8.bf16 %v609
          %v970 = vunpack.c.l.s8.bf16 %v610
          %v971 = vunpack.c.l.s8.bf16 %v611
          %v972 = vunpack.c.h.s8.bf16 %v608
          %v973 = vunpack.c.h.s8.bf16 %v609
          %v974 = vunpack.c.h.s8.bf16 %v610
          %v975 = vunpack.c.h.s8.bf16 %v611
          %v976 = vunpack.c.l.s8.bf16 %v612
          %v977 = vunpack.c.l.s8.bf16 %v613
          %v978 = vunpack.c.l.s8.bf16 %v614
          %v979 = vunpack.c.l.s8.bf16 %v615
          %v980 = vunpack.c.h.s8.bf16 %v612
          %v981 = vunpack.c.h.s8.bf16 %v613
          %v982 = vunpack.c.h.s8.bf16 %v614
          %v983 = vunpack.c.h.s8.bf16 %v615
          %v984 = vunpack.c.l.s8.bf16 %v616
          %v985 = vunpack.c.l.s8.bf16 %v617
          %v986 = vunpack.c.l.s8.bf16 %v618
          %v987 = vunpack.c.l.s8.bf16 %v619
          %v988 = vunpack.c.h.s8.bf16 %v616
          %v989 = vunpack.c.h.s8.bf16 %v617
          %v990 = vunpack.c.h.s8.bf16 %v618
          %v991 = vunpack.c.h.s8.bf16 %v619
          %v992 = vunpack.c.l.s8.bf16 %v620
          %v993 = vunpack.c.l.s8.bf16 %v621
          %v994 = vunpack.c.l.s8.bf16 %v622
          %v995 = vunpack.c.l.s8.bf16 %v623
          %v996 = vunpack.c.h.s8.bf16 %v620
          %v997 = vunpack.c.h.s8.bf16 %v621
          %v998 = vunpack.c.h.s8.bf16 %v622
          %v999 = vunpack.c.h.s8.bf16 %v623
          %v1000 = vunpack.c.l.s8.bf16 %v624
          %v1001 = vunpack.c.l.s8.bf16 %v625
          %v1002 = vunpack.c.l.s8.bf16 %v626
          %v1003 = vunpack.c.l.s8.bf16 %v627
          %v1004 = vunpack.c.h.s8.bf16 %v624
          %v1005 = vunpack.c.h.s8.bf16 %v625
          %v1006 = vunpack.c.h.s8.bf16 %v626
          %v1007 = vunpack.c.h.s8.bf16 %v627
          %v1008 = vunpack.c.l.s8.bf16 %v628
          %v1009 = vunpack.c.l.s8.bf16 %v629
          %v1010 = vunpack.c.l.s8.bf16 %v630
          %v1011 = vunpack.c.l.s8.bf16 %v631
          %v1012 = vunpack.c.h.s8.bf16 %v628
          %v1013 = vunpack.c.h.s8.bf16 %v629
          %v1014 = vunpack.c.h.s8.bf16 %v630
          %v1015 = vunpack.c.h.s8.bf16 %v631
          %v1016 = vunpack.c.l.s8.bf16 %v632
          %v1017 = vunpack.c.l.s8.bf16 %v633
          %v1018 = vunpack.c.l.s8.bf16 %v634
          %v1019 = vunpack.c.l.s8.bf16 %v635
          %v1020 = vunpack.c.h.s8.bf16 %v632
          %v1021 = vunpack.c.h.s8.bf16 %v633
          %v1022 = vunpack.c.h.s8.bf16 %v634
          %v1023 = vunpack.c.h.s8.bf16 %v635
          %v1024 = vunpack.c.l.s8.bf16 %v636
          %v1025 = vunpack.c.l.s8.bf16 %v637
          %v1026 = vunpack.c.l.s8.bf16 %v638
          %v1027 = vunpack.c.l.s8.bf16 %v639
          %v1028 = vunpack.c.h.s8.bf16 %v636
          %v1029 = vunpack.c.h.s8.bf16 %v637
          %v1030 = vunpack.c.h.s8.bf16 %v638
          %v1031 = vunpack.c.h.s8.bf16 %v639
          %v1032 = vunpack.c.l.s8.bf16 %v640
          %v1033 = vunpack.c.l.s8.bf16 %v641
          %v1034 = vunpack.c.l.s8.bf16 %v642
          %v1035 = vunpack.c.l.s8.bf16 %v643
          %v1036 = vunpack.c.h.s8.bf16 %v640
          %v1037 = vunpack.c.h.s8.bf16 %v641
          %v1038 = vunpack.c.h.s8.bf16 %v642
          %v1039 = vunpack.c.h.s8.bf16 %v643
          %v1040 = vunpack.c.l.s8.bf16 %v644
          %v1041 = vunpack.c.l.s8.bf16 %v645
          %v1042 = vunpack.c.l.s8.bf16 %v646
          %v1043 = vunpack.c.l.s8.bf16 %v647
          %v1044 = vunpack.c.h.s8.bf16 %v644
          %v1045 = vunpack.c.h.s8.bf16 %v645
          %v1046 = vunpack.c.h.s8.bf16 %v646
          %v1047 = vunpack.c.h.s8.bf16 %v647
          %v1048 = vunpack.c.l.s8.bf16 %v648
          %v1049 = vunpack.c.l.s8.bf16 %v649
          %v1050 = vunpack.c.l.s8.bf16 %v650
          %v1051 = vunpack.c.l.s8.bf16 %v651
          %v1052 = vunpack.c.h.s8.bf16 %v648
          %v1053 = vunpack.c.h.s8.bf16 %v649
          %v1054 = vunpack.c.h.s8.bf16 %v650
          %v1055 = vunpack.c.h.s8.bf16 %v651
          %v1056 = vunpack.c.l.s8.bf16 %v652
          %v1057 = vunpack.c.l.s8.bf16 %v653
          %v1058 = vunpack.c.l.s8.bf16 %v654
          %v1059 = vunpack.c.l.s8.bf16 %v655
          %v1060 = vunpack.c.h.s8.bf16 %v652
          %v1061 = vunpack.c.h.s8.bf16 %v653
          %v1062 = vunpack.c.h.s8.bf16 %v654
          %v1063 = vunpack.c.h.s8.bf16 %v655
          %v1064 = vunpack.c.l.s8.bf16 %v656
          %v1065 = vunpack.c.l.s8.bf16 %v657
          %v1066 = vunpack.c.l.s8.bf16 %v658
          %v1067 = vunpack.c.l.s8.bf16 %v659
          %v1068 = vunpack.c.h.s8.bf16 %v656
          %v1069 = vunpack.c.h.s8.bf16 %v657
          %v1070 = vunpack.c.h.s8.bf16 %v658
          %v1071 = vunpack.c.h.s8.bf16 %v659
          %v1072 = vunpack.c.l.s8.bf16 %v660
          %v1073 = vunpack.c.l.s8.bf16 %v661
          %v1074 = vunpack.c.l.s8.bf16 %v662
          %v1075 = vunpack.c.l.s8.bf16 %v663
          %v1076 = vunpack.c.h.s8.bf16 %v660
          %v1077 = vunpack.c.h.s8.bf16 %v661
          %v1078 = vunpack.c.h.s8.bf16 %v662
          %v1079 = vunpack.c.h.s8.bf16 %v663
          %v1080 = vunpack.c.l.s8.bf16 %v664
          %v1081 = vunpack.c.l.s8.bf16 %v665
          %v1082 = vunpack.c.l.s8.bf16 %v666
          %v1083 = vunpack.c.l.s8.bf16 %v667
          %v1084 = vunpack.c.h.s8.bf16 %v664
          %v1085 = vunpack.c.h.s8.bf16 %v665
          %v1086 = vunpack.c.h.s8.bf16 %v666
          %v1087 = vunpack.c.h.s8.bf16 %v667
          %v1088 = vunpack.c.l.s8.bf16 %v668
          %v1089 = vunpack.c.l.s8.bf16 %v669
          %v1090 = vunpack.c.l.s8.bf16 %v670
          %v1091 = vunpack.c.l.s8.bf16 %v671
          %v1092 = vunpack.c.h.s8.bf16 %v668
          %v1093 = vunpack.c.h.s8.bf16 %v669
          %v1094 = vunpack.c.h.s8.bf16 %v670
          %v1095 = vunpack.c.h.s8.bf16 %v671
          %v1096 = vunpack.c.l.s8.bf16 %v672
          %v1097 = vunpack.c.l.s8.bf16 %v673
          %v1098 = vunpack.c.l.s8.bf16 %v674
          %v1099 = vunpack.c.l.s8.bf16 %v675
          %v1100 = vunpack.c.h.s8.bf16 %v672
          %v1101 = vunpack.c.h.s8.bf16 %v673
          %v1102 = vunpack.c.h.s8.bf16 %v674
          %v1103 = vunpack.c.h.s8.bf16 %v675
          %v1104 = vunpack.c.l.s8.bf16 %v676
          %v1105 = vunpack.c.l.s8.bf16 %v677
          %v1106 = vunpack.c.l.s8.bf16 %v678
          %v1107 = vunpack.c.l.s8.bf16 %v679
          %v1108 = vunpack.c.h.s8.bf16 %v676
          %v1109 = vunpack.c.h.s8.bf16 %v677
          %v1110 = vunpack.c.h.s8.bf16 %v678
          %v1111 = vunpack.c.h.s8.bf16 %v679
          %v1112 = vunpack.c.l.s8.bf16 %v680
          %v1113 = vunpack.c.l.s8.bf16 %v681
          %v1114 = vunpack.c.l.s8.bf16 %v682
          %v1115 = vunpack.c.l.s8.bf16 %v683
          %v1116 = vunpack.c.h.s8.bf16 %v680
          %v1117 = vunpack.c.h.s8.bf16 %v681
          %v1118 = vunpack.c.h.s8.bf16 %v682
          %v1119 = vunpack.c.h.s8.bf16 %v683
          %v1120 = vunpack.c.l.s8.bf16 %v684
          %v1121 = vunpack.c.l.s8.bf16 %v685
          %v1122 = vunpack.c.l.s8.bf16 %v686
          %v1123 = vunpack.c.l.s8.bf16 %v687
          %v1124 = vunpack.c.h.s8.bf16 %v684
          %v1125 = vunpack.c.h.s8.bf16 %v685
          %v1126 = vunpack.c.h.s8.bf16 %v686
          %v1127 = vunpack.c.h.s8.bf16 %v687
          %v1128 = vunpack.c.l.s8.bf16 %v688
          %v1129 = vunpack.c.l.s8.bf16 %v689
          %v1130 = vunpack.c.l.s8.bf16 %v690
          %v1131 = vunpack.c.l.s8.bf16 %v691
          %v1132 = vunpack.c.h.s8.bf16 %v688
          %v1133 = vunpack.c.h.s8.bf16 %v689
          %v1134 = vunpack.c.h.s8.bf16 %v690
          %v1135 = vunpack.c.h.s8.bf16 %v691
          %v1136 = vunpack.c.l.s8.bf16 %v692
          %v1137 = vunpack.c.l.s8.bf16 %v693
          %v1138 = vunpack.c.l.s8.bf16 %v694
          %v1139 = vunpack.c.l.s8.bf16 %v695
          %v1140 = vunpack.c.h.s8.bf16 %v692
          %v1141 = vunpack.c.h.s8.bf16 %v693
          %v1142 = vunpack.c.h.s8.bf16 %v694
          %v1143 = vunpack.c.h.s8.bf16 %v695
          %v1144 = vunpack.c.l.s8.bf16 %v696
          %v1145 = vunpack.c.l.s8.bf16 %v697
          %v1146 = vunpack.c.l.s8.bf16 %v698
          %v1147 = vunpack.c.l.s8.bf16 %v699
          %v1148 = vunpack.c.h.s8.bf16 %v696
          %v1149 = vunpack.c.h.s8.bf16 %v697
          %v1150 = vunpack.c.h.s8.bf16 %v698
          %v1151 = vunpack.c.h.s8.bf16 %v699
          %v1152 = vunpack.c.l.s8.bf16 %v700
          %v1153 = vunpack.c.l.s8.bf16 %v701
          %v1154 = vunpack.c.l.s8.bf16 %v702
          %v1155 = vunpack.c.l.s8.bf16 %v703
          %v1156 = vunpack.c.h.s8.bf16 %v700
          %v1157 = vunpack.c.h.s8.bf16 %v701
          %v1158 = vunpack.c.h.s8.bf16 %v702
          %v1159 = vunpack.c.h.s8.bf16 %v703
          %v1160 = vunpack.c.l.s8.bf16 %v704
          %v1161 = vunpack.c.l.s8.bf16 %v705
          %v1162 = vunpack.c.l.s8.bf16 %v706
          %v1163 = vunpack.c.l.s8.bf16 %v707
          %v1164 = vunpack.c.h.s8.bf16 %v704
          %v1165 = vunpack.c.h.s8.bf16 %v705
          %v1166 = vunpack.c.h.s8.bf16 %v706
          %v1167 = vunpack.c.h.s8.bf16 %v707
          %v1168 = vunpack.c.l.s8.bf16 %v708
          %v1169 = vunpack.c.l.s8.bf16 %v709
          %v1170 = vunpack.c.l.s8.bf16 %v710
          %v1171 = vunpack.c.l.s8.bf16 %v711
          %v1172 = vunpack.c.h.s8.bf16 %v708
          %v1173 = vunpack.c.h.s8.bf16 %v709
          %v1174 = vunpack.c.h.s8.bf16 %v710
          %v1175 = vunpack.c.h.s8.bf16 %v711
          %v1176 = vunpack.c.l.s8.bf16 %v712
          %v1177 = vunpack.c.l.s8.bf16 %v713
          %v1178 = vunpack.c.l.s8.bf16 %v714
          %v1179 = vunpack.c.l.s8.bf16 %v715
          %v1180 = vunpack.c.h.s8.bf16 %v712
          %v1181 = vunpack.c.h.s8.bf16 %v713
          %v1182 = vunpack.c.h.s8.bf16 %v714
          %v1183 = vunpack.c.h.s8.bf16 %v715
          %v1184 = vunpack.c.l.s8.bf16 %v716
          %v1185 = vunpack.c.l.s8.bf16 %v717
          %v1186 = vunpack.c.l.s8.bf16 %v718
          %v1187 = vunpack.c.l.s8.bf16 %v719
          %v1188 = vunpack.c.h.s8.bf16 %v716
          %v1189 = vunpack.c.h.s8.bf16 %v717
          %v1190 = vunpack.c.h.s8.bf16 %v718
          %v1191 = vunpack.c.h.s8.bf16 %v719
          %v1192 = vunpack.c.l.s8.bf16 %v720
          %v1193 = vunpack.c.l.s8.bf16 %v721
          %v1194 = vunpack.c.l.s8.bf16 %v722
          %v1195 = vunpack.c.l.s8.bf16 %v723
          %v1196 = vunpack.c.h.s8.bf16 %v720
          %v1197 = vunpack.c.h.s8.bf16 %v721
          %v1198 = vunpack.c.h.s8.bf16 %v722
          %v1199 = vunpack.c.h.s8.bf16 %v723
          %v1200 = vunpack.c.l.s8.bf16 %v724
          %v1201 = vunpack.c.l.s8.bf16 %v725
          %v1202 = vunpack.c.l.s8.bf16 %v726
          %v1203 = vunpack.c.l.s8.bf16 %v727
          %v1204 = vunpack.c.h.s8.bf16 %v724
          %v1205 = vunpack.c.h.s8.bf16 %v725
          %v1206 = vunpack.c.h.s8.bf16 %v726
          %v1207 = vunpack.c.h.s8.bf16 %v727
          %v1208 = vunpack.c.l.s8.bf16 %v728
          %v1209 = vunpack.c.l.s8.bf16 %v729
          %v1210 = vunpack.c.l.s8.bf16 %v730
          %v1211 = vunpack.c.l.s8.bf16 %v731
          %v1212 = vunpack.c.h.s8.bf16 %v728
          %v1213 = vunpack.c.h.s8.bf16 %v729
          %v1214 = vunpack.c.h.s8.bf16 %v730
          %v1215 = vunpack.c.h.s8.bf16 %v731
          %v1216 = vunpack.c.l.s8.bf16 %v732
          %v1217 = vunpack.c.l.s8.bf16 %v733
          %v1218 = vunpack.c.l.s8.bf16 %v734
          %v1219 = vunpack.c.l.s8.bf16 %v735
          %v1220 = vunpack.c.h.s8.bf16 %v732
          %v1221 = vunpack.c.h.s8.bf16 %v733
          %v1222 = vunpack.c.h.s8.bf16 %v734
          %v1223 = vunpack.c.h.s8.bf16 %v735
          %v1224 = vunpack.c.l.s8.bf16 %v736
          %v1225 = vunpack.c.l.s8.bf16 %v737
          %v1226 = vunpack.c.l.s8.bf16 %v738
          %v1227 = vunpack.c.l.s8.bf16 %v739
          %v1228 = vunpack.c.h.s8.bf16 %v736
          %v1229 = vunpack.c.h.s8.bf16 %v737
          %v1230 = vunpack.c.h.s8.bf16 %v738
          %v1231 = vunpack.c.h.s8.bf16 %v739
          %v1232 = vunpack.c.l.s8.bf16 %v740
          %v1233 = vunpack.c.l.s8.bf16 %v741
          %v1234 = vunpack.c.l.s8.bf16 %v742
          %v1235 = vunpack.c.l.s8.bf16 %v743
          %v1236 = vunpack.c.h.s8.bf16 %v740
          %v1237 = vunpack.c.h.s8.bf16 %v741
          %v1238 = vunpack.c.h.s8.bf16 %v742
          %v1239 = vunpack.c.h.s8.bf16 %v743
          %v1240 = vunpack.c.l.s8.bf16 %v744
          %v1241 = vunpack.c.l.s8.bf16 %v745
          %v1242 = vunpack.c.l.s8.bf16 %v746
          %v1243 = vunpack.c.l.s8.bf16 %v747
          %v1244 = vunpack.c.h.s8.bf16 %v744
          %v1245 = vunpack.c.h.s8.bf16 %v745
          %v1246 = vunpack.c.h.s8.bf16 %v746
          %v1247 = vunpack.c.h.s8.bf16 %v747
          %v1248 = vunpack.c.l.s8.bf16 %v748
          %v1249 = vunpack.c.l.s8.bf16 %v749
          %v1250 = vunpack.c.l.s8.bf16 %v750
          %v1251 = vunpack.c.l.s8.bf16 %v751
          %v1252 = vunpack.c.h.s8.bf16 %v748
          %v1253 = vunpack.c.h.s8.bf16 %v749
          %v1254 = vunpack.c.h.s8.bf16 %v750
          %v1255 = vunpack.c.h.s8.bf16 %v751
          %v1256 = vunpack.c.l.s8.bf16 %v752
          %v1257 = vunpack.c.l.s8.bf16 %v753
          %v1258 = vunpack.c.l.s8.bf16 %v754
          %v1259 = vunpack.c.l.s8.bf16 %v755
          %v1260 = vunpack.c.h.s8.bf16 %v752
          %v1261 = vunpack.c.h.s8.bf16 %v753
          %v1262 = vunpack.c.h.s8.bf16 %v754
          %v1263 = vunpack.c.h.s8.bf16 %v755
          %v1264 = vunpack.c.l.s8.bf16 %v756
          %v1265 = vunpack.c.l.s8.bf16 %v757
          %v1266 = vunpack.c.l.s8.bf16 %v758
          %v1267 = vunpack.c.l.s8.bf16 %v759
          %v1268 = vunpack.c.h.s8.bf16 %v756
          %v1269 = vunpack.c.h.s8.bf16 %v757
          %v1270 = vunpack.c.h.s8.bf16 %v758
          %v1271 = vunpack.c.h.s8.bf16 %v759
          %v1272 = vunpack.c.l.s8.bf16 %v760
          %v1273 = vunpack.c.l.s8.bf16 %v761
          %v1274 = vunpack.c.l.s8.bf16 %v762
          %v1275 = vunpack.c.l.s8.bf16 %v763
          %v1276 = vunpack.c.h.s8.bf16 %v760
          %v1277 = vunpack.c.h.s8.bf16 %v761
          %v1278 = vunpack.c.h.s8.bf16 %v762
          %v1279 = vunpack.c.h.s8.bf16 %v763
          %v1280 = vunpack.c.l.s8.bf16 %v764
          %v1281 = vunpack.c.l.s8.bf16 %v765
          %v1282 = vunpack.c.l.s8.bf16 %v766
          %v1283 = vunpack.c.l.s8.bf16 %v767
          %v1284 = vunpack.c.h.s8.bf16 %v764
          %v1285 = vunpack.c.h.s8.bf16 %v765
          %v1286 = vunpack.c.h.s8.bf16 %v766
          %v1287 = vunpack.c.h.s8.bf16 %v767
          %v1288 = vunpack.c.l.s8.bf16 %v768
          %v1289 = vunpack.c.l.s8.bf16 %v769
          %v1290 = vunpack.c.l.s8.bf16 %v770
          %v1291 = vunpack.c.l.s8.bf16 %v771
          %v1292 = vunpack.c.h.s8.bf16 %v768
          %v1293 = vunpack.c.h.s8.bf16 %v769
          %v1294 = vunpack.c.h.s8.bf16 %v770
          %v1295 = vunpack.c.h.s8.bf16 %v771
          %v1296 = vunpack.c.l.s8.bf16 %v772
          %v1297 = vunpack.c.l.s8.bf16 %v773
          %v1298 = vunpack.c.l.s8.bf16 %v774
          %v1299 = vunpack.c.l.s8.bf16 %v775
          %v1300 = vunpack.c.h.s8.bf16 %v772
          %v1301 = vunpack.c.h.s8.bf16 %v773
          %v1302 = vunpack.c.h.s8.bf16 %v774
          %v1303 = vunpack.c.h.s8.bf16 %v775
          %v1304 = vunpack.c.l.s8.bf16 %v776
          %v1305 = vunpack.c.l.s8.bf16 %v777
          %v1306 = vunpack.c.l.s8.bf16 %v778
          %v1307 = vunpack.c.l.s8.bf16 %v779
          %v1308 = vunpack.c.h.s8.bf16 %v776
          %v1309 = vunpack.c.h.s8.bf16 %v777
          %v1310 = vunpack.c.h.s8.bf16 %v778
          %v1311 = vunpack.c.h.s8.bf16 %v779
          %v1312 = vunpack.c.l.s8.bf16 %v780
          %v1313 = vunpack.c.l.s8.bf16 %v781
          %v1314 = vunpack.c.l.s8.bf16 %v782
          %v1315 = vunpack.c.l.s8.bf16 %v783
          %v1316 = vunpack.c.h.s8.bf16 %v780
          %v1317 = vunpack.c.h.s8.bf16 %v781
          %v1318 = vunpack.c.h.s8.bf16 %v782
          %v1319 = vunpack.c.h.s8.bf16 %v783
          %v1320 = vunpack.c.l.s8.bf16 %v784
          %v1321 = vunpack.c.l.s8.bf16 %v785
          %v1322 = vunpack.c.l.s8.bf16 %v786
          %v1323 = vunpack.c.l.s8.bf16 %v787
          %v1324 = vunpack.c.h.s8.bf16 %v784
          %v1325 = vunpack.c.h.s8.bf16 %v785
          %v1326 = vunpack.c.h.s8.bf16 %v786
          %v1327 = vunpack.c.h.s8.bf16 %v787
          %v1328 = vunpack.c.l.s8.bf16 %v788
          %v1329 = vunpack.c.l.s8.bf16 %v789
          %v1330 = vunpack.c.l.s8.bf16 %v790
          %v1331 = vunpack.c.l.s8.bf16 %v791
          %v1332 = vunpack.c.h.s8.bf16 %v788
          %v1333 = vunpack.c.h.s8.bf16 %v789
          %v1334 = vunpack.c.h.s8.bf16 %v790
          %v1335 = vunpack.c.h.s8.bf16 %v791
          %v1336 = vunpack.c.l.s8.bf16 %v792
          %v1337 = vunpack.c.l.s8.bf16 %v793
          %v1338 = vunpack.c.l.s8.bf16 %v794
          %v1339 = vunpack.c.l.s8.bf16 %v795
          %v1340 = vunpack.c.h.s8.bf16 %v792
          %v1341 = vunpack.c.h.s8.bf16 %v793
          %v1342 = vunpack.c.h.s8.bf16 %v794
          %v1343 = vunpack.c.h.s8.bf16 %v795
          %v1344 = vunpack.c.l.s8.bf16 %v796
          %v1345 = vunpack.c.l.s8.bf16 %v797
          %v1346 = vunpack.c.l.s8.bf16 %v798
          %v1347 = vunpack.c.l.s8.bf16 %v799
          %v1348 = vunpack.c.h.s8.bf16 %v796
          %v1349 = vunpack.c.h.s8.bf16 %v797
          %v1350 = vunpack.c.h.s8.bf16 %v798
          %v1351 = vunpack.c.h.s8.bf16 %v799
          %v1352 = vunpack.c.l.s8.bf16 %v800
          %v1353 = vunpack.c.l.s8.bf16 %v801
          %v1354 = vunpack.c.l.s8.bf16 %v802
          %v1355 = vunpack.c.l.s8.bf16 %v803
          %v1356 = vunpack.c.h.s8.bf16 %v800
          %v1357 = vunpack.c.h.s8.bf16 %v801
          %v1358 = vunpack.c.h.s8.bf16 %v802
          %v1359 = vunpack.c.h.s8.bf16 %v803
          %v1360 = vunpack.c.l.s8.bf16 %v804
          %v1361 = vunpack.c.l.s8.bf16 %v805
          %v1362 = vunpack.c.l.s8.bf16 %v806
          %v1363 = vunpack.c.l.s8.bf16 %v807
          %v1364 = vunpack.c.h.s8.bf16 %v804
          %v1365 = vunpack.c.h.s8.bf16 %v805
          %v1366 = vunpack.c.h.s8.bf16 %v806
          %v1367 = vunpack.c.h.s8.bf16 %v807
          %v1368 = vunpack.c.l.s8.bf16 %v808
          %v1369 = vunpack.c.l.s8.bf16 %v809
          %v1370 = vunpack.c.l.s8.bf16 %v810
          %v1371 = vunpack.c.l.s8.bf16 %v811
          %v1372 = vunpack.c.h.s8.bf16 %v808
          %v1373 = vunpack.c.h.s8.bf16 %v809
          %v1374 = vunpack.c.h.s8.bf16 %v810
          %v1375 = vunpack.c.h.s8.bf16 %v811
          %v1376 = vunpack.c.l.s8.bf16 %v812
          %v1377 = vunpack.c.l.s8.bf16 %v813
          %v1378 = vunpack.c.l.s8.bf16 %v814
          %v1379 = vunpack.c.l.s8.bf16 %v815
          %v1380 = vunpack.c.h.s8.bf16 %v812
          %v1381 = vunpack.c.h.s8.bf16 %v813
          %v1382 = vunpack.c.h.s8.bf16 %v814
          %v1383 = vunpack.c.h.s8.bf16 %v815
          %v1384 = vunpack.c.l.s8.bf16 %v816
          %v1385 = vunpack.c.l.s8.bf16 %v817
          %v1386 = vunpack.c.l.s8.bf16 %v818
          %v1387 = vunpack.c.l.s8.bf16 %v819
          %v1388 = vunpack.c.h.s8.bf16 %v816
          %v1389 = vunpack.c.h.s8.bf16 %v817
          %v1390 = vunpack.c.h.s8.bf16 %v818
          %v1391 = vunpack.c.h.s8.bf16 %v819
          %v1392 = vunpack.c.l.s8.bf16 %v820
          %v1393 = vunpack.c.l.s8.bf16 %v821
          %v1394 = vunpack.c.l.s8.bf16 %v822
          %v1395 = vunpack.c.l.s8.bf16 %v823
          %v1396 = vunpack.c.h.s8.bf16 %v820
          %v1397 = vunpack.c.h.s8.bf16 %v821
          %v1398 = vunpack.c.h.s8.bf16 %v822
          %v1399 = vunpack.c.h.s8.bf16 %v823
          %v1400 = vunpack.c.l.s8.bf16 %v824
          %v1401 = vunpack.c.l.s8.bf16 %v825
          %v1402 = vunpack.c.l.s8.bf16 %v826
          %v1403 = vunpack.c.l.s8.bf16 %v827
          %v1404 = vunpack.c.h.s8.bf16 %v824
          %v1405 = vunpack.c.h.s8.bf16 %v825
          %v1406 = vunpack.c.h.s8.bf16 %v826
          %v1407 = vunpack.c.h.s8.bf16 %v827
          %v1408 = vunpack.c.l.s8.bf16 %v828
          %v1409 = vunpack.c.l.s8.bf16 %v829
          %v1410 = vunpack.c.l.s8.bf16 %v830
          %v1411 = vunpack.c.l.s8.bf16 %v831
          %v1412 = vunpack.c.h.s8.bf16 %v828
          %v1413 = vunpack.c.h.s8.bf16 %v829
          %v1414 = vunpack.c.h.s8.bf16 %v830
          %v1415 = vunpack.c.h.s8.bf16 %v831
          %v1416 = vunpack.c.l.s8.bf16 %v832
          %v1417 = vunpack.c.l.s8.bf16 %v833
          %v1418 = vunpack.c.l.s8.bf16 %v834
          %v1419 = vunpack.c.l.s8.bf16 %v835
          %v1420 = vunpack.c.h.s8.bf16 %v832
          %v1421 = vunpack.c.h.s8.bf16 %v833
          %v1422 = vunpack.c.h.s8.bf16 %v834
          %v1423 = vunpack.c.h.s8.bf16 %v835
          %v1424 = vunpack.c.l.s8.bf16 %v836
          %v1425 = vunpack.c.l.s8.bf16 %v837
          %v1426 = vunpack.c.l.s8.bf16 %v838
          %v1427 = vunpack.c.l.s8.bf16 %v839
          %v1428 = vunpack.c.h.s8.bf16 %v836
          %v1429 = vunpack.c.h.s8.bf16 %v837
          %v1430 = vunpack.c.h.s8.bf16 %v838
          %v1431 = vunpack.c.h.s8.bf16 %v839
          %v1432 = vunpack.c.l.s8.bf16 %v840
          %v1433 = vunpack.c.l.s8.bf16 %v841
          %v1434 = vunpack.c.l.s8.bf16 %v842
          %v1435 = vunpack.c.l.s8.bf16 %v843
          %v1436 = vunpack.c.h.s8.bf16 %v840
          %v1437 = vunpack.c.h.s8.bf16 %v841
          %v1438 = vunpack.c.h.s8.bf16 %v842
          %v1439 = vunpack.c.h.s8.bf16 %v843
          %v1440 = vunpack.c.l.s8.bf16 %v844
          %v1441 = vunpack.c.l.s8.bf16 %v845
          %v1442 = vunpack.c.l.s8.bf16 %v846
          %v1443 = vunpack.c.l.s8.bf16 %v847
          %v1444 = vunpack.c.h.s8.bf16 %v844
          %v1445 = vunpack.c.h.s8.bf16 %v845
          %v1446 = vunpack.c.h.s8.bf16 %v846
          %v1447 = vunpack.c.h.s8.bf16 %v847
          %v1448 = vunpack.c.l.s8.bf16 %v848
          %v1449 = vunpack.c.l.s8.bf16 %v849
          %v1450 = vunpack.c.l.s8.bf16 %v850
          %v1451 = vunpack.c.l.s8.bf16 %v851
          %v1452 = vunpack.c.h.s8.bf16 %v848
          %v1453 = vunpack.c.h.s8.bf16 %v849
          %v1454 = vunpack.c.h.s8.bf16 %v850
          %v1455 = vunpack.c.h.s8.bf16 %v851
          %v1456 = vunpack.c.l.s8.bf16 %v852
          %v1457 = vunpack.c.l.s8.bf16 %v853
          %v1458 = vunpack.c.l.s8.bf16 %v854
          %v1459 = vunpack.c.l.s8.bf16 %v855
          %v1460 = vunpack.c.h.s8.bf16 %v852
          %v1461 = vunpack.c.h.s8.bf16 %v853
          %v1462 = vunpack.c.h.s8.bf16 %v854
          %v1463 = vunpack.c.h.s8.bf16 %v855
          %v1464 = vld [vmem:[%s0] sm:$0xff]
          %v1465 = vld [vmem:[%s0 + $0x8] sm:$0xff]
          %v1466 = vld [vmem:[%s0 + $0x10] sm:$0xff]
          %v1467 = vld [vmem:[%s0 + $0x18] sm:$0xff]
          %v1468 = vld [vmem:[%s0 + $0x20] sm:$0xff]
          %v1469 = vld [vmem:[%s0 + $0x28] sm:$0xff]
          %v1470 = vld [vmem:[%s0 + $0x30] sm:$0xff]
          %v1471 = vld [vmem:[%s0 + $0x38] sm:$0xff]
          %v1472 = vld [vmem:[%s0 + $0x40] sm:$0xff]
          %v1473 = vld [vmem:[%s0 + $0x48] sm:$0xf]
          %v1484 = vunpack.c.l.b16 %v1464
          %v1485 = vunpack.c.h.b16 %v1464
          %v1486 = vunpack.c.l.b16 %v1465
          %v1487 = vunpack.c.h.b16 %v1465
          %v1488 = vunpack.c.l.b16 %v1466
          %v1489 = vunpack.c.h.b16 %v1466
          %v1490 = vunpack.c.l.b16 %v1467
          %v1491 = vunpack.c.h.b16 %v1467
          %v1492 = vunpack.c.l.b16 %v1468
          %v1493 = vunpack.c.h.b16 %v1468
          %v1494 = vunpack.c.l.b16 %v1469
          %v1495 = vunpack.c.h.b16 %v1469
          %v1496 = vunpack.c.l.b16 %v1470
          %v1497 = vunpack.c.h.b16 %v1470
          %v1498 = vunpack.c.l.b16 %v1471
          %v1499 = vunpack.c.h.b16 %v1471
          %v1500 = vunpack.c.l.b16 %v1472
          %v1501 = vunpack.c.h.b16 %v1472
          %v1502 = vunpack.c.l.b16 %v1473
          %v1503 = vpack.c.b16 %v1484, %v1484
          %v1504 = vpack.c.b16 %v1485, %v1485
          %v1505 = vpack.c.b16 %v1486, %v1486
          %v1506 = vpack.c.b16 %v1487, %v1487
          %v1507 = vpack.c.b16 %v1488, %v1488
          %v1508 = vpack.c.b16 %v1489, %v1489
          %v1509 = vpack.c.b16 %v1490, %v1490
          %v1510 = vpack.c.b16 %v1491, %v1491
          %v1511 = vpack.c.b16 %v1492, %v1492
          %v1512 = vpack.c.b16 %v1493, %v1493
          %v1513 = vpack.c.b16 %v1494, %v1494
          %v1514 = vpack.c.b16 %v1495, %v1495
          %v1515 = vpack.c.b16 %v1496, %v1496
          %v1516 = vpack.c.b16 %v1497, %v1497
          %v1517 = vpack.c.b16 %v1498, %v1498
          %v1518 = vpack.c.b16 %v1499, %v1499
          %v1519 = vpack.c.b16 %v1500, %v1500
          %v1520 = vpack.c.b16 %v1501, %v1501
          %v1521 = vpack.c.b16 %v1502, %v1502
          %1541 = vmatprep.subr.bf16.mxu0 %v857
          %1542 = vmatpush1.bf16.msra.mxu0 %v856
          %1543 = vmatprep.subr.bf16.mxu0 %v861
          %1544 = vmatpush1.bf16.msra.mxu0 %v860
          %1545 = vmatprep.subr.bf16.mxu0 %v865
          %1546 = vmatpush1.bf16.msra.mxu0 %v864
          %1547 = vmatprep.subr.bf16.mxu0 %v869
          %1548 = vmatpush1.bf16.msra.mxu0 %v868
          %1549 = vmatprep.subr.bf16.mxu0 %v873
          %1550 = vmatpush1.bf16.msra.mxu0 %v872
          %1551 = vmatprep.subr.bf16.mxu0 %v877
          %1552 = vmatpush1.bf16.msra.mxu0 %v876
          %1553 = vmatprep.subr.bf16.mxu0 %v881
          %1554 = vmatpush1.bf16.msra.mxu0 %v880
          %1555 = vmatprep.subr.bf16.mxu0 %v885
          %1556 = vmatpush1.bf16.msra.mxu0 %v884
          %1557 = vmatprep.subr.bf16.mxu0 %v889
          %1558 = vmatpush1.bf16.msra.mxu0 %v888
          %1559 = vmatprep.subr.bf16.mxu0 %v893
          %1560 = vmatpush1.bf16.msra.mxu0 %v892
          %1561 = vmatprep.subr.bf16.mxu0 %v897
          %1562 = vmatpush1.bf16.msra.mxu0 %v896
          %1563 = vmatprep.subr.bf16.mxu0 %v901
          %1564 = vmatpush1.bf16.msra.mxu0 %v900
          %1565 = vmatprep.subr.bf16.mxu0 %v905
          %1566 = vmatpush1.bf16.msra.mxu0 %v904
          %1567 = vmatprep.subr.bf16.mxu0 %v909
          %1568 = vmatpush1.bf16.msra.mxu0 %v908
          %1569 = vmatprep.subr.bf16.mxu0 %v913
          %1570 = vmatpush1.bf16.msra.mxu0 %v912
          %1571 = vmatprep.subr.bf16.mxu0 %v917
          %1572 = vmatpush1.bf16.msra.mxu0 %v916
          %1573 = vmatprep.mubr.bf16.mxu0 %v1504
          %1574 = vmatmul.mubr.bf16.gmra.mrb[0].mxu0 %v1503
          %v1575 = vpop.f32.mrb[0].mxu0
          %v1576 = vadd.f32 0.0, %v1575
          %v1577 = vpop.f32.mrb[0].mxu0
          %v1578 = vadd.f32 0.0, %v1577
          %v1579 = vpop.f32.mrb[0].mxu0
          %v1580 = vpop.f32.mrb[0].mxu0
          %1581 = vdwg.mxu0
          %1582 = vmatprep.subr.bf16.mxu0 %v921
          %1583 = vmatpush1.bf16.msra.mxu0 %v920
          %1584 = vmatprep.subr.bf16.mxu0 %v925
          %1585 = vmatpush1.bf16.msra.mxu0 %v924
          %1586 = vmatprep.subr.bf16.mxu0 %v929
          %1587 = vmatpush1.bf16.msra.mxu0 %v928
          %1588 = vmatprep.subr.bf16.mxu0 %v933
          %1589 = vmatpush1.bf16.msra.mxu0 %v932
          %1590 = vmatprep.subr.bf16.mxu0 %v937
          %1591 = vmatpush1.bf16.msra.mxu0 %v936
          %1592 = vmatprep.subr.bf16.mxu0 %v941
          %1593 = vmatpush1.bf16.msra.mxu0 %v940
          %1594 = vmatprep.subr.bf16.mxu0 %v945
          %1595 = vmatpush1.bf16.msra.mxu0 %v944
          %1596 = vmatprep.subr.bf16.mxu0 %v949
          %1597 = vmatpush1.bf16.msra.mxu0 %v948
          %1598 = vmatprep.subr.bf16.mxu0 %v953
          %1599 = vmatpush1.bf16.msra.mxu0 %v952
          %1600 = vmatprep.subr.bf16.mxu0 %v957
          %1601 = vmatpush1.bf16.msra.mxu0 %v956
          %1602 = vmatprep.subr.bf16.mxu0 %v961
          %1603 = vmatpush1.bf16.msra.mxu0 %v960
          %1604 = vmatprep.subr.bf16.mxu0 %v965
          %1605 = vmatpush1.bf16.msra.mxu0 %v964
          %1606 = vmatprep.subr.bf16.mxu0 %v969
          %1607 = vmatpush1.bf16.msra.mxu0 %v968
          %1608 = vmatprep.subr.bf16.mxu0 %v973
          %1609 = vmatpush1.bf16.msra.mxu0 %v972
          %1610 = vmatprep.subr.bf16.mxu0 %v977
          %1611 = vmatpush1.bf16.msra.mxu0 %v976
          %1612 = vmatprep.subr.bf16.mxu0 %v981
          %1613 = vmatpush1.bf16.msra.mxu0 %v980
          %1614 = vmatprep.mubr.bf16.mxu0 %v1506
          %1615 = vmatmul.mubr.bf16.gmra.mrb[0].mxu0 %v1505
          %v1616 = vpop.f32.mrb[0].mxu0
          %v1617 = vadd.f32 %v1576, %v1616
          %v1618 = vpop.f32.mrb[0].mxu0
          %v1619 = vadd.f32 %v1578, %v1618
          %v1620 = vpop.f32.mrb[0].mxu0
          %v1621 = vpop.f32.mrb[0].mxu0
          %1622 = vdwg.mxu0
          %1623 = vmatprep.subr.bf16.mxu0 %v985
          %1624 = vmatpush1.bf16.msra.mxu0 %v984
          %1625 = vmatprep.subr.bf16.mxu0 %v989
          %1626 = vmatpush1.bf16.msra.mxu0 %v988
          %1627 = vmatprep.subr.bf16.mxu0 %v993
          %1628 = vmatpush1.bf16.msra.mxu0 %v992
          %1629 = vmatprep.subr.bf16.mxu0 %v997
          %1630 = vmatpush1.bf16.msra.mxu0 %v996
          %1631 = vmatprep.subr.bf16.mxu0 %v1001
          %1632 = vmatpush1.bf16.msra.mxu0 %v1000
          %1633 = vmatprep.subr.bf16.mxu0 %v1005
          %1634 = vmatpush1.bf16.msra.mxu0 %v1004
          %1635 = vmatprep.subr.bf16.mxu0 %v1009
          %1636 = vmatpush1.bf16.msra.mxu0 %v1008
          %1637 = vmatprep.subr.bf16.mxu0 %v1013
          %1638 = vmatpush1.bf16.msra.mxu0 %v1012
          %1639 = vmatprep.subr.bf16.mxu0 %v1017
          %1640 = vmatpush1.bf16.msra.mxu0 %v1016
          %1641 = vmatprep.subr.bf16.mxu0 %v1021
          %1642 = vmatpush1.bf16.msra.mxu0 %v1020
          %1643 = vmatprep.subr.bf16.mxu0 %v1025
          %1644 = vmatpush1.bf16.msra.mxu0 %v1024
          %1645 = vmatprep.subr.bf16.mxu0 %v1029
          %1646 = vmatpush1.bf16.msra.mxu0 %v1028
          %1647 = vmatprep.subr.bf16.mxu0 %v1033
          %1648 = vmatpush1.bf16.msra.mxu0 %v1032
          %1649 = vmatprep.subr.bf16.mxu0 %v1037
          %1650 = vmatpush1.bf16.msra.mxu0 %v1036
          %1651 = vmatprep.subr.bf16.mxu0 %v1041
          %1652 = vmatpush1.bf16.msra.mxu0 %v1040
          %1653 = vmatprep.subr.bf16.mxu0 %v1045
          %1654 = vmatpush1.bf16.msra.mxu0 %v1044
          %1655 = vmatprep.mubr.bf16.mxu0 %v1508
          %1656 = vmatmul.mubr.bf16.gmra.mrb[0].mxu0 %v1507
          %v1657 = vpop.f32.mrb[0].mxu0
          %v1658 = vadd.f32 %v1617, %v1657
          %v1659 = vpop.f32.mrb[0].mxu0
          %v1660 = vadd.f32 %v1619, %v1659
          %v1661 = vpop.f32.mrb[0].mxu0
          %v1662 = vpop.f32.mrb[0].mxu0
          %1663 = vdwg.mxu0
          %1664 = vmatprep.subr.bf16.mxu0 %v1049
          %1665 = vmatpush1.bf16.msra.mxu0 %v1048
          %1666 = vmatprep.subr.bf16.mxu0 %v1053
          %1667 = vmatpush1.bf16.msra.mxu0 %v1052
          %1668 = vmatprep.subr.bf16.mxu0 %v1057
          %1669 = vmatpush1.bf16.msra.mxu0 %v1056
          %1670 = vmatprep.subr.bf16.mxu0 %v1061
          %1671 = vmatpush1.bf16.msra.mxu0 %v1060
          %1672 = vmatprep.subr.bf16.mxu0 %v1065
          %1673 = vmatpush1.bf16.msra.mxu0 %v1064
          %1674 = vmatprep.subr.bf16.mxu0 %v1069
          %1675 = vmatpush1.bf16.msra.mxu0 %v1068
          %1676 = vmatprep.subr.bf16.mxu0 %v1073
          %1677 = vmatpush1.bf16.msra.mxu0 %v1072
          %1678 = vmatprep.subr.bf16.mxu0 %v1077
          %1679 = vmatpush1.bf16.msra.mxu0 %v1076
          %1680 = vmatprep.subr.bf16.mxu0 %v1081
          %1681 = vmatpush1.bf16.msra.mxu0 %v1080
          %1682 = vmatprep.subr.bf16.mxu0 %v1085
          %1683 = vmatpush1.bf16.msra.mxu0 %v1084
          %1684 = vmatprep.subr.bf16.mxu0 %v1089
          %1685 = vmatpush1.bf16.msra.mxu0 %v1088
          %1686 = vmatprep.subr.bf16.mxu0 %v1093
          %1687 = vmatpush1.bf16.msra.mxu0 %v1092
          %1688 = vmatprep.subr.bf16.mxu0 %v1097
          %1689 = vmatpush1.bf16.msra.mxu0 %v1096
          %1690 = vmatprep.subr.bf16.mxu0 %v1101
          %1691 = vmatpush1.bf16.msra.mxu0 %v1100
          %1692 = vmatprep.subr.bf16.mxu0 %v1105
          %1693 = vmatpush1.bf16.msra.mxu0 %v1104
          %1694 = vmatprep.subr.bf16.mxu0 %v1109
          %1695 = vmatpush1.bf16.msra.mxu0 %v1108
          %1696 = vmatprep.mubr.bf16.mxu0 %v1510
          %1697 = vmatmul.mubr.bf16.gmra.mrb[0].mxu0 %v1509
          %v1698 = vpop.f32.mrb[0].mxu0
          %v1699 = vadd.f32 %v1658, %v1698
          %v1700 = vpop.f32.mrb[0].mxu0
          %v1701 = vadd.f32 %v1660, %v1700
          %v1702 = vpop.f32.mrb[0].mxu0
          %v1703 = vpop.f32.mrb[0].mxu0
          %1704 = vdwg.mxu0
          %1705 = vmatprep.subr.bf16.mxu0 %v1113
          %1706 = vmatpush1.bf16.msra.mxu0 %v1112
          %1707 = vmatprep.subr.bf16.mxu0 %v1117
          %1708 = vmatpush1.bf16.msra.mxu0 %v1116
          %1709 = vmatprep.subr.bf16.mxu0 %v1121
          %1710 = vmatpush1.bf16.msra.mxu0 %v1120
          %1711 = vmatprep.subr.bf16.mxu0 %v1125
          %1712 = vmatpush1.bf16.msra.mxu0 %v1124
          %1713 = vmatprep.subr.bf16.mxu0 %v1129
          %1714 = vmatpush1.bf16.msra.mxu0 %v1128
          %1715 = vmatprep.subr.bf16.mxu0 %v1133
          %1716 = vmatpush1.bf16.msra.mxu0 %v1132
          %1717 = vmatprep.subr.bf16.mxu0 %v1137
          %1718 = vmatpush1.bf16.msra.mxu0 %v1136
          %1719 = vmatprep.subr.bf16.mxu0 %v1141
          %1720 = vmatpush1.bf16.msra.mxu0 %v1140
          %1721 = vmatprep.subr.bf16.mxu0 %v1145
          %1722 = vmatpush1.bf16.msra.mxu0 %v1144
          %1723 = vmatprep.subr.bf16.mxu0 %v1149
          %1724 = vmatpush1.bf16.msra.mxu0 %v1148
          %1725 = vmatprep.subr.bf16.mxu0 %v1153
          %1726 = vmatpush1.bf16.msra.mxu0 %v1152
          %1727 = vmatprep.subr.bf16.mxu0 %v1157
          %1728 = vmatpush1.bf16.msra.mxu0 %v1156
          %1729 = vmatprep.subr.bf16.mxu0 %v1161
          %1730 = vmatpush1.bf16.msra.mxu0 %v1160
          %1731 = vmatprep.subr.bf16.mxu0 %v1165
          %1732 = vmatpush1.bf16.msra.mxu0 %v1164
          %1733 = vmatprep.subr.bf16.mxu0 %v1169
          %1734 = vmatpush1.bf16.msra.mxu0 %v1168
          %1735 = vmatprep.subr.bf16.mxu0 %v1173
          %1736 = vmatpush1.bf16.msra.mxu0 %v1172
          %1737 = vmatprep.mubr.bf16.mxu0 %v1512
          %1738 = vmatmul.mubr.bf16.gmra.mrb[0].mxu0 %v1511
          %v1739 = vpop.f32.mrb[0].mxu0
          %v1740 = vadd.f32 %v1699, %v1739
          %v1741 = vpop.f32.mrb[0].mxu0
          %v1742 = vadd.f32 %v1701, %v1741
          %v1743 = vpop.f32.mrb[0].mxu0
          %v1744 = vpop.f32.mrb[0].mxu0
          %1745 = vdwg.mxu0
          %1746 = vmatprep.subr.bf16.mxu0 %v1177
          %1747 = vmatpush1.bf16.msra.mxu0 %v1176
          %1748 = vmatprep.subr.bf16.mxu0 %v1181
          %1749 = vmatpush1.bf16.msra.mxu0 %v1180
          %1750 = vmatprep.subr.bf16.mxu0 %v1185
          %1751 = vmatpush1.bf16.msra.mxu0 %v1184
          %1752 = vmatprep.subr.bf16.mxu0 %v1189
          %1753 = vmatpush1.bf16.msra.mxu0 %v1188
          %1754 = vmatprep.subr.bf16.mxu0 %v1193
          %1755 = vmatpush1.bf16.msra.mxu0 %v1192
          %1756 = vmatprep.subr.bf16.mxu0 %v1197
          %1757 = vmatpush1.bf16.msra.mxu0 %v1196
          %1758 = vmatprep.subr.bf16.mxu0 %v1201
          %1759 = vmatpush1.bf16.msra.mxu0 %v1200
          %1760 = vmatprep.subr.bf16.mxu0 %v1205
          %1761 = vmatpush1.bf16.msra.mxu0 %v1204
          %1762 = vmatprep.subr.bf16.mxu0 %v1209
          %1763 = vmatpush1.bf16.msra.mxu0 %v1208
          %1764 = vmatprep.subr.bf16.mxu0 %v1213
          %1765 = vmatpush1.bf16.msra.mxu0 %v1212
          %1766 = vmatprep.subr.bf16.mxu0 %v1217
          %1767 = vmatpush1.bf16.msra.mxu0 %v1216
          %1768 = vmatprep.subr.bf16.mxu0 %v1221
          %1769 = vmatpush1.bf16.msra.mxu0 %v1220
          %1770 = vmatprep.subr.bf16.mxu0 %v1225
          %1771 = vmatpush1.bf16.msra.mxu0 %v1224
          %1772 = vmatprep.subr.bf16.mxu0 %v1229
          %1773 = vmatpush1.bf16.msra.mxu0 %v1228
          %1774 = vmatprep.subr.bf16.mxu0 %v1233
          %1775 = vmatpush1.bf16.msra.mxu0 %v1232
          %1776 = vmatprep.subr.bf16.mxu0 %v1237
          %1777 = vmatpush1.bf16.msra.mxu0 %v1236
          %1778 = vmatprep.mubr.bf16.mxu0 %v1514
          %1779 = vmatmul.mubr.bf16.gmra.mrb[0].mxu0 %v1513
          %v1780 = vpop.f32.mrb[0].mxu0
          %v1781 = vadd.f32 %v1740, %v1780
          %v1782 = vpop.f32.mrb[0].mxu0
          %v1783 = vadd.f32 %v1742, %v1782
          %v1784 = vpop.f32.mrb[0].mxu0
          %v1785 = vpop.f32.mrb[0].mxu0
          %1786 = vdwg.mxu0
          %1787 = vmatprep.subr.bf16.mxu0 %v1241
          %1788 = vmatpush1.bf16.msra.mxu0 %v1240
          %1789 = vmatprep.subr.bf16.mxu0 %v1245
          %1790 = vmatpush1.bf16.msra.mxu0 %v1244
          %1791 = vmatprep.subr.bf16.mxu0 %v1249
          %1792 = vmatpush1.bf16.msra.mxu0 %v1248
          %1793 = vmatprep.subr.bf16.mxu0 %v1253
          %1794 = vmatpush1.bf16.msra.mxu0 %v1252
          %1795 = vmatprep.subr.bf16.mxu0 %v1257
          %1796 = vmatpush1.bf16.msra.mxu0 %v1256
          %1797 = vmatprep.subr.bf16.mxu0 %v1261
          %1798 = vmatpush1.bf16.msra.mxu0 %v1260
          %1799 = vmatprep.subr.bf16.mxu0 %v1265
          %1800 = vmatpush1.bf16.msra.mxu0 %v1264
          %1801 = vmatprep.subr.bf16.mxu0 %v1269
          %1802 = vmatpush1.bf16.msra.mxu0 %v1268
          %1803 = vmatprep.subr.bf16.mxu0 %v1273
          %1804 = vmatpush1.bf16.msra.mxu0 %v1272
          %1805 = vmatprep.subr.bf16.mxu0 %v1277
          %1806 = vmatpush1.bf16.msra.mxu0 %v1276
          %1807 = vmatprep.subr.bf16.mxu0 %v1281
          %1808 = vmatpush1.bf16.msra.mxu0 %v1280
          %1809 = vmatprep.subr.bf16.mxu0 %v1285
          %1810 = vmatpush1.bf16.msra.mxu0 %v1284
          %1811 = vmatprep.subr.bf16.mxu0 %v1289
          %1812 = vmatpush1.bf16.msra.mxu0 %v1288
          %1813 = vmatprep.subr.bf16.mxu0 %v1293
          %1814 = vmatpush1.bf16.msra.mxu0 %v1292
          %1815 = vmatprep.subr.bf16.mxu0 %v1297
          %1816 = vmatpush1.bf16.msra.mxu0 %v1296
          %1817 = vmatprep.subr.bf16.mxu0 %v1301
          %1818 = vmatpush1.bf16.msra.mxu0 %v1300
          %1819 = vmatprep.mubr.bf16.mxu0 %v1516
          %1820 = vmatmul.mubr.bf16.gmra.mrb[0].mxu0 %v1515
          %v1821 = vpop.f32.mrb[0].mxu0
          %v1822 = vadd.f32 %v1781, %v1821
          %v1823 = vpop.f32.mrb[0].mxu0
          %v1824 = vadd.f32 %v1783, %v1823
          %v1825 = vpop.f32.mrb[0].mxu0
          %v1826 = vpop.f32.mrb[0].mxu0
          %1827 = vdwg.mxu0
          %1828 = vmatprep.subr.bf16.mxu0 %v1305
          %1829 = vmatpush1.bf16.msra.mxu0 %v1304
          %1830 = vmatprep.subr.bf16.mxu0 %v1309
          %1831 = vmatpush1.bf16.msra.mxu0 %v1308
          %1832 = vmatprep.subr.bf16.mxu0 %v1313
          %1833 = vmatpush1.bf16.msra.mxu0 %v1312
          %1834 = vmatprep.subr.bf16.mxu0 %v1317
          %1835 = vmatpush1.bf16.msra.mxu0 %v1316
          %1836 = vmatprep.subr.bf16.mxu0 %v1321
          %1837 = vmatpush1.bf16.msra.mxu0 %v1320
          %1838 = vmatprep.subr.bf16.mxu0 %v1325
          %1839 = vmatpush1.bf16.msra.mxu0 %v1324
          %1840 = vmatprep.subr.bf16.mxu0 %v1329
          %1841 = vmatpush1.bf16.msra.mxu0 %v1328
          %1842 = vmatprep.subr.bf16.mxu0 %v1333
          %1843 = vmatpush1.bf16.msra.mxu0 %v1332
          %1844 = vmatprep.subr.bf16.mxu0 %v1337
          %1845 = vmatpush1.bf16.msra.mxu0 %v1336
          %1846 = vmatprep.subr.bf16.mxu0 %v1341
          %1847 = vmatpush1.bf16.msra.mxu0 %v1340
          %1848 = vmatprep.subr.bf16.mxu0 %v1345
          %1849 = vmatpush1.bf16.msra.mxu0 %v1344
          %1850 = vmatprep.subr.bf16.mxu0 %v1349
          %1851 = vmatpush1.bf16.msra.mxu0 %v1348
          %1852 = vmatprep.subr.bf16.mxu0 %v1353
          %1853 = vmatpush1.bf16.msra.mxu0 %v1352
          %1854 = vmatprep.subr.bf16.mxu0 %v1357
          %1855 = vmatpush1.bf16.msra.mxu0 %v1356
          %1856 = vmatprep.subr.bf16.mxu0 %v1361
          %1857 = vmatpush1.bf16.msra.mxu0 %v1360
          %1858 = vmatprep.subr.bf16.mxu0 %v1365
          %1859 = vmatpush1.bf16.msra.mxu0 %v1364
          %1860 = vmatprep.mubr.bf16.mxu0 %v1518
          %1861 = vmatmul.mubr.bf16.gmra.mrb[0].mxu0 %v1517
          %v1862 = vpop.f32.mrb[0].mxu0
          %v1863 = vadd.f32 %v1822, %v1862
          %v1864 = vpop.f32.mrb[0].mxu0
          %v1865 = vadd.f32 %v1824, %v1864
          %v1866 = vpop.f32.mrb[0].mxu0
          %v1867 = vpop.f32.mrb[0].mxu0
          %1868 = vdwg.mxu0
          %1869 = vmatprep.subr.bf16.mxu0 %v1369
          %1870 = vmatpush1.bf16.msra.mxu0 %v1368
          %1871 = vmatprep.subr.bf16.mxu0 %v1373
          %1872 = vmatpush1.bf16.msra.mxu0 %v1372
          %1873 = vmatprep.subr.bf16.mxu0 %v1377
          %1874 = vmatpush1.bf16.msra.mxu0 %v1376
          %1875 = vmatprep.subr.bf16.mxu0 %v1381
          %1876 = vmatpush1.bf16.msra.mxu0 %v1380
          %1877 = vmatprep.subr.bf16.mxu0 %v1385
          %1878 = vmatpush1.bf16.msra.mxu0 %v1384
          %1879 = vmatprep.subr.bf16.mxu0 %v1389
          %1880 = vmatpush1.bf16.msra.mxu0 %v1388
          %1881 = vmatprep.subr.bf16.mxu0 %v1393
          %1882 = vmatpush1.bf16.msra.mxu0 %v1392
          %1883 = vmatprep.subr.bf16.mxu0 %v1397
          %1884 = vmatpush1.bf16.msra.mxu0 %v1396
          %1885 = vmatprep.subr.bf16.mxu0 %v1401
          %1886 = vmatpush1.bf16.msra.mxu0 %v1400
          %1887 = vmatprep.subr.bf16.mxu0 %v1405
          %1888 = vmatpush1.bf16.msra.mxu0 %v1404
          %1889 = vmatprep.subr.bf16.mxu0 %v1409
          %1890 = vmatpush1.bf16.msra.mxu0 %v1408
          %1891 = vmatprep.subr.bf16.mxu0 %v1413
          %1892 = vmatpush1.bf16.msra.mxu0 %v1412
          %1893 = vmatprep.subr.bf16.mxu0 %v1417
          %1894 = vmatpush1.bf16.msra.mxu0 %v1416
          %1895 = vmatprep.subr.bf16.mxu0 %v1421
          %1896 = vmatpush1.bf16.msra.mxu0 %v1420
          %1897 = vmatprep.subr.bf16.mxu0 %v1425
          %1898 = vmatpush1.bf16.msra.mxu0 %v1424
          %1899 = vmatprep.subr.bf16.mxu0 %v1429
          %1900 = vmatpush1.bf16.msra.mxu0 %v1428
          %1901 = vmatprep.mubr.bf16.mxu0 %v1520
          %1902 = vmatmul.mubr.bf16.gmra.mrb[0].mxu0 %v1519
          %v1903 = vpop.f32.mrb[0].mxu0
          %v1904 = vadd.f32 %v1863, %v1903
          %v1905 = vpop.f32.mrb[0].mxu0
          %v1906 = vadd.f32 %v1865, %v1905
          %v1907 = vpop.f32.mrb[0].mxu0
          %v1908 = vpop.f32.mrb[0].mxu0
          %1909 = vdwg.mxu0
          %1910 = vmatprep.subr.bf16.mxu0 %v1433
          %1911 = vmatpush1.bf16.msra.mxu0 %v1432
          %1912 = vmatprep.subr.bf16.mxu0 %v1437
          %1913 = vmatpush1.bf16.msra.mxu0 %v1436
          %1914 = vmatprep.subr.bf16.mxu0 %v1441
          %1915 = vmatpush1.bf16.msra.mxu0 %v1440
          %1916 = vmatprep.subr.bf16.mxu0 %v1445
          %1917 = vmatpush1.bf16.msra.mxu0 %v1444
          %1918 = vmatprep.subr.bf16.mxu0 %v1449
          %1919 = vmatpush1.bf16.msra.mxu0 %v1448
          %1920 = vmatprep.subr.bf16.mxu0 %v1453
          %1921 = vmatpush1.bf16.msra.mxu0 %v1452
          %1922 = vmatprep.subr.bf16.mxu0 %v1457
          %1923 = vmatpush1.bf16.msra.mxu0 %v1456
          %1924 = vmatprep.subr.bf16.mxu0 %v1461
          %1925 = vmatpush1.bf16.msra.mxu0 %v1460
          %1926 = vmatprep.subr.bf16.mxu0 0
          %1927 = vmatpush1.bf16.msra.mxu0 0
          %1928 = vmatprep.subr.bf16.mxu0 0
          %1929 = vmatpush1.bf16.msra.mxu0 0
          %1930 = vmatprep.subr.bf16.mxu0 0
          %1931 = vmatpush1.bf16.msra.mxu0 0
          %1932 = vmatprep.subr.bf16.mxu0 0
          %1933 = vmatpush1.bf16.msra.mxu0 0
          %1934 = vmatprep.subr.bf16.mxu0 0
          %1935 = vmatpush1.bf16.msra.mxu0 0
          %1936 = vmatprep.subr.bf16.mxu0 0
          %1937 = vmatpush1.bf16.msra.mxu0 0
          %1938 = vmatprep.subr.bf16.mxu0 0
          %1939 = vmatpush1.bf16.msra.mxu0 0
          %1940 = vmatprep.subr.bf16.mxu0 0
          %1941 = vmatpush1.bf16.msra.mxu0 0
          %1942 = vmatprep.mubr.bf16.mxu0 0
          %1943 = vmatmul.mubr.bf16.gmra.mrb[0].mxu0 %v1521
          %v1944 = vpop.f32.mrb[0].mxu0
          %v1945 = vadd.f32 %v1904, %v1944
          %v1946 = vpop.f32.mrb[0].mxu0
          %v1947 = vadd.f32 %v1906, %v1946
          %v1948 = vpop.f32.mrb[0].mxu0
          %v1949 = vpop.f32.mrb[0].mxu0
          %1950 = vdwg.mxu0
          %1951 = vmatprep.subr.bf16.mxu0 %v859
          %1952 = vmatpush1.bf16.msra.mxu0 %v858
          %1953 = vmatprep.subr.bf16.mxu0 %v863
          %1954 = vmatpush1.bf16.msra.mxu0 %v862
          %1955 = vmatprep.subr.bf16.mxu0 %v867
          %1956 = vmatpush1.bf16.msra.mxu0 %v866
          %1957 = vmatprep.subr.bf16.mxu0 %v871
          %1958 = vmatpush1.bf16.msra.mxu0 %v870
          %1959 = vmatprep.subr.bf16.mxu0 %v875
          %1960 = vmatpush1.bf16.msra.mxu0 %v874
          %1961 = vmatprep.subr.bf16.mxu0 %v879
          %1962 = vmatpush1.bf16.msra.mxu0 %v878
          %1963 = vmatprep.subr.bf16.mxu0 %v883
          %1964 = vmatpush1.bf16.msra.mxu0 %v882
          %1965 = vmatprep.subr.bf16.mxu0 %v887
          %1966 = vmatpush1.bf16.msra.mxu0 %v886
          %1967 = vmatprep.subr.bf16.mxu0 %v891
          %1968 = vmatpush1.bf16.msra.mxu0 %v890
          %1969 = vmatprep.subr.bf16.mxu0 %v895
          %1970 = vmatpush1.bf16.msra.mxu0 %v894
          %1971 = vmatprep.subr.bf16.mxu0 %v899
          %1972 = vmatpush1.bf16.msra.mxu0 %v898
          %1973 = vmatprep.subr.bf16.mxu0 %v903
          %1974 = vmatpush1.bf16.msra.mxu0 %v902
          %1975 = vmatprep.subr.bf16.mxu0 %v907
          %1976 = vmatpush1.bf16.msra.mxu0 %v906
          %1977 = vmatprep.subr.bf16.mxu0 %v911
          %1978 = vmatpush1.bf16.msra.mxu0 %v910
          %1979 = vmatprep.subr.bf16.mxu0 %v915
          %1980 = vmatpush1.bf16.msra.mxu0 %v914
          %1981 = vmatprep.subr.bf16.mxu0 %v919
          %1982 = vmatpush1.bf16.msra.mxu0 %v918
          %1983 = vmatprep.mubr.bf16.mxu0 %v1504
          %1984 = vmatmul.mubr.bf16.gmra.mrb[0].mxu0 %v1503
          %v1985 = vpop.f32.mrb[0].mxu0
          %v1986 = vadd.f32 0.0, %v1985
          %v1987 = vpop.f32.mrb[0].mxu0
          %v1988 = vadd.f32 0.0, %v1987
          %v1989 = vpop.f32.mrb[0].mxu0
          %v1990 = vpop.f32.mrb[0].mxu0
          %1991 = vdwg.mxu0
          %1992 = vmatprep.subr.bf16.mxu0 %v923
          %1993 = vmatpush1.bf16.msra.mxu0 %v922
          %1994 = vmatprep.subr.bf16.mxu0 %v927
          %1995 = vmatpush1.bf16.msra.mxu0 %v926
          %1996 = vmatprep.subr.bf16.mxu0 %v931
          %1997 = vmatpush1.bf16.msra.mxu0 %v930
          %1998 = vmatprep.subr.bf16.mxu0 %v935
          %1999 = vmatpush1.bf16.msra.mxu0 %v934
          %2000 = vmatprep.subr.bf16.mxu0 %v939
          %2001 = vmatpush1.bf16.msra.mxu0 %v938
          %2002 = vmatprep.subr.bf16.mxu0 %v943
          %2003 = vmatpush1.bf16.msra.mxu0 %v942
          %2004 = vmatprep.subr.bf16.mxu0 %v947
          %2005 = vmatpush1.bf16.msra.mxu0 %v946
          %2006 = vmatprep.subr.bf16.mxu0 %v951
          %2007 = vmatpush1.bf16.msra.mxu0 %v950
          %2008 = vmatprep.subr.bf16.mxu0 %v955
          %2009 = vmatpush1.bf16.msra.mxu0 %v954
          %2010 = vmatprep.subr.bf16.mxu0 %v959
          %2011 = vmatpush1.bf16.msra.mxu0 %v958
          %2012 = vmatprep.subr.bf16.mxu0 %v963
          %2013 = vmatpush1.bf16.msra.mxu0 %v962
          %2014 = vmatprep.subr.bf16.mxu0 %v967
          %2015 = vmatpush1.bf16.msra.mxu0 %v966
          %2016 = vmatprep.subr.bf16.mxu0 %v971
          %2017 = vmatpush1.bf16.msra.mxu0 %v970
          %2018 = vmatprep.subr.bf16.mxu0 %v975
          %2019 = vmatpush1.bf16.msra.mxu0 %v974
          %2020 = vmatprep.subr.bf16.mxu0 %v979
          %2021 = vmatpush1.bf16.msra.mxu0 %v978
          %2022 = vmatprep.subr.bf16.mxu0 %v983
          %2023 = vmatpush1.bf16.msra.mxu0 %v982
          %2024 = vmatprep.mubr.bf16.mxu0 %v1506
          %2025 = vmatmul.mubr.bf16.gmra.mrb[0].mxu0 %v1505
          %v2026 = vpop.f32.mrb[0].mxu0
          %v2027 = vadd.f32 %v1986, %v2026
          %v2028 = vpop.f32.mrb[0].mxu0
          %v2029 = vadd.f32 %v1988, %v2028
          %v2030 = vpop.f32.mrb[0].mxu0
          %v2031 = vpop.f32.mrb[0].mxu0
          %2032 = vdwg.mxu0
          %2033 = vmatprep.subr.bf16.mxu0 %v987
          %2034 = vmatpush1.bf16.msra.mxu0 %v986
          %2035 = vmatprep.subr.bf16.mxu0 %v991
          %2036 = vmatpush1.bf16.msra.mxu0 %v990
          %2037 = vmatprep.subr.bf16.mxu0 %v995
          %2038 = vmatpush1.bf16.msra.mxu0 %v994
          %2039 = vmatprep.subr.bf16.mxu0 %v999
          %2040 = vmatpush1.bf16.msra.mxu0 %v998
          %2041 = vmatprep.subr.bf16.mxu0 %v1003
          %2042 = vmatpush1.bf16.msra.mxu0 %v1002
          %2043 = vmatprep.subr.bf16.mxu0 %v1007
          %2044 = vmatpush1.bf16.msra.mxu0 %v1006
          %2045 = vmatprep.subr.bf16.mxu0 %v1011
          %2046 = vmatpush1.bf16.msra.mxu0 %v1010
          %2047 = vmatprep.subr.bf16.mxu0 %v1015
          %2048 = vmatpush1.bf16.msra.mxu0 %v1014
          %2049 = vmatprep.subr.bf16.mxu0 %v1019
          %2050 = vmatpush1.bf16.msra.mxu0 %v1018
          %2051 = vmatprep.subr.bf16.mxu0 %v1023
          %2052 = vmatpush1.bf16.msra.mxu0 %v1022
          %2053 = vmatprep.subr.bf16.mxu0 %v1027
          %2054 = vmatpush1.bf16.msra.mxu0 %v1026
          %2055 = vmatprep.subr.bf16.mxu0 %v1031
          %2056 = vmatpush1.bf16.msra.mxu0 %v1030
          %2057 = vmatprep.subr.bf16.mxu0 %v1035
          %2058 = vmatpush1.bf16.msra.mxu0 %v1034
          %2059 = vmatprep.subr.bf16.mxu0 %v1039
          %2060 = vmatpush1.bf16.msra.mxu0 %v1038
          %2061 = vmatprep.subr.bf16.mxu0 %v1043
          %2062 = vmatpush1.bf16.msra.mxu0 %v1042
          %2063 = vmatprep.subr.bf16.mxu0 %v1047
          %2064 = vmatpush1.bf16.msra.mxu0 %v1046
          %2065 = vmatprep.mubr.bf16.mxu0 %v1508
          %2066 = vmatmul.mubr.bf16.gmra.mrb[0].mxu0 %v1507
          %v2067 = vpop.f32.mrb[0].mxu0
          %v2068 = vadd.f32 %v2027, %v2067
          %v2069 = vpop.f32.mrb[0].mxu0
          %v2070 = vadd.f32 %v2029, %v2069
          %v2071 = vpop.f32.mrb[0].mxu0
          %v2072 = vpop.f32.mrb[0].mxu0
          %2073 = vdwg.mxu0
          %2074 = vmatprep.subr.bf16.mxu0 %v1051
          %2075 = vmatpush1.bf16.msra.mxu0 %v1050
          %2076 = vmatprep.subr.bf16.mxu0 %v1055
          %2077 = vmatpush1.bf16.msra.mxu0 %v1054
          %2078 = vmatprep.subr.bf16.mxu0 %v1059
          %2079 = vmatpush1.bf16.msra.mxu0 %v1058
          %2080 = vmatprep.subr.bf16.mxu0 %v1063
          %2081 = vmatpush1.bf16.msra.mxu0 %v1062
          %2082 = vmatprep.subr.bf16.mxu0 %v1067
          %2083 = vmatpush1.bf16.msra.mxu0 %v1066
          %2084 = vmatprep.subr.bf16.mxu0 %v1071
          %2085 = vmatpush1.bf16.msra.mxu0 %v1070
          %2086 = vmatprep.subr.bf16.mxu0 %v1075
          %2087 = vmatpush1.bf16.msra.mxu0 %v1074
          %2088 = vmatprep.subr.bf16.mxu0 %v1079
          %2089 = vmatpush1.bf16.msra.mxu0 %v1078
          %2090 = vmatprep.subr.bf16.mxu0 %v1083
          %2091 = vmatpush1.bf16.msra.mxu0 %v1082
          %2092 = vmatprep.subr.bf16.mxu0 %v1087
          %2093 = vmatpush1.bf16.msra.mxu0 %v1086
          %2094 = vmatprep.subr.bf16.mxu0 %v1091
          %2095 = vmatpush1.bf16.msra.mxu0 %v1090
          %2096 = vmatprep.subr.bf16.mxu0 %v1095
          %2097 = vmatpush1.bf16.msra.mxu0 %v1094
          %2098 = vmatprep.subr.bf16.mxu0 %v1099
          %2099 = vmatpush1.bf16.msra.mxu0 %v1098
          %2100 = vmatprep.subr.bf16.mxu0 %v1103
          %2101 = vmatpush1.bf16.msra.mxu0 %v1102
          %2102 = vmatprep.subr.bf16.mxu0 %v1107
          %2103 = vmatpush1.bf16.msra.mxu0 %v1106
          %2104 = vmatprep.subr.bf16.mxu0 %v1111
          %2105 = vmatpush1.bf16.msra.mxu0 %v1110
          %2106 = vmatprep.mubr.bf16.mxu0 %v1510
          %2107 = vmatmul.mubr.bf16.gmra.mrb[0].mxu0 %v1509
          %v2108 = vpop.f32.mrb[0].mxu0
          %v2109 = vadd.f32 %v2068, %v2108
          %v2110 = vpop.f32.mrb[0].mxu0
          %v2111 = vadd.f32 %v2070, %v2110
          %v2112 = vpop.f32.mrb[0].mxu0
          %v2113 = vpop.f32.mrb[0].mxu0
          %2114 = vdwg.mxu0
          %2115 = vmatprep.subr.bf16.mxu0 %v1115
          %2116 = vmatpush1.bf16.msra.mxu0 %v1114
          %2117 = vmatprep.subr.bf16.mxu0 %v1119
          %2118 = vmatpush1.bf16.msra.mxu0 %v1118
          %2119 = vmatprep.subr.bf16.mxu0 %v1123
          %2120 = vmatpush1.bf16.msra.mxu0 %v1122
          %2121 = vmatprep.subr.bf16.mxu0 %v1127
          %2122 = vmatpush1.bf16.msra.mxu0 %v1126
          %2123 = vmatprep.subr.bf16.mxu0 %v1131
          %2124 = vmatpush1.bf16.msra.mxu0 %v1130
          %2125 = vmatprep.subr.bf16.mxu0 %v1135
          %2126 = vmatpush1.bf16.msra.mxu0 %v1134
          %2127 = vmatprep.subr.bf16.mxu0 %v1139
          %2128 = vmatpush1.bf16.msra.mxu0 %v1138
          %2129 = vmatprep.subr.bf16.mxu0 %v1143
          %2130 = vmatpush1.bf16.msra.mxu0 %v1142
          %2131 = vmatprep.subr.bf16.mxu0 %v1147
          %2132 = vmatpush1.bf16.msra.mxu0 %v1146
          %2133 = vmatprep.subr.bf16.mxu0 %v1151
          %2134 = vmatpush1.bf16.msra.mxu0 %v1150
          %2135 = vmatprep.subr.bf16.mxu0 %v1155
          %2136 = vmatpush1.bf16.msra.mxu0 %v1154
          %2137 = vmatprep.subr.bf16.mxu0 %v1159
          %2138 = vmatpush1.bf16.msra.mxu0 %v1158
          %2139 = vmatprep.subr.bf16.mxu0 %v1163
          %2140 = vmatpush1.bf16.msra.mxu0 %v1162
          %2141 = vmatprep.subr.bf16.mxu0 %v1167
          %2142 = vmatpush1.bf16.msra.mxu0 %v1166
          %2143 = vmatprep.subr.bf16.mxu0 %v1171
          %2144 = vmatpush1.bf16.msra.mxu0 %v1170
          %2145 = vmatprep.subr.bf16.mxu0 %v1175
          %2146 = vmatpush1.bf16.msra.mxu0 %v1174
          %2147 = vmatprep.mubr.bf16.mxu0 %v1512
          %2148 = vmatmul.mubr.bf16.gmra.mrb[0].mxu0 %v1511
          %v2149 = vpop.f32.mrb[0].mxu0
          %v2150 = vadd.f32 %v2109, %v2149
          %v2151 = vpop.f32.mrb[0].mxu0
          %v2152 = vadd.f32 %v2111, %v2151
          %v2153 = vpop.f32.mrb[0].mxu0
          %v2154 = vpop.f32.mrb[0].mxu0
          %2155 = vdwg.mxu0
          %2156 = vmatprep.subr.bf16.mxu0 %v1179
          %2157 = vmatpush1.bf16.msra.mxu0 %v1178
          %2158 = vmatprep.subr.bf16.mxu0 %v1183
          %2159 = vmatpush1.bf16.msra.mxu0 %v1182
          %2160 = vmatprep.subr.bf16.mxu0 %v1187
          %2161 = vmatpush1.bf16.msra.mxu0 %v1186
          %2162 = vmatprep.subr.bf16.mxu0 %v1191
          %2163 = vmatpush1.bf16.msra.mxu0 %v1190
          %2164 = vmatprep.subr.bf16.mxu0 %v1195
          %2165 = vmatpush1.bf16.msra.mxu0 %v1194
          %2166 = vmatprep.subr.bf16.mxu0 %v1199
          %2167 = vmatpush1.bf16.msra.mxu0 %v1198
          %2168 = vmatprep.subr.bf16.mxu0 %v1203
          %2169 = vmatpush1.bf16.msra.mxu0 %v1202
          %2170 = vmatprep.subr.bf16.mxu0 %v1207
          %2171 = vmatpush1.bf16.msra.mxu0 %v1206
          %2172 = vmatprep.subr.bf16.mxu0 %v1211
          %2173 = vmatpush1.bf16.msra.mxu0 %v1210
          %2174 = vmatprep.subr.bf16.mxu0 %v1215
          %2175 = vmatpush1.bf16.msra.mxu0 %v1214
          %2176 = vmatprep.subr.bf16.mxu0 %v1219
          %2177 = vmatpush1.bf16.msra.mxu0 %v1218
          %2178 = vmatprep.subr.bf16.mxu0 %v1223
          %2179 = vmatpush1.bf16.msra.mxu0 %v1222
          %2180 = vmatprep.subr.bf16.mxu0 %v1227
          %2181 = vmatpush1.bf16.msra.mxu0 %v1226
          %2182 = vmatprep.subr.bf16.mxu0 %v1231
          %2183 = vmatpush1.bf16.msra.mxu0 %v1230
          %2184 = vmatprep.subr.bf16.mxu0 %v1235
          %2185 = vmatpush1.bf16.msra.mxu0 %v1234
          %2186 = vmatprep.subr.bf16.mxu0 %v1239
          %2187 = vmatpush1.bf16.msra.mxu0 %v1238
          %2188 = vmatprep.mubr.bf16.mxu0 %v1514
          %2189 = vmatmul.mubr.bf16.gmra.mrb[0].mxu0 %v1513
          %v2190 = vpop.f32.mrb[0].mxu0
          %v2191 = vadd.f32 %v2150, %v2190
          %v2192 = vpop.f32.mrb[0].mxu0
          %v2193 = vadd.f32 %v2152, %v2192
          %v2194 = vpop.f32.mrb[0].mxu0
          %v2195 = vpop.f32.mrb[0].mxu0
          %2196 = vdwg.mxu0
          %2197 = vmatprep.subr.bf16.mxu0 %v1243
          %2198 = vmatpush1.bf16.msra.mxu0 %v1242
          %2199 = vmatprep.subr.bf16.mxu0 %v1247
          %2200 = vmatpush1.bf16.msra.mxu0 %v1246
          %2201 = vmatprep.subr.bf16.mxu0 %v1251
          %2202 = vmatpush1.bf16.msra.mxu0 %v1250
          %2203 = vmatprep.subr.bf16.mxu0 %v1255
          %2204 = vmatpush1.bf16.msra.mxu0 %v1254
          %2205 = vmatprep.subr.bf16.mxu0 %v1259
          %2206 = vmatpush1.bf16.msra.mxu0 %v1258
          %2207 = vmatprep.subr.bf16.mxu0 %v1263
          %2208 = vmatpush1.bf16.msra.mxu0 %v1262
          %2209 = vmatprep.subr.bf16.mxu0 %v1267
          %2210 = vmatpush1.bf16.msra.mxu0 %v1266
          %2211 = vmatprep.subr.bf16.mxu0 %v1271
          %2212 = vmatpush1.bf16.msra.mxu0 %v1270
          %2213 = vmatprep.subr.bf16.mxu0 %v1275
          %2214 = vmatpush1.bf16.msra.mxu0 %v1274
          %2215 = vmatprep.subr.bf16.mxu0 %v1279
          %2216 = vmatpush1.bf16.msra.mxu0 %v1278
          %2217 = vmatprep.subr.bf16.mxu0 %v1283
          %2218 = vmatpush1.bf16.msra.mxu0 %v1282
          %2219 = vmatprep.subr.bf16.mxu0 %v1287
          %2220 = vmatpush1.bf16.msra.mxu0 %v1286
          %2221 = vmatprep.subr.bf16.mxu0 %v1291
          %2222 = vmatpush1.bf16.msra.mxu0 %v1290
          %2223 = vmatprep.subr.bf16.mxu0 %v1295
          %2224 = vmatpush1.bf16.msra.mxu0 %v1294
          %2225 = vmatprep.subr.bf16.mxu0 %v1299
          %2226 = vmatpush1.bf16.msra.mxu0 %v1298
          %2227 = vmatprep.subr.bf16.mxu0 %v1303
          %2228 = vmatpush1.bf16.msra.mxu0 %v1302
          %2229 = vmatprep.mubr.bf16.mxu0 %v1516
          %2230 = vmatmul.mubr.bf16.gmra.mrb[0].mxu0 %v1515
          %v2231 = vpop.f32.mrb[0].mxu0
          %v2232 = vadd.f32 %v2191, %v2231
          %v2233 = vpop.f32.mrb[0].mxu0
          %v2234 = vadd.f32 %v2193, %v2233
          %v2235 = vpop.f32.mrb[0].mxu0
          %v2236 = vpop.f32.mrb[0].mxu0
          %2237 = vdwg.mxu0
          %2238 = vmatprep.subr.bf16.mxu0 %v1307
          %2239 = vmatpush1.bf16.msra.mxu0 %v1306
          %2240 = vmatprep.subr.bf16.mxu0 %v1311
          %2241 = vmatpush1.bf16.msra.mxu0 %v1310
          %2242 = vmatprep.subr.bf16.mxu0 %v1315
          %2243 = vmatpush1.bf16.msra.mxu0 %v1314
          %2244 = vmatprep.subr.bf16.mxu0 %v1319
          %2245 = vmatpush1.bf16.msra.mxu0 %v1318
          %2246 = vmatprep.subr.bf16.mxu0 %v1323
          %2247 = vmatpush1.bf16.msra.mxu0 %v1322
          %2248 = vmatprep.subr.bf16.mxu0 %v1327
          %2249 = vmatpush1.bf16.msra.mxu0 %v1326
          %2250 = vmatprep.subr.bf16.mxu0 %v1331
          %2251 = vmatpush1.bf16.msra.mxu0 %v1330
          %2252 = vmatprep.subr.bf16.mxu0 %v1335
          %2253 = vmatpush1.bf16.msra.mxu0 %v1334
          %2254 = vmatprep.subr.bf16.mxu0 %v1339
          %2255 = vmatpush1.bf16.msra.mxu0 %v1338
          %2256 = vmatprep.subr.bf16.mxu0 %v1343
          %2257 = vmatpush1.bf16.msra.mxu0 %v1342
          %2258 = vmatprep.subr.bf16.mxu0 %v1347
          %2259 = vmatpush1.bf16.msra.mxu0 %v1346
          %2260 = vmatprep.subr.bf16.mxu0 %v1351
          %2261 = vmatpush1.bf16.msra.mxu0 %v1350
          %2262 = vmatprep.subr.bf16.mxu0 %v1355
          %2263 = vmatpush1.bf16.msra.mxu0 %v1354
          %2264 = vmatprep.subr.bf16.mxu0 %v1359
          %2265 = vmatpush1.bf16.msra.mxu0 %v1358
          %2266 = vmatprep.subr.bf16.mxu0 %v1363
          %2267 = vmatpush1.bf16.msra.mxu0 %v1362
          %2268 = vmatprep.subr.bf16.mxu0 %v1367
          %2269 = vmatpush1.bf16.msra.mxu0 %v1366
          %2270 = vmatprep.mubr.bf16.mxu0 %v1518
          %2271 = vmatmul.mubr.bf16.gmra.mrb[0].mxu0 %v1517
          %v2272 = vpop.f32.mrb[0].mxu0
          %v2273 = vadd.f32 %v2232, %v2272
          %v2274 = vpop.f32.mrb[0].mxu0
          %v2275 = vadd.f32 %v2234, %v2274
          %v2276 = vpop.f32.mrb[0].mxu0
          %v2277 = vpop.f32.mrb[0].mxu0
          %2278 = vdwg.mxu0
          %2279 = vmatprep.subr.bf16.mxu0 %v1371
          %2280 = vmatpush1.bf16.msra.mxu0 %v1370
          %2281 = vmatprep.subr.bf16.mxu0 %v1375
          %2282 = vmatpush1.bf16.msra.mxu0 %v1374
          %2283 = vmatprep.subr.bf16.mxu0 %v1379
          %2284 = vmatpush1.bf16.msra.mxu0 %v1378
          %2285 = vmatprep.subr.bf16.mxu0 %v1383
          %2286 = vmatpush1.bf16.msra.mxu0 %v1382
          %2287 = vmatprep.subr.bf16.mxu0 %v1387
          %2288 = vmatpush1.bf16.msra.mxu0 %v1386
          %2289 = vmatprep.subr.bf16.mxu0 %v1391
          %2290 = vmatpush1.bf16.msra.mxu0 %v1390
          %2291 = vmatprep.subr.bf16.mxu0 %v1395
          %2292 = vmatpush1.bf16.msra.mxu0 %v1394
          %2293 = vmatprep.subr.bf16.mxu0 %v1399
          %2294 = vmatpush1.bf16.msra.mxu0 %v1398
          %2295 = vmatprep.subr.bf16.mxu0 %v1403
          %2296 = vmatpush1.bf16.msra.mxu0 %v1402
          %2297 = vmatprep.subr.bf16.mxu0 %v1407
          %2298 = vmatpush1.bf16.msra.mxu0 %v1406
          %2299 = vmatprep.subr.bf16.mxu0 %v1411
          %2300 = vmatpush1.bf16.msra.mxu0 %v1410
          %2301 = vmatprep.subr.bf16.mxu0 %v1415
          %2302 = vmatpush1.bf16.msra.mxu0 %v1414
          %2303 = vmatprep.subr.bf16.mxu0 %v1419
          %2304 = vmatpush1.bf16.msra.mxu0 %v1418
          %2305 = vmatprep.subr.bf16.mxu0 %v1423
          %2306 = vmatpush1.bf16.msra.mxu0 %v1422
          %2307 = vmatprep.subr.bf16.mxu0 %v1427
          %2308 = vmatpush1.bf16.msra.mxu0 %v1426
          %2309 = vmatprep.subr.bf16.mxu0 %v1431
          %2310 = vmatpush1.bf16.msra.mxu0 %v1430
          %2311 = vmatprep.mubr.bf16.mxu0 %v1520
          %2312 = vmatmul.mubr.bf16.gmra.mrb[0].mxu0 %v1519
          %v2313 = vpop.f32.mrb[0].mxu0
          %v2314 = vadd.f32 %v2273, %v2313
          %v2315 = vpop.f32.mrb[0].mxu0
          %v2316 = vadd.f32 %v2275, %v2315
          %v2317 = vpop.f32.mrb[0].mxu0
          %v2318 = vpop.f32.mrb[0].mxu0
          %2319 = vdwg.mxu0
          %2320 = vmatprep.subr.bf16.mxu0 %v1435
          %2321 = vmatpush1.bf16.msra.mxu0 %v1434
          %2322 = vmatprep.subr.bf16.mxu0 %v1439
          %2323 = vmatpush1.bf16.msra.mxu0 %v1438
          %2324 = vmatprep.subr.bf16.mxu0 %v1443
          %2325 = vmatpush1.bf16.msra.mxu0 %v1442
          %2326 = vmatprep.subr.bf16.mxu0 %v1447
          %2327 = vmatpush1.bf16.msra.mxu0 %v1446
          %2328 = vmatprep.subr.bf16.mxu0 %v1451
          %2329 = vmatpush1.bf16.msra.mxu0 %v1450
          %2330 = vmatprep.subr.bf16.mxu0 %v1455
          %2331 = vmatpush1.bf16.msra.mxu0 %v1454
          %2332 = vmatprep.subr.bf16.mxu0 %v1459
          %2333 = vmatpush1.bf16.msra.mxu0 %v1458
          %2334 = vmatprep.subr.bf16.mxu0 %v1463
          %2335 = vmatpush1.bf16.msra.mxu0 %v1462
          %2336 = vmatprep.subr.bf16.mxu0 0
          %2337 = vmatpush1.bf16.msra.mxu0 0
          %2338 = vmatprep.subr.bf16.mxu0 0
          %2339 = vmatpush1.bf16.msra.mxu0 0
          %2340 = vmatprep.subr.bf16.mxu0 0
          %2341 = vmatpush1.bf16.msra.mxu0 0
          %2342 = vmatprep.subr.bf16.mxu0 0
          %2343 = vmatpush1.bf16.msra.mxu0 0
          %2344 = vmatprep.subr.bf16.mxu0 0
          %2345 = vmatpush1.bf16.msra.mxu0 0
          %2346 = vmatprep.subr.bf16.mxu0 0
          %2347 = vmatpush1.bf16.msra.mxu0 0
          %2348 = vmatprep.subr.bf16.mxu0 0
          %2349 = vmatpush1.bf16.msra.mxu0 0
          %2350 = vmatprep.subr.bf16.mxu0 0
          %2351 = vmatpush1.bf16.msra.mxu0 0
          %2352 = vmatprep.mubr.bf16.mxu0 0
          %2353 = vmatmul.mubr.bf16.gmra.mrb[0].mxu0 %v1521
          %v2354 = vpop.f32.mrb[0].mxu0
          %v2355 = vadd.f32 %v2314, %v2354
          %v2356 = vpop.f32.mrb[0].mxu0
          %v2357 = vadd.f32 %v2316, %v2356
          %v2358 = vpop.f32.mrb[0].mxu0
          %v2359 = vpop.f32.mrb[0].mxu0
          %2360 = vdwg.mxu0
          %v2361 = vld [vmem:[%s456] ss:$2 sm:$0xf]
          %v2363 = vlaneseq
          %v2364 = vshrl.u32 %v2363, 7
          %v2365 = vsub.s32 0, %v2364
          %v2366 = vrot.slane %v2361, %v2365
          %v2367 = vlaneseq
          %v2368 = vshrl.u32 %v2367, 7
          %v2369 = vsub.s32 1, %v2368
          %v2370 = vrot.slane %v2361, %v2369
          %v2371 = vlaneseq
          %v2372 = vshrl.u32 %v2371, 7
          %v2373 = vsub.s32 2, %v2372
          %v2374 = vrot.slane %v2361, %v2373
          %v2375 = vlaneseq
          %v2376 = vshrl.u32 %v2375, 7
          %v2377 = vsub.s32 3, %v2376
          %v2378 = vrot.slane %v2361, %v2377
          %v2383 = vmul.f32 %v1945, %v2366
          %v2384 = vmul.f32 %v1947, %v2370
          %v2385 = vmul.f32 %v2355, %v2374
          %v2386 = vmul.f32 %v2357, %v2378
          %s2387 = scalar_lea.vmem %s456, 1 [#allocation6]
          %v2388 = vld [vmem:[%s2387] ss:$2 sm:$0xf]
          %v2390 = vlaneseq
          %v2391 = vshrl.u32 %v2390, 7
          %v2392 = vsub.s32 0, %v2391
          %v2393 = vrot.slane %v2388, %v2392
          %v2394 = vlaneseq
          %v2395 = vshrl.u32 %v2394, 7
          %v2396 = vsub.s32 1, %v2395
          %v2397 = vrot.slane %v2388, %v2396
          %v2398 = vlaneseq
          %v2399 = vshrl.u32 %v2398, 7
          %v2400 = vsub.s32 2, %v2399
          %v2401 = vrot.slane %v2388, %v2400
          %v2402 = vlaneseq
          %v2403 = vshrl.u32 %v2402, 7
          %v2404 = vsub.s32 3, %v2403
          %v2405 = vrot.slane %v2388, %v2404
          %v2410 = vadd.f32 %v2383, %v2393
          %v2411 = vadd.f32 %v2384, %v2397
          %v2412 = vadd.f32 %v2385, %v2401
          %v2413 = vadd.f32 %v2386, %v2405
          %v2414 = vmax.f32 %v2410, 0.0
          %v2415 = vmax.f32 %v2411, 0.0
          %v2416 = vmax.f32 %v2412, 0.0
          %v2417 = vmax.f32 %v2413, 0.0
          %s2418 = smul.u32 %s31, 512
          %s2419 = sshra.s32 %s2418, 7
          %s2420 = sand.u32 %s2418, 127
          %s2421 = smul.addr %s2419, 8
          %s2422 = scalar_lea.vmem [#allocation2], %s2421
          %2423 = vst [vmem:[%s2422] sm:$0xff] %v2414
          %2424 = vst [vmem:[%s2422 + $0x8] sm:$0xff] %v2415
          %2425 = vst [vmem:[%s2422 + $0x10] sm:$0xff] %v2416
          %2426 = vst [vmem:[%s2422 + $0x18] sm:$0xff] %v2417
        $region92: #{ember_nn_forward.1} parent=55 // pred_fallthru
          _
        %p2427 = scmp.ge.s32.totalorder %s31, 8
        // Predicated region
        $region93: #{ember_nn_forward.1} parent=55 // pred_check
          %p2428 = pneg %p2427
        $region94: #{ember_nn_forward.1} parent=55 // pred_check_branch
          %2430 = sbr.rel (%p2428) target = $region96
        $region95: #{ember_nn_forward.1} parent=55 // pred_region
          %s2431 = ssub.s32 %s31, 8
          %v2432 = vld [vmem:[%s465] sm:$0xff]
          %v2433 = vld [vmem:[%s465 + $0x8] sm:$0xff]
          %v2434 = vld [vmem:[%s465 + $0x10] sm:$0xff]
          %v2435 = vld [vmem:[%s465 + $0x18] sm:$0xff]
          %v2436 = vld [vmem:[%s465 + $0x20] sm:$0xff]
          %v2437 = vld [vmem:[%s465 + $0x28] sm:$0xff]
          %v2438 = vld [vmem:[%s465 + $0x30] sm:$0xff]
          %v2439 = vld [vmem:[%s465 + $0x38] sm:$0xff]
          %v2440 = vld [vmem:[%s465 + $0x40] sm:$0xff]
          %v2441 = vld [vmem:[%s465 + $0x48] sm:$0xff]
          %v2442 = vld [vmem:[%s465 + $0x50] sm:$0xff]
          %v2443 = vld [vmem:[%s465 + $0x58] sm:$0xff]
          %v2444 = vld [vmem:[%s465 + $0x60] sm:$0xff]
          %v2445 = vld [vmem:[%s465 + $0x68] sm:$0xff]
          %v2446 = vld [vmem:[%s465 + $0x70] sm:$0xff]
          %v2447 = vld [vmem:[%s465 + $0x78] sm:$0xff]
          %v2448 = vld [vmem:[%s465 + $0x80] sm:$0xff]
          %v2449 = vld [vmem:[%s465 + $0x88] sm:$0xff]
          %v2450 = vld [vmem:[%s465 + $0x90] sm:$0xff]
          %v2451 = vld [vmem:[%s465 + $0x98] sm:$0xff]
          %v2452 = vld [vmem:[%s465 + $0xa0] sm:$0xff]
          %v2453 = vld [vmem:[%s465 + $0xa8] sm:$0xff]
          %v2454 = vld [vmem:[%s465 + $0xb0] sm:$0xff]
          %v2455 = vld [vmem:[%s465 + $0xb8] sm:$0xff]
          %v2456 = vld [vmem:[%s465 + $0xc0] sm:$0xff]
          %v2457 = vld [vmem:[%s465 + $0xc8] sm:$0xff]
          %v2458 = vld [vmem:[%s465 + $0xd0] sm:$0xff]
          %v2459 = vld [vmem:[%s465 + $0xd8] sm:$0xff]
          %v2460 = vld [vmem:[%s465 + $0xe0] sm:$0xff]
          %v2461 = vld [vmem:[%s465 + $0xe8] sm:$0xff]
          %v2462 = vld [vmem:[%s465 + $0xf0] sm:$0xff]
          %v2463 = vld [vmem:[%s465 + $0xf8] sm:$0xff]
          %v2464 = vld [vmem:[%s465 + $0x100] sm:$0xff]
          %v2465 = vld [vmem:[%s465 + $0x108] sm:$0xff]
          %v2466 = vld [vmem:[%s465 + $0x110] sm:$0xff]
          %v2467 = vld [vmem:[%s465 + $0x118] sm:$0xff]
          %v2468 = vld [vmem:[%s465 + $0x120] sm:$0xff]
          %v2469 = vld [vmem:[%s465 + $0x128] sm:$0xff]
          %v2470 = vld [vmem:[%s465 + $0x130] sm:$0xff]
          %v2471 = vld [vmem:[%s465 + $0x138] sm:$0xff]
          %v2472 = vld [vmem:[%s465 + $0x140] sm:$0xff]
          %v2473 = vld [vmem:[%s465 + $0x148] sm:$0xff]
          %v2474 = vld [vmem:[%s465 + $0x150] sm:$0xff]
          %v2475 = vld [vmem:[%s465 + $0x158] sm:$0xff]
          %v2476 = vld [vmem:[%s465 + $0x160] sm:$0xff]
          %v2477 = vld [vmem:[%s465 + $0x168] sm:$0xff]
          %v2478 = vld [vmem:[%s465 + $0x170] sm:$0xff]
          %v2479 = vld [vmem:[%s465 + $0x178] sm:$0xff]
          %v2480 = vld [vmem:[%s465 + $0x180] sm:$0xff]
          %v2481 = vld [vmem:[%s465 + $0x188] sm:$0xff]
          %v2482 = vld [vmem:[%s465 + $0x190] sm:$0xff]
          %v2483 = vld [vmem:[%s465 + $0x198] sm:$0xff]
          %v2484 = vld [vmem:[%s465 + $0x1a0] sm:$0xff]
          %v2485 = vld [vmem:[%s465 + $0x1a8] sm:$0xff]
          %v2486 = vld [vmem:[%s465 + $0x1b0] sm:$0xff]
          %v2487 = vld [vmem:[%s465 + $0x1b8] sm:$0xff]
          %v2488 = vld [vmem:[%s465 + $0x1c0] sm:$0xff]
          %v2489 = vld [vmem:[%s465 + $0x1c8] sm:$0xff]
          %v2490 = vld [vmem:[%s465 + $0x1d0] sm:$0xff]
          %v2491 = vld [vmem:[%s465 + $0x1d8] sm:$0xff]
          %v2492 = vld [vmem:[%s465 + $0x1e0] sm:$0xff]
          %v2493 = vld [vmem:[%s465 + $0x1e8] sm:$0xff]
          %v2494 = vld [vmem:[%s465 + $0x1f0] sm:$0xff]
          %v2495 = vld [vmem:[%s465 + $0x1f8] sm:$0xff]
          %v2496 = vld [vmem:[%s465 + $0x200] sm:$0xff]
          %v2497 = vld [vmem:[%s465 + $0x208] sm:$0xff]
          %v2498 = vld [vmem:[%s465 + $0x210] sm:$0xff]
          %v2499 = vld [vmem:[%s465 + $0x218] sm:$0xff]
          %v2500 = vld [vmem:[%s465 + $0x220] sm:$0xff]
          %v2501 = vld [vmem:[%s465 + $0x228] sm:$0xff]
          %v2502 = vld [vmem:[%s465 + $0x230] sm:$0xff]
          %v2503 = vld [vmem:[%s465 + $0x238] sm:$0xff]
          %v2504 = vld [vmem:[%s465 + $0x240] sm:$0xff]
          %v2505 = vld [vmem:[%s465 + $0x248] sm:$0xff]
          %v2506 = vld [vmem:[%s465 + $0x250] sm:$0xff]
          %v2507 = vld [vmem:[%s465 + $0x258] sm:$0xff]
          %v2508 = vld [vmem:[%s465 + $0x260] sm:$0xff]
          %v2509 = vld [vmem:[%s465 + $0x268] sm:$0xff]
          %v2510 = vld [vmem:[%s465 + $0x270] sm:$0xff]
          %v2511 = vld [vmem:[%s465 + $0x278] sm:$0xff]
          %v2512 = vld [vmem:[%s465 + $0x280] sm:$0xff]
          %v2513 = vld [vmem:[%s465 + $0x288] sm:$0xff]
          %v2514 = vld [vmem:[%s465 + $0x290] sm:$0xff]
          %v2515 = vld [vmem:[%s465 + $0x298] sm:$0xff]
          %v2516 = vld [vmem:[%s465 + $0x2a0] sm:$0xff]
          %v2517 = vld [vmem:[%s465 + $0x2a8] sm:$0xff]
          %v2518 = vld [vmem:[%s465 + $0x2b0] sm:$0xff]
          %v2519 = vld [vmem:[%s465 + $0x2b8] sm:$0xff]
          %v2520 = vld [vmem:[%s465 + $0x2c0] sm:$0xff]
          %v2521 = vld [vmem:[%s465 + $0x2c8] sm:$0xff]
          %v2522 = vld [vmem:[%s465 + $0x2d0] sm:$0xff]
          %v2523 = vld [vmem:[%s465 + $0x2d8] sm:$0xff]
          %v2524 = vld [vmem:[%s465 + $0x2e0] sm:$0xff]
          %v2525 = vld [vmem:[%s465 + $0x2e8] sm:$0xff]
          %v2526 = vld [vmem:[%s465 + $0x2f0] sm:$0xff]
          %v2527 = vld [vmem:[%s465 + $0x2f8] sm:$0xff]
          %v2528 = vld [vmem:[%s465 + $0x300] sm:$0xff]
          %v2529 = vld [vmem:[%s465 + $0x308] sm:$0xff]
          %v2530 = vld [vmem:[%s465 + $0x310] sm:$0xff]
          %v2531 = vld [vmem:[%s465 + $0x318] sm:$0xff]
          %v2532 = vld [vmem:[%s465 + $0x320] sm:$0xff]
          %v2533 = vld [vmem:[%s465 + $0x328] sm:$0xff]
          %v2534 = vld [vmem:[%s465 + $0x330] sm:$0xff]
          %v2535 = vld [vmem:[%s465 + $0x338] sm:$0xff]
          %v2536 = vld [vmem:[%s465 + $0x340] sm:$0xff]
          %v2537 = vld [vmem:[%s465 + $0x348] sm:$0xff]
          %v2538 = vld [vmem:[%s465 + $0x350] sm:$0xff]
          %v2539 = vld [vmem:[%s465 + $0x358] sm:$0xff]
          %v2540 = vld [vmem:[%s465 + $0x360] sm:$0xff]
          %v2541 = vld [vmem:[%s465 + $0x368] sm:$0xff]
          %v2542 = vld [vmem:[%s465 + $0x370] sm:$0xff]
          %v2543 = vld [vmem:[%s465 + $0x378] sm:$0xff]
          %v2544 = vld [vmem:[%s465 + $0x380] sm:$0xff]
          %v2545 = vld [vmem:[%s465 + $0x388] sm:$0xff]
          %v2546 = vld [vmem:[%s465 + $0x390] sm:$0xff]
          %v2547 = vld [vmem:[%s465 + $0x398] sm:$0xff]
          %v2548 = vld [vmem:[%s465 + $0x3a0] sm:$0xff]
          %v2549 = vld [vmem:[%s465 + $0x3a8] sm:$0xff]
          %v2550 = vld [vmem:[%s465 + $0x3b0] sm:$0xff]
          %v2551 = vld [vmem:[%s465 + $0x3b8] sm:$0xff]
          %v2552 = vld [vmem:[%s465 + $0x3c0] sm:$0xff]
          %v2553 = vld [vmem:[%s465 + $0x3c8] sm:$0xff]
          %v2554 = vld [vmem:[%s465 + $0x3d0] sm:$0xff]
          %v2555 = vld [vmem:[%s465 + $0x3d8] sm:$0xff]
          %v2556 = vld [vmem:[%s465 + $0x3e0] sm:$0xff]
          %v2557 = vld [vmem:[%s465 + $0x3e8] sm:$0xff]
          %v2558 = vld [vmem:[%s465 + $0x3f0] sm:$0xff]
          %v2559 = vld [vmem:[%s465 + $0x3f8] sm:$0xff]
          %v2560 = vld [vmem:[%s465 + $0x400] sm:$0xff]
          %v2561 = vld [vmem:[%s465 + $0x408] sm:$0xff]
          %v2562 = vld [vmem:[%s465 + $0x410] sm:$0xff]
          %v2563 = vld [vmem:[%s465 + $0x418] sm:$0xff]
          %v2564 = vld [vmem:[%s465 + $0x420] sm:$0xff]
          %v2565 = vld [vmem:[%s465 + $0x428] sm:$0xff]
          %v2566 = vld [vmem:[%s465 + $0x430] sm:$0xff]
          %v2567 = vld [vmem:[%s465 + $0x438] sm:$0xff]
          %v2568 = vld [vmem:[%s465 + $0x440] sm:$0xff]
          %v2569 = vld [vmem:[%s465 + $0x448] sm:$0xff]
          %v2570 = vld [vmem:[%s465 + $0x450] sm:$0xff]
          %v2571 = vld [vmem:[%s465 + $0x458] sm:$0xff]
          %v2572 = vld [vmem:[%s465 + $0x460] sm:$0xff]
          %v2573 = vld [vmem:[%s465 + $0x468] sm:$0xff]
          %v2574 = vld [vmem:[%s465 + $0x470] sm:$0xff]
          %v2575 = vld [vmem:[%s465 + $0x478] sm:$0xff]
          %v2576 = vld [vmem:[%s465 + $0x480] sm:$0xff]
          %v2577 = vld [vmem:[%s465 + $0x488] sm:$0xff]
          %v2578 = vld [vmem:[%s465 + $0x490] sm:$0xff]
          %v2579 = vld [vmem:[%s465 + $0x498] sm:$0xff]
          %v2580 = vld [vmem:[%s465 + $0x4a0] sm:$0xff]
          %v2581 = vld [vmem:[%s465 + $0x4a8] sm:$0xff]
          %v2582 = vld [vmem:[%s465 + $0x4b0] sm:$0xff]
          %v2583 = vld [vmem:[%s465 + $0x4b8] sm:$0xff]
          %v2584 = vld [vmem:[%s465 + $0x4c0] sm:$0xff]
          %v2585 = vld [vmem:[%s465 + $0x4c8] sm:$0xff]
          %v2586 = vld [vmem:[%s465 + $0x4d0] sm:$0xff]
          %v2587 = vld [vmem:[%s465 + $0x4d8] sm:$0xff]
          %v2588 = vld [vmem:[%s465 + $0x4e0] sm:$0xff]
          %v2589 = vld [vmem:[%s465 + $0x4e8] sm:$0xff]
          %v2590 = vld [vmem:[%s465 + $0x4f0] sm:$0xff]
          %v2591 = vld [vmem:[%s465 + $0x4f8] sm:$0xff]
          %v2592 = vld [vmem:[%s465 + $0x500] sm:$0xff]
          %v2593 = vld [vmem:[%s465 + $0x508] sm:$0xff]
          %v2594 = vld [vmem:[%s465 + $0x510] sm:$0xff]
          %v2595 = vld [vmem:[%s465 + $0x518] sm:$0xff]
          %v2596 = vld [vmem:[%s465 + $0x520] sm:$0xff]
          %v2597 = vld [vmem:[%s465 + $0x528] sm:$0xff]
          %v2598 = vld [vmem:[%s465 + $0x530] sm:$0xff]
          %v2599 = vld [vmem:[%s465 + $0x538] sm:$0xff]
          %v2600 = vld [vmem:[%s465 + $0x540] sm:$0xff]
          %v2601 = vld [vmem:[%s465 + $0x548] sm:$0xff]
          %v2602 = vld [vmem:[%s465 + $0x550] sm:$0xff]
          %v2603 = vld [vmem:[%s465 + $0x558] sm:$0xff]
          %v2604 = vld [vmem:[%s465 + $0x560] sm:$0xff]
          %v2605 = vld [vmem:[%s465 + $0x568] sm:$0xff]
          %v2606 = vld [vmem:[%s465 + $0x570] sm:$0xff]
          %v2607 = vld [vmem:[%s465 + $0x578] sm:$0xff]
          %v2608 = vld [vmem:[%s465 + $0x580] sm:$0xff]
          %v2609 = vld [vmem:[%s465 + $0x588] sm:$0xff]
          %v2610 = vld [vmem:[%s465 + $0x590] sm:$0xff]
          %v2611 = vld [vmem:[%s465 + $0x598] sm:$0xff]
          %v2612 = vld [vmem:[%s465 + $0x5a0] sm:$0xff]
          %v2613 = vld [vmem:[%s465 + $0x5a8] sm:$0xff]
          %v2614 = vld [vmem:[%s465 + $0x5b0] sm:$0xff]
          %v2615 = vld [vmem:[%s465 + $0x5b8] sm:$0xff]
          %v2616 = vld [vmem:[%s465 + $0x5c0] sm:$0xff]
          %v2617 = vld [vmem:[%s465 + $0x5c8] sm:$0xff]
          %v2618 = vld [vmem:[%s465 + $0x5d0] sm:$0xff]
          %v2619 = vld [vmem:[%s465 + $0x5d8] sm:$0xff]
          %v2620 = vld [vmem:[%s465 + $0x5e0] sm:$0xff]
          %v2621 = vld [vmem:[%s465 + $0x5e8] sm:$0xff]
          %v2622 = vld [vmem:[%s465 + $0x5f0] sm:$0xff]
          %v2623 = vld [vmem:[%s465 + $0x5f8] sm:$0xff]
          %v2624 = vld [vmem:[%s465 + $0x600] sm:$0xff]
          %v2625 = vld [vmem:[%s465 + $0x608] sm:$0xff]
          %v2626 = vld [vmem:[%s465 + $0x610] sm:$0xff]
          %v2627 = vld [vmem:[%s465 + $0x618] sm:$0xff]
          %v2628 = vld [vmem:[%s465 + $0x620] sm:$0xff]
          %v2629 = vld [vmem:[%s465 + $0x628] sm:$0xff]
          %v2630 = vld [vmem:[%s465 + $0x630] sm:$0xff]
          %v2631 = vld [vmem:[%s465 + $0x638] sm:$0xff]
          %v2632 = vld [vmem:[%s465 + $0x640] sm:$0xff]
          %v2633 = vld [vmem:[%s465 + $0x648] sm:$0xff]
          %v2634 = vld [vmem:[%s465 + $0x650] sm:$0xff]
          %v2635 = vld [vmem:[%s465 + $0x658] sm:$0xff]
          %v2636 = vld [vmem:[%s465 + $0x660] sm:$0xff]
          %v2637 = vld [vmem:[%s465 + $0x668] sm:$0xff]
          %v2638 = vld [vmem:[%s465 + $0x670] sm:$0xff]
          %v2639 = vld [vmem:[%s465 + $0x678] sm:$0xff]
          %v2640 = vld [vmem:[%s465 + $0x680] sm:$0xff]
          %v2641 = vld [vmem:[%s465 + $0x688] sm:$0xff]
          %v2642 = vld [vmem:[%s465 + $0x690] sm:$0xff]
          %v2643 = vld [vmem:[%s465 + $0x698] sm:$0xff]
          %v2644 = vld [vmem:[%s465 + $0x6a0] sm:$0xff]
          %v2645 = vld [vmem:[%s465 + $0x6a8] sm:$0xff]
          %v2646 = vld [vmem:[%s465 + $0x6b0] sm:$0xff]
          %v2647 = vld [vmem:[%s465 + $0x6b8] sm:$0xff]
          %v2648 = vld [vmem:[%s465 + $0x6c0] sm:$0xff]
          %v2649 = vld [vmem:[%s465 + $0x6c8] sm:$0xff]
          %v2650 = vld [vmem:[%s465 + $0x6d0] sm:$0xff]
          %v2651 = vld [vmem:[%s465 + $0x6d8] sm:$0xff]
          %v2652 = vld [vmem:[%s465 + $0x6e0] sm:$0xff]
          %v2653 = vld [vmem:[%s465 + $0x6e8] sm:$0xff]
          %v2654 = vld [vmem:[%s465 + $0x6f0] sm:$0xff]
          %v2655 = vld [vmem:[%s465 + $0x6f8] sm:$0xff]
          %v2656 = vld [vmem:[%s465 + $0x700] sm:$0xff]
          %v2657 = vld [vmem:[%s465 + $0x708] sm:$0xff]
          %v2658 = vld [vmem:[%s465 + $0x710] sm:$0xff]
          %v2659 = vld [vmem:[%s465 + $0x718] sm:$0xff]
          %v2660 = vld [vmem:[%s465 + $0x720] sm:$0xff]
          %v2661 = vld [vmem:[%s465 + $0x728] sm:$0xff]
          %v2662 = vld [vmem:[%s465 + $0x730] sm:$0xff]
          %v2663 = vld [vmem:[%s465 + $0x738] sm:$0xff]
          %v2664 = vld [vmem:[%s465 + $0x740] sm:$0xff]
          %v2665 = vld [vmem:[%s465 + $0x748] sm:$0xff]
          %v2666 = vld [vmem:[%s465 + $0x750] sm:$0xff]
          %v2667 = vld [vmem:[%s465 + $0x758] sm:$0xff]
          %v2668 = vld [vmem:[%s465 + $0x760] sm:$0xff]
          %v2669 = vld [vmem:[%s465 + $0x768] sm:$0xff]
          %v2670 = vld [vmem:[%s465 + $0x770] sm:$0xff]
          %v2671 = vld [vmem:[%s465 + $0x778] sm:$0xff]
          %v2672 = vld [vmem:[%s465 + $0x780] sm:$0xff]
          %v2673 = vld [vmem:[%s465 + $0x788] sm:$0xff]
          %v2674 = vld [vmem:[%s465 + $0x790] sm:$0xff]
          %v2675 = vld [vmem:[%s465 + $0x798] sm:$0xff]
          %v2676 = vld [vmem:[%s465 + $0x7a0] sm:$0xff]
          %v2677 = vld [vmem:[%s465 + $0x7a8] sm:$0xff]
          %v2678 = vld [vmem:[%s465 + $0x7b0] sm:$0xff]
          %v2679 = vld [vmem:[%s465 + $0x7b8] sm:$0xff]
          %v2680 = vld [vmem:[%s465 + $0x7c0] sm:$0xff]
          %v2681 = vld [vmem:[%s465 + $0x7c8] sm:$0xff]
          %v2682 = vld [vmem:[%s465 + $0x7d0] sm:$0xff]
          %v2683 = vld [vmem:[%s465 + $0x7d8] sm:$0xff]
          %v2684 = vld [vmem:[%s465 + $0x7e0] sm:$0xff]
          %v2685 = vld [vmem:[%s465 + $0x7e8] sm:$0xff]
          %v2686 = vld [vmem:[%s465 + $0x7f0] sm:$0xff]
          %v2687 = vld [vmem:[%s465 + $0x7f8] sm:$0xff]
          %v2688 = vld [vmem:[%s465 + $0x800] sm:$0xff]
          %v2689 = vld [vmem:[%s465 + $0x808] sm:$0xff]
          %v2690 = vld [vmem:[%s465 + $0x810] sm:$0xff]
          %v2691 = vld [vmem:[%s465 + $0x818] sm:$0xff]
          %v2692 = vld [vmem:[%s465 + $0x820] sm:$0xff]
          %v2693 = vld [vmem:[%s465 + $0x828] sm:$0xff]
          %v2694 = vld [vmem:[%s465 + $0x830] sm:$0xff]
          %v2695 = vld [vmem:[%s465 + $0x838] sm:$0xff]
          %v2696 = vld [vmem:[%s465 + $0x840] sm:$0xff]
          %v2697 = vld [vmem:[%s465 + $0x848] sm:$0xff]
          %v2698 = vld [vmem:[%s465 + $0x850] sm:$0xff]
          %v2699 = vld [vmem:[%s465 + $0x858] sm:$0xff]
          %v2700 = vld [vmem:[%s465 + $0x860] sm:$0xff]
          %v2701 = vld [vmem:[%s465 + $0x868] sm:$0xff]
          %v2702 = vld [vmem:[%s465 + $0x870] sm:$0xff]
          %v2703 = vld [vmem:[%s465 + $0x878] sm:$0xff]
          %v2704 = vld [vmem:[%s465 + $0x880] sm:$0xff]
          %v2705 = vld [vmem:[%s465 + $0x888] sm:$0xff]
          %v2706 = vld [vmem:[%s465 + $0x890] sm:$0xff]
          %v2707 = vld [vmem:[%s465 + $0x898] sm:$0xff]
          %v2708 = vld [vmem:[%s465 + $0x8a0] sm:$0xff]
          %v2709 = vld [vmem:[%s465 + $0x8a8] sm:$0xff]
          %v2710 = vld [vmem:[%s465 + $0x8b0] sm:$0xff]
          %v2711 = vld [vmem:[%s465 + $0x8b8] sm:$0xff]
          %v2712 = vld [vmem:[%s465 + $0x8c0] sm:$0xff]
          %v2713 = vld [vmem:[%s465 + $0x8c8] sm:$0xff]
          %v2714 = vld [vmem:[%s465 + $0x8d0] sm:$0xff]
          %v2715 = vld [vmem:[%s465 + $0x8d8] sm:$0xff]
          %v2716 = vld [vmem:[%s465 + $0x8e0] sm:$0xff]
          %v2717 = vld [vmem:[%s465 + $0x8e8] sm:$0xff]
          %v2718 = vld [vmem:[%s465 + $0x8f0] sm:$0xff]
          %v2719 = vld [vmem:[%s465 + $0x8f8] sm:$0xff]
          %v2720 = vld [vmem:[%s465 + $0x900] sm:$0xff]
          %v2721 = vld [vmem:[%s465 + $0x908] sm:$0xff]
          %v2722 = vld [vmem:[%s465 + $0x910] sm:$0xff]
          %v2723 = vld [vmem:[%s465 + $0x918] sm:$0xff]
          %v2724 = vld [vmem:[%s465 + $0x920] sm:$0xff]
          %v2725 = vld [vmem:[%s465 + $0x928] sm:$0xff]
          %v2726 = vld [vmem:[%s465 + $0x930] sm:$0xff]
          %v2727 = vld [vmem:[%s465 + $0x938] sm:$0xff]
          %v2728 = vld [vmem:[%s465 + $0x940] sm:$0xff]
          %v2729 = vld [vmem:[%s465 + $0x948] sm:$0xff]
          %v2730 = vld [vmem:[%s465 + $0x950] sm:$0xff]
          %v2731 = vld [vmem:[%s465 + $0x958] sm:$0xff]
          %v2732 = vld [vmem:[%s465 + $0x960] sm:$0xff]
          %v2733 = vld [vmem:[%s465 + $0x968] sm:$0xff]
          %v2734 = vld [vmem:[%s465 + $0x970] sm:$0xff]
          %v2735 = vld [vmem:[%s465 + $0x978] sm:$0xff]
          %v2736 = vld [vmem:[%s465 + $0x980] sm:$0xff]
          %v2737 = vld [vmem:[%s465 + $0x988] sm:$0xff]
          %v2738 = vld [vmem:[%s465 + $0x990] sm:$0xff]
          %v2739 = vld [vmem:[%s465 + $0x998] sm:$0xff]
          %v2740 = vld [vmem:[%s465 + $0x9a0] sm:$0xff]
          %v2741 = vld [vmem:[%s465 + $0x9a8] sm:$0xff]
          %v2742 = vld [vmem:[%s465 + $0x9b0] sm:$0xff]
          %v2743 = vld [vmem:[%s465 + $0x9b8] sm:$0xff]
          %v2744 = vld [vmem:[%s465 + $0x9c0] sm:$0xff]
          %v2745 = vld [vmem:[%s465 + $0x9c8] sm:$0xff]
          %v2746 = vld [vmem:[%s465 + $0x9d0] sm:$0xff]
          %v2747 = vld [vmem:[%s465 + $0x9d8] sm:$0xff]
          %v2748 = vld [vmem:[%s465 + $0x9e0] sm:$0xff]
          %v2749 = vld [vmem:[%s465 + $0x9e8] sm:$0xff]
          %v2750 = vld [vmem:[%s465 + $0x9f0] sm:$0xff]
          %v2751 = vld [vmem:[%s465 + $0x9f8] sm:$0xff]
          %v2752 = vld [vmem:[%s465 + $0xa00] sm:$0xff]
          %v2753 = vld [vmem:[%s465 + $0xa08] sm:$0xff]
          %v2754 = vld [vmem:[%s465 + $0xa10] sm:$0xff]
          %v2755 = vld [vmem:[%s465 + $0xa18] sm:$0xff]
          %v2756 = vld [vmem:[%s465 + $0xa20] sm:$0xff]
          %v2757 = vld [vmem:[%s465 + $0xa28] sm:$0xff]
          %v2758 = vld [vmem:[%s465 + $0xa30] sm:$0xff]
          %v2759 = vld [vmem:[%s465 + $0xa38] sm:$0xff]
          %v2760 = vld [vmem:[%s465 + $0xa40] sm:$0xff]
          %v2761 = vld [vmem:[%s465 + $0xa48] sm:$0xff]
          %v2762 = vld [vmem:[%s465 + $0xa50] sm:$0xff]
          %v2763 = vld [vmem:[%s465 + $0xa58] sm:$0xff]
          %v2764 = vld [vmem:[%s465 + $0xa60] sm:$0xff]
          %v2765 = vld [vmem:[%s465 + $0xa68] sm:$0xff]
          %v2766 = vld [vmem:[%s465 + $0xa70] sm:$0xff]
          %v2767 = vld [vmem:[%s465 + $0xa78] sm:$0xff]
          %v2768 = vld [vmem:[%s465 + $0xa80] sm:$0xff]
          %v2769 = vld [vmem:[%s465 + $0xa88] sm:$0xff]
          %v2770 = vld [vmem:[%s465 + $0xa90] sm:$0xff]
          %v2771 = vld [vmem:[%s465 + $0xa98] sm:$0xff]
          %v2772 = vld [vmem:[%s465 + $0xaa0] sm:$0xff]
          %v2773 = vld [vmem:[%s465 + $0xaa8] sm:$0xff]
          %v2774 = vld [vmem:[%s465 + $0xab0] sm:$0xff]
          %v2775 = vld [vmem:[%s465 + $0xab8] sm:$0xff]
          %v2776 = vld [vmem:[%s465 + $0xac0] sm:$0xff]
          %v2777 = vld [vmem:[%s465 + $0xac8] sm:$0xff]
          %v2778 = vld [vmem:[%s465 + $0xad0] sm:$0xff]
          %v2779 = vld [vmem:[%s465 + $0xad8] sm:$0xff]
          %v2780 = vld [vmem:[%s465 + $0xae0] sm:$0xff]
          %v2781 = vld [vmem:[%s465 + $0xae8] sm:$0xff]
          %v2782 = vld [vmem:[%s465 + $0xaf0] sm:$0xff]
          %v2783 = vld [vmem:[%s465 + $0xaf8] sm:$0xff]
          %v2784 = vld [vmem:[%s465 + $0xb00] sm:$0xff]
          %v2785 = vld [vmem:[%s465 + $0xb08] sm:$0xff]
          %v2786 = vld [vmem:[%s465 + $0xb10] sm:$0xff]
          %v2787 = vld [vmem:[%s465 + $0xb18] sm:$0xff]
          %v2788 = vld [vmem:[%s465 + $0xb20] sm:$0xff]
          %v2789 = vld [vmem:[%s465 + $0xb28] sm:$0xff]
          %v2790 = vld [vmem:[%s465 + $0xb30] sm:$0xff]
          %v2791 = vld [vmem:[%s465 + $0xb38] sm:$0xff]
          %v2792 = vld [vmem:[%s465 + $0xb40] sm:$0xff]
          %v2793 = vld [vmem:[%s465 + $0xb48] sm:$0xff]
          %v2794 = vld [vmem:[%s465 + $0xb50] sm:$0xff]
          %v2795 = vld [vmem:[%s465 + $0xb58] sm:$0xff]
          %v2796 = vld [vmem:[%s465 + $0xb60] sm:$0xff]
          %v2797 = vld [vmem:[%s465 + $0xb68] sm:$0xff]
          %v2798 = vld [vmem:[%s465 + $0xb70] sm:$0xff]
          %v2799 = vld [vmem:[%s465 + $0xb78] sm:$0xff]
          %v2800 = vld [vmem:[%s465 + $0xb80] sm:$0xff]
          %v2801 = vld [vmem:[%s465 + $0xb88] sm:$0xff]
          %v2802 = vld [vmem:[%s465 + $0xb90] sm:$0xff]
          %v2803 = vld [vmem:[%s465 + $0xb98] sm:$0xff]
          %v2804 = vld [vmem:[%s465 + $0xba0] sm:$0xff]
          %v2805 = vld [vmem:[%s465 + $0xba8] sm:$0xff]
          %v2806 = vld [vmem:[%s465 + $0xbb0] sm:$0xff]
          %v2807 = vld [vmem:[%s465 + $0xbb8] sm:$0xff]
          %v2808 = vld [vmem:[%s465 + $0xbc0] sm:$0xff]
          %v2809 = vld [vmem:[%s465 + $0xbc8] sm:$0xff]
          %v2810 = vld [vmem:[%s465 + $0xbd0] sm:$0xff]
          %v2811 = vld [vmem:[%s465 + $0xbd8] sm:$0xff]
          %v2812 = vld [vmem:[%s465 + $0xbe0] sm:$0xff]
          %v2813 = vld [vmem:[%s465 + $0xbe8] sm:$0xff]
          %v2814 = vld [vmem:[%s465 + $0xbf0] sm:$0xff]
          %v2815 = vld [vmem:[%s465 + $0xbf8] sm:$0xff]
          %v2816 = vld [vmem:[%s465 + $0xc00] sm:$0xff]
          %v2817 = vld [vmem:[%s465 + $0xc08] sm:$0xff]
          %v2818 = vld [vmem:[%s465 + $0xc10] sm:$0xff]
          %v2819 = vld [vmem:[%s465 + $0xc18] sm:$0xff]
          %v2820 = vld [vmem:[%s465 + $0xc20] sm:$0xff]
          %v2821 = vld [vmem:[%s465 + $0xc28] sm:$0xff]
          %v2822 = vld [vmem:[%s465 + $0xc30] sm:$0xff]
          %v2823 = vld [vmem:[%s465 + $0xc38] sm:$0xff]
          %v2824 = vld [vmem:[%s465 + $0xc40] sm:$0xff]
          %v2825 = vld [vmem:[%s465 + $0xc48] sm:$0xff]
          %v2826 = vld [vmem:[%s465 + $0xc50] sm:$0xff]
          %v2827 = vld [vmem:[%s465 + $0xc58] sm:$0xff]
          %v2828 = vld [vmem:[%s465 + $0xc60] sm:$0xff]
          %v2829 = vld [vmem:[%s465 + $0xc68] sm:$0xff]
          %v2830 = vld [vmem:[%s465 + $0xc70] sm:$0xff]
          %v2831 = vld [vmem:[%s465 + $0xc78] sm:$0xff]
          %v2832 = vld [vmem:[%s465 + $0xc80] sm:$0xff]
          %v2833 = vld [vmem:[%s465 + $0xc88] sm:$0xff]
          %v2834 = vld [vmem:[%s465 + $0xc90] sm:$0xff]
          %v2835 = vld [vmem:[%s465 + $0xc98] sm:$0xff]
          %v2836 = vld [vmem:[%s465 + $0xca0] sm:$0xff]
          %v2837 = vld [vmem:[%s465 + $0xca8] sm:$0xff]
          %v2838 = vld [vmem:[%s465 + $0xcb0] sm:$0xff]
          %v2839 = vld [vmem:[%s465 + $0xcb8] sm:$0xff]
          %v2840 = vld [vmem:[%s465 + $0xcc0] sm:$0xff]
          %v2841 = vld [vmem:[%s465 + $0xcc8] sm:$0xff]
          %v2842 = vld [vmem:[%s465 + $0xcd0] sm:$0xff]
          %v2843 = vld [vmem:[%s465 + $0xcd8] sm:$0xff]
          %v2844 = vld [vmem:[%s465 + $0xce0] sm:$0xff]
          %v2845 = vld [vmem:[%s465 + $0xce8] sm:$0xff]
          %v2846 = vld [vmem:[%s465 + $0xcf0] sm:$0xff]
          %v2847 = vld [vmem:[%s465 + $0xcf8] sm:$0xff]
          %v2848 = vld [vmem:[%s465 + $0xd00] sm:$0xff]
          %v2849 = vld [vmem:[%s465 + $0xd08] sm:$0xff]
          %v2850 = vld [vmem:[%s465 + $0xd10] sm:$0xff]
          %v2851 = vld [vmem:[%s465 + $0xd18] sm:$0xff]
          %v2852 = vld [vmem:[%s465 + $0xd20] sm:$0xff]
          %v2853 = vld [vmem:[%s465 + $0xd28] sm:$0xff]
          %v2854 = vld [vmem:[%s465 + $0xd30] sm:$0xff]
          %v2855 = vld [vmem:[%s465 + $0xd38] sm:$0xff]
          %v2856 = vld [vmem:[%s465 + $0xd40] sm:$0xff]
          %v2857 = vld [vmem:[%s465 + $0xd48] sm:$0xff]
          %v2858 = vld [vmem:[%s465 + $0xd50] sm:$0xff]
          %v2859 = vld [vmem:[%s465 + $0xd58] sm:$0xff]
          %v2860 = vld [vmem:[%s465 + $0xd60] sm:$0xff]
          %v2861 = vld [vmem:[%s465 + $0xd68] sm:$0xff]
          %v2862 = vld [vmem:[%s465 + $0xd70] sm:$0xff]
          %v2863 = vld [vmem:[%s465 + $0xd78] sm:$0xff]
          %v2864 = vld [vmem:[%s465 + $0xd80] sm:$0xff]
          %v2865 = vld [vmem:[%s465 + $0xd88] sm:$0xff]
          %v2866 = vld [vmem:[%s465 + $0xd90] sm:$0xff]
          %v2867 = vld [vmem:[%s465 + $0xd98] sm:$0xff]
          %v2868 = vld [vmem:[%s465 + $0xda0] sm:$0xff]
          %v2869 = vld [vmem:[%s465 + $0xda8] sm:$0xff]
          %v2870 = vld [vmem:[%s465 + $0xdb0] sm:$0xff]
          %v2871 = vld [vmem:[%s465 + $0xdb8] sm:$0xff]
          %v2872 = vld [vmem:[%s465 + $0xdc0] sm:$0xff]
          %v2873 = vld [vmem:[%s465 + $0xdc8] sm:$0xff]
          %v2874 = vld [vmem:[%s465 + $0xdd0] sm:$0xff]
          %v2875 = vld [vmem:[%s465 + $0xdd8] sm:$0xff]
          %v2876 = vld [vmem:[%s465 + $0xde0] sm:$0xff]
          %v2877 = vld [vmem:[%s465 + $0xde8] sm:$0xff]
          %v2878 = vld [vmem:[%s465 + $0xdf0] sm:$0xff]
          %v2879 = vld [vmem:[%s465 + $0xdf8] sm:$0xff]
          %v2880 = vld [vmem:[%s465 + $0xe00] sm:$0xff]
          %v2881 = vld [vmem:[%s465 + $0xe08] sm:$0xff]
          %v2882 = vld [vmem:[%s465 + $0xe10] sm:$0xff]
          %v2883 = vld [vmem:[%s465 + $0xe18] sm:$0xff]
          %v2884 = vld [vmem:[%s465 + $0xe20] sm:$0xff]
          %v2885 = vld [vmem:[%s465 + $0xe28] sm:$0xff]
          %v2886 = vld [vmem:[%s465 + $0xe30] sm:$0xff]
          %v2887 = vld [vmem:[%s465 + $0xe38] sm:$0xff]
          %v2888 = vld [vmem:[%s465 + $0xe40] sm:$0xff]
          %v2889 = vld [vmem:[%s465 + $0xe48] sm:$0xff]
          %v2890 = vld [vmem:[%s465 + $0xe50] sm:$0xff]
          %v2891 = vld [vmem:[%s465 + $0xe58] sm:$0xff]
          %v2892 = vld [vmem:[%s465 + $0xe60] sm:$0xff]
          %v2893 = vld [vmem:[%s465 + $0xe68] sm:$0xff]
          %v2894 = vld [vmem:[%s465 + $0xe70] sm:$0xff]
          %v2895 = vld [vmem:[%s465 + $0xe78] sm:$0xff]
          %v2896 = vld [vmem:[%s465 + $0xe80] sm:$0xff]
          %v2897 = vld [vmem:[%s465 + $0xe88] sm:$0xff]
          %v2898 = vld [vmem:[%s465 + $0xe90] sm:$0xff]
          %v2899 = vld [vmem:[%s465 + $0xe98] sm:$0xff]
          %v2900 = vld [vmem:[%s465 + $0xea0] sm:$0xff]
          %v2901 = vld [vmem:[%s465 + $0xea8] sm:$0xff]
          %v2902 = vld [vmem:[%s465 + $0xeb0] sm:$0xff]
          %v2903 = vld [vmem:[%s465 + $0xeb8] sm:$0xff]
          %v2904 = vld [vmem:[%s465 + $0xec0] sm:$0xff]
          %v2905 = vld [vmem:[%s465 + $0xec8] sm:$0xff]
          %v2906 = vld [vmem:[%s465 + $0xed0] sm:$0xff]
          %v2907 = vld [vmem:[%s465 + $0xed8] sm:$0xff]
          %v2908 = vld [vmem:[%s465 + $0xee0] sm:$0xff]
          %v2909 = vld [vmem:[%s465 + $0xee8] sm:$0xff]
          %v2910 = vld [vmem:[%s465 + $0xef0] sm:$0xff]
          %v2911 = vld [vmem:[%s465 + $0xef8] sm:$0xff]
          %v2912 = vld [vmem:[%s465 + $0xf00] sm:$0xff]
          %v2913 = vld [vmem:[%s465 + $0xf08] sm:$0xff]
          %v2914 = vld [vmem:[%s465 + $0xf10] sm:$0xff]
          %v2915 = vld [vmem:[%s465 + $0xf18] sm:$0xff]
          %v2916 = vld [vmem:[%s465 + $0xf20] sm:$0xff]
          %v2917 = vld [vmem:[%s465 + $0xf28] sm:$0xff]
          %v2918 = vld [vmem:[%s465 + $0xf30] sm:$0xff]
          %v2919 = vld [vmem:[%s465 + $0xf38] sm:$0xff]
          %v2920 = vld [vmem:[%s465 + $0xf40] sm:$0xff]
          %v2921 = vld [vmem:[%s465 + $0xf48] sm:$0xff]
          %v2922 = vld [vmem:[%s465 + $0xf50] sm:$0xff]
          %v2923 = vld [vmem:[%s465 + $0xf58] sm:$0xff]
          %v2924 = vld [vmem:[%s465 + $0xf60] sm:$0xff]
          %v2925 = vld [vmem:[%s465 + $0xf68] sm:$0xff]
          %v2926 = vld [vmem:[%s465 + $0xf70] sm:$0xff]
          %v2927 = vld [vmem:[%s465 + $0xf78] sm:$0xff]
          %v2928 = vld [vmem:[%s465 + $0xf80] sm:$0xff]
          %v2929 = vld [vmem:[%s465 + $0xf88] sm:$0xff]
          %v2930 = vld [vmem:[%s465 + $0xf90] sm:$0xff]
          %v2931 = vld [vmem:[%s465 + $0xf98] sm:$0xff]
          %v2932 = vld [vmem:[%s465 + $0xfa0] sm:$0xff]
          %v2933 = vld [vmem:[%s465 + $0xfa8] sm:$0xff]
          %v2934 = vld [vmem:[%s465 + $0xfb0] sm:$0xff]
          %v2935 = vld [vmem:[%s465 + $0xfb8] sm:$0xff]
          %v2936 = vld [vmem:[%s465 + $0xfc0] sm:$0xff]
          %v2937 = vld [vmem:[%s465 + $0xfc8] sm:$0xff]
          %v2938 = vld [vmem:[%s465 + $0xfd0] sm:$0xff]
          %v2939 = vld [vmem:[%s465 + $0xfd8] sm:$0xff]
          %v2940 = vld [vmem:[%s465 + $0xfe0] sm:$0xff]
          %v2941 = vld [vmem:[%s465 + $0xfe8] sm:$0xff]
          %v2942 = vld [vmem:[%s465 + $0xff0] sm:$0xff]
          %v2943 = vld [vmem:[%s465 + $0xff8] sm:$0xff]
          %v2944 = vunpack.c.l.s8.bf16 %v2432
          %v2945 = vunpack.c.l.s8.bf16 %v2433
          %v2946 = vunpack.c.l.s8.bf16 %v2434
          %v2947 = vunpack.c.l.s8.bf16 %v2435
          %v2948 = vunpack.c.h.s8.bf16 %v2432
          %v2949 = vunpack.c.h.s8.bf16 %v2433
          %v2950 = vunpack.c.h.s8.bf16 %v2434
          %v2951 = vunpack.c.h.s8.bf16 %v2435
          %v2952 = vunpack.c.l.s8.bf16 %v2436
          %v2953 = vunpack.c.l.s8.bf16 %v2437
          %v2954 = vunpack.c.l.s8.bf16 %v2438
          %v2955 = vunpack.c.l.s8.bf16 %v2439
          %v2956 = vunpack.c.h.s8.bf16 %v2436
          %v2957 = vunpack.c.h.s8.bf16 %v2437
          %v2958 = vunpack.c.h.s8.bf16 %v2438
          %v2959 = vunpack.c.h.s8.bf16 %v2439
          %v2960 = vunpack.c.l.s8.bf16 %v2440
          %v2961 = vunpack.c.l.s8.bf16 %v2441
          %v2962 = vunpack.c.l.s8.bf16 %v2442
          %v2963 = vunpack.c.l.s8.bf16 %v2443
          %v2964 = vunpack.c.h.s8.bf16 %v2440
          %v2965 = vunpack.c.h.s8.bf16 %v2441
          %v2966 = vunpack.c.h.s8.bf16 %v2442
          %v2967 = vunpack.c.h.s8.bf16 %v2443
          %v2968 = vunpack.c.l.s8.bf16 %v2444
          %v2969 = vunpack.c.l.s8.bf16 %v2445
          %v2970 = vunpack.c.l.s8.bf16 %v2446
          %v2971 = vunpack.c.l.s8.bf16 %v2447
          %v2972 = vunpack.c.h.s8.bf16 %v2444
          %v2973 = vunpack.c.h.s8.bf16 %v2445
          %v2974 = vunpack.c.h.s8.bf16 %v2446
          %v2975 = vunpack.c.h.s8.bf16 %v2447
          %v2976 = vunpack.c.l.s8.bf16 %v2448
          %v2977 = vunpack.c.l.s8.bf16 %v2449
          %v2978 = vunpack.c.l.s8.bf16 %v2450
          %v2979 = vunpack.c.l.s8.bf16 %v2451
          %v2980 = vunpack.c.h.s8.bf16 %v2448
          %v2981 = vunpack.c.h.s8.bf16 %v2449
          %v2982 = vunpack.c.h.s8.bf16 %v2450
          %v2983 = vunpack.c.h.s8.bf16 %v2451
          %v2984 = vunpack.c.l.s8.bf16 %v2452
          %v2985 = vunpack.c.l.s8.bf16 %v2453
          %v2986 = vunpack.c.l.s8.bf16 %v2454
          %v2987 = vunpack.c.l.s8.bf16 %v2455
          %v2988 = vunpack.c.h.s8.bf16 %v2452
          %v2989 = vunpack.c.h.s8.bf16 %v2453
          %v2990 = vunpack.c.h.s8.bf16 %v2454
          %v2991 = vunpack.c.h.s8.bf16 %v2455
          %v2992 = vunpack.c.l.s8.bf16 %v2456
          %v2993 = vunpack.c.l.s8.bf16 %v2457
          %v2994 = vunpack.c.l.s8.bf16 %v2458
          %v2995 = vunpack.c.l.s8.bf16 %v2459
          %v2996 = vunpack.c.h.s8.bf16 %v2456
          %v2997 = vunpack.c.h.s8.bf16 %v2457
          %v2998 = vunpack.c.h.s8.bf16 %v2458
          %v2999 = vunpack.c.h.s8.bf16 %v2459
          %v3000 = vunpack.c.l.s8.bf16 %v2460
          %v3001 = vunpack.c.l.s8.bf16 %v2461
          %v3002 = vunpack.c.l.s8.bf16 %v2462
          %v3003 = vunpack.c.l.s8.bf16 %v2463
          %v3004 = vunpack.c.h.s8.bf16 %v2460
          %v3005 = vunpack.c.h.s8.bf16 %v2461
          %v3006 = vunpack.c.h.s8.bf16 %v2462
          %v3007 = vunpack.c.h.s8.bf16 %v2463
          %v3008 = vunpack.c.l.s8.bf16 %v2464
          %v3009 = vunpack.c.l.s8.bf16 %v2465
          %v3010 = vunpack.c.l.s8.bf16 %v2466
          %v3011 = vunpack.c.l.s8.bf16 %v2467
          %v3012 = vunpack.c.h.s8.bf16 %v2464
          %v3013 = vunpack.c.h.s8.bf16 %v2465
          %v3014 = vunpack.c.h.s8.bf16 %v2466
          %v3015 = vunpack.c.h.s8.bf16 %v2467
          %v3016 = vunpack.c.l.s8.bf16 %v2468
          %v3017 = vunpack.c.l.s8.bf16 %v2469
          %v3018 = vunpack.c.l.s8.bf16 %v2470
          %v3019 = vunpack.c.l.s8.bf16 %v2471
          %v3020 = vunpack.c.h.s8.bf16 %v2468
          %v3021 = vunpack.c.h.s8.bf16 %v2469
          %v3022 = vunpack.c.h.s8.bf16 %v2470
          %v3023 = vunpack.c.h.s8.bf16 %v2471
          %v3024 = vunpack.c.l.s8.bf16 %v2472
          %v3025 = vunpack.c.l.s8.bf16 %v2473
          %v3026 = vunpack.c.l.s8.bf16 %v2474
          %v3027 = vunpack.c.l.s8.bf16 %v2475
          %v3028 = vunpack.c.h.s8.bf16 %v2472
          %v3029 = vunpack.c.h.s8.bf16 %v2473
          %v3030 = vunpack.c.h.s8.bf16 %v2474
          %v3031 = vunpack.c.h.s8.bf16 %v2475
          %v3032 = vunpack.c.l.s8.bf16 %v2476
          %v3033 = vunpack.c.l.s8.bf16 %v2477
          %v3034 = vunpack.c.l.s8.bf16 %v2478
          %v3035 = vunpack.c.l.s8.bf16 %v2479
          %v3036 = vunpack.c.h.s8.bf16 %v2476
          %v3037 = vunpack.c.h.s8.bf16 %v2477
          %v3038 = vunpack.c.h.s8.bf16 %v2478
          %v3039 = vunpack.c.h.s8.bf16 %v2479
          %v3040 = vunpack.c.l.s8.bf16 %v2480
          %v3041 = vunpack.c.l.s8.bf16 %v2481
          %v3042 = vunpack.c.l.s8.bf16 %v2482
          %v3043 = vunpack.c.l.s8.bf16 %v2483
          %v3044 = vunpack.c.h.s8.bf16 %v2480
          %v3045 = vunpack.c.h.s8.bf16 %v2481
          %v3046 = vunpack.c.h.s8.bf16 %v2482
          %v3047 = vunpack.c.h.s8.bf16 %v2483
          %v3048 = vunpack.c.l.s8.bf16 %v2484
          %v3049 = vunpack.c.l.s8.bf16 %v2485
          %v3050 = vunpack.c.l.s8.bf16 %v2486
          %v3051 = vunpack.c.l.s8.bf16 %v2487
          %v3052 = vunpack.c.h.s8.bf16 %v2484
          %v3053 = vunpack.c.h.s8.bf16 %v2485
          %v3054 = vunpack.c.h.s8.bf16 %v2486
          %v3055 = vunpack.c.h.s8.bf16 %v2487
          %v3056 = vunpack.c.l.s8.bf16 %v2488
          %v3057 = vunpack.c.l.s8.bf16 %v2489
          %v3058 = vunpack.c.l.s8.bf16 %v2490
          %v3059 = vunpack.c.l.s8.bf16 %v2491
          %v3060 = vunpack.c.h.s8.bf16 %v2488
          %v3061 = vunpack.c.h.s8.bf16 %v2489
          %v3062 = vunpack.c.h.s8.bf16 %v2490
          %v3063 = vunpack.c.h.s8.bf16 %v2491
          %v3064 = vunpack.c.l.s8.bf16 %v2492
          %v3065 = vunpack.c.l.s8.bf16 %v2493
          %v3066 = vunpack.c.l.s8.bf16 %v2494
          %v3067 = vunpack.c.l.s8.bf16 %v2495
          %v3068 = vunpack.c.h.s8.bf16 %v2492
          %v3069 = vunpack.c.h.s8.bf16 %v2493
          %v3070 = vunpack.c.h.s8.bf16 %v2494
          %v3071 = vunpack.c.h.s8.bf16 %v2495
          %v3072 = vunpack.c.l.s8.bf16 %v2496
          %v3073 = vunpack.c.l.s8.bf16 %v2497
          %v3074 = vunpack.c.l.s8.bf16 %v2498
          %v3075 = vunpack.c.l.s8.bf16 %v2499
          %v3076 = vunpack.c.h.s8.bf16 %v2496
          %v3077 = vunpack.c.h.s8.bf16 %v2497
          %v3078 = vunpack.c.h.s8.bf16 %v2498
          %v3079 = vunpack.c.h.s8.bf16 %v2499
          %v3080 = vunpack.c.l.s8.bf16 %v2500
          %v3081 = vunpack.c.l.s8.bf16 %v2501
          %v3082 = vunpack.c.l.s8.bf16 %v2502
          %v3083 = vunpack.c.l.s8.bf16 %v2503
          %v3084 = vunpack.c.h.s8.bf16 %v2500
          %v3085 = vunpack.c.h.s8.bf16 %v2501
          %v3086 = vunpack.c.h.s8.bf16 %v2502
          %v3087 = vunpack.c.h.s8.bf16 %v2503
          %v3088 = vunpack.c.l.s8.bf16 %v2504
          %v3089 = vunpack.c.l.s8.bf16 %v2505
          %v3090 = vunpack.c.l.s8.bf16 %v2506
          %v3091 = vunpack.c.l.s8.bf16 %v2507
          %v3092 = vunpack.c.h.s8.bf16 %v2504
          %v3093 = vunpack.c.h.s8.bf16 %v2505
          %v3094 = vunpack.c.h.s8.bf16 %v2506
          %v3095 = vunpack.c.h.s8.bf16 %v2507
          %v3096 = vunpack.c.l.s8.bf16 %v2508
          %v3097 = vunpack.c.l.s8.bf16 %v2509
          %v3098 = vunpack.c.l.s8.bf16 %v2510
          %v3099 = vunpack.c.l.s8.bf16 %v2511
          %v3100 = vunpack.c.h.s8.bf16 %v2508
          %v3101 = vunpack.c.h.s8.bf16 %v2509
          %v3102 = vunpack.c.h.s8.bf16 %v2510
          %v3103 = vunpack.c.h.s8.bf16 %v2511
          %v3104 = vunpack.c.l.s8.bf16 %v2512
          %v3105 = vunpack.c.l.s8.bf16 %v2513
          %v3106 = vunpack.c.l.s8.bf16 %v2514
          %v3107 = vunpack.c.l.s8.bf16 %v2515
          %v3108 = vunpack.c.h.s8.bf16 %v2512
          %v3109 = vunpack.c.h.s8.bf16 %v2513
          %v3110 = vunpack.c.h.s8.bf16 %v2514
          %v3111 = vunpack.c.h.s8.bf16 %v2515
          %v3112 = vunpack.c.l.s8.bf16 %v2516
          %v3113 = vunpack.c.l.s8.bf16 %v2517
          %v3114 = vunpack.c.l.s8.bf16 %v2518
          %v3115 = vunpack.c.l.s8.bf16 %v2519
          %v3116 = vunpack.c.h.s8.bf16 %v2516
          %v3117 = vunpack.c.h.s8.bf16 %v2517
          %v3118 = vunpack.c.h.s8.bf16 %v2518
          %v3119 = vunpack.c.h.s8.bf16 %v2519
          %v3120 = vunpack.c.l.s8.bf16 %v2520
          %v3121 = vunpack.c.l.s8.bf16 %v2521
          %v3122 = vunpack.c.l.s8.bf16 %v2522
          %v3123 = vunpack.c.l.s8.bf16 %v2523
          %v3124 = vunpack.c.h.s8.bf16 %v2520
          %v3125 = vunpack.c.h.s8.bf16 %v2521
          %v3126 = vunpack.c.h.s8.bf16 %v2522
          %v3127 = vunpack.c.h.s8.bf16 %v2523
          %v3128 = vunpack.c.l.s8.bf16 %v2524
          %v3129 = vunpack.c.l.s8.bf16 %v2525
          %v3130 = vunpack.c.l.s8.bf16 %v2526
          %v3131 = vunpack.c.l.s8.bf16 %v2527
          %v3132 = vunpack.c.h.s8.bf16 %v2524
          %v3133 = vunpack.c.h.s8.bf16 %v2525
          %v3134 = vunpack.c.h.s8.bf16 %v2526
          %v3135 = vunpack.c.h.s8.bf16 %v2527
          %v3136 = vunpack.c.l.s8.bf16 %v2528
          %v3137 = vunpack.c.l.s8.bf16 %v2529
          %v3138 = vunpack.c.l.s8.bf16 %v2530
          %v3139 = vunpack.c.l.s8.bf16 %v2531
          %v3140 = vunpack.c.h.s8.bf16 %v2528
          %v3141 = vunpack.c.h.s8.bf16 %v2529
          %v3142 = vunpack.c.h.s8.bf16 %v2530
          %v3143 = vunpack.c.h.s8.bf16 %v2531
          %v3144 = vunpack.c.l.s8.bf16 %v2532
          %v3145 = vunpack.c.l.s8.bf16 %v2533
          %v3146 = vunpack.c.l.s8.bf16 %v2534
          %v3147 = vunpack.c.l.s8.bf16 %v2535
          %v3148 = vunpack.c.h.s8.bf16 %v2532
          %v3149 = vunpack.c.h.s8.bf16 %v2533
          %v3150 = vunpack.c.h.s8.bf16 %v2534
          %v3151 = vunpack.c.h.s8.bf16 %v2535
          %v3152 = vunpack.c.l.s8.bf16 %v2536
          %v3153 = vunpack.c.l.s8.bf16 %v2537
          %v3154 = vunpack.c.l.s8.bf16 %v2538
          %v3155 = vunpack.c.l.s8.bf16 %v2539
          %v3156 = vunpack.c.h.s8.bf16 %v2536
          %v3157 = vunpack.c.h.s8.bf16 %v2537
          %v3158 = vunpack.c.h.s8.bf16 %v2538
          %v3159 = vunpack.c.h.s8.bf16 %v2539
          %v3160 = vunpack.c.l.s8.bf16 %v2540
          %v3161 = vunpack.c.l.s8.bf16 %v2541
          %v3162 = vunpack.c.l.s8.bf16 %v2542
          %v3163 = vunpack.c.l.s8.bf16 %v2543
          %v3164 = vunpack.c.h.s8.bf16 %v2540
          %v3165 = vunpack.c.h.s8.bf16 %v2541
          %v3166 = vunpack.c.h.s8.bf16 %v2542
          %v3167 = vunpack.c.h.s8.bf16 %v2543
          %v3168 = vunpack.c.l.s8.bf16 %v2544
          %v3169 = vunpack.c.l.s8.bf16 %v2545
          %v3170 = vunpack.c.l.s8.bf16 %v2546
          %v3171 = vunpack.c.l.s8.bf16 %v2547
          %v3172 = vunpack.c.h.s8.bf16 %v2544
          %v3173 = vunpack.c.h.s8.bf16 %v2545
          %v3174 = vunpack.c.h.s8.bf16 %v2546
          %v3175 = vunpack.c.h.s8.bf16 %v2547
          %v3176 = vunpack.c.l.s8.bf16 %v2548
          %v3177 = vunpack.c.l.s8.bf16 %v2549
          %v3178 = vunpack.c.l.s8.bf16 %v2550
          %v3179 = vunpack.c.l.s8.bf16 %v2551
          %v3180 = vunpack.c.h.s8.bf16 %v2548
          %v3181 = vunpack.c.h.s8.bf16 %v2549
          %v3182 = vunpack.c.h.s8.bf16 %v2550
          %v3183 = vunpack.c.h.s8.bf16 %v2551
          %v3184 = vunpack.c.l.s8.bf16 %v2552
          %v3185 = vunpack.c.l.s8.bf16 %v2553
          %v3186 = vunpack.c.l.s8.bf16 %v2554
          %v3187 = vunpack.c.l.s8.bf16 %v2555
          %v3188 = vunpack.c.h.s8.bf16 %v2552
          %v3189 = vunpack.c.h.s8.bf16 %v2553
          %v3190 = vunpack.c.h.s8.bf16 %v2554
          %v3191 = vunpack.c.h.s8.bf16 %v2555
          %v3192 = vunpack.c.l.s8.bf16 %v2556
          %v3193 = vunpack.c.l.s8.bf16 %v2557
          %v3194 = vunpack.c.l.s8.bf16 %v2558
          %v3195 = vunpack.c.l.s8.bf16 %v2559
          %v3196 = vunpack.c.h.s8.bf16 %v2556
          %v3197 = vunpack.c.h.s8.bf16 %v2557
          %v3198 = vunpack.c.h.s8.bf16 %v2558
          %v3199 = vunpack.c.h.s8.bf16 %v2559
          %v3200 = vunpack.c.l.s8.bf16 %v2560
          %v3201 = vunpack.c.l.s8.bf16 %v2561
          %v3202 = vunpack.c.l.s8.bf16 %v2562
          %v3203 = vunpack.c.l.s8.bf16 %v2563
          %v3204 = vunpack.c.h.s8.bf16 %v2560
          %v3205 = vunpack.c.h.s8.bf16 %v2561
          %v3206 = vunpack.c.h.s8.bf16 %v2562
          %v3207 = vunpack.c.h.s8.bf16 %v2563
          %v3208 = vunpack.c.l.s8.bf16 %v2564
          %v3209 = vunpack.c.l.s8.bf16 %v2565
          %v3210 = vunpack.c.l.s8.bf16 %v2566
          %v3211 = vunpack.c.l.s8.bf16 %v2567
          %v3212 = vunpack.c.h.s8.bf16 %v2564
          %v3213 = vunpack.c.h.s8.bf16 %v2565
          %v3214 = vunpack.c.h.s8.bf16 %v2566
          %v3215 = vunpack.c.h.s8.bf16 %v2567
          %v3216 = vunpack.c.l.s8.bf16 %v2568
          %v3217 = vunpack.c.l.s8.bf16 %v2569
          %v3218 = vunpack.c.l.s8.bf16 %v2570
          %v3219 = vunpack.c.l.s8.bf16 %v2571
          %v3220 = vunpack.c.h.s8.bf16 %v2568
          %v3221 = vunpack.c.h.s8.bf16 %v2569
          %v3222 = vunpack.c.h.s8.bf16 %v2570
          %v3223 = vunpack.c.h.s8.bf16 %v2571
          %v3224 = vunpack.c.l.s8.bf16 %v2572
          %v3225 = vunpack.c.l.s8.bf16 %v2573
          %v3226 = vunpack.c.l.s8.bf16 %v2574
          %v3227 = vunpack.c.l.s8.bf16 %v2575
          %v3228 = vunpack.c.h.s8.bf16 %v2572
          %v3229 = vunpack.c.h.s8.bf16 %v2573
          %v3230 = vunpack.c.h.s8.bf16 %v2574
          %v3231 = vunpack.c.h.s8.bf16 %v2575
          %v3232 = vunpack.c.l.s8.bf16 %v2576
          %v3233 = vunpack.c.l.s8.bf16 %v2577
          %v3234 = vunpack.c.l.s8.bf16 %v2578
          %v3235 = vunpack.c.l.s8.bf16 %v2579
          %v3236 = vunpack.c.h.s8.bf16 %v2576
          %v3237 = vunpack.c.h.s8.bf16 %v2577
          %v3238 = vunpack.c.h.s8.bf16 %v2578
          %v3239 = vunpack.c.h.s8.bf16 %v2579
          %v3240 = vunpack.c.l.s8.bf16 %v2580
          %v3241 = vunpack.c.l.s8.bf16 %v2581
          %v3242 = vunpack.c.l.s8.bf16 %v2582
          %v3243 = vunpack.c.l.s8.bf16 %v2583
          %v3244 = vunpack.c.h.s8.bf16 %v2580
          %v3245 = vunpack.c.h.s8.bf16 %v2581
          %v3246 = vunpack.c.h.s8.bf16 %v2582
          %v3247 = vunpack.c.h.s8.bf16 %v2583
          %v3248 = vunpack.c.l.s8.bf16 %v2584
          %v3249 = vunpack.c.l.s8.bf16 %v2585
          %v3250 = vunpack.c.l.s8.bf16 %v2586
          %v3251 = vunpack.c.l.s8.bf16 %v2587
          %v3252 = vunpack.c.h.s8.bf16 %v2584
          %v3253 = vunpack.c.h.s8.bf16 %v2585
          %v3254 = vunpack.c.h.s8.bf16 %v2586
          %v3255 = vunpack.c.h.s8.bf16 %v2587
          %v3256 = vunpack.c.l.s8.bf16 %v2588
          %v3257 = vunpack.c.l.s8.bf16 %v2589
          %v3258 = vunpack.c.l.s8.bf16 %v2590
          %v3259 = vunpack.c.l.s8.bf16 %v2591
          %v3260 = vunpack.c.h.s8.bf16 %v2588
          %v3261 = vunpack.c.h.s8.bf16 %v2589
          %v3262 = vunpack.c.h.s8.bf16 %v2590
          %v3263 = vunpack.c.h.s8.bf16 %v2591
          %v3264 = vunpack.c.l.s8.bf16 %v2592
          %v3265 = vunpack.c.l.s8.bf16 %v2593
          %v3266 = vunpack.c.l.s8.bf16 %v2594
          %v3267 = vunpack.c.l.s8.bf16 %v2595
          %v3268 = vunpack.c.h.s8.bf16 %v2592
          %v3269 = vunpack.c.h.s8.bf16 %v2593
          %v3270 = vunpack.c.h.s8.bf16 %v2594
          %v3271 = vunpack.c.h.s8.bf16 %v2595
          %v3272 = vunpack.c.l.s8.bf16 %v2596
          %v3273 = vunpack.c.l.s8.bf16 %v2597
          %v3274 = vunpack.c.l.s8.bf16 %v2598
          %v3275 = vunpack.c.l.s8.bf16 %v2599
          %v3276 = vunpack.c.h.s8.bf16 %v2596
          %v3277 = vunpack.c.h.s8.bf16 %v2597
          %v3278 = vunpack.c.h.s8.bf16 %v2598
          %v3279 = vunpack.c.h.s8.bf16 %v2599
          %v3280 = vunpack.c.l.s8.bf16 %v2600
          %v3281 = vunpack.c.l.s8.bf16 %v2601
          %v3282 = vunpack.c.l.s8.bf16 %v2602
          %v3283 = vunpack.c.l.s8.bf16 %v2603
          %v3284 = vunpack.c.h.s8.bf16 %v2600
          %v3285 = vunpack.c.h.s8.bf16 %v2601
          %v3286 = vunpack.c.h.s8.bf16 %v2602
          %v3287 = vunpack.c.h.s8.bf16 %v2603
          %v3288 = vunpack.c.l.s8.bf16 %v2604
          %v3289 = vunpack.c.l.s8.bf16 %v2605
          %v3290 = vunpack.c.l.s8.bf16 %v2606
          %v3291 = vunpack.c.l.s8.bf16 %v2607
          %v3292 = vunpack.c.h.s8.bf16 %v2604
          %v3293 = vunpack.c.h.s8.bf16 %v2605
          %v3294 = vunpack.c.h.s8.bf16 %v2606
          %v3295 = vunpack.c.h.s8.bf16 %v2607
          %v3296 = vunpack.c.l.s8.bf16 %v2608
          %v3297 = vunpack.c.l.s8.bf16 %v2609
          %v3298 = vunpack.c.l.s8.bf16 %v2610
          %v3299 = vunpack.c.l.s8.bf16 %v2611
          %v3300 = vunpack.c.h.s8.bf16 %v2608
          %v3301 = vunpack.c.h.s8.bf16 %v2609
          %v3302 = vunpack.c.h.s8.bf16 %v2610
          %v3303 = vunpack.c.h.s8.bf16 %v2611
          %v3304 = vunpack.c.l.s8.bf16 %v2612
          %v3305 = vunpack.c.l.s8.bf16 %v2613
          %v3306 = vunpack.c.l.s8.bf16 %v2614
          %v3307 = vunpack.c.l.s8.bf16 %v2615
          %v3308 = vunpack.c.h.s8.bf16 %v2612
          %v3309 = vunpack.c.h.s8.bf16 %v2613
          %v3310 = vunpack.c.h.s8.bf16 %v2614
          %v3311 = vunpack.c.h.s8.bf16 %v2615
          %v3312 = vunpack.c.l.s8.bf16 %v2616
          %v3313 = vunpack.c.l.s8.bf16 %v2617
          %v3314 = vunpack.c.l.s8.bf16 %v2618
          %v3315 = vunpack.c.l.s8.bf16 %v2619
          %v3316 = vunpack.c.h.s8.bf16 %v2616
          %v3317 = vunpack.c.h.s8.bf16 %v2617
          %v3318 = vunpack.c.h.s8.bf16 %v2618
          %v3319 = vunpack.c.h.s8.bf16 %v2619
          %v3320 = vunpack.c.l.s8.bf16 %v2620
          %v3321 = vunpack.c.l.s8.bf16 %v2621
          %v3322 = vunpack.c.l.s8.bf16 %v2622
          %v3323 = vunpack.c.l.s8.bf16 %v2623
          %v3324 = vunpack.c.h.s8.bf16 %v2620
          %v3325 = vunpack.c.h.s8.bf16 %v2621
          %v3326 = vunpack.c.h.s8.bf16 %v2622
          %v3327 = vunpack.c.h.s8.bf16 %v2623
          %v3328 = vunpack.c.l.s8.bf16 %v2624
          %v3329 = vunpack.c.l.s8.bf16 %v2625
          %v3330 = vunpack.c.l.s8.bf16 %v2626
          %v3331 = vunpack.c.l.s8.bf16 %v2627
          %v3332 = vunpack.c.h.s8.bf16 %v2624
          %v3333 = vunpack.c.h.s8.bf16 %v2625
          %v3334 = vunpack.c.h.s8.bf16 %v2626
          %v3335 = vunpack.c.h.s8.bf16 %v2627
          %v3336 = vunpack.c.l.s8.bf16 %v2628
          %v3337 = vunpack.c.l.s8.bf16 %v2629
          %v3338 = vunpack.c.l.s8.bf16 %v2630
          %v3339 = vunpack.c.l.s8.bf16 %v2631
          %v3340 = vunpack.c.h.s8.bf16 %v2628
          %v3341 = vunpack.c.h.s8.bf16 %v2629
          %v3342 = vunpack.c.h.s8.bf16 %v2630
          %v3343 = vunpack.c.h.s8.bf16 %v2631
          %v3344 = vunpack.c.l.s8.bf16 %v2632
          %v3345 = vunpack.c.l.s8.bf16 %v2633
          %v3346 = vunpack.c.l.s8.bf16 %v2634
          %v3347 = vunpack.c.l.s8.bf16 %v2635
          %v3348 = vunpack.c.h.s8.bf16 %v2632
          %v3349 = vunpack.c.h.s8.bf16 %v2633
          %v3350 = vunpack.c.h.s8.bf16 %v2634
          %v3351 = vunpack.c.h.s8.bf16 %v2635
          %v3352 = vunpack.c.l.s8.bf16 %v2636
          %v3353 = vunpack.c.l.s8.bf16 %v2637
          %v3354 = vunpack.c.l.s8.bf16 %v2638
          %v3355 = vunpack.c.l.s8.bf16 %v2639
          %v3356 = vunpack.c.h.s8.bf16 %v2636
          %v3357 = vunpack.c.h.s8.bf16 %v2637
          %v3358 = vunpack.c.h.s8.bf16 %v2638
          %v3359 = vunpack.c.h.s8.bf16 %v2639
          %v3360 = vunpack.c.l.s8.bf16 %v2640
          %v3361 = vunpack.c.l.s8.bf16 %v2641
          %v3362 = vunpack.c.l.s8.bf16 %v2642
          %v3363 = vunpack.c.l.s8.bf16 %v2643
          %v3364 = vunpack.c.h.s8.bf16 %v2640
          %v3365 = vunpack.c.h.s8.bf16 %v2641
          %v3366 = vunpack.c.h.s8.bf16 %v2642
          %v3367 = vunpack.c.h.s8.bf16 %v2643
          %v3368 = vunpack.c.l.s8.bf16 %v2644
          %v3369 = vunpack.c.l.s8.bf16 %v2645
          %v3370 = vunpack.c.l.s8.bf16 %v2646
          %v3371 = vunpack.c.l.s8.bf16 %v2647
          %v3372 = vunpack.c.h.s8.bf16 %v2644
          %v3373 = vunpack.c.h.s8.bf16 %v2645
          %v3374 = vunpack.c.h.s8.bf16 %v2646
          %v3375 = vunpack.c.h.s8.bf16 %v2647
          %v3376 = vunpack.c.l.s8.bf16 %v2648
          %v3377 = vunpack.c.l.s8.bf16 %v2649
          %v3378 = vunpack.c.l.s8.bf16 %v2650
          %v3379 = vunpack.c.l.s8.bf16 %v2651
          %v3380 = vunpack.c.h.s8.bf16 %v2648
          %v3381 = vunpack.c.h.s8.bf16 %v2649
          %v3382 = vunpack.c.h.s8.bf16 %v2650
          %v3383 = vunpack.c.h.s8.bf16 %v2651
          %v3384 = vunpack.c.l.s8.bf16 %v2652
          %v3385 = vunpack.c.l.s8.bf16 %v2653
          %v3386 = vunpack.c.l.s8.bf16 %v2654
          %v3387 = vunpack.c.l.s8.bf16 %v2655
          %v3388 = vunpack.c.h.s8.bf16 %v2652
          %v3389 = vunpack.c.h.s8.bf16 %v2653
          %v3390 = vunpack.c.h.s8.bf16 %v2654
          %v3391 = vunpack.c.h.s8.bf16 %v2655
          %v3392 = vunpack.c.l.s8.bf16 %v2656
          %v3393 = vunpack.c.l.s8.bf16 %v2657
          %v3394 = vunpack.c.l.s8.bf16 %v2658
          %v3395 = vunpack.c.l.s8.bf16 %v2659
          %v3396 = vunpack.c.h.s8.bf16 %v2656
          %v3397 = vunpack.c.h.s8.bf16 %v2657
          %v3398 = vunpack.c.h.s8.bf16 %v2658
          %v3399 = vunpack.c.h.s8.bf16 %v2659
          %v3400 = vunpack.c.l.s8.bf16 %v2660
          %v3401 = vunpack.c.l.s8.bf16 %v2661
          %v3402 = vunpack.c.l.s8.bf16 %v2662
          %v3403 = vunpack.c.l.s8.bf16 %v2663
          %v3404 = vunpack.c.h.s8.bf16 %v2660
          %v3405 = vunpack.c.h.s8.bf16 %v2661
          %v3406 = vunpack.c.h.s8.bf16 %v2662
          %v3407 = vunpack.c.h.s8.bf16 %v2663
          %v3408 = vunpack.c.l.s8.bf16 %v2664
          %v3409 = vunpack.c.l.s8.bf16 %v2665
          %v3410 = vunpack.c.l.s8.bf16 %v2666
          %v3411 = vunpack.c.l.s8.bf16 %v2667
          %v3412 = vunpack.c.h.s8.bf16 %v2664
          %v3413 = vunpack.c.h.s8.bf16 %v2665
          %v3414 = vunpack.c.h.s8.bf16 %v2666
          %v3415 = vunpack.c.h.s8.bf16 %v2667
          %v3416 = vunpack.c.l.s8.bf16 %v2668
          %v3417 = vunpack.c.l.s8.bf16 %v2669
          %v3418 = vunpack.c.l.s8.bf16 %v2670
          %v3419 = vunpack.c.l.s8.bf16 %v2671
          %v3420 = vunpack.c.h.s8.bf16 %v2668
          %v3421 = vunpack.c.h.s8.bf16 %v2669
          %v3422 = vunpack.c.h.s8.bf16 %v2670
          %v3423 = vunpack.c.h.s8.bf16 %v2671
          %v3424 = vunpack.c.l.s8.bf16 %v2672
          %v3425 = vunpack.c.l.s8.bf16 %v2673
          %v3426 = vunpack.c.l.s8.bf16 %v2674
          %v3427 = vunpack.c.l.s8.bf16 %v2675
          %v3428 = vunpack.c.h.s8.bf16 %v2672
          %v3429 = vunpack.c.h.s8.bf16 %v2673
          %v3430 = vunpack.c.h.s8.bf16 %v2674
          %v3431 = vunpack.c.h.s8.bf16 %v2675
          %v3432 = vunpack.c.l.s8.bf16 %v2676
          %v3433 = vunpack.c.l.s8.bf16 %v2677
          %v3434 = vunpack.c.l.s8.bf16 %v2678
          %v3435 = vunpack.c.l.s8.bf16 %v2679
          %v3436 = vunpack.c.h.s8.bf16 %v2676
          %v3437 = vunpack.c.h.s8.bf16 %v2677
          %v3438 = vunpack.c.h.s8.bf16 %v2678
          %v3439 = vunpack.c.h.s8.bf16 %v2679
          %v3440 = vunpack.c.l.s8.bf16 %v2680
          %v3441 = vunpack.c.l.s8.bf16 %v2681
          %v3442 = vunpack.c.l.s8.bf16 %v2682
          %v3443 = vunpack.c.l.s8.bf16 %v2683
          %v3444 = vunpack.c.h.s8.bf16 %v2680
          %v3445 = vunpack.c.h.s8.bf16 %v2681
          %v3446 = vunpack.c.h.s8.bf16 %v2682
          %v3447 = vunpack.c.h.s8.bf16 %v2683
          %v3448 = vunpack.c.l.s8.bf16 %v2684
          %v3449 = vunpack.c.l.s8.bf16 %v2685
          %v3450 = vunpack.c.l.s8.bf16 %v2686
          %v3451 = vunpack.c.l.s8.bf16 %v2687
          %v3452 = vunpack.c.h.s8.bf16 %v2684
          %v3453 = vunpack.c.h.s8.bf16 %v2685
          %v3454 = vunpack.c.h.s8.bf16 %v2686
          %v3455 = vunpack.c.h.s8.bf16 %v2687
          %v3456 = vunpack.c.l.s8.bf16 %v2688
          %v3457 = vunpack.c.l.s8.bf16 %v2689
          %v3458 = vunpack.c.l.s8.bf16 %v2690
          %v3459 = vunpack.c.l.s8.bf16 %v2691
          %v3460 = vunpack.c.h.s8.bf16 %v2688
          %v3461 = vunpack.c.h.s8.bf16 %v2689
          %v3462 = vunpack.c.h.s8.bf16 %v2690
          %v3463 = vunpack.c.h.s8.bf16 %v2691
          %v3464 = vunpack.c.l.s8.bf16 %v2692
          %v3465 = vunpack.c.l.s8.bf16 %v2693
          %v3466 = vunpack.c.l.s8.bf16 %v2694
          %v3467 = vunpack.c.l.s8.bf16 %v2695
          %v3468 = vunpack.c.h.s8.bf16 %v2692
          %v3469 = vunpack.c.h.s8.bf16 %v2693
          %v3470 = vunpack.c.h.s8.bf16 %v2694
          %v3471 = vunpack.c.h.s8.bf16 %v2695
          %v3472 = vunpack.c.l.s8.bf16 %v2696
          %v3473 = vunpack.c.l.s8.bf16 %v2697
          %v3474 = vunpack.c.l.s8.bf16 %v2698
          %v3475 = vunpack.c.l.s8.bf16 %v2699
          %v3476 = vunpack.c.h.s8.bf16 %v2696
          %v3477 = vunpack.c.h.s8.bf16 %v2697
          %v3478 = vunpack.c.h.s8.bf16 %v2698
          %v3479 = vunpack.c.h.s8.bf16 %v2699
          %v3480 = vunpack.c.l.s8.bf16 %v2700
          %v3481 = vunpack.c.l.s8.bf16 %v2701
          %v3482 = vunpack.c.l.s8.bf16 %v2702
          %v3483 = vunpack.c.l.s8.bf16 %v2703
          %v3484 = vunpack.c.h.s8.bf16 %v2700
          %v3485 = vunpack.c.h.s8.bf16 %v2701
          %v3486 = vunpack.c.h.s8.bf16 %v2702
          %v3487 = vunpack.c.h.s8.bf16 %v2703
          %v3488 = vunpack.c.l.s8.bf16 %v2704
          %v3489 = vunpack.c.l.s8.bf16 %v2705
          %v3490 = vunpack.c.l.s8.bf16 %v2706
          %v3491 = vunpack.c.l.s8.bf16 %v2707
          %v3492 = vunpack.c.h.s8.bf16 %v2704
          %v3493 = vunpack.c.h.s8.bf16 %v2705
          %v3494 = vunpack.c.h.s8.bf16 %v2706
          %v3495 = vunpack.c.h.s8.bf16 %v2707
          %v3496 = vunpack.c.l.s8.bf16 %v2708
          %v3497 = vunpack.c.l.s8.bf16 %v2709
          %v3498 = vunpack.c.l.s8.bf16 %v2710
          %v3499 = vunpack.c.l.s8.bf16 %v2711
          %v3500 = vunpack.c.h.s8.bf16 %v2708
          %v3501 = vunpack.c.h.s8.bf16 %v2709
          %v3502 = vunpack.c.h.s8.bf16 %v2710
          %v3503 = vunpack.c.h.s8.bf16 %v2711
          %v3504 = vunpack.c.l.s8.bf16 %v2712
          %v3505 = vunpack.c.l.s8.bf16 %v2713
          %v3506 = vunpack.c.l.s8.bf16 %v2714
          %v3507 = vunpack.c.l.s8.bf16 %v2715
          %v3508 = vunpack.c.h.s8.bf16 %v2712
          %v3509 = vunpack.c.h.s8.bf16 %v2713
          %v3510 = vunpack.c.h.s8.bf16 %v2714
          %v3511 = vunpack.c.h.s8.bf16 %v2715
          %v3512 = vunpack.c.l.s8.bf16 %v2716
          %v3513 = vunpack.c.l.s8.bf16 %v2717
          %v3514 = vunpack.c.l.s8.bf16 %v2718
          %v3515 = vunpack.c.l.s8.bf16 %v2719
          %v3516 = vunpack.c.h.s8.bf16 %v2716
          %v3517 = vunpack.c.h.s8.bf16 %v2717
          %v3518 = vunpack.c.h.s8.bf16 %v2718
          %v3519 = vunpack.c.h.s8.bf16 %v2719
          %v3520 = vunpack.c.l.s8.bf16 %v2720
          %v3521 = vunpack.c.l.s8.bf16 %v2721
          %v3522 = vunpack.c.l.s8.bf16 %v2722
          %v3523 = vunpack.c.l.s8.bf16 %v2723
          %v3524 = vunpack.c.h.s8.bf16 %v2720
          %v3525 = vunpack.c.h.s8.bf16 %v2721
          %v3526 = vunpack.c.h.s8.bf16 %v2722
          %v3527 = vunpack.c.h.s8.bf16 %v2723
          %v3528 = vunpack.c.l.s8.bf16 %v2724
          %v3529 = vunpack.c.l.s8.bf16 %v2725
          %v3530 = vunpack.c.l.s8.bf16 %v2726
          %v3531 = vunpack.c.l.s8.bf16 %v2727
          %v3532 = vunpack.c.h.s8.bf16 %v2724
          %v3533 = vunpack.c.h.s8.bf16 %v2725
          %v3534 = vunpack.c.h.s8.bf16 %v2726
          %v3535 = vunpack.c.h.s8.bf16 %v2727
          %v3536 = vunpack.c.l.s8.bf16 %v2728
          %v3537 = vunpack.c.l.s8.bf16 %v2729
          %v3538 = vunpack.c.l.s8.bf16 %v2730
          %v3539 = vunpack.c.l.s8.bf16 %v2731
          %v3540 = vunpack.c.h.s8.bf16 %v2728
          %v3541 = vunpack.c.h.s8.bf16 %v2729
          %v3542 = vunpack.c.h.s8.bf16 %v2730
          %v3543 = vunpack.c.h.s8.bf16 %v2731
          %v3544 = vunpack.c.l.s8.bf16 %v2732
          %v3545 = vunpack.c.l.s8.bf16 %v2733
          %v3546 = vunpack.c.l.s8.bf16 %v2734
          %v3547 = vunpack.c.l.s8.bf16 %v2735
          %v3548 = vunpack.c.h.s8.bf16 %v2732
          %v3549 = vunpack.c.h.s8.bf16 %v2733
          %v3550 = vunpack.c.h.s8.bf16 %v2734
          %v3551 = vunpack.c.h.s8.bf16 %v2735
          %v3552 = vunpack.c.l.s8.bf16 %v2736
          %v3553 = vunpack.c.l.s8.bf16 %v2737
          %v3554 = vunpack.c.l.s8.bf16 %v2738
          %v3555 = vunpack.c.l.s8.bf16 %v2739
          %v3556 = vunpack.c.h.s8.bf16 %v2736
          %v3557 = vunpack.c.h.s8.bf16 %v2737
          %v3558 = vunpack.c.h.s8.bf16 %v2738
          %v3559 = vunpack.c.h.s8.bf16 %v2739
          %v3560 = vunpack.c.l.s8.bf16 %v2740
          %v3561 = vunpack.c.l.s8.bf16 %v2741
          %v3562 = vunpack.c.l.s8.bf16 %v2742
          %v3563 = vunpack.c.l.s8.bf16 %v2743
          %v3564 = vunpack.c.h.s8.bf16 %v2740
          %v3565 = vunpack.c.h.s8.bf16 %v2741
          %v3566 = vunpack.c.h.s8.bf16 %v2742
          %v3567 = vunpack.c.h.s8.bf16 %v2743
          %v3568 = vunpack.c.l.s8.bf16 %v2744
          %v3569 = vunpack.c.l.s8.bf16 %v2745
          %v3570 = vunpack.c.l.s8.bf16 %v2746
          %v3571 = vunpack.c.l.s8.bf16 %v2747
          %v3572 = vunpack.c.h.s8.bf16 %v2744
          %v3573 = vunpack.c.h.s8.bf16 %v2745
          %v3574 = vunpack.c.h.s8.bf16 %v2746
          %v3575 = vunpack.c.h.s8.bf16 %v2747
          %v3576 = vunpack.c.l.s8.bf16 %v2748
          %v3577 = vunpack.c.l.s8.bf16 %v2749
          %v3578 = vunpack.c.l.s8.bf16 %v2750
          %v3579 = vunpack.c.l.s8.bf16 %v2751
          %v3580 = vunpack.c.h.s8.bf16 %v2748
          %v3581 = vunpack.c.h.s8.bf16 %v2749
          %v3582 = vunpack.c.h.s8.bf16 %v2750
          %v3583 = vunpack.c.h.s8.bf16 %v2751
          %v3584 = vunpack.c.l.s8.bf16 %v2752
          %v3585 = vunpack.c.l.s8.bf16 %v2753
          %v3586 = vunpack.c.l.s8.bf16 %v2754
          %v3587 = vunpack.c.l.s8.bf16 %v2755
          %v3588 = vunpack.c.h.s8.bf16 %v2752
          %v3589 = vunpack.c.h.s8.bf16 %v2753
          %v3590 = vunpack.c.h.s8.bf16 %v2754
          %v3591 = vunpack.c.h.s8.bf16 %v2755
          %v3592 = vunpack.c.l.s8.bf16 %v2756
          %v3593 = vunpack.c.l.s8.bf16 %v2757
          %v3594 = vunpack.c.l.s8.bf16 %v2758
          %v3595 = vunpack.c.l.s8.bf16 %v2759
          %v3596 = vunpack.c.h.s8.bf16 %v2756
          %v3597 = vunpack.c.h.s8.bf16 %v2757
          %v3598 = vunpack.c.h.s8.bf16 %v2758
          %v3599 = vunpack.c.h.s8.bf16 %v2759
          %v3600 = vunpack.c.l.s8.bf16 %v2760
          %v3601 = vunpack.c.l.s8.bf16 %v2761
          %v3602 = vunpack.c.l.s8.bf16 %v2762
          %v3603 = vunpack.c.l.s8.bf16 %v2763
          %v3604 = vunpack.c.h.s8.bf16 %v2760
          %v3605 = vunpack.c.h.s8.bf16 %v2761
          %v3606 = vunpack.c.h.s8.bf16 %v2762
          %v3607 = vunpack.c.h.s8.bf16 %v2763
          %v3608 = vunpack.c.l.s8.bf16 %v2764
          %v3609 = vunpack.c.l.s8.bf16 %v2765
          %v3610 = vunpack.c.l.s8.bf16 %v2766
          %v3611 = vunpack.c.l.s8.bf16 %v2767
          %v3612 = vunpack.c.h.s8.bf16 %v2764
          %v3613 = vunpack.c.h.s8.bf16 %v2765
          %v3614 = vunpack.c.h.s8.bf16 %v2766
          %v3615 = vunpack.c.h.s8.bf16 %v2767
          %v3616 = vunpack.c.l.s8.bf16 %v2768
          %v3617 = vunpack.c.l.s8.bf16 %v2769
          %v3618 = vunpack.c.l.s8.bf16 %v2770
          %v3619 = vunpack.c.l.s8.bf16 %v2771
          %v3620 = vunpack.c.h.s8.bf16 %v2768
          %v3621 = vunpack.c.h.s8.bf16 %v2769
          %v3622 = vunpack.c.h.s8.bf16 %v2770
          %v3623 = vunpack.c.h.s8.bf16 %v2771
          %v3624 = vunpack.c.l.s8.bf16 %v2772
          %v3625 = vunpack.c.l.s8.bf16 %v2773
          %v3626 = vunpack.c.l.s8.bf16 %v2774
          %v3627 = vunpack.c.l.s8.bf16 %v2775
          %v3628 = vunpack.c.h.s8.bf16 %v2772
          %v3629 = vunpack.c.h.s8.bf16 %v2773
          %v3630 = vunpack.c.h.s8.bf16 %v2774
          %v3631 = vunpack.c.h.s8.bf16 %v2775
          %v3632 = vunpack.c.l.s8.bf16 %v2776
          %v3633 = vunpack.c.l.s8.bf16 %v2777
          %v3634 = vunpack.c.l.s8.bf16 %v2778
          %v3635 = vunpack.c.l.s8.bf16 %v2779
          %v3636 = vunpack.c.h.s8.bf16 %v2776
          %v3637 = vunpack.c.h.s8.bf16 %v2777
          %v3638 = vunpack.c.h.s8.bf16 %v2778
          %v3639 = vunpack.c.h.s8.bf16 %v2779
          %v3640 = vunpack.c.l.s8.bf16 %v2780
          %v3641 = vunpack.c.l.s8.bf16 %v2781
          %v3642 = vunpack.c.l.s8.bf16 %v2782
          %v3643 = vunpack.c.l.s8.bf16 %v2783
          %v3644 = vunpack.c.h.s8.bf16 %v2780
          %v3645 = vunpack.c.h.s8.bf16 %v2781
          %v3646 = vunpack.c.h.s8.bf16 %v2782
          %v3647 = vunpack.c.h.s8.bf16 %v2783
          %v3648 = vunpack.c.l.s8.bf16 %v2784
          %v3649 = vunpack.c.l.s8.bf16 %v2785
          %v3650 = vunpack.c.l.s8.bf16 %v2786
          %v3651 = vunpack.c.l.s8.bf16 %v2787
          %v3652 = vunpack.c.h.s8.bf16 %v2784
          %v3653 = vunpack.c.h.s8.bf16 %v2785
          %v3654 = vunpack.c.h.s8.bf16 %v2786
          %v3655 = vunpack.c.h.s8.bf16 %v2787
          %v3656 = vunpack.c.l.s8.bf16 %v2788
          %v3657 = vunpack.c.l.s8.bf16 %v2789
          %v3658 = vunpack.c.l.s8.bf16 %v2790
          %v3659 = vunpack.c.l.s8.bf16 %v2791
          %v3660 = vunpack.c.h.s8.bf16 %v2788
          %v3661 = vunpack.c.h.s8.bf16 %v2789
          %v3662 = vunpack.c.h.s8.bf16 %v2790
          %v3663 = vunpack.c.h.s8.bf16 %v2791
          %v3664 = vunpack.c.l.s8.bf16 %v2792
          %v3665 = vunpack.c.l.s8.bf16 %v2793
          %v3666 = vunpack.c.l.s8.bf16 %v2794
          %v3667 = vunpack.c.l.s8.bf16 %v2795
          %v3668 = vunpack.c.h.s8.bf16 %v2792
          %v3669 = vunpack.c.h.s8.bf16 %v2793
          %v3670 = vunpack.c.h.s8.bf16 %v2794
          %v3671 = vunpack.c.h.s8.bf16 %v2795
          %v3672 = vunpack.c.l.s8.bf16 %v2796
          %v3673 = vunpack.c.l.s8.bf16 %v2797
          %v3674 = vunpack.c.l.s8.bf16 %v2798
          %v3675 = vunpack.c.l.s8.bf16 %v2799
          %v3676 = vunpack.c.h.s8.bf16 %v2796
          %v3677 = vunpack.c.h.s8.bf16 %v2797
          %v3678 = vunpack.c.h.s8.bf16 %v2798
          %v3679 = vunpack.c.h.s8.bf16 %v2799
          %v3680 = vunpack.c.l.s8.bf16 %v2800
          %v3681 = vunpack.c.l.s8.bf16 %v2801
          %v3682 = vunpack.c.l.s8.bf16 %v2802
          %v3683 = vunpack.c.l.s8.bf16 %v2803
          %v3684 = vunpack.c.h.s8.bf16 %v2800
          %v3685 = vunpack.c.h.s8.bf16 %v2801
          %v3686 = vunpack.c.h.s8.bf16 %v2802
          %v3687 = vunpack.c.h.s8.bf16 %v2803
          %v3688 = vunpack.c.l.s8.bf16 %v2804
          %v3689 = vunpack.c.l.s8.bf16 %v2805
          %v3690 = vunpack.c.l.s8.bf16 %v2806
          %v3691 = vunpack.c.l.s8.bf16 %v2807
          %v3692 = vunpack.c.h.s8.bf16 %v2804
          %v3693 = vunpack.c.h.s8.bf16 %v2805
          %v3694 = vunpack.c.h.s8.bf16 %v2806
          %v3695 = vunpack.c.h.s8.bf16 %v2807
          %v3696 = vunpack.c.l.s8.bf16 %v2808
          %v3697 = vunpack.c.l.s8.bf16 %v2809
          %v3698 = vunpack.c.l.s8.bf16 %v2810
          %v3699 = vunpack.c.l.s8.bf16 %v2811
          %v3700 = vunpack.c.h.s8.bf16 %v2808
          %v3701 = vunpack.c.h.s8.bf16 %v2809
          %v3702 = vunpack.c.h.s8.bf16 %v2810
          %v3703 = vunpack.c.h.s8.bf16 %v2811
          %v3704 = vunpack.c.l.s8.bf16 %v2812
          %v3705 = vunpack.c.l.s8.bf16 %v2813
          %v3706 = vunpack.c.l.s8.bf16 %v2814
          %v3707 = vunpack.c.l.s8.bf16 %v2815
          %v3708 = vunpack.c.h.s8.bf16 %v2812
          %v3709 = vunpack.c.h.s8.bf16 %v2813
          %v3710 = vunpack.c.h.s8.bf16 %v2814
          %v3711 = vunpack.c.h.s8.bf16 %v2815
          %v3712 = vunpack.c.l.s8.bf16 %v2816
          %v3713 = vunpack.c.l.s8.bf16 %v2817
          %v3714 = vunpack.c.l.s8.bf16 %v2818
          %v3715 = vunpack.c.l.s8.bf16 %v2819
          %v3716 = vunpack.c.h.s8.bf16 %v2816
          %v3717 = vunpack.c.h.s8.bf16 %v2817
          %v3718 = vunpack.c.h.s8.bf16 %v2818
          %v3719 = vunpack.c.h.s8.bf16 %v2819
          %v3720 = vunpack.c.l.s8.bf16 %v2820
          %v3721 = vunpack.c.l.s8.bf16 %v2821
          %v3722 = vunpack.c.l.s8.bf16 %v2822
          %v3723 = vunpack.c.l.s8.bf16 %v2823
          %v3724 = vunpack.c.h.s8.bf16 %v2820
          %v3725 = vunpack.c.h.s8.bf16 %v2821
          %v3726 = vunpack.c.h.s8.bf16 %v2822
          %v3727 = vunpack.c.h.s8.bf16 %v2823
          %v3728 = vunpack.c.l.s8.bf16 %v2824
          %v3729 = vunpack.c.l.s8.bf16 %v2825
          %v3730 = vunpack.c.l.s8.bf16 %v2826
          %v3731 = vunpack.c.l.s8.bf16 %v2827
          %v3732 = vunpack.c.h.s8.bf16 %v2824
          %v3733 = vunpack.c.h.s8.bf16 %v2825
          %v3734 = vunpack.c.h.s8.bf16 %v2826
          %v3735 = vunpack.c.h.s8.bf16 %v2827
          %v3736 = vunpack.c.l.s8.bf16 %v2828
          %v3737 = vunpack.c.l.s8.bf16 %v2829
          %v3738 = vunpack.c.l.s8.bf16 %v2830
          %v3739 = vunpack.c.l.s8.bf16 %v2831
          %v3740 = vunpack.c.h.s8.bf16 %v2828
          %v3741 = vunpack.c.h.s8.bf16 %v2829
          %v3742 = vunpack.c.h.s8.bf16 %v2830
          %v3743 = vunpack.c.h.s8.bf16 %v2831
          %v3744 = vunpack.c.l.s8.bf16 %v2832
          %v3745 = vunpack.c.l.s8.bf16 %v2833
          %v3746 = vunpack.c.l.s8.bf16 %v2834
          %v3747 = vunpack.c.l.s8.bf16 %v2835
          %v3748 = vunpack.c.h.s8.bf16 %v2832
          %v3749 = vunpack.c.h.s8.bf16 %v2833
          %v3750 = vunpack.c.h.s8.bf16 %v2834
          %v3751 = vunpack.c.h.s8.bf16 %v2835
          %v3752 = vunpack.c.l.s8.bf16 %v2836
          %v3753 = vunpack.c.l.s8.bf16 %v2837
          %v3754 = vunpack.c.l.s8.bf16 %v2838
          %v3755 = vunpack.c.l.s8.bf16 %v2839
          %v3756 = vunpack.c.h.s8.bf16 %v2836
          %v3757 = vunpack.c.h.s8.bf16 %v2837
          %v3758 = vunpack.c.h.s8.bf16 %v2838
          %v3759 = vunpack.c.h.s8.bf16 %v2839
          %v3760 = vunpack.c.l.s8.bf16 %v2840
          %v3761 = vunpack.c.l.s8.bf16 %v2841
          %v3762 = vunpack.c.l.s8.bf16 %v2842
          %v3763 = vunpack.c.l.s8.bf16 %v2843
          %v3764 = vunpack.c.h.s8.bf16 %v2840
          %v3765 = vunpack.c.h.s8.bf16 %v2841
          %v3766 = vunpack.c.h.s8.bf16 %v2842
          %v3767 = vunpack.c.h.s8.bf16 %v2843
          %v3768 = vunpack.c.l.s8.bf16 %v2844
          %v3769 = vunpack.c.l.s8.bf16 %v2845
          %v3770 = vunpack.c.l.s8.bf16 %v2846
          %v3771 = vunpack.c.l.s8.bf16 %v2847
          %v3772 = vunpack.c.h.s8.bf16 %v2844
          %v3773 = vunpack.c.h.s8.bf16 %v2845
          %v3774 = vunpack.c.h.s8.bf16 %v2846
          %v3775 = vunpack.c.h.s8.bf16 %v2847
          %v3776 = vunpack.c.l.s8.bf16 %v2848
          %v3777 = vunpack.c.l.s8.bf16 %v2849
          %v3778 = vunpack.c.l.s8.bf16 %v2850
          %v3779 = vunpack.c.l.s8.bf16 %v2851
          %v3780 = vunpack.c.h.s8.bf16 %v2848
          %v3781 = vunpack.c.h.s8.bf16 %v2849
          %v3782 = vunpack.c.h.s8.bf16 %v2850
          %v3783 = vunpack.c.h.s8.bf16 %v2851
          %v3784 = vunpack.c.l.s8.bf16 %v2852
          %v3785 = vunpack.c.l.s8.bf16 %v2853
          %v3786 = vunpack.c.l.s8.bf16 %v2854
          %v3787 = vunpack.c.l.s8.bf16 %v2855
          %v3788 = vunpack.c.h.s8.bf16 %v2852
          %v3789 = vunpack.c.h.s8.bf16 %v2853
          %v3790 = vunpack.c.h.s8.bf16 %v2854
          %v3791 = vunpack.c.h.s8.bf16 %v2855
          %v3792 = vunpack.c.l.s8.bf16 %v2856
          %v3793 = vunpack.c.l.s8.bf16 %v2857
          %v3794 = vunpack.c.l.s8.bf16 %v2858
          %v3795 = vunpack.c.l.s8.bf16 %v2859
          %v3796 = vunpack.c.h.s8.bf16 %v2856
          %v3797 = vunpack.c.h.s8.bf16 %v2857
          %v3798 = vunpack.c.h.s8.bf16 %v2858
          %v3799 = vunpack.c.h.s8.bf16 %v2859
          %v3800 = vunpack.c.l.s8.bf16 %v2860
          %v3801 = vunpack.c.l.s8.bf16 %v2861
          %v3802 = vunpack.c.l.s8.bf16 %v2862
          %v3803 = vunpack.c.l.s8.bf16 %v2863
          %v3804 = vunpack.c.h.s8.bf16 %v2860
          %v3805 = vunpack.c.h.s8.bf16 %v2861
          %v3806 = vunpack.c.h.s8.bf16 %v2862
          %v3807 = vunpack.c.h.s8.bf16 %v2863
          %v3808 = vunpack.c.l.s8.bf16 %v2864
          %v3809 = vunpack.c.l.s8.bf16 %v2865
          %v3810 = vunpack.c.l.s8.bf16 %v2866
          %v3811 = vunpack.c.l.s8.bf16 %v2867
          %v3812 = vunpack.c.h.s8.bf16 %v2864
          %v3813 = vunpack.c.h.s8.bf16 %v2865
          %v3814 = vunpack.c.h.s8.bf16 %v2866
          %v3815 = vunpack.c.h.s8.bf16 %v2867
          %v3816 = vunpack.c.l.s8.bf16 %v2868
          %v3817 = vunpack.c.l.s8.bf16 %v2869
          %v3818 = vunpack.c.l.s8.bf16 %v2870
          %v3819 = vunpack.c.l.s8.bf16 %v2871
          %v3820 = vunpack.c.h.s8.bf16 %v2868
          %v3821 = vunpack.c.h.s8.bf16 %v2869
          %v3822 = vunpack.c.h.s8.bf16 %v2870
          %v3823 = vunpack.c.h.s8.bf16 %v2871
          %v3824 = vunpack.c.l.s8.bf16 %v2872
          %v3825 = vunpack.c.l.s8.bf16 %v2873
          %v3826 = vunpack.c.l.s8.bf16 %v2874
          %v3827 = vunpack.c.l.s8.bf16 %v2875
          %v3828 = vunpack.c.h.s8.bf16 %v2872
          %v3829 = vunpack.c.h.s8.bf16 %v2873
          %v3830 = vunpack.c.h.s8.bf16 %v2874
          %v3831 = vunpack.c.h.s8.bf16 %v2875
          %v3832 = vunpack.c.l.s8.bf16 %v2876
          %v3833 = vunpack.c.l.s8.bf16 %v2877
          %v3834 = vunpack.c.l.s8.bf16 %v2878
          %v3835 = vunpack.c.l.s8.bf16 %v2879
          %v3836 = vunpack.c.h.s8.bf16 %v2876
          %v3837 = vunpack.c.h.s8.bf16 %v2877
          %v3838 = vunpack.c.h.s8.bf16 %v2878
          %v3839 = vunpack.c.h.s8.bf16 %v2879
          %v3840 = vunpack.c.l.s8.bf16 %v2880
          %v3841 = vunpack.c.l.s8.bf16 %v2881
          %v3842 = vunpack.c.l.s8.bf16 %v2882
          %v3843 = vunpack.c.l.s8.bf16 %v2883
          %v3844 = vunpack.c.h.s8.bf16 %v2880
          %v3845 = vunpack.c.h.s8.bf16 %v2881
          %v3846 = vunpack.c.h.s8.bf16 %v2882
          %v3847 = vunpack.c.h.s8.bf16 %v2883
          %v3848 = vunpack.c.l.s8.bf16 %v2884
          %v3849 = vunpack.c.l.s8.bf16 %v2885
          %v3850 = vunpack.c.l.s8.bf16 %v2886
          %v3851 = vunpack.c.l.s8.bf16 %v2887
          %v3852 = vunpack.c.h.s8.bf16 %v2884
          %v3853 = vunpack.c.h.s8.bf16 %v2885
          %v3854 = vunpack.c.h.s8.bf16 %v2886
          %v3855 = vunpack.c.h.s8.bf16 %v2887
          %v3856 = vunpack.c.l.s8.bf16 %v2888
          %v3857 = vunpack.c.l.s8.bf16 %v2889
          %v3858 = vunpack.c.l.s8.bf16 %v2890
          %v3859 = vunpack.c.l.s8.bf16 %v2891
          %v3860 = vunpack.c.h.s8.bf16 %v2888
          %v3861 = vunpack.c.h.s8.bf16 %v2889
          %v3862 = vunpack.c.h.s8.bf16 %v2890
          %v3863 = vunpack.c.h.s8.bf16 %v2891
          %v3864 = vunpack.c.l.s8.bf16 %v2892
          %v3865 = vunpack.c.l.s8.bf16 %v2893
          %v3866 = vunpack.c.l.s8.bf16 %v2894
          %v3867 = vunpack.c.l.s8.bf16 %v2895
          %v3868 = vunpack.c.h.s8.bf16 %v2892
          %v3869 = vunpack.c.h.s8.bf16 %v2893
          %v3870 = vunpack.c.h.s8.bf16 %v2894
          %v3871 = vunpack.c.h.s8.bf16 %v2895
          %v3872 = vunpack.c.l.s8.bf16 %v2896
          %v3873 = vunpack.c.l.s8.bf16 %v2897
          %v3874 = vunpack.c.l.s8.bf16 %v2898
          %v3875 = vunpack.c.l.s8.bf16 %v2899
          %v3876 = vunpack.c.h.s8.bf16 %v2896
          %v3877 = vunpack.c.h.s8.bf16 %v2897
          %v3878 = vunpack.c.h.s8.bf16 %v2898
          %v3879 = vunpack.c.h.s8.bf16 %v2899
          %v3880 = vunpack.c.l.s8.bf16 %v2900
          %v3881 = vunpack.c.l.s8.bf16 %v2901
          %v3882 = vunpack.c.l.s8.bf16 %v2902
          %v3883 = vunpack.c.l.s8.bf16 %v2903
          %v3884 = vunpack.c.h.s8.bf16 %v2900
          %v3885 = vunpack.c.h.s8.bf16 %v2901
          %v3886 = vunpack.c.h.s8.bf16 %v2902
          %v3887 = vunpack.c.h.s8.bf16 %v2903
          %v3888 = vunpack.c.l.s8.bf16 %v2904
          %v3889 = vunpack.c.l.s8.bf16 %v2905
          %v3890 = vunpack.c.l.s8.bf16 %v2906
          %v3891 = vunpack.c.l.s8.bf16 %v2907
          %v3892 = vunpack.c.h.s8.bf16 %v2904
          %v3893 = vunpack.c.h.s8.bf16 %v2905
          %v3894 = vunpack.c.h.s8.bf16 %v2906
          %v3895 = vunpack.c.h.s8.bf16 %v2907
          %v3896 = vunpack.c.l.s8.bf16 %v2908
          %v3897 = vunpack.c.l.s8.bf16 %v2909
          %v3898 = vunpack.c.l.s8.bf16 %v2910
          %v3899 = vunpack.c.l.s8.bf16 %v2911
          %v3900 = vunpack.c.h.s8.bf16 %v2908
          %v3901 = vunpack.c.h.s8.bf16 %v2909
          %v3902 = vunpack.c.h.s8.bf16 %v2910
          %v3903 = vunpack.c.h.s8.bf16 %v2911
          %v3904 = vunpack.c.l.s8.bf16 %v2912
          %v3905 = vunpack.c.l.s8.bf16 %v2913
          %v3906 = vunpack.c.l.s8.bf16 %v2914
          %v3907 = vunpack.c.l.s8.bf16 %v2915
          %v3908 = vunpack.c.h.s8.bf16 %v2912
          %v3909 = vunpack.c.h.s8.bf16 %v2913
          %v3910 = vunpack.c.h.s8.bf16 %v2914
          %v3911 = vunpack.c.h.s8.bf16 %v2915
          %v3912 = vunpack.c.l.s8.bf16 %v2916
          %v3913 = vunpack.c.l.s8.bf16 %v2917
          %v3914 = vunpack.c.l.s8.bf16 %v2918
          %v3915 = vunpack.c.l.s8.bf16 %v2919
          %v3916 = vunpack.c.h.s8.bf16 %v2916
          %v3917 = vunpack.c.h.s8.bf16 %v2917
          %v3918 = vunpack.c.h.s8.bf16 %v2918
          %v3919 = vunpack.c.h.s8.bf16 %v2919
          %v3920 = vunpack.c.l.s8.bf16 %v2920
          %v3921 = vunpack.c.l.s8.bf16 %v2921
          %v3922 = vunpack.c.l.s8.bf16 %v2922
          %v3923 = vunpack.c.l.s8.bf16 %v2923
          %v3924 = vunpack.c.h.s8.bf16 %v2920
          %v3925 = vunpack.c.h.s8.bf16 %v2921
          %v3926 = vunpack.c.h.s8.bf16 %v2922
          %v3927 = vunpack.c.h.s8.bf16 %v2923
          %v3928 = vunpack.c.l.s8.bf16 %v2924
          %v3929 = vunpack.c.l.s8.bf16 %v2925
          %v3930 = vunpack.c.l.s8.bf16 %v2926
          %v3931 = vunpack.c.l.s8.bf16 %v2927
          %v3932 = vunpack.c.h.s8.bf16 %v2924
          %v3933 = vunpack.c.h.s8.bf16 %v2925
          %v3934 = vunpack.c.h.s8.bf16 %v2926
          %v3935 = vunpack.c.h.s8.bf16 %v2927
          %v3936 = vunpack.c.l.s8.bf16 %v2928
          %v3937 = vunpack.c.l.s8.bf16 %v2929
          %v3938 = vunpack.c.l.s8.bf16 %v2930
          %v3939 = vunpack.c.l.s8.bf16 %v2931
          %v3940 = vunpack.c.h.s8.bf16 %v2928
          %v3941 = vunpack.c.h.s8.bf16 %v2929
          %v3942 = vunpack.c.h.s8.bf16 %v2930
          %v3943 = vunpack.c.h.s8.bf16 %v2931
          %v3944 = vunpack.c.l.s8.bf16 %v2932
          %v3945 = vunpack.c.l.s8.bf16 %v2933
          %v3946 = vunpack.c.l.s8.bf16 %v2934
          %v3947 = vunpack.c.l.s8.bf16 %v2935
          %v3948 = vunpack.c.h.s8.bf16 %v2932
          %v3949 = vunpack.c.h.s8.bf16 %v2933
          %v3950 = vunpack.c.h.s8.bf16 %v2934
          %v3951 = vunpack.c.h.s8.bf16 %v2935
          %v3952 = vunpack.c.l.s8.bf16 %v2936
          %v3953 = vunpack.c.l.s8.bf16 %v2937
          %v3954 = vunpack.c.l.s8.bf16 %v2938
          %v3955 = vunpack.c.l.s8.bf16 %v2939
          %v3956 = vunpack.c.h.s8.bf16 %v2936
          %v3957 = vunpack.c.h.s8.bf16 %v2937
          %v3958 = vunpack.c.h.s8.bf16 %v2938
          %v3959 = vunpack.c.h.s8.bf16 %v2939
          %v3960 = vunpack.c.l.s8.bf16 %v2940
          %v3961 = vunpack.c.l.s8.bf16 %v2941
          %v3962 = vunpack.c.l.s8.bf16 %v2942
          %v3963 = vunpack.c.l.s8.bf16 %v2943
          %v3964 = vunpack.c.h.s8.bf16 %v2940
          %v3965 = vunpack.c.h.s8.bf16 %v2941
          %v3966 = vunpack.c.h.s8.bf16 %v2942
          %v3967 = vunpack.c.h.s8.bf16 %v2943
          %v3968 = vld [vmem:[#allocation2] sm:$0xff]
          %v3969 = vld [vmem:[#allocation2 + $0x8] sm:$0xff]
          %v3970 = vld [vmem:[#allocation2 + $0x10] sm:$0xff]
          %v3971 = vld [vmem:[#allocation2 + $0x18] sm:$0xff]
          %v3972 = vld [vmem:[#allocation2 + $0x20] sm:$0xff]
          %v3973 = vld [vmem:[#allocation2 + $0x28] sm:$0xff]
          %v3974 = vld [vmem:[#allocation2 + $0x30] sm:$0xff]
          %v3975 = vld [vmem:[#allocation2 + $0x38] sm:$0xff]
          %v3976 = vld [vmem:[#allocation2 + $0x40] sm:$0xff]
          %v3977 = vld [vmem:[#allocation2 + $0x48] sm:$0xff]
          %v3978 = vld [vmem:[#allocation2 + $0x50] sm:$0xff]
          %v3979 = vld [vmem:[#allocation2 + $0x58] sm:$0xff]
          %v3980 = vld [vmem:[#allocation2 + $0x60] sm:$0xff]
          %v3981 = vld [vmem:[#allocation2 + $0x68] sm:$0xff]
          %v3982 = vld [vmem:[#allocation2 + $0x70] sm:$0xff]
          %v3983 = vld [vmem:[#allocation2 + $0x78] sm:$0xff]
          %v3984 = vld [vmem:[#allocation2 + $0x80] sm:$0xff]
          %v3985 = vld [vmem:[#allocation2 + $0x88] sm:$0xff]
          %v3986 = vld [vmem:[#allocation2 + $0x90] sm:$0xff]
          %v3987 = vld [vmem:[#allocation2 + $0x98] sm:$0xff]
          %v3988 = vld [vmem:[#allocation2 + $0xa0] sm:$0xff]
          %v3989 = vld [vmem:[#allocation2 + $0xa8] sm:$0xff]
          %v3990 = vld [vmem:[#allocation2 + $0xb0] sm:$0xff]
          %v3991 = vld [vmem:[#allocation2 + $0xb8] sm:$0xff]
          %v3992 = vld [vmem:[#allocation2 + $0xc0] sm:$0xff]
          %v3993 = vld [vmem:[#allocation2 + $0xc8] sm:$0xff]
          %v3994 = vld [vmem:[#allocation2 + $0xd0] sm:$0xff]
          %v3995 = vld [vmem:[#allocation2 + $0xd8] sm:$0xff]
          %v3996 = vld [vmem:[#allocation2 + $0xe0] sm:$0xff]
          %v3997 = vld [vmem:[#allocation2 + $0xe8] sm:$0xff]
          %v3998 = vld [vmem:[#allocation2 + $0xf0] sm:$0xff]
          %v3999 = vld [vmem:[#allocation2 + $0xf8] sm:$0xff]
          %v4000 = vpack.c.bf16 %v3968, %v3968
          %v4001 = vpack.c.bf16 %v3969, %v3969
          %v4002 = vpack.c.bf16 %v3970, %v3970
          %v4003 = vpack.c.bf16 %v3971, %v3971
          %v4004 = vpack.c.bf16 %v3972, %v3972
          %v4005 = vpack.c.bf16 %v3973, %v3973
          %v4006 = vpack.c.bf16 %v3974, %v3974
          %v4007 = vpack.c.bf16 %v3975, %v3975
          %v4008 = vpack.c.bf16 %v3976, %v3976
          %v4009 = vpack.c.bf16 %v3977, %v3977
          %v4010 = vpack.c.bf16 %v3978, %v3978
          %v4011 = vpack.c.bf16 %v3979, %v3979
          %v4012 = vpack.c.bf16 %v3980, %v3980
          %v4013 = vpack.c.bf16 %v3981, %v3981
          %v4014 = vpack.c.bf16 %v3982, %v3982
          %v4015 = vpack.c.bf16 %v3983, %v3983
          %v4016 = vpack.c.bf16 %v3984, %v3984
          %v4017 = vpack.c.bf16 %v3985, %v3985
          %v4018 = vpack.c.bf16 %v3986, %v3986
          %v4019 = vpack.c.bf16 %v3987, %v3987
          %v4020 = vpack.c.bf16 %v3988, %v3988
          %v4021 = vpack.c.bf16 %v3989, %v3989
          %v4022 = vpack.c.bf16 %v3990, %v3990
          %v4023 = vpack.c.bf16 %v3991, %v3991
          %v4024 = vpack.c.bf16 %v3992, %v3992
          %v4025 = vpack.c.bf16 %v3993, %v3993
          %v4026 = vpack.c.bf16 %v3994, %v3994
          %v4027 = vpack.c.bf16 %v3995, %v3995
          %v4028 = vpack.c.bf16 %v3996, %v3996
          %v4029 = vpack.c.bf16 %v3997, %v3997
          %v4030 = vpack.c.bf16 %v3998, %v3998
          %v4031 = vpack.c.bf16 %v3999, %v3999
          %4032 = vmatprep.subr.bf16.mxu0 %v2945
          %4033 = vmatpush1.bf16.msra.mxu0 %v2944
          %4034 = vmatprep.subr.bf16.mxu0 %v2949
          %4035 = vmatpush1.bf16.msra.mxu0 %v2948
          %4036 = vmatprep.subr.bf16.mxu0 %v2953
          %4037 = vmatpush1.bf16.msra.mxu0 %v2952
          %4038 = vmatprep.subr.bf16.mxu0 %v2957
          %4039 = vmatpush1.bf16.msra.mxu0 %v2956
          %4040 = vmatprep.subr.bf16.mxu0 %v2961
          %4041 = vmatpush1.bf16.msra.mxu0 %v2960
          %4042 = vmatprep.subr.bf16.mxu0 %v2965
          %4043 = vmatpush1.bf16.msra.mxu0 %v2964
          %4044 = vmatprep.subr.bf16.mxu0 %v2969
          %4045 = vmatpush1.bf16.msra.mxu0 %v2968
          %4046 = vmatprep.subr.bf16.mxu0 %v2973
          %4047 = vmatpush1.bf16.msra.mxu0 %v2972
          %4048 = vmatprep.subr.bf16.mxu0 %v2977
          %4049 = vmatpush1.bf16.msra.mxu0 %v2976
          %4050 = vmatprep.subr.bf16.mxu0 %v2981
          %4051 = vmatpush1.bf16.msra.mxu0 %v2980
          %4052 = vmatprep.subr.bf16.mxu0 %v2985
          %4053 = vmatpush1.bf16.msra.mxu0 %v2984
          %4054 = vmatprep.subr.bf16.mxu0 %v2989
          %4055 = vmatpush1.bf16.msra.mxu0 %v2988
          %4056 = vmatprep.subr.bf16.mxu0 %v2993
          %4057 = vmatpush1.bf16.msra.mxu0 %v2992
          %4058 = vmatprep.subr.bf16.mxu0 %v2997
          %4059 = vmatpush1.bf16.msra.mxu0 %v2996
          %4060 = vmatprep.subr.bf16.mxu0 %v3001
          %4061 = vmatpush1.bf16.msra.mxu0 %v3000
          %4062 = vmatprep.subr.bf16.mxu0 %v3005
          %4063 = vmatpush1.bf16.msra.mxu0 %v3004
          %4064 = vmatprep.mubr.bf16.mxu0 %v4001
          %4065 = vmatmul.mubr.bf16.gmra.mrb[0].mxu0 %v4000
          %v4066 = vpop.f32.mrb[0].mxu0
          %v4067 = vadd.f32 0.0, %v4066
          %v4068 = vpop.f32.mrb[0].mxu0
          %v4069 = vadd.f32 0.0, %v4068
          %v4070 = vpop.f32.mrb[0].mxu0
          %v4071 = vpop.f32.mrb[0].mxu0
          %4072 = vdwg.mxu0
          %4073 = vmatprep.subr.bf16.mxu0 %v3009
          %4074 = vmatpush1.bf16.msra.mxu0 %v3008
          %4075 = vmatprep.subr.bf16.mxu0 %v3013
          %4076 = vmatpush1.bf16.msra.mxu0 %v3012
          %4077 = vmatprep.subr.bf16.mxu0 %v3017
          %4078 = vmatpush1.bf16.msra.mxu0 %v3016
          %4079 = vmatprep.subr.bf16.mxu0 %v3021
          %4080 = vmatpush1.bf16.msra.mxu0 %v3020
          %4081 = vmatprep.subr.bf16.mxu0 %v3025
          %4082 = vmatpush1.bf16.msra.mxu0 %v3024
          %4083 = vmatprep.subr.bf16.mxu0 %v3029
          %4084 = vmatpush1.bf16.msra.mxu0 %v3028
          %4085 = vmatprep.subr.bf16.mxu0 %v3033
          %4086 = vmatpush1.bf16.msra.mxu0 %v3032
          %4087 = vmatprep.subr.bf16.mxu0 %v3037
          %4088 = vmatpush1.bf16.msra.mxu0 %v3036
          %4089 = vmatprep.subr.bf16.mxu0 %v3041
          %4090 = vmatpush1.bf16.msra.mxu0 %v3040
          %4091 = vmatprep.subr.bf16.mxu0 %v3045
          %4092 = vmatpush1.bf16.msra.mxu0 %v3044
          %4093 = vmatprep.subr.bf16.mxu0 %v3049
          %4094 = vmatpush1.bf16.msra.mxu0 %v3048
          %4095 = vmatprep.subr.bf16.mxu0 %v3053
          %4096 = vmatpush1.bf16.msra.mxu0 %v3052
          %4097 = vmatprep.subr.bf16.mxu0 %v3057
          %4098 = vmatpush1.bf16.msra.mxu0 %v3056
          %4099 = vmatprep.subr.bf16.mxu0 %v3061
          %4100 = vmatpush1.bf16.msra.mxu0 %v3060
          %4101 = vmatprep.subr.bf16.mxu0 %v3065
          %4102 = vmatpush1.bf16.msra.mxu0 %v3064
          %4103 = vmatprep.subr.bf16.mxu0 %v3069
          %4104 = vmatpush1.bf16.msra.mxu0 %v3068
          %4105 = vmatprep.mubr.bf16.mxu0 %v4003
          %4106 = vmatmul.mubr.bf16.gmra.mrb[0].mxu0 %v4002
          %v4107 = vpop.f32.mrb[0].mxu0
          %v4108 = vadd.f32 %v4067, %v4107
          %v4109 = vpop.f32.mrb[0].mxu0
          %v4110 = vadd.f32 %v4069, %v4109
          %v4111 = vpop.f32.mrb[0].mxu0
          %v4112 = vpop.f32.mrb[0].mxu0
          %4113 = vdwg.mxu0
          %4114 = vmatprep.subr.bf16.mxu0 %v3073
          %4115 = vmatpush1.bf16.msra.mxu0 %v3072
          %4116 = vmatprep.subr.bf16.mxu0 %v3077
          %4117 = vmatpush1.bf16.msra.mxu0 %v3076
          %4118 = vmatprep.subr.bf16.mxu0 %v3081
          %4119 = vmatpush1.bf16.msra.mxu0 %v3080
          %4120 = vmatprep.subr.bf16.mxu0 %v3085
          %4121 = vmatpush1.bf16.msra.mxu0 %v3084
          %4122 = vmatprep.subr.bf16.mxu0 %v3089
          %4123 = vmatpush1.bf16.msra.mxu0 %v3088
          %4124 = vmatprep.subr.bf16.mxu0 %v3093
          %4125 = vmatpush1.bf16.msra.mxu0 %v3092
          %4126 = vmatprep.subr.bf16.mxu0 %v3097
          %4127 = vmatpush1.bf16.msra.mxu0 %v3096
          %4128 = vmatprep.subr.bf16.mxu0 %v3101
          %4129 = vmatpush1.bf16.msra.mxu0 %v3100
          %4130 = vmatprep.subr.bf16.mxu0 %v3105
          %4131 = vmatpush1.bf16.msra.mxu0 %v3104
          %4132 = vmatprep.subr.bf16.mxu0 %v3109
          %4133 = vmatpush1.bf16.msra.mxu0 %v3108
          %4134 = vmatprep.subr.bf16.mxu0 %v3113
          %4135 = vmatpush1.bf16.msra.mxu0 %v3112
          %4136 = vmatprep.subr.bf16.mxu0 %v3117
          %4137 = vmatpush1.bf16.msra.mxu0 %v3116
          %4138 = vmatprep.subr.bf16.mxu0 %v3121
          %4139 = vmatpush1.bf16.msra.mxu0 %v3120
          %4140 = vmatprep.subr.bf16.mxu0 %v3125
          %4141 = vmatpush1.bf16.msra.mxu0 %v3124
          %4142 = vmatprep.subr.bf16.mxu0 %v3129
          %4143 = vmatpush1.bf16.msra.mxu0 %v3128
          %4144 = vmatprep.subr.bf16.mxu0 %v3133
          %4145 = vmatpush1.bf16.msra.mxu0 %v3132
          %4146 = vmatprep.mubr.bf16.mxu0 %v4005
          %4147 = vmatmul.mubr.bf16.gmra.mrb[0].mxu0 %v4004
          %v4148 = vpop.f32.mrb[0].mxu0
          %v4149 = vadd.f32 %v4108, %v4148
          %v4150 = vpop.f32.mrb[0].mxu0
          %v4151 = vadd.f32 %v4110, %v4150
          %v4152 = vpop.f32.mrb[0].mxu0
          %v4153 = vpop.f32.mrb[0].mxu0
          %4154 = vdwg.mxu0
          %4155 = vmatprep.subr.bf16.mxu0 %v3137
          %4156 = vmatpush1.bf16.msra.mxu0 %v3136
          %4157 = vmatprep.subr.bf16.mxu0 %v3141
          %4158 = vmatpush1.bf16.msra.mxu0 %v3140
          %4159 = vmatprep.subr.bf16.mxu0 %v3145
          %4160 = vmatpush1.bf16.msra.mxu0 %v3144
          %4161 = vmatprep.subr.bf16.mxu0 %v3149
          %4162 = vmatpush1.bf16.msra.mxu0 %v3148
          %4163 = vmatprep.subr.bf16.mxu0 %v3153
          %4164 = vmatpush1.bf16.msra.mxu0 %v3152
          %4165 = vmatprep.subr.bf16.mxu0 %v3157
          %4166 = vmatpush1.bf16.msra.mxu0 %v3156
          %4167 = vmatprep.subr.bf16.mxu0 %v3161
          %4168 = vmatpush1.bf16.msra.mxu0 %v3160
          %4169 = vmatprep.subr.bf16.mxu0 %v3165
          %4170 = vmatpush1.bf16.msra.mxu0 %v3164
          %4171 = vmatprep.subr.bf16.mxu0 %v3169
          %4172 = vmatpush1.bf16.msra.mxu0 %v3168
          %4173 = vmatprep.subr.bf16.mxu0 %v3173
          %4174 = vmatpush1.bf16.msra.mxu0 %v3172
          %4175 = vmatprep.subr.bf16.mxu0 %v3177
          %4176 = vmatpush1.bf16.msra.mxu0 %v3176
          %4177 = vmatprep.subr.bf16.mxu0 %v3181
          %4178 = vmatpush1.bf16.msra.mxu0 %v3180
          %4179 = vmatprep.subr.bf16.mxu0 %v3185
          %4180 = vmatpush1.bf16.msra.mxu0 %v3184
          %4181 = vmatprep.subr.bf16.mxu0 %v3189
          %4182 = vmatpush1.bf16.msra.mxu0 %v3188
          %4183 = vmatprep.subr.bf16.mxu0 %v3193
          %4184 = vmatpush1.bf16.msra.mxu0 %v3192
          %4185 = vmatprep.subr.bf16.mxu0 %v3197
          %4186 = vmatpush1.bf16.msra.mxu0 %v3196
          %4187 = vmatprep.mubr.bf16.mxu0 %v4007
          %4188 = vmatmul.mubr.bf16.gmra.mrb[0].mxu0 %v4006
          %v4189 = vpop.f32.mrb[0].mxu0
          %v4190 = vadd.f32 %v4149, %v4189
          %v4191 = vpop.f32.mrb[0].mxu0
          %v4192 = vadd.f32 %v4151, %v4191
          %v4193 = vpop.f32.mrb[0].mxu0
          %v4194 = vpop.f32.mrb[0].mxu0
          %4195 = vdwg.mxu0
          %4196 = vmatprep.subr.bf16.mxu0 %v3201
          %4197 = vmatpush1.bf16.msra.mxu0 %v3200
          %4198 = vmatprep.subr.bf16.mxu0 %v3205
          %4199 = vmatpush1.bf16.msra.mxu0 %v3204
          %4200 = vmatprep.subr.bf16.mxu0 %v3209
          %4201 = vmatpush1.bf16.msra.mxu0 %v3208
          %4202 = vmatprep.subr.bf16.mxu0 %v3213
          %4203 = vmatpush1.bf16.msra.mxu0 %v3212
          %4204 = vmatprep.subr.bf16.mxu0 %v3217
          %4205 = vmatpush1.bf16.msra.mxu0 %v3216
          %4206 = vmatprep.subr.bf16.mxu0 %v3221
          %4207 = vmatpush1.bf16.msra.mxu0 %v3220
          %4208 = vmatprep.subr.bf16.mxu0 %v3225
          %4209 = vmatpush1.bf16.msra.mxu0 %v3224
          %4210 = vmatprep.subr.bf16.mxu0 %v3229
          %4211 = vmatpush1.bf16.msra.mxu0 %v3228
          %4212 = vmatprep.subr.bf16.mxu0 %v3233
          %4213 = vmatpush1.bf16.msra.mxu0 %v3232
          %4214 = vmatprep.subr.bf16.mxu0 %v3237
          %4215 = vmatpush1.bf16.msra.mxu0 %v3236
          %4216 = vmatprep.subr.bf16.mxu0 %v3241
          %4217 = vmatpush1.bf16.msra.mxu0 %v3240
          %4218 = vmatprep.subr.bf16.mxu0 %v3245
          %4219 = vmatpush1.bf16.msra.mxu0 %v3244
          %4220 = vmatprep.subr.bf16.mxu0 %v3249
          %4221 = vmatpush1.bf16.msra.mxu0 %v3248
          %4222 = vmatprep.subr.bf16.mxu0 %v3253
          %4223 = vmatpush1.bf16.msra.mxu0 %v3252
          %4224 = vmatprep.subr.bf16.mxu0 %v3257
          %4225 = vmatpush1.bf16.msra.mxu0 %v3256
          %4226 = vmatprep.subr.bf16.mxu0 %v3261
          %4227 = vmatpush1.bf16.msra.mxu0 %v3260
          %4228 = vmatprep.mubr.bf16.mxu0 %v4009
          %4229 = vmatmul.mubr.bf16.gmra.mrb[0].mxu0 %v4008
          %v4230 = vpop.f32.mrb[0].mxu0
          %v4231 = vadd.f32 %v4190, %v4230
          %v4232 = vpop.f32.mrb[0].mxu0
          %v4233 = vadd.f32 %v4192, %v4232
          %v4234 = vpop.f32.mrb[0].mxu0
          %v4235 = vpop.f32.mrb[0].mxu0
          %4236 = vdwg.mxu0
          %4237 = vmatprep.subr.bf16.mxu0 %v3265
          %4238 = vmatpush1.bf16.msra.mxu0 %v3264
          %4239 = vmatprep.subr.bf16.mxu0 %v3269
          %4240 = vmatpush1.bf16.msra.mxu0 %v3268
          %4241 = vmatprep.subr.bf16.mxu0 %v3273
          %4242 = vmatpush1.bf16.msra.mxu0 %v3272
          %4243 = vmatprep.subr.bf16.mxu0 %v3277
          %4244 = vmatpush1.bf16.msra.mxu0 %v3276
          %4245 = vmatprep.subr.bf16.mxu0 %v3281
          %4246 = vmatpush1.bf16.msra.mxu0 %v3280
          %4247 = vmatprep.subr.bf16.mxu0 %v3285
          %4248 = vmatpush1.bf16.msra.mxu0 %v3284
          %4249 = vmatprep.subr.bf16.mxu0 %v3289
          %4250 = vmatpush1.bf16.msra.mxu0 %v3288
          %4251 = vmatprep.subr.bf16.mxu0 %v3293
          %4252 = vmatpush1.bf16.msra.mxu0 %v3292
          %4253 = vmatprep.subr.bf16.mxu0 %v3297
          %4254 = vmatpush1.bf16.msra.mxu0 %v3296
          %4255 = vmatprep.subr.bf16.mxu0 %v3301
          %4256 = vmatpush1.bf16.msra.mxu0 %v3300
          %4257 = vmatprep.subr.bf16.mxu0 %v3305
          %4258 = vmatpush1.bf16.msra.mxu0 %v3304
          %4259 = vmatprep.subr.bf16.mxu0 %v3309
          %4260 = vmatpush1.bf16.msra.mxu0 %v3308
          %4261 = vmatprep.subr.bf16.mxu0 %v3313
          %4262 = vmatpush1.bf16.msra.mxu0 %v3312
          %4263 = vmatprep.subr.bf16.mxu0 %v3317
          %4264 = vmatpush1.bf16.msra.mxu0 %v3316
          %4265 = vmatprep.subr.bf16.mxu0 %v3321
          %4266 = vmatpush1.bf16.msra.mxu0 %v3320
          %4267 = vmatprep.subr.bf16.mxu0 %v3325
          %4268 = vmatpush1.bf16.msra.mxu0 %v3324
          %4269 = vmatprep.mubr.bf16.mxu0 %v4011
          %4270 = vmatmul.mubr.bf16.gmra.mrb[0].mxu0 %v4010
          %v4271 = vpop.f32.mrb[0].mxu0
          %v4272 = vadd.f32 %v4231, %v4271
          %v4273 = vpop.f32.mrb[0].mxu0
          %v4274 = vadd.f32 %v4233, %v4273
          %v4275 = vpop.f32.mrb[0].mxu0
          %v4276 = vpop.f32.mrb[0].mxu0
          %4277 = vdwg.mxu0
          %4278 = vmatprep.subr.bf16.mxu0 %v3329
          %4279 = vmatpush1.bf16.msra.mxu0 %v3328
          %4280 = vmatprep.subr.bf16.mxu0 %v3333
          %4281 = vmatpush1.bf16.msra.mxu0 %v3332
          %4282 = vmatprep.subr.bf16.mxu0 %v3337
          %4283 = vmatpush1.bf16.msra.mxu0 %v3336
          %4284 = vmatprep.subr.bf16.mxu0 %v3341
          %4285 = vmatpush1.bf16.msra.mxu0 %v3340
          %4286 = vmatprep.subr.bf16.mxu0 %v3345
          %4287 = vmatpush1.bf16.msra.mxu0 %v3344
          %4288 = vmatprep.subr.bf16.mxu0 %v3349
          %4289 = vmatpush1.bf16.msra.mxu0 %v3348
          %4290 = vmatprep.subr.bf16.mxu0 %v3353
          %4291 = vmatpush1.bf16.msra.mxu0 %v3352
          %4292 = vmatprep.subr.bf16.mxu0 %v3357
          %4293 = vmatpush1.bf16.msra.mxu0 %v3356
          %4294 = vmatprep.subr.bf16.mxu0 %v3361
          %4295 = vmatpush1.bf16.msra.mxu0 %v3360
          %4296 = vmatprep.subr.bf16.mxu0 %v3365
          %4297 = vmatpush1.bf16.msra.mxu0 %v3364
          %4298 = vmatprep.subr.bf16.mxu0 %v3369
          %4299 = vmatpush1.bf16.msra.mxu0 %v3368
          %4300 = vmatprep.subr.bf16.mxu0 %v3373
          %4301 = vmatpush1.bf16.msra.mxu0 %v3372
          %4302 = vmatprep.subr.bf16.mxu0 %v3377
          %4303 = vmatpush1.bf16.msra.mxu0 %v3376
          %4304 = vmatprep.subr.bf16.mxu0 %v3381
          %4305 = vmatpush1.bf16.msra.mxu0 %v3380
          %4306 = vmatprep.subr.bf16.mxu0 %v3385
          %4307 = vmatpush1.bf16.msra.mxu0 %v3384
          %4308 = vmatprep.subr.bf16.mxu0 %v3389
          %4309 = vmatpush1.bf16.msra.mxu0 %v3388
          %4310 = vmatprep.mubr.bf16.mxu0 %v4013
          %4311 = vmatmul.mubr.bf16.gmra.mrb[0].mxu0 %v4012
          %v4312 = vpop.f32.mrb[0].mxu0
          %v4313 = vadd.f32 %v4272, %v4312
          %v4314 = vpop.f32.mrb[0].mxu0
          %v4315 = vadd.f32 %v4274, %v4314
          %v4316 = vpop.f32.mrb[0].mxu0
          %v4317 = vpop.f32.mrb[0].mxu0
          %4318 = vdwg.mxu0
          %4319 = vmatprep.subr.bf16.mxu0 %v3393
          %4320 = vmatpush1.bf16.msra.mxu0 %v3392
          %4321 = vmatprep.subr.bf16.mxu0 %v3397
          %4322 = vmatpush1.bf16.msra.mxu0 %v3396
          %4323 = vmatprep.subr.bf16.mxu0 %v3401
          %4324 = vmatpush1.bf16.msra.mxu0 %v3400
          %4325 = vmatprep.subr.bf16.mxu0 %v3405
          %4326 = vmatpush1.bf16.msra.mxu0 %v3404
          %4327 = vmatprep.subr.bf16.mxu0 %v3409
          %4328 = vmatpush1.bf16.msra.mxu0 %v3408
          %4329 = vmatprep.subr.bf16.mxu0 %v3413
          %4330 = vmatpush1.bf16.msra.mxu0 %v3412
          %4331 = vmatprep.subr.bf16.mxu0 %v3417
          %4332 = vmatpush1.bf16.msra.mxu0 %v3416
          %4333 = vmatprep.subr.bf16.mxu0 %v3421
          %4334 = vmatpush1.bf16.msra.mxu0 %v3420
          %4335 = vmatprep.subr.bf16.mxu0 %v3425
          %4336 = vmatpush1.bf16.msra.mxu0 %v3424
          %4337 = vmatprep.subr.bf16.mxu0 %v3429
          %4338 = vmatpush1.bf16.msra.mxu0 %v3428
          %4339 = vmatprep.subr.bf16.mxu0 %v3433
          %4340 = vmatpush1.bf16.msra.mxu0 %v3432
          %4341 = vmatprep.subr.bf16.mxu0 %v3437
          %4342 = vmatpush1.bf16.msra.mxu0 %v3436
          %4343 = vmatprep.subr.bf16.mxu0 %v3441
          %4344 = vmatpush1.bf16.msra.mxu0 %v3440
          %4345 = vmatprep.subr.bf16.mxu0 %v3445
          %4346 = vmatpush1.bf16.msra.mxu0 %v3444
          %4347 = vmatprep.subr.bf16.mxu0 %v3449
          %4348 = vmatpush1.bf16.msra.mxu0 %v3448
          %4349 = vmatprep.subr.bf16.mxu0 %v3453
          %4350 = vmatpush1.bf16.msra.mxu0 %v3452
          %4351 = vmatprep.mubr.bf16.mxu0 %v4015
          %4352 = vmatmul.mubr.bf16.gmra.mrb[0].mxu0 %v4014
          %v4353 = vpop.f32.mrb[0].mxu0
          %v4354 = vadd.f32 %v4313, %v4353
          %v4355 = vpop.f32.mrb[0].mxu0
          %v4356 = vadd.f32 %v4315, %v4355
          %v4357 = vpop.f32.mrb[0].mxu0
          %v4358 = vpop.f32.mrb[0].mxu0
          %4359 = vdwg.mxu0
          %4360 = vmatprep.subr.bf16.mxu0 %v3457
          %4361 = vmatpush1.bf16.msra.mxu0 %v3456
          %4362 = vmatprep.subr.bf16.mxu0 %v3461
          %4363 = vmatpush1.bf16.msra.mxu0 %v3460
          %4364 = vmatprep.subr.bf16.mxu0 %v3465
          %4365 = vmatpush1.bf16.msra.mxu0 %v3464
          %4366 = vmatprep.subr.bf16.mxu0 %v3469
          %4367 = vmatpush1.bf16.msra.mxu0 %v3468
          %4368 = vmatprep.subr.bf16.mxu0 %v3473
          %4369 = vmatpush1.bf16.msra.mxu0 %v3472
          %4370 = vmatprep.subr.bf16.mxu0 %v3477
          %4371 = vmatpush1.bf16.msra.mxu0 %v3476
          %4372 = vmatprep.subr.bf16.mxu0 %v3481
          %4373 = vmatpush1.bf16.msra.mxu0 %v3480
          %4374 = vmatprep.subr.bf16.mxu0 %v3485
          %4375 = vmatpush1.bf16.msra.mxu0 %v3484
          %4376 = vmatprep.subr.bf16.mxu0 %v3489
          %4377 = vmatpush1.bf16.msra.mxu0 %v3488
          %4378 = vmatprep.subr.bf16.mxu0 %v3493
          %4379 = vmatpush1.bf16.msra.mxu0 %v3492
          %4380 = vmatprep.subr.bf16.mxu0 %v3497
          %4381 = vmatpush1.bf16.msra.mxu0 %v3496
          %4382 = vmatprep.subr.bf16.mxu0 %v3501
          %4383 = vmatpush1.bf16.msra.mxu0 %v3500
          %4384 = vmatprep.subr.bf16.mxu0 %v3505
          %4385 = vmatpush1.bf16.msra.mxu0 %v3504
          %4386 = vmatprep.subr.bf16.mxu0 %v3509
          %4387 = vmatpush1.bf16.msra.mxu0 %v3508
          %4388 = vmatprep.subr.bf16.mxu0 %v3513
          %4389 = vmatpush1.bf16.msra.mxu0 %v3512
          %4390 = vmatprep.subr.bf16.mxu0 %v3517
          %4391 = vmatpush1.bf16.msra.mxu0 %v3516
          %4392 = vmatprep.mubr.bf16.mxu0 %v4017
          %4393 = vmatmul.mubr.bf16.gmra.mrb[0].mxu0 %v4016
          %v4394 = vpop.f32.mrb[0].mxu0
          %v4395 = vadd.f32 %v4354, %v4394
          %v4396 = vpop.f32.mrb[0].mxu0
          %v4397 = vadd.f32 %v4356, %v4396
          %v4398 = vpop.f32.mrb[0].mxu0
          %v4399 = vpop.f32.mrb[0].mxu0
          %4400 = vdwg.mxu0
          %4401 = vmatprep.subr.bf16.mxu0 %v3521
          %4402 = vmatpush1.bf16.msra.mxu0 %v3520
          %4403 = vmatprep.subr.bf16.mxu0 %v3525
          %4404 = vmatpush1.bf16.msra.mxu0 %v3524
          %4405 = vmatprep.subr.bf16.mxu0 %v3529
          %4406 = vmatpush1.bf16.msra.mxu0 %v3528
          %4407 = vmatprep.subr.bf16.mxu0 %v3533
          %4408 = vmatpush1.bf16.msra.mxu0 %v3532
          %4409 = vmatprep.subr.bf16.mxu0 %v3537
          %4410 = vmatpush1.bf16.msra.mxu0 %v3536
          %4411 = vmatprep.subr.bf16.mxu0 %v3541
          %4412 = vmatpush1.bf16.msra.mxu0 %v3540
          %4413 = vmatprep.subr.bf16.mxu0 %v3545
          %4414 = vmatpush1.bf16.msra.mxu0 %v3544
          %4415 = vmatprep.subr.bf16.mxu0 %v3549
          %4416 = vmatpush1.bf16.msra.mxu0 %v3548
          %4417 = vmatprep.subr.bf16.mxu0 %v3553
          %4418 = vmatpush1.bf16.msra.mxu0 %v3552
          %4419 = vmatprep.subr.bf16.mxu0 %v3557
          %4420 = vmatpush1.bf16.msra.mxu0 %v3556
          %4421 = vmatprep.subr.bf16.mxu0 %v3561
          %4422 = vmatpush1.bf16.msra.mxu0 %v3560
          %4423 = vmatprep.subr.bf16.mxu0 %v3565
          %4424 = vmatpush1.bf16.msra.mxu0 %v3564
          %4425 = vmatprep.subr.bf16.mxu0 %v3569
          %4426 = vmatpush1.bf16.msra.mxu0 %v3568
          %4427 = vmatprep.subr.bf16.mxu0 %v3573
          %4428 = vmatpush1.bf16.msra.mxu0 %v3572
          %4429 = vmatprep.subr.bf16.mxu0 %v3577
          %4430 = vmatpush1.bf16.msra.mxu0 %v3576
          %4431 = vmatprep.subr.bf16.mxu0 %v3581
          %4432 = vmatpush1.bf16.msra.mxu0 %v3580
          %4433 = vmatprep.mubr.bf16.mxu0 %v4019
          %4434 = vmatmul.mubr.bf16.gmra.mrb[0].mxu0 %v4018
          %v4435 = vpop.f32.mrb[0].mxu0
          %v4436 = vadd.f32 %v4395, %v4435
          %v4437 = vpop.f32.mrb[0].mxu0
          %v4438 = vadd.f32 %v4397, %v4437
          %v4439 = vpop.f32.mrb[0].mxu0
          %v4440 = vpop.f32.mrb[0].mxu0
          %4441 = vdwg.mxu0
          %4442 = vmatprep.subr.bf16.mxu0 %v3585
          %4443 = vmatpush1.bf16.msra.mxu0 %v3584
          %4444 = vmatprep.subr.bf16.mxu0 %v3589
          %4445 = vmatpush1.bf16.msra.mxu0 %v3588
          %4446 = vmatprep.subr.bf16.mxu0 %v3593
          %4447 = vmatpush1.bf16.msra.mxu0 %v3592
          %4448 = vmatprep.subr.bf16.mxu0 %v3597
          %4449 = vmatpush1.bf16.msra.mxu0 %v3596
          %4450 = vmatprep.subr.bf16.mxu0 %v3601
          %4451 = vmatpush1.bf16.msra.mxu0 %v3600
          %4452 = vmatprep.subr.bf16.mxu0 %v3605
          %4453 = vmatpush1.bf16.msra.mxu0 %v3604
          %4454 = vmatprep.subr.bf16.mxu0 %v3609
          %4455 = vmatpush1.bf16.msra.mxu0 %v3608
          %4456 = vmatprep.subr.bf16.mxu0 %v3613
          %4457 = vmatpush1.bf16.msra.mxu0 %v3612
          %4458 = vmatprep.subr.bf16.mxu0 %v3617
          %4459 = vmatpush1.bf16.msra.mxu0 %v3616
          %4460 = vmatprep.subr.bf16.mxu0 %v3621
          %4461 = vmatpush1.bf16.msra.mxu0 %v3620
          %4462 = vmatprep.subr.bf16.mxu0 %v3625
          %4463 = vmatpush1.bf16.msra.mxu0 %v3624
          %4464 = vmatprep.subr.bf16.mxu0 %v3629
          %4465 = vmatpush1.bf16.msra.mxu0 %v3628
          %4466 = vmatprep.subr.bf16.mxu0 %v3633
          %4467 = vmatpush1.bf16.msra.mxu0 %v3632
          %4468 = vmatprep.subr.bf16.mxu0 %v3637
          %4469 = vmatpush1.bf16.msra.mxu0 %v3636
          %4470 = vmatprep.subr.bf16.mxu0 %v3641
          %4471 = vmatpush1.bf16.msra.mxu0 %v3640
          %4472 = vmatprep.subr.bf16.mxu0 %v3645
          %4473 = vmatpush1.bf16.msra.mxu0 %v3644
          %4474 = vmatprep.mubr.bf16.mxu0 %v4021
          %4475 = vmatmul.mubr.bf16.gmra.mrb[0].mxu0 %v4020
          %v4476 = vpop.f32.mrb[0].mxu0
          %v4477 = vadd.f32 %v4436, %v4476
          %v4478 = vpop.f32.mrb[0].mxu0
          %v4479 = vadd.f32 %v4438, %v4478
          %v4480 = vpop.f32.mrb[0].mxu0
          %v4481 = vpop.f32.mrb[0].mxu0
          %4482 = vdwg.mxu0
          %4483 = vmatprep.subr.bf16.mxu0 %v3649
          %4484 = vmatpush1.bf16.msra.mxu0 %v3648
          %4485 = vmatprep.subr.bf16.mxu0 %v3653
          %4486 = vmatpush1.bf16.msra.mxu0 %v3652
          %4487 = vmatprep.subr.bf16.mxu0 %v3657
          %4488 = vmatpush1.bf16.msra.mxu0 %v3656
          %4489 = vmatprep.subr.bf16.mxu0 %v3661
          %4490 = vmatpush1.bf16.msra.mxu0 %v3660
          %4491 = vmatprep.subr.bf16.mxu0 %v3665
          %4492 = vmatpush1.bf16.msra.mxu0 %v3664
          %4493 = vmatprep.subr.bf16.mxu0 %v3669
          %4494 = vmatpush1.bf16.msra.mxu0 %v3668
          %4495 = vmatprep.subr.bf16.mxu0 %v3673
          %4496 = vmatpush1.bf16.msra.mxu0 %v3672
          %4497 = vmatprep.subr.bf16.mxu0 %v3677
          %4498 = vmatpush1.bf16.msra.mxu0 %v3676
          %4499 = vmatprep.subr.bf16.mxu0 %v3681
          %4500 = vmatpush1.bf16.msra.mxu0 %v3680
          %4501 = vmatprep.subr.bf16.mxu0 %v3685
          %4502 = vmatpush1.bf16.msra.mxu0 %v3684
          %4503 = vmatprep.subr.bf16.mxu0 %v3689
          %4504 = vmatpush1.bf16.msra.mxu0 %v3688
          %4505 = vmatprep.subr.bf16.mxu0 %v3693
          %4506 = vmatpush1.bf16.msra.mxu0 %v3692
          %4507 = vmatprep.subr.bf16.mxu0 %v3697
          %4508 = vmatpush1.bf16.msra.mxu0 %v3696
          %4509 = vmatprep.subr.bf16.mxu0 %v3701
          %4510 = vmatpush1.bf16.msra.mxu0 %v3700
          %4511 = vmatprep.subr.bf16.mxu0 %v3705
          %4512 = vmatpush1.bf16.msra.mxu0 %v3704
          %4513 = vmatprep.subr.bf16.mxu0 %v3709
          %4514 = vmatpush1.bf16.msra.mxu0 %v3708
          %4515 = vmatprep.mubr.bf16.mxu0 %v4023
          %4516 = vmatmul.mubr.bf16.gmra.mrb[0].mxu0 %v4022
          %v4517 = vpop.f32.mrb[0].mxu0
          %v4518 = vadd.f32 %v4477, %v4517
          %v4519 = vpop.f32.mrb[0].mxu0
          %v4520 = vadd.f32 %v4479, %v4519
          %v4521 = vpop.f32.mrb[0].mxu0
          %v4522 = vpop.f32.mrb[0].mxu0
          %4523 = vdwg.mxu0
          %4524 = vmatprep.subr.bf16.mxu0 %v3713
          %4525 = vmatpush1.bf16.msra.mxu0 %v3712
          %4526 = vmatprep.subr.bf16.mxu0 %v3717
          %4527 = vmatpush1.bf16.msra.mxu0 %v3716
          %4528 = vmatprep.subr.bf16.mxu0 %v3721
          %4529 = vmatpush1.bf16.msra.mxu0 %v3720
          %4530 = vmatprep.subr.bf16.mxu0 %v3725
          %4531 = vmatpush1.bf16.msra.mxu0 %v3724
          %4532 = vmatprep.subr.bf16.mxu0 %v3729
          %4533 = vmatpush1.bf16.msra.mxu0 %v3728
          %4534 = vmatprep.subr.bf16.mxu0 %v3733
          %4535 = vmatpush1.bf16.msra.mxu0 %v3732
          %4536 = vmatprep.subr.bf16.mxu0 %v3737
          %4537 = vmatpush1.bf16.msra.mxu0 %v3736
          %4538 = vmatprep.subr.bf16.mxu0 %v3741
          %4539 = vmatpush1.bf16.msra.mxu0 %v3740
          %4540 = vmatprep.subr.bf16.mxu0 %v3745
          %4541 = vmatpush1.bf16.msra.mxu0 %v3744
          %4542 = vmatprep.subr.bf16.mxu0 %v3749
          %4543 = vmatpush1.bf16.msra.mxu0 %v3748
          %4544 = vmatprep.subr.bf16.mxu0 %v3753
          %4545 = vmatpush1.bf16.msra.mxu0 %v3752
          %4546 = vmatprep.subr.bf16.mxu0 %v3757
          %4547 = vmatpush1.bf16.msra.mxu0 %v3756
          %4548 = vmatprep.subr.bf16.mxu0 %v3761
          %4549 = vmatpush1.bf16.msra.mxu0 %v3760
          %4550 = vmatprep.subr.bf16.mxu0 %v3765
          %4551 = vmatpush1.bf16.msra.mxu0 %v3764
          %4552 = vmatprep.subr.bf16.mxu0 %v3769
          %4553 = vmatpush1.bf16.msra.mxu0 %v3768
          %4554 = vmatprep.subr.bf16.mxu0 %v3773
          %4555 = vmatpush1.bf16.msra.mxu0 %v3772
          %4556 = vmatprep.mubr.bf16.mxu0 %v4025
          %4557 = vmatmul.mubr.bf16.gmra.mrb[0].mxu0 %v4024
          %v4558 = vpop.f32.mrb[0].mxu0
          %v4559 = vadd.f32 %v4518, %v4558
          %v4560 = vpop.f32.mrb[0].mxu0
          %v4561 = vadd.f32 %v4520, %v4560
          %v4562 = vpop.f32.mrb[0].mxu0
          %v4563 = vpop.f32.mrb[0].mxu0
          %4564 = vdwg.mxu0
          %4565 = vmatprep.subr.bf16.mxu0 %v3777
          %4566 = vmatpush1.bf16.msra.mxu0 %v3776
          %4567 = vmatprep.subr.bf16.mxu0 %v3781
          %4568 = vmatpush1.bf16.msra.mxu0 %v3780
          %4569 = vmatprep.subr.bf16.mxu0 %v3785
          %4570 = vmatpush1.bf16.msra.mxu0 %v3784
          %4571 = vmatprep.subr.bf16.mxu0 %v3789
          %4572 = vmatpush1.bf16.msra.mxu0 %v3788
          %4573 = vmatprep.subr.bf16.mxu0 %v3793
          %4574 = vmatpush1.bf16.msra.mxu0 %v3792
          %4575 = vmatprep.subr.bf16.mxu0 %v3797
          %4576 = vmatpush1.bf16.msra.mxu0 %v3796
          %4577 = vmatprep.subr.bf16.mxu0 %v3801
          %4578 = vmatpush1.bf16.msra.mxu0 %v3800
          %4579 = vmatprep.subr.bf16.mxu0 %v3805
          %4580 = vmatpush1.bf16.msra.mxu0 %v3804
          %4581 = vmatprep.subr.bf16.mxu0 %v3809
          %4582 = vmatpush1.bf16.msra.mxu0 %v3808
          %4583 = vmatprep.subr.bf16.mxu0 %v3813
          %4584 = vmatpush1.bf16.msra.mxu0 %v3812
          %4585 = vmatprep.subr.bf16.mxu0 %v3817
          %4586 = vmatpush1.bf16.msra.mxu0 %v3816
          %4587 = vmatprep.subr.bf16.mxu0 %v3821
          %4588 = vmatpush1.bf16.msra.mxu0 %v3820
          %4589 = vmatprep.subr.bf16.mxu0 %v3825
          %4590 = vmatpush1.bf16.msra.mxu0 %v3824
          %4591 = vmatprep.subr.bf16.mxu0 %v3829
          %4592 = vmatpush1.bf16.msra.mxu0 %v3828
          %4593 = vmatprep.subr.bf16.mxu0 %v3833
          %4594 = vmatpush1.bf16.msra.mxu0 %v3832
          %4595 = vmatprep.subr.bf16.mxu0 %v3837
          %4596 = vmatpush1.bf16.msra.mxu0 %v3836
          %4597 = vmatprep.mubr.bf16.mxu0 %v4027
          %4598 = vmatmul.mubr.bf16.gmra.mrb[0].mxu0 %v4026
          %v4599 = vpop.f32.mrb[0].mxu0
          %v4600 = vadd.f32 %v4559, %v4599
          %v4601 = vpop.f32.mrb[0].mxu0
          %v4602 = vadd.f32 %v4561, %v4601
          %v4603 = vpop.f32.mrb[0].mxu0
          %v4604 = vpop.f32.mrb[0].mxu0
          %4605 = vdwg.mxu0
          %4606 = vmatprep.subr.bf16.mxu0 %v3841
          %4607 = vmatpush1.bf16.msra.mxu0 %v3840
          %4608 = vmatprep.subr.bf16.mxu0 %v3845
          %4609 = vmatpush1.bf16.msra.mxu0 %v3844
          %4610 = vmatprep.subr.bf16.mxu0 %v3849
          %4611 = vmatpush1.bf16.msra.mxu0 %v3848
          %4612 = vmatprep.subr.bf16.mxu0 %v3853
          %4613 = vmatpush1.bf16.msra.mxu0 %v3852
          %4614 = vmatprep.subr.bf16.mxu0 %v3857
          %4615 = vmatpush1.bf16.msra.mxu0 %v3856
          %4616 = vmatprep.subr.bf16.mxu0 %v3861
          %4617 = vmatpush1.bf16.msra.mxu0 %v3860
          %4618 = vmatprep.subr.bf16.mxu0 %v3865
          %4619 = vmatpush1.bf16.msra.mxu0 %v3864
          %4620 = vmatprep.subr.bf16.mxu0 %v3869
          %4621 = vmatpush1.bf16.msra.mxu0 %v3868
          %4622 = vmatprep.subr.bf16.mxu0 %v3873
          %4623 = vmatpush1.bf16.msra.mxu0 %v3872
          %4624 = vmatprep.subr.bf16.mxu0 %v3877
          %4625 = vmatpush1.bf16.msra.mxu0 %v3876
          %4626 = vmatprep.subr.bf16.mxu0 %v3881
          %4627 = vmatpush1.bf16.msra.mxu0 %v3880
          %4628 = vmatprep.subr.bf16.mxu0 %v3885
          %4629 = vmatpush1.bf16.msra.mxu0 %v3884
          %4630 = vmatprep.subr.bf16.mxu0 %v3889
          %4631 = vmatpush1.bf16.msra.mxu0 %v3888
          %4632 = vmatprep.subr.bf16.mxu0 %v3893
          %4633 = vmatpush1.bf16.msra.mxu0 %v3892
          %4634 = vmatprep.subr.bf16.mxu0 %v3897
          %4635 = vmatpush1.bf16.msra.mxu0 %v3896
          %4636 = vmatprep.subr.bf16.mxu0 %v3901
          %4637 = vmatpush1.bf16.msra.mxu0 %v3900
          %4638 = vmatprep.mubr.bf16.mxu0 %v4029
          %4639 = vmatmul.mubr.bf16.gmra.mrb[0].mxu0 %v4028
          %v4640 = vpop.f32.mrb[0].mxu0
          %v4641 = vadd.f32 %v4600, %v4640
          %v4642 = vpop.f32.mrb[0].mxu0
          %v4643 = vadd.f32 %v4602, %v4642
          %v4644 = vpop.f32.mrb[0].mxu0
          %v4645 = vpop.f32.mrb[0].mxu0
          %4646 = vdwg.mxu0
          %4647 = vmatprep.subr.bf16.mxu0 %v3905
          %4648 = vmatpush1.bf16.msra.mxu0 %v3904
          %4649 = vmatprep.subr.bf16.mxu0 %v3909
          %4650 = vmatpush1.bf16.msra.mxu0 %v3908
          %4651 = vmatprep.subr.bf16.mxu0 %v3913
          %4652 = vmatpush1.bf16.msra.mxu0 %v3912
          %4653 = vmatprep.subr.bf16.mxu0 %v3917
          %4654 = vmatpush1.bf16.msra.mxu0 %v3916
          %4655 = vmatprep.subr.bf16.mxu0 %v3921
          %4656 = vmatpush1.bf16.msra.mxu0 %v3920
          %4657 = vmatprep.subr.bf16.mxu0 %v3925
          %4658 = vmatpush1.bf16.msra.mxu0 %v3924
          %4659 = vmatprep.subr.bf16.mxu0 %v3929
          %4660 = vmatpush1.bf16.msra.mxu0 %v3928
          %4661 = vmatprep.subr.bf16.mxu0 %v3933
          %4662 = vmatpush1.bf16.msra.mxu0 %v3932
          %4663 = vmatprep.subr.bf16.mxu0 %v3937
          %4664 = vmatpush1.bf16.msra.mxu0 %v3936
          %4665 = vmatprep.subr.bf16.mxu0 %v3941
          %4666 = vmatpush1.bf16.msra.mxu0 %v3940
          %4667 = vmatprep.subr.bf16.mxu0 %v3945
          %4668 = vmatpush1.bf16.msra.mxu0 %v3944
          %4669 = vmatprep.subr.bf16.mxu0 %v3949
          %4670 = vmatpush1.bf16.msra.mxu0 %v3948
          %4671 = vmatprep.subr.bf16.mxu0 %v3953
          %4672 = vmatpush1.bf16.msra.mxu0 %v3952
          %4673 = vmatprep.subr.bf16.mxu0 %v3957
          %4674 = vmatpush1.bf16.msra.mxu0 %v3956
          %4675 = vmatprep.subr.bf16.mxu0 %v3961
          %4676 = vmatpush1.bf16.msra.mxu0 %v3960
          %4677 = vmatprep.subr.bf16.mxu0 %v3965
          %4678 = vmatpush1.bf16.msra.mxu0 %v3964
          %4679 = vmatprep.mubr.bf16.mxu0 %v4031
          %4680 = vmatmul.mubr.bf16.gmra.mrb[0].mxu0 %v4030
          %v4681 = vpop.f32.mrb[0].mxu0
          %v4682 = vadd.f32 %v4641, %v4681
          %v4683 = vpop.f32.mrb[0].mxu0
          %v4684 = vadd.f32 %v4643, %v4683
          %v4685 = vpop.f32.mrb[0].mxu0
          %v4686 = vpop.f32.mrb[0].mxu0
          %4687 = vdwg.mxu0
          %4688 = vmatprep.subr.bf16.mxu0 %v2947
          %4689 = vmatpush1.bf16.msra.mxu0 %v2946
          %4690 = vmatprep.subr.bf16.mxu0 %v2951
          %4691 = vmatpush1.bf16.msra.mxu0 %v2950
          %4692 = vmatprep.subr.bf16.mxu0 %v2955
          %4693 = vmatpush1.bf16.msra.mxu0 %v2954
          %4694 = vmatprep.subr.bf16.mxu0 %v2959
          %4695 = vmatpush1.bf16.msra.mxu0 %v2958
          %4696 = vmatprep.subr.bf16.mxu0 %v2963
          %4697 = vmatpush1.bf16.msra.mxu0 %v2962
          %4698 = vmatprep.subr.bf16.mxu0 %v2967
          %4699 = vmatpush1.bf16.msra.mxu0 %v2966
          %4700 = vmatprep.subr.bf16.mxu0 %v2971
          %4701 = vmatpush1.bf16.msra.mxu0 %v2970
          %4702 = vmatprep.subr.bf16.mxu0 %v2975
          %4703 = vmatpush1.bf16.msra.mxu0 %v2974
          %4704 = vmatprep.subr.bf16.mxu0 %v2979
          %4705 = vmatpush1.bf16.msra.mxu0 %v2978
          %4706 = vmatprep.subr.bf16.mxu0 %v2983
          %4707 = vmatpush1.bf16.msra.mxu0 %v2982
          %4708 = vmatprep.subr.bf16.mxu0 %v2987
          %4709 = vmatpush1.bf16.msra.mxu0 %v2986
          %4710 = vmatprep.subr.bf16.mxu0 %v2991
          %4711 = vmatpush1.bf16.msra.mxu0 %v2990
          %4712 = vmatprep.subr.bf16.mxu0 %v2995
          %4713 = vmatpush1.bf16.msra.mxu0 %v2994
          %4714 = vmatprep.subr.bf16.mxu0 %v2999
          %4715 = vmatpush1.bf16.msra.mxu0 %v2998
          %4716 = vmatprep.subr.bf16.mxu0 %v3003
          %4717 = vmatpush1.bf16.msra.mxu0 %v3002
          %4718 = vmatprep.subr.bf16.mxu0 %v3007
          %4719 = vmatpush1.bf16.msra.mxu0 %v3006
          %4720 = vmatprep.mubr.bf16.mxu0 %v4001
          %4721 = vmatmul.mubr.bf16.gmra.mrb[0].mxu0 %v4000
          %v4722 = vpop.f32.mrb[0].mxu0
          %v4723 = vadd.f32 0.0, %v4722
          %v4724 = vpop.f32.mrb[0].mxu0
          %v4725 = vadd.f32 0.0, %v4724
          %v4726 = vpop.f32.mrb[0].mxu0
          %v4727 = vpop.f32.mrb[0].mxu0
          %4728 = vdwg.mxu0
          %4729 = vmatprep.subr.bf16.mxu0 %v3011
          %4730 = vmatpush1.bf16.msra.mxu0 %v3010
          %4731 = vmatprep.subr.bf16.mxu0 %v3015
          %4732 = vmatpush1.bf16.msra.mxu0 %v3014
          %4733 = vmatprep.subr.bf16.mxu0 %v3019
          %4734 = vmatpush1.bf16.msra.mxu0 %v3018
          %4735 = vmatprep.subr.bf16.mxu0 %v3023
          %4736 = vmatpush1.bf16.msra.mxu0 %v3022
          %4737 = vmatprep.subr.bf16.mxu0 %v3027
          %4738 = vmatpush1.bf16.msra.mxu0 %v3026
          %4739 = vmatprep.subr.bf16.mxu0 %v3031
          %4740 = vmatpush1.bf16.msra.mxu0 %v3030
          %4741 = vmatprep.subr.bf16.mxu0 %v3035
          %4742 = vmatpush1.bf16.msra.mxu0 %v3034
          %4743 = vmatprep.subr.bf16.mxu0 %v3039
          %4744 = vmatpush1.bf16.msra.mxu0 %v3038
          %4745 = vmatprep.subr.bf16.mxu0 %v3043
          %4746 = vmatpush1.bf16.msra.mxu0 %v3042
          %4747 = vmatprep.subr.bf16.mxu0 %v3047
          %4748 = vmatpush1.bf16.msra.mxu0 %v3046
          %4749 = vmatprep.subr.bf16.mxu0 %v3051
          %4750 = vmatpush1.bf16.msra.mxu0 %v3050
          %4751 = vmatprep.subr.bf16.mxu0 %v3055
          %4752 = vmatpush1.bf16.msra.mxu0 %v3054
          %4753 = vmatprep.subr.bf16.mxu0 %v3059
          %4754 = vmatpush1.bf16.msra.mxu0 %v3058
          %4755 = vmatprep.subr.bf16.mxu0 %v3063
          %4756 = vmatpush1.bf16.msra.mxu0 %v3062
          %4757 = vmatprep.subr.bf16.mxu0 %v3067
          %4758 = vmatpush1.bf16.msra.mxu0 %v3066
          %4759 = vmatprep.subr.bf16.mxu0 %v3071
          %4760 = vmatpush1.bf16.msra.mxu0 %v3070
          %4761 = vmatprep.mubr.bf16.mxu0 %v4003
          %4762 = vmatmul.mubr.bf16.gmra.mrb[0].mxu0 %v4002
          %v4763 = vpop.f32.mrb[0].mxu0
          %v4764 = vadd.f32 %v4723, %v4763
          %v4765 = vpop.f32.mrb[0].mxu0
          %v4766 = vadd.f32 %v4725, %v4765
          %v4767 = vpop.f32.mrb[0].mxu0
          %v4768 = vpop.f32.mrb[0].mxu0
          %4769 = vdwg.mxu0
          %4770 = vmatprep.subr.bf16.mxu0 %v3075
          %4771 = vmatpush1.bf16.msra.mxu0 %v3074
          %4772 = vmatprep.subr.bf16.mxu0 %v3079
          %4773 = vmatpush1.bf16.msra.mxu0 %v3078
          %4774 = vmatprep.subr.bf16.mxu0 %v3083
          %4775 = vmatpush1.bf16.msra.mxu0 %v3082
          %4776 = vmatprep.subr.bf16.mxu0 %v3087
          %4777 = vmatpush1.bf16.msra.mxu0 %v3086
          %4778 = vmatprep.subr.bf16.mxu0 %v3091
          %4779 = vmatpush1.bf16.msra.mxu0 %v3090
          %4780 = vmatprep.subr.bf16.mxu0 %v3095
          %4781 = vmatpush1.bf16.msra.mxu0 %v3094
          %4782 = vmatprep.subr.bf16.mxu0 %v3099
          %4783 = vmatpush1.bf16.msra.mxu0 %v3098
          %4784 = vmatprep.subr.bf16.mxu0 %v3103
          %4785 = vmatpush1.bf16.msra.mxu0 %v3102
          %4786 = vmatprep.subr.bf16.mxu0 %v3107
          %4787 = vmatpush1.bf16.msra.mxu0 %v3106
          %4788 = vmatprep.subr.bf16.mxu0 %v3111
          %4789 = vmatpush1.bf16.msra.mxu0 %v3110
          %4790 = vmatprep.subr.bf16.mxu0 %v3115
          %4791 = vmatpush1.bf16.msra.mxu0 %v3114
          %4792 = vmatprep.subr.bf16.mxu0 %v3119
          %4793 = vmatpush1.bf16.msra.mxu0 %v3118
          %4794 = vmatprep.subr.bf16.mxu0 %v3123
          %4795 = vmatpush1.bf16.msra.mxu0 %v3122
          %4796 = vmatprep.subr.bf16.mxu0 %v3127
          %4797 = vmatpush1.bf16.msra.mxu0 %v3126
          %4798 = vmatprep.subr.bf16.mxu0 %v3131
          %4799 = vmatpush1.bf16.msra.mxu0 %v3130
          %4800 = vmatprep.subr.bf16.mxu0 %v3135
          %4801 = vmatpush1.bf16.msra.mxu0 %v3134
          %4802 = vmatprep.mubr.bf16.mxu0 %v4005
          %4803 = vmatmul.mubr.bf16.gmra.mrb[0].mxu0 %v4004
          %v4804 = vpop.f32.mrb[0].mxu0
          %v4805 = vadd.f32 %v4764, %v4804
          %v4806 = vpop.f32.mrb[0].mxu0
          %v4807 = vadd.f32 %v4766, %v4806
          %v4808 = vpop.f32.mrb[0].mxu0
          %v4809 = vpop.f32.mrb[0].mxu0
          %4810 = vdwg.mxu0
          %4811 = vmatprep.subr.bf16.mxu0 %v3139
          %4812 = vmatpush1.bf16.msra.mxu0 %v3138
          %4813 = vmatprep.subr.bf16.mxu0 %v3143
          %4814 = vmatpush1.bf16.msra.mxu0 %v3142
          %4815 = vmatprep.subr.bf16.mxu0 %v3147
          %4816 = vmatpush1.bf16.msra.mxu0 %v3146
          %4817 = vmatprep.subr.bf16.mxu0 %v3151
          %4818 = vmatpush1.bf16.msra.mxu0 %v3150
          %4819 = vmatprep.subr.bf16.mxu0 %v3155
          %4820 = vmatpush1.bf16.msra.mxu0 %v3154
          %4821 = vmatprep.subr.bf16.mxu0 %v3159
          %4822 = vmatpush1.bf16.msra.mxu0 %v3158
          %4823 = vmatprep.subr.bf16.mxu0 %v3163
          %4824 = vmatpush1.bf16.msra.mxu0 %v3162
          %4825 = vmatprep.subr.bf16.mxu0 %v3167
          %4826 = vmatpush1.bf16.msra.mxu0 %v3166
          %4827 = vmatprep.subr.bf16.mxu0 %v3171
          %4828 = vmatpush1.bf16.msra.mxu0 %v3170
          %4829 = vmatprep.subr.bf16.mxu0 %v3175
          %4830 = vmatpush1.bf16.msra.mxu0 %v3174
          %4831 = vmatprep.subr.bf16.mxu0 %v3179
          %4832 = vmatpush1.bf16.msra.mxu0 %v3178
          %4833 = vmatprep.subr.bf16.mxu0 %v3183
          %4834 = vmatpush1.bf16.msra.mxu0 %v3182
          %4835 = vmatprep.subr.bf16.mxu0 %v3187
          %4836 = vmatpush1.bf16.msra.mxu0 %v3186
          %4837 = vmatprep.subr.bf16.mxu0 %v3191
          %4838 = vmatpush1.bf16.msra.mxu0 %v3190
          %4839 = vmatprep.subr.bf16.mxu0 %v3195
          %4840 = vmatpush1.bf16.msra.mxu0 %v3194
          %4841 = vmatprep.subr.bf16.mxu0 %v3199
          %4842 = vmatpush1.bf16.msra.mxu0 %v3198
          %4843 = vmatprep.mubr.bf16.mxu0 %v4007
          %4844 = vmatmul.mubr.bf16.gmra.mrb[0].mxu0 %v4006
          %v4845 = vpop.f32.mrb[0].mxu0
          %v4846 = vadd.f32 %v4805, %v4845
          %v4847 = vpop.f32.mrb[0].mxu0
          %v4848 = vadd.f32 %v4807, %v4847
          %v4849 = vpop.f32.mrb[0].mxu0
          %v4850 = vpop.f32.mrb[0].mxu0
          %4851 = vdwg.mxu0
          %4852 = vmatprep.subr.bf16.mxu0 %v3203
          %4853 = vmatpush1.bf16.msra.mxu0 %v3202
          %4854 = vmatprep.subr.bf16.mxu0 %v3207
          %4855 = vmatpush1.bf16.msra.mxu0 %v3206
          %4856 = vmatprep.subr.bf16.mxu0 %v3211
          %4857 = vmatpush1.bf16.msra.mxu0 %v3210
          %4858 = vmatprep.subr.bf16.mxu0 %v3215
          %4859 = vmatpush1.bf16.msra.mxu0 %v3214
          %4860 = vmatprep.subr.bf16.mxu0 %v3219
          %4861 = vmatpush1.bf16.msra.mxu0 %v3218
          %4862 = vmatprep.subr.bf16.mxu0 %v3223
          %4863 = vmatpush1.bf16.msra.mxu0 %v3222
          %4864 = vmatprep.subr.bf16.mxu0 %v3227
          %4865 = vmatpush1.bf16.msra.mxu0 %v3226
          %4866 = vmatprep.subr.bf16.mxu0 %v3231
          %4867 = vmatpush1.bf16.msra.mxu0 %v3230
          %4868 = vmatprep.subr.bf16.mxu0 %v3235
          %4869 = vmatpush1.bf16.msra.mxu0 %v3234
          %4870 = vmatprep.subr.bf16.mxu0 %v3239
          %4871 = vmatpush1.bf16.msra.mxu0 %v3238
          %4872 = vmatprep.subr.bf16.mxu0 %v3243
          %4873 = vmatpush1.bf16.msra.mxu0 %v3242
          %4874 = vmatprep.subr.bf16.mxu0 %v3247
          %4875 = vmatpush1.bf16.msra.mxu0 %v3246
          %4876 = vmatprep.subr.bf16.mxu0 %v3251
          %4877 = vmatpush1.bf16.msra.mxu0 %v3250
          %4878 = vmatprep.subr.bf16.mxu0 %v3255
          %4879 = vmatpush1.bf16.msra.mxu0 %v3254
          %4880 = vmatprep.subr.bf16.mxu0 %v3259
          %4881 = vmatpush1.bf16.msra.mxu0 %v3258
          %4882 = vmatprep.subr.bf16.mxu0 %v3263
          %4883 = vmatpush1.bf16.msra.mxu0 %v3262
          %4884 = vmatprep.mubr.bf16.mxu0 %v4009
          %4885 = vmatmul.mubr.bf16.gmra.mrb[0].mxu0 %v4008
          %v4886 = vpop.f32.mrb[0].mxu0
          %v4887 = vadd.f32 %v4846, %v4886
          %v4888 = vpop.f32.mrb[0].mxu0
          %v4889 = vadd.f32 %v4848, %v4888
          %v4890 = vpop.f32.mrb[0].mxu0
          %v4891 = vpop.f32.mrb[0].mxu0
          %4892 = vdwg.mxu0
          %4893 = vmatprep.subr.bf16.mxu0 %v3267
          %4894 = vmatpush1.bf16.msra.mxu0 %v3266
          %4895 = vmatprep.subr.bf16.mxu0 %v3271
          %4896 = vmatpush1.bf16.msra.mxu0 %v3270
          %4897 = vmatprep.subr.bf16.mxu0 %v3275
          %4898 = vmatpush1.bf16.msra.mxu0 %v3274
          %4899 = vmatprep.subr.bf16.mxu0 %v3279
          %4900 = vmatpush1.bf16.msra.mxu0 %v3278
          %4901 = vmatprep.subr.bf16.mxu0 %v3283
          %4902 = vmatpush1.bf16.msra.mxu0 %v3282
          %4903 = vmatprep.subr.bf16.mxu0 %v3287
          %4904 = vmatpush1.bf16.msra.mxu0 %v3286
          %4905 = vmatprep.subr.bf16.mxu0 %v3291
          %4906 = vmatpush1.bf16.msra.mxu0 %v3290
          %4907 = vmatprep.subr.bf16.mxu0 %v3295
          %4908 = vmatpush1.bf16.msra.mxu0 %v3294
          %4909 = vmatprep.subr.bf16.mxu0 %v3299
          %4910 = vmatpush1.bf16.msra.mxu0 %v3298
          %4911 = vmatprep.subr.bf16.mxu0 %v3303
          %4912 = vmatpush1.bf16.msra.mxu0 %v3302
          %4913 = vmatprep.subr.bf16.mxu0 %v3307
          %4914 = vmatpush1.bf16.msra.mxu0 %v3306
          %4915 = vmatprep.subr.bf16.mxu0 %v3311
          %4916 = vmatpush1.bf16.msra.mxu0 %v3310
          %4917 = vmatprep.subr.bf16.mxu0 %v3315
          %4918 = vmatpush1.bf16.msra.mxu0 %v3314
          %4919 = vmatprep.subr.bf16.mxu0 %v3319
          %4920 = vmatpush1.bf16.msra.mxu0 %v3318
          %4921 = vmatprep.subr.bf16.mxu0 %v3323
          %4922 = vmatpush1.bf16.msra.mxu0 %v3322
          %4923 = vmatprep.subr.bf16.mxu0 %v3327
          %4924 = vmatpush1.bf16.msra.mxu0 %v3326
          %4925 = vmatprep.mubr.bf16.mxu0 %v4011
          %4926 = vmatmul.mubr.bf16.gmra.mrb[0].mxu0 %v4010
          %v4927 = vpop.f32.mrb[0].mxu0
          %v4928 = vadd.f32 %v4887, %v4927
          %v4929 = vpop.f32.mrb[0].mxu0
          %v4930 = vadd.f32 %v4889, %v4929
          %v4931 = vpop.f32.mrb[0].mxu0
          %v4932 = vpop.f32.mrb[0].mxu0
          %4933 = vdwg.mxu0
          %4934 = vmatprep.subr.bf16.mxu0 %v3331
          %4935 = vmatpush1.bf16.msra.mxu0 %v3330
          %4936 = vmatprep.subr.bf16.mxu0 %v3335
          %4937 = vmatpush1.bf16.msra.mxu0 %v3334
          %4938 = vmatprep.subr.bf16.mxu0 %v3339
          %4939 = vmatpush1.bf16.msra.mxu0 %v3338
          %4940 = vmatprep.subr.bf16.mxu0 %v3343
          %4941 = vmatpush1.bf16.msra.mxu0 %v3342
          %4942 = vmatprep.subr.bf16.mxu0 %v3347
          %4943 = vmatpush1.bf16.msra.mxu0 %v3346
          %4944 = vmatprep.subr.bf16.mxu0 %v3351
          %4945 = vmatpush1.bf16.msra.mxu0 %v3350
          %4946 = vmatprep.subr.bf16.mxu0 %v3355
          %4947 = vmatpush1.bf16.msra.mxu0 %v3354
          %4948 = vmatprep.subr.bf16.mxu0 %v3359
          %4949 = vmatpush1.bf16.msra.mxu0 %v3358
          %4950 = vmatprep.subr.bf16.mxu0 %v3363
          %4951 = vmatpush1.bf16.msra.mxu0 %v3362
          %4952 = vmatprep.subr.bf16.mxu0 %v3367
          %4953 = vmatpush1.bf16.msra.mxu0 %v3366
          %4954 = vmatprep.subr.bf16.mxu0 %v3371
          %4955 = vmatpush1.bf16.msra.mxu0 %v3370
          %4956 = vmatprep.subr.bf16.mxu0 %v3375
          %4957 = vmatpush1.bf16.msra.mxu0 %v3374
          %4958 = vmatprep.subr.bf16.mxu0 %v3379
          %4959 = vmatpush1.bf16.msra.mxu0 %v3378
          %4960 = vmatprep.subr.bf16.mxu0 %v3383
          %4961 = vmatpush1.bf16.msra.mxu0 %v3382
          %4962 = vmatprep.subr.bf16.mxu0 %v3387
          %4963 = vmatpush1.bf16.msra.mxu0 %v3386
          %4964 = vmatprep.subr.bf16.mxu0 %v3391
          %4965 = vmatpush1.bf16.msra.mxu0 %v3390
          %4966 = vmatprep.mubr.bf16.mxu0 %v4013
          %4967 = vmatmul.mubr.bf16.gmra.mrb[0].mxu0 %v4012
          %v4968 = vpop.f32.mrb[0].mxu0
          %v4969 = vadd.f32 %v4928, %v4968
          %v4970 = vpop.f32.mrb[0].mxu0
          %v4971 = vadd.f32 %v4930, %v4970
          %v4972 = vpop.f32.mrb[0].mxu0
          %v4973 = vpop.f32.mrb[0].mxu0
          %4974 = vdwg.mxu0
          %4975 = vmatprep.subr.bf16.mxu0 %v3395
          %4976 = vmatpush1.bf16.msra.mxu0 %v3394
          %4977 = vmatprep.subr.bf16.mxu0 %v3399
          %4978 = vmatpush1.bf16.msra.mxu0 %v3398
          %4979 = vmatprep.subr.bf16.mxu0 %v3403
          %4980 = vmatpush1.bf16.msra.mxu0 %v3402
          %4981 = vmatprep.subr.bf16.mxu0 %v3407
          %4982 = vmatpush1.bf16.msra.mxu0 %v3406
          %4983 = vmatprep.subr.bf16.mxu0 %v3411
          %4984 = vmatpush1.bf16.msra.mxu0 %v3410
          %4985 = vmatprep.subr.bf16.mxu0 %v3415
          %4986 = vmatpush1.bf16.msra.mxu0 %v3414
          %4987 = vmatprep.subr.bf16.mxu0 %v3419
          %4988 = vmatpush1.bf16.msra.mxu0 %v3418
          %4989 = vmatprep.subr.bf16.mxu0 %v3423
          %4990 = vmatpush1.bf16.msra.mxu0 %v3422
          %4991 = vmatprep.subr.bf16.mxu0 %v3427
          %4992 = vmatpush1.bf16.msra.mxu0 %v3426
          %4993 = vmatprep.subr.bf16.mxu0 %v3431
          %4994 = vmatpush1.bf16.msra.mxu0 %v3430
          %4995 = vmatprep.subr.bf16.mxu0 %v3435
          %4996 = vmatpush1.bf16.msra.mxu0 %v3434
          %4997 = vmatprep.subr.bf16.mxu0 %v3439
          %4998 = vmatpush1.bf16.msra.mxu0 %v3438
          %4999 = vmatprep.subr.bf16.mxu0 %v3443
          %5000 = vmatpush1.bf16.msra.mxu0 %v3442
          %5001 = vmatprep.subr.bf16.mxu0 %v3447
          %5002 = vmatpush1.bf16.msra.mxu0 %v3446
          %5003 = vmatprep.subr.bf16.mxu0 %v3451
          %5004 = vmatpush1.bf16.msra.mxu0 %v3450
          %5005 = vmatprep.subr.bf16.mxu0 %v3455
          %5006 = vmatpush1.bf16.msra.mxu0 %v3454
          %5007 = vmatprep.mubr.bf16.mxu0 %v4015
          %5008 = vmatmul.mubr.bf16.gmra.mrb[0].mxu0 %v4014
          %v5009 = vpop.f32.mrb[0].mxu0
          %v5010 = vadd.f32 %v4969, %v5009
          %v5011 = vpop.f32.mrb[0].mxu0
          %v5012 = vadd.f32 %v4971, %v5011
          %v5013 = vpop.f32.mrb[0].mxu0
          %v5014 = vpop.f32.mrb[0].mxu0
          %5015 = vdwg.mxu0
          %5016 = vmatprep.subr.bf16.mxu0 %v3459
          %5017 = vmatpush1.bf16.msra.mxu0 %v3458
          %5018 = vmatprep.subr.bf16.mxu0 %v3463
          %5019 = vmatpush1.bf16.msra.mxu0 %v3462
          %5020 = vmatprep.subr.bf16.mxu0 %v3467
          %5021 = vmatpush1.bf16.msra.mxu0 %v3466
          %5022 = vmatprep.subr.bf16.mxu0 %v3471
          %5023 = vmatpush1.bf16.msra.mxu0 %v3470
          %5024 = vmatprep.subr.bf16.mxu0 %v3475
          %5025 = vmatpush1.bf16.msra.mxu0 %v3474
          %5026 = vmatprep.subr.bf16.mxu0 %v3479
          %5027 = vmatpush1.bf16.msra.mxu0 %v3478
          %5028 = vmatprep.subr.bf16.mxu0 %v3483
          %5029 = vmatpush1.bf16.msra.mxu0 %v3482
          %5030 = vmatprep.subr.bf16.mxu0 %v3487
          %5031 = vmatpush1.bf16.msra.mxu0 %v3486
          %5032 = vmatprep.subr.bf16.mxu0 %v3491
          %5033 = vmatpush1.bf16.msra.mxu0 %v3490
          %5034 = vmatprep.subr.bf16.mxu0 %v3495
          %5035 = vmatpush1.bf16.msra.mxu0 %v3494
          %5036 = vmatprep.subr.bf16.mxu0 %v3499
          %5037 = vmatpush1.bf16.msra.mxu0 %v3498
          %5038 = vmatprep.subr.bf16.mxu0 %v3503
          %5039 = vmatpush1.bf16.msra.mxu0 %v3502
          %5040 = vmatprep.subr.bf16.mxu0 %v3507
          %5041 = vmatpush1.bf16.msra.mxu0 %v3506
          %5042 = vmatprep.subr.bf16.mxu0 %v3511
          %5043 = vmatpush1.bf16.msra.mxu0 %v3510
          %5044 = vmatprep.subr.bf16.mxu0 %v3515
          %5045 = vmatpush1.bf16.msra.mxu0 %v3514
          %5046 = vmatprep.subr.bf16.mxu0 %v3519
          %5047 = vmatpush1.bf16.msra.mxu0 %v3518
          %5048 = vmatprep.mubr.bf16.mxu0 %v4017
          %5049 = vmatmul.mubr.bf16.gmra.mrb[0].mxu0 %v4016
          %v5050 = vpop.f32.mrb[0].mxu0
          %v5051 = vadd.f32 %v5010, %v5050
          %v5052 = vpop.f32.mrb[0].mxu0
          %v5053 = vadd.f32 %v5012, %v5052
          %v5054 = vpop.f32.mrb[0].mxu0
          %v5055 = vpop.f32.mrb[0].mxu0
          %5056 = vdwg.mxu0
          %5057 = vmatprep.subr.bf16.mxu0 %v3523
          %5058 = vmatpush1.bf16.msra.mxu0 %v3522
          %5059 = vmatprep.subr.bf16.mxu0 %v3527
          %5060 = vmatpush1.bf16.msra.mxu0 %v3526
          %5061 = vmatprep.subr.bf16.mxu0 %v3531
          %5062 = vmatpush1.bf16.msra.mxu0 %v3530
          %5063 = vmatprep.subr.bf16.mxu0 %v3535
          %5064 = vmatpush1.bf16.msra.mxu0 %v3534
          %5065 = vmatprep.subr.bf16.mxu0 %v3539
          %5066 = vmatpush1.bf16.msra.mxu0 %v3538
          %5067 = vmatprep.subr.bf16.mxu0 %v3543
          %5068 = vmatpush1.bf16.msra.mxu0 %v3542
          %5069 = vmatprep.subr.bf16.mxu0 %v3547
          %5070 = vmatpush1.bf16.msra.mxu0 %v3546
          %5071 = vmatprep.subr.bf16.mxu0 %v3551
          %5072 = vmatpush1.bf16.msra.mxu0 %v3550
          %5073 = vmatprep.subr.bf16.mxu0 %v3555
          %5074 = vmatpush1.bf16.msra.mxu0 %v3554
          %5075 = vmatprep.subr.bf16.mxu0 %v3559
          %5076 = vmatpush1.bf16.msra.mxu0 %v3558
          %5077 = vmatprep.subr.bf16.mxu0 %v3563
          %5078 = vmatpush1.bf16.msra.mxu0 %v3562
          %5079 = vmatprep.subr.bf16.mxu0 %v3567
          %5080 = vmatpush1.bf16.msra.mxu0 %v3566
          %5081 = vmatprep.subr.bf16.mxu0 %v3571
          %5082 = vmatpush1.bf16.msra.mxu0 %v3570
          %5083 = vmatprep.subr.bf16.mxu0 %v3575
          %5084 = vmatpush1.bf16.msra.mxu0 %v3574
          %5085 = vmatprep.subr.bf16.mxu0 %v3579
          %5086 = vmatpush1.bf16.msra.mxu0 %v3578
          %5087 = vmatprep.subr.bf16.mxu0 %v3583
          %5088 = vmatpush1.bf16.msra.mxu0 %v3582
          %5089 = vmatprep.mubr.bf16.mxu0 %v4019
          %5090 = vmatmul.mubr.bf16.gmra.mrb[0].mxu0 %v4018
          %v5091 = vpop.f32.mrb[0].mxu0
          %v5092 = vadd.f32 %v5051, %v5091
          %v5093 = vpop.f32.mrb[0].mxu0
          %v5094 = vadd.f32 %v5053, %v5093
          %v5095 = vpop.f32.mrb[0].mxu0
          %v5096 = vpop.f32.mrb[0].mxu0
          %5097 = vdwg.mxu0
          %5098 = vmatprep.subr.bf16.mxu0 %v3587
          %5099 = vmatpush1.bf16.msra.mxu0 %v3586
          %5100 = vmatprep.subr.bf16.mxu0 %v3591
          %5101 = vmatpush1.bf16.msra.mxu0 %v3590
          %5102 = vmatprep.subr.bf16.mxu0 %v3595
          %5103 = vmatpush1.bf16.msra.mxu0 %v3594
          %5104 = vmatprep.subr.bf16.mxu0 %v3599
          %5105 = vmatpush1.bf16.msra.mxu0 %v3598
          %5106 = vmatprep.subr.bf16.mxu0 %v3603
          %5107 = vmatpush1.bf16.msra.mxu0 %v3602
          %5108 = vmatprep.subr.bf16.mxu0 %v3607
          %5109 = vmatpush1.bf16.msra.mxu0 %v3606
          %5110 = vmatprep.subr.bf16.mxu0 %v3611
          %5111 = vmatpush1.bf16.msra.mxu0 %v3610
          %5112 = vmatprep.subr.bf16.mxu0 %v3615
          %5113 = vmatpush1.bf16.msra.mxu0 %v3614
          %5114 = vmatprep.subr.bf16.mxu0 %v3619
          %5115 = vmatpush1.bf16.msra.mxu0 %v3618
          %5116 = vmatprep.subr.bf16.mxu0 %v3623
          %5117 = vmatpush1.bf16.msra.mxu0 %v3622
          %5118 = vmatprep.subr.bf16.mxu0 %v3627
          %5119 = vmatpush1.bf16.msra.mxu0 %v3626
          %5120 = vmatprep.subr.bf16.mxu0 %v3631
          %5121 = vmatpush1.bf16.msra.mxu0 %v3630
          %5122 = vmatprep.subr.bf16.mxu0 %v3635
          %5123 = vmatpush1.bf16.msra.mxu0 %v3634
          %5124 = vmatprep.subr.bf16.mxu0 %v3639
          %5125 = vmatpush1.bf16.msra.mxu0 %v3638
          %5126 = vmatprep.subr.bf16.mxu0 %v3643
          %5127 = vmatpush1.bf16.msra.mxu0 %v3642
          %5128 = vmatprep.subr.bf16.mxu0 %v3647
          %5129 = vmatpush1.bf16.msra.mxu0 %v3646
          %5130 = vmatprep.mubr.bf16.mxu0 %v4021
          %5131 = vmatmul.mubr.bf16.gmra.mrb[0].mxu0 %v4020
          %v5132 = vpop.f32.mrb[0].mxu0
          %v5133 = vadd.f32 %v5092, %v5132
          %v5134 = vpop.f32.mrb[0].mxu0
          %v5135 = vadd.f32 %v5094, %v5134
          %v5136 = vpop.f32.mrb[0].mxu0
          %v5137 = vpop.f32.mrb[0].mxu0
          %5138 = vdwg.mxu0
          %5139 = vmatprep.subr.bf16.mxu0 %v3651
          %5140 = vmatpush1.bf16.msra.mxu0 %v3650
          %5141 = vmatprep.subr.bf16.mxu0 %v3655
          %5142 = vmatpush1.bf16.msra.mxu0 %v3654
          %5143 = vmatprep.subr.bf16.mxu0 %v3659
          %5144 = vmatpush1.bf16.msra.mxu0 %v3658
          %5145 = vmatprep.subr.bf16.mxu0 %v3663
          %5146 = vmatpush1.bf16.msra.mxu0 %v3662
          %5147 = vmatprep.subr.bf16.mxu0 %v3667
          %5148 = vmatpush1.bf16.msra.mxu0 %v3666
          %5149 = vmatprep.subr.bf16.mxu0 %v3671
          %5150 = vmatpush1.bf16.msra.mxu0 %v3670
          %5151 = vmatprep.subr.bf16.mxu0 %v3675
          %5152 = vmatpush1.bf16.msra.mxu0 %v3674
          %5153 = vmatprep.subr.bf16.mxu0 %v3679
          %5154 = vmatpush1.bf16.msra.mxu0 %v3678
          %5155 = vmatprep.subr.bf16.mxu0 %v3683
          %5156 = vmatpush1.bf16.msra.mxu0 %v3682
          %5157 = vmatprep.subr.bf16.mxu0 %v3687
          %5158 = vmatpush1.bf16.msra.mxu0 %v3686
          %5159 = vmatprep.subr.bf16.mxu0 %v3691
          %5160 = vmatpush1.bf16.msra.mxu0 %v3690
          %5161 = vmatprep.subr.bf16.mxu0 %v3695
          %5162 = vmatpush1.bf16.msra.mxu0 %v3694
          %5163 = vmatprep.subr.bf16.mxu0 %v3699
          %5164 = vmatpush1.bf16.msra.mxu0 %v3698
          %5165 = vmatprep.subr.bf16.mxu0 %v3703
          %5166 = vmatpush1.bf16.msra.mxu0 %v3702
          %5167 = vmatprep.subr.bf16.mxu0 %v3707
          %5168 = vmatpush1.bf16.msra.mxu0 %v3706
          %5169 = vmatprep.subr.bf16.mxu0 %v3711
          %5170 = vmatpush1.bf16.msra.mxu0 %v3710
          %5171 = vmatprep.mubr.bf16.mxu0 %v4023
          %5172 = vmatmul.mubr.bf16.gmra.mrb[0].mxu0 %v4022
          %v5173 = vpop.f32.mrb[0].mxu0
          %v5174 = vadd.f32 %v5133, %v5173
          %v5175 = vpop.f32.mrb[0].mxu0
          %v5176 = vadd.f32 %v5135, %v5175
          %v5177 = vpop.f32.mrb[0].mxu0
          %v5178 = vpop.f32.mrb[0].mxu0
          %5179 = vdwg.mxu0
          %5180 = vmatprep.subr.bf16.mxu0 %v3715
          %5181 = vmatpush1.bf16.msra.mxu0 %v3714
          %5182 = vmatprep.subr.bf16.mxu0 %v3719
          %5183 = vmatpush1.bf16.msra.mxu0 %v3718
          %5184 = vmatprep.subr.bf16.mxu0 %v3723
          %5185 = vmatpush1.bf16.msra.mxu0 %v3722
          %5186 = vmatprep.subr.bf16.mxu0 %v3727
          %5187 = vmatpush1.bf16.msra.mxu0 %v3726
          %5188 = vmatprep.subr.bf16.mxu0 %v3731
          %5189 = vmatpush1.bf16.msra.mxu0 %v3730
          %5190 = vmatprep.subr.bf16.mxu0 %v3735
          %5191 = vmatpush1.bf16.msra.mxu0 %v3734
          %5192 = vmatprep.subr.bf16.mxu0 %v3739
          %5193 = vmatpush1.bf16.msra.mxu0 %v3738
          %5194 = vmatprep.subr.bf16.mxu0 %v3743
          %5195 = vmatpush1.bf16.msra.mxu0 %v3742
          %5196 = vmatprep.subr.bf16.mxu0 %v3747
          %5197 = vmatpush1.bf16.msra.mxu0 %v3746
          %5198 = vmatprep.subr.bf16.mxu0 %v3751
          %5199 = vmatpush1.bf16.msra.mxu0 %v3750
          %5200 = vmatprep.subr.bf16.mxu0 %v3755
          %5201 = vmatpush1.bf16.msra.mxu0 %v3754
          %5202 = vmatprep.subr.bf16.mxu0 %v3759
          %5203 = vmatpush1.bf16.msra.mxu0 %v3758
          %5204 = vmatprep.subr.bf16.mxu0 %v3763
          %5205 = vmatpush1.bf16.msra.mxu0 %v3762
          %5206 = vmatprep.subr.bf16.mxu0 %v3767
          %5207 = vmatpush1.bf16.msra.mxu0 %v3766
          %5208 = vmatprep.subr.bf16.mxu0 %v3771
          %5209 = vmatpush1.bf16.msra.mxu0 %v3770
          %5210 = vmatprep.subr.bf16.mxu0 %v3775
          %5211 = vmatpush1.bf16.msra.mxu0 %v3774
          %5212 = vmatprep.mubr.bf16.mxu0 %v4025
          %5213 = vmatmul.mubr.bf16.gmra.mrb[0].mxu0 %v4024
          %v5214 = vpop.f32.mrb[0].mxu0
          %v5215 = vadd.f32 %v5174, %v5214
          %v5216 = vpop.f32.mrb[0].mxu0
          %v5217 = vadd.f32 %v5176, %v5216
          %v5218 = vpop.f32.mrb[0].mxu0
          %v5219 = vpop.f32.mrb[0].mxu0
          %5220 = vdwg.mxu0
          %5221 = vmatprep.subr.bf16.mxu0 %v3779
          %5222 = vmatpush1.bf16.msra.mxu0 %v3778
          %5223 = vmatprep.subr.bf16.mxu0 %v3783
          %5224 = vmatpush1.bf16.msra.mxu0 %v3782
          %5225 = vmatprep.subr.bf16.mxu0 %v3787
          %5226 = vmatpush1.bf16.msra.mxu0 %v3786
          %5227 = vmatprep.subr.bf16.mxu0 %v3791
          %5228 = vmatpush1.bf16.msra.mxu0 %v3790
          %5229 = vmatprep.subr.bf16.mxu0 %v3795
          %5230 = vmatpush1.bf16.msra.mxu0 %v3794
          %5231 = vmatprep.subr.bf16.mxu0 %v3799
          %5232 = vmatpush1.bf16.msra.mxu0 %v3798
          %5233 = vmatprep.subr.bf16.mxu0 %v3803
          %5234 = vmatpush1.bf16.msra.mxu0 %v3802
          %5235 = vmatprep.subr.bf16.mxu0 %v3807
          %5236 = vmatpush1.bf16.msra.mxu0 %v3806
          %5237 = vmatprep.subr.bf16.mxu0 %v3811
          %5238 = vmatpush1.bf16.msra.mxu0 %v3810
          %5239 = vmatprep.subr.bf16.mxu0 %v3815
          %5240 = vmatpush1.bf16.msra.mxu0 %v3814
          %5241 = vmatprep.subr.bf16.mxu0 %v3819
          %5242 = vmatpush1.bf16.msra.mxu0 %v3818
          %5243 = vmatprep.subr.bf16.mxu0 %v3823
          %5244 = vmatpush1.bf16.msra.mxu0 %v3822
          %5245 = vmatprep.subr.bf16.mxu0 %v3827
          %5246 = vmatpush1.bf16.msra.mxu0 %v3826
          %5247 = vmatprep.subr.bf16.mxu0 %v3831
          %5248 = vmatpush1.bf16.msra.mxu0 %v3830
          %5249 = vmatprep.subr.bf16.mxu0 %v3835
          %5250 = vmatpush1.bf16.msra.mxu0 %v3834
          %5251 = vmatprep.subr.bf16.mxu0 %v3839
          %5252 = vmatpush1.bf16.msra.mxu0 %v3838
          %5253 = vmatprep.mubr.bf16.mxu0 %v4027
          %5254 = vmatmul.mubr.bf16.gmra.mrb[0].mxu0 %v4026
          %v5255 = vpop.f32.mrb[0].mxu0
          %v5256 = vadd.f32 %v5215, %v5255
          %v5257 = vpop.f32.mrb[0].mxu0
          %v5258 = vadd.f32 %v5217, %v5257
          %v5259 = vpop.f32.mrb[0].mxu0
          %v5260 = vpop.f32.mrb[0].mxu0
          %5261 = vdwg.mxu0
          %5262 = vmatprep.subr.bf16.mxu0 %v3843
          %5263 = vmatpush1.bf16.msra.mxu0 %v3842
          %5264 = vmatprep.subr.bf16.mxu0 %v3847
          %5265 = vmatpush1.bf16.msra.mxu0 %v3846
          %5266 = vmatprep.subr.bf16.mxu0 %v3851
          %5267 = vmatpush1.bf16.msra.mxu0 %v3850
          %5268 = vmatprep.subr.bf16.mxu0 %v3855
          %5269 = vmatpush1.bf16.msra.mxu0 %v3854
          %5270 = vmatprep.subr.bf16.mxu0 %v3859
          %5271 = vmatpush1.bf16.msra.mxu0 %v3858
          %5272 = vmatprep.subr.bf16.mxu0 %v3863
          %5273 = vmatpush1.bf16.msra.mxu0 %v3862
          %5274 = vmatprep.subr.bf16.mxu0 %v3867
          %5275 = vmatpush1.bf16.msra.mxu0 %v3866
          %5276 = vmatprep.subr.bf16.mxu0 %v3871
          %5277 = vmatpush1.bf16.msra.mxu0 %v3870
          %5278 = vmatprep.subr.bf16.mxu0 %v3875
          %5279 = vmatpush1.bf16.msra.mxu0 %v3874
          %5280 = vmatprep.subr.bf16.mxu0 %v3879
          %5281 = vmatpush1.bf16.msra.mxu0 %v3878
          %5282 = vmatprep.subr.bf16.mxu0 %v3883
          %5283 = vmatpush1.bf16.msra.mxu0 %v3882
          %5284 = vmatprep.subr.bf16.mxu0 %v3887
          %5285 = vmatpush1.bf16.msra.mxu0 %v3886
          %5286 = vmatprep.subr.bf16.mxu0 %v3891
          %5287 = vmatpush1.bf16.msra.mxu0 %v3890
          %5288 = vmatprep.subr.bf16.mxu0 %v3895
          %5289 = vmatpush1.bf16.msra.mxu0 %v3894
          %5290 = vmatprep.subr.bf16.mxu0 %v3899
          %5291 = vmatpush1.bf16.msra.mxu0 %v3898
          %5292 = vmatprep.subr.bf16.mxu0 %v3903
          %5293 = vmatpush1.bf16.msra.mxu0 %v3902
          %5294 = vmatprep.mubr.bf16.mxu0 %v4029
          %5295 = vmatmul.mubr.bf16.gmra.mrb[0].mxu0 %v4028
          %v5296 = vpop.f32.mrb[0].mxu0
          %v5297 = vadd.f32 %v5256, %v5296
          %v5298 = vpop.f32.mrb[0].mxu0
          %v5299 = vadd.f32 %v5258, %v5298
          %v5300 = vpop.f32.mrb[0].mxu0
          %v5301 = vpop.f32.mrb[0].mxu0
          %5302 = vdwg.mxu0
          %5303 = vmatprep.subr.bf16.mxu0 %v3907
          %5304 = vmatpush1.bf16.msra.mxu0 %v3906
          %5305 = vmatprep.subr.bf16.mxu0 %v3911
          %5306 = vmatpush1.bf16.msra.mxu0 %v3910
          %5307 = vmatprep.subr.bf16.mxu0 %v3915
          %5308 = vmatpush1.bf16.msra.mxu0 %v3914
          %5309 = vmatprep.subr.bf16.mxu0 %v3919
          %5310 = vmatpush1.bf16.msra.mxu0 %v3918
          %5311 = vmatprep.subr.bf16.mxu0 %v3923
          %5312 = vmatpush1.bf16.msra.mxu0 %v3922
          %5313 = vmatprep.subr.bf16.mxu0 %v3927
          %5314 = vmatpush1.bf16.msra.mxu0 %v3926
          %5315 = vmatprep.subr.bf16.mxu0 %v3931
          %5316 = vmatpush1.bf16.msra.mxu0 %v3930
          %5317 = vmatprep.subr.bf16.mxu0 %v3935
          %5318 = vmatpush1.bf16.msra.mxu0 %v3934
          %5319 = vmatprep.subr.bf16.mxu0 %v3939
          %5320 = vmatpush1.bf16.msra.mxu0 %v3938
          %5321 = vmatprep.subr.bf16.mxu0 %v3943
          %5322 = vmatpush1.bf16.msra.mxu0 %v3942
          %5323 = vmatprep.subr.bf16.mxu0 %v3947
          %5324 = vmatpush1.bf16.msra.mxu0 %v3946
          %5325 = vmatprep.subr.bf16.mxu0 %v3951
          %5326 = vmatpush1.bf16.msra.mxu0 %v3950
          %5327 = vmatprep.subr.bf16.mxu0 %v3955
          %5328 = vmatpush1.bf16.msra.mxu0 %v3954
          %5329 = vmatprep.subr.bf16.mxu0 %v3959
          %5330 = vmatpush1.bf16.msra.mxu0 %v3958
          %5331 = vmatprep.subr.bf16.mxu0 %v3963
          %5332 = vmatpush1.bf16.msra.mxu0 %v3962
          %5333 = vmatprep.subr.bf16.mxu0 %v3967
          %5334 = vmatpush1.bf16.msra.mxu0 %v3966
          %5335 = vmatprep.mubr.bf16.mxu0 %v4031
          %5336 = vmatmul.mubr.bf16.gmra.mrb[0].mxu0 %v4030
          %v5337 = vpop.f32.mrb[0].mxu0
          %v5338 = vadd.f32 %v5297, %v5337
          %v5339 = vpop.f32.mrb[0].mxu0
          %v5340 = vadd.f32 %v5299, %v5339
          %v5341 = vpop.f32.mrb[0].mxu0
          %v5342 = vpop.f32.mrb[0].mxu0
          %5343 = vdwg.mxu0
          %v5344 = vld [vmem:[%s474] ss:$2 sm:$0xf]
          %v5346 = vlaneseq
          %v5347 = vshrl.u32 %v5346, 7
          %v5348 = vsub.s32 0, %v5347
          %v5349 = vrot.slane %v5344, %v5348
          %v5350 = vlaneseq
          %v5351 = vshrl.u32 %v5350, 7
          %v5352 = vsub.s32 1, %v5351
          %v5353 = vrot.slane %v5344, %v5352
          %v5354 = vlaneseq
          %v5355 = vshrl.u32 %v5354, 7
          %v5356 = vsub.s32 2, %v5355
          %v5357 = vrot.slane %v5344, %v5356
          %v5358 = vlaneseq
          %v5359 = vshrl.u32 %v5358, 7
          %v5360 = vsub.s32 3, %v5359
          %v5361 = vrot.slane %v5344, %v5360
          %v5366 = vmul.f32 %v4682, %v5349
          %v5367 = vmul.f32 %v4684, %v5353
          %v5368 = vmul.f32 %v5338, %v5357
          %v5369 = vmul.f32 %v5340, %v5361
          %s5370 = scalar_lea.vmem %s474, 1 [#allocation9]
          %v5371 = vld [vmem:[%s5370] ss:$2 sm:$0xf]
          %v5373 = vlaneseq
          %v5374 = vshrl.u32 %v5373, 7
          %v5375 = vsub.s32 0, %v5374
          %v5376 = vrot.slane %v5371, %v5375
          %v5377 = vlaneseq
          %v5378 = vshrl.u32 %v5377, 7
          %v5379 = vsub.s32 1, %v5378
          %v5380 = vrot.slane %v5371, %v5379
          %v5381 = vlaneseq
          %v5382 = vshrl.u32 %v5381, 7
          %v5383 = vsub.s32 2, %v5382
          %v5384 = vrot.slane %v5371, %v5383
          %v5385 = vlaneseq
          %v5386 = vshrl.u32 %v5385, 7
          %v5387 = vsub.s32 3, %v5386
          %v5388 = vrot.slane %v5371, %v5387
          %v5393 = vadd.f32 %v5366, %v5376
          %v5394 = vadd.f32 %v5367, %v5380
          %v5395 = vadd.f32 %v5368, %v5384
          %v5396 = vadd.f32 %v5369, %v5388
          %v5397 = vmax.f32 %v5393, 0.0
          %v5398 = vmax.f32 %v5394, 0.0
          %v5399 = vmax.f32 %v5395, 0.0
          %v5400 = vmax.f32 %v5396, 0.0
          %s5401 = smul.u32 %s2431, 512
          %s5402 = sshra.s32 %s5401, 7
          %s5403 = sand.u32 %s5401, 127
          %s5404 = smul.addr %s5402, 8
          %s5405 = scalar_lea.vmem [#allocation3], %s5404
          %5406 = vst [vmem:[%s5405] sm:$0xff] %v5397
          %5407 = vst [vmem:[%s5405 + $0x8] sm:$0xff] %v5398
          %5408 = vst [vmem:[%s5405 + $0x10] sm:$0xff] %v5399
          %5409 = vst [vmem:[%s5405 + $0x18] sm:$0xff] %v5400
        $region96: #{ember_nn_forward.1} parent=55 // pred_fallthru
          _
        %p5410 = scmp.eq.s32.totalorder %s31, 11
        // Predicated region
        $region97: #{ember_nn_forward.1} parent=55 // pred_check
          %p5411 = pneg %p5410
        $region98: #{ember_nn_forward.1} parent=55 // pred_check_branch
          %5413 = sbr.rel (%p5411) target = $region100
        $region99: #{ember_nn_forward.1} parent=55 // pred_region
          %v5414 = vld [vmem:[#allocation3] sm:$0xff]
          %v5415 = vld [vmem:[#allocation3 + $0x8] sm:$0xff]
          %v5416 = vld [vmem:[#allocation3 + $0x10] sm:$0xff]
          %v5417 = vld [vmem:[#allocation3 + $0x18] sm:$0xff]
          %v5418 = vld [vmem:[#allocation3 + $0x20] sm:$0xff]
          %v5419 = vld [vmem:[#allocation3 + $0x28] sm:$0xff]
          %v5420 = vld [vmem:[#allocation3 + $0x30] sm:$0xff]
          %v5421 = vld [vmem:[#allocation3 + $0x38] sm:$0xff]
          %v5422 = vld [vmem:[#allocation3 + $0x40] sm:$0xff]
          %v5423 = vld [vmem:[#allocation3 + $0x48] sm:$0xff]
          %v5424 = vld [vmem:[#allocation3 + $0x50] sm:$0xff]
          %v5425 = vld [vmem:[#allocation3 + $0x58] sm:$0xff]
          %v5426 = vld [vmem:[#allocation3 + $0x60] sm:$0xff]
          %v5427 = vld [vmem:[#allocation3 + $0x68] sm:$0xff]
          %v5428 = vld [vmem:[#allocation3 + $0x70] sm:$0xff]
          %v5429 = vld [vmem:[#allocation3 + $0x78] sm:$0xff]
          %v5430 = vpack.c.bf16 %v5414, %v5414
          %v5431 = vpack.c.bf16 %v5415, %v5415
          %v5432 = vpack.c.bf16 %v5416, %v5416
          %v5433 = vpack.c.bf16 %v5417, %v5417
          %v5434 = vpack.c.bf16 %v5418, %v5418
          %v5435 = vpack.c.bf16 %v5419, %v5419
          %v5436 = vpack.c.bf16 %v5420, %v5420
          %v5437 = vpack.c.bf16 %v5421, %v5421
          %v5438 = vpack.c.bf16 %v5422, %v5422
          %v5439 = vpack.c.bf16 %v5423, %v5423
          %v5440 = vpack.c.bf16 %v5424, %v5424
          %v5441 = vpack.c.bf16 %v5425, %v5425
          %v5442 = vpack.c.bf16 %v5426, %v5426
          %v5443 = vpack.c.bf16 %v5427, %v5427
          %v5444 = vpack.c.bf16 %v5428, %v5428
          %v5445 = vpack.c.bf16 %v5429, %v5429
          %v5446 = vld [vmem:[#allocation11] sm:$0xf]
          %v5447 = vld [vmem:[#allocation11 + $0x4] sm:$0xf]
          %v5448 = vld [vmem:[#allocation11 + $0x8] sm:$0xf]
          %v5449 = vld [vmem:[#allocation11 + $0xc] sm:$0xf]
          %v5450 = vld [vmem:[#allocation11 + $0x10] sm:$0xf]
          %v5451 = vld [vmem:[#allocation11 + $0x14] sm:$0xf]
          %v5452 = vld [vmem:[#allocation11 + $0x18] sm:$0xf]
          %v5453 = vld [vmem:[#allocation11 + $0x1c] sm:$0xf]
          %v5454 = vld [vmem:[#allocation11 + $0x20] sm:$0xf]
          %v5455 = vld [vmem:[#allocation11 + $0x24] sm:$0xf]
          %v5456 = vld [vmem:[#allocation11 + $0x28] sm:$0xf]
          %v5457 = vld [vmem:[#allocation11 + $0x2c] sm:$0xf]
          %v5458 = vld [vmem:[#allocation11 + $0x30] sm:$0xf]
          %v5459 = vld [vmem:[#allocation11 + $0x34] sm:$0xf]
          %v5460 = vld [vmem:[#allocation11 + $0x38] sm:$0xf]
          %v5461 = vld [vmem:[#allocation11 + $0x3c] sm:$0xf]
          %v5462 = vld [vmem:[#allocation11 + $0x40] sm:$0xf]
          %v5463 = vld [vmem:[#allocation11 + $0x44] sm:$0xf]
          %v5464 = vld [vmem:[#allocation11 + $0x48] sm:$0xf]
          %v5465 = vld [vmem:[#allocation11 + $0x4c] sm:$0xf]
          %v5466 = vld [vmem:[#allocation11 + $0x50] sm:$0xf]
          %v5467 = vld [vmem:[#allocation11 + $0x54] sm:$0xf]
          %v5468 = vld [vmem:[#allocation11 + $0x58] sm:$0xf]
          %v5469 = vld [vmem:[#allocation11 + $0x5c] sm:$0xf]
          %v5470 = vld [vmem:[#allocation11 + $0x60] sm:$0xf]
          %v5471 = vld [vmem:[#allocation11 + $0x64] sm:$0xf]
          %v5472 = vld [vmem:[#allocation11 + $0x68] sm:$0xf]
          %v5473 = vld [vmem:[#allocation11 + $0x6c] sm:$0xf]
          %v5474 = vld [vmem:[#allocation11 + $0x70] sm:$0xf]
          %v5475 = vld [vmem:[#allocation11 + $0x74] sm:$0xf]
          %v5476 = vld [vmem:[#allocation11 + $0x78] sm:$0xf]
          %v5477 = vld [vmem:[#allocation11 + $0x7c] sm:$0xf]
          %v5478 = vld [vmem:[#allocation11 + $0x80] sm:$0xf]
          %v5479 = vld [vmem:[#allocation11 + $0x84] sm:$0xf]
          %v5480 = vld [vmem:[#allocation11 + $0x88] sm:$0xf]
          %v5481 = vld [vmem:[#allocation11 + $0x8c] sm:$0xf]
          %v5482 = vld [vmem:[#allocation11 + $0x90] sm:$0xf]
          %v5483 = vld [vmem:[#allocation11 + $0x94] sm:$0xf]
          %v5484 = vld [vmem:[#allocation11 + $0x98] sm:$0xf]
          %v5485 = vld [vmem:[#allocation11 + $0x9c] sm:$0xf]
          %v5486 = vld [vmem:[#allocation11 + $0xa0] sm:$0xf]
          %v5487 = vld [vmem:[#allocation11 + $0xa4] sm:$0xf]
          %v5488 = vld [vmem:[#allocation11 + $0xa8] sm:$0xf]
          %v5489 = vld [vmem:[#allocation11 + $0xac] sm:$0xf]
          %v5490 = vld [vmem:[#allocation11 + $0xb0] sm:$0xf]
          %v5491 = vld [vmem:[#allocation11 + $0xb4] sm:$0xf]
          %v5492 = vld [vmem:[#allocation11 + $0xb8] sm:$0xf]
          %v5493 = vld [vmem:[#allocation11 + $0xbc] sm:$0xf]
          %v5494 = vld [vmem:[#allocation11 + $0xc0] sm:$0xf]
          %v5495 = vld [vmem:[#allocation11 + $0xc4] sm:$0xf]
          %v5496 = vld [vmem:[#allocation11 + $0xc8] sm:$0xf]
          %v5497 = vld [vmem:[#allocation11 + $0xcc] sm:$0xf]
          %v5498 = vld [vmem:[#allocation11 + $0xd0] sm:$0xf]
          %v5499 = vld [vmem:[#allocation11 + $0xd4] sm:$0xf]
          %v5500 = vld [vmem:[#allocation11 + $0xd8] sm:$0xf]
          %v5501 = vld [vmem:[#allocation11 + $0xdc] sm:$0xf]
          %v5502 = vld [vmem:[#allocation11 + $0xe0] sm:$0xf]
          %v5503 = vld [vmem:[#allocation11 + $0xe4] sm:$0xf]
          %v5504 = vld [vmem:[#allocation11 + $0xe8] sm:$0xf]
          %v5505 = vld [vmem:[#allocation11 + $0xec] sm:$0xf]
          %v5506 = vld [vmem:[#allocation11 + $0xf0] sm:$0xf]
          %v5507 = vld [vmem:[#allocation11 + $0xf4] sm:$0xf]
          %v5508 = vld [vmem:[#allocation11 + $0xf8] sm:$0xf]
          %v5509 = vld [vmem:[#allocation11 + $0xfc] sm:$0xf]
          %v5510 = vld [vmem:[#allocation11 + $0x100] sm:$0xf]
          %v5511 = vld [vmem:[#allocation11 + $0x104] sm:$0xf]
          %v5512 = vld [vmem:[#allocation11 + $0x108] sm:$0xf]
          %v5513 = vld [vmem:[#allocation11 + $0x10c] sm:$0xf]
          %v5514 = vld [vmem:[#allocation11 + $0x110] sm:$0xf]
          %v5515 = vld [vmem:[#allocation11 + $0x114] sm:$0xf]
          %v5516 = vld [vmem:[#allocation11 + $0x118] sm:$0xf]
          %v5517 = vld [vmem:[#allocation11 + $0x11c] sm:$0xf]
          %v5518 = vld [vmem:[#allocation11 + $0x120] sm:$0xf]
          %v5519 = vld [vmem:[#allocation11 + $0x124] sm:$0xf]
          %v5520 = vld [vmem:[#allocation11 + $0x128] sm:$0xf]
          %v5521 = vld [vmem:[#allocation11 + $0x12c] sm:$0xf]
          %v5522 = vld [vmem:[#allocation11 + $0x130] sm:$0xf]
          %v5523 = vld [vmem:[#allocation11 + $0x134] sm:$0xf]
          %v5524 = vld [vmem:[#allocation11 + $0x138] sm:$0xf]
          %v5525 = vld [vmem:[#allocation11 + $0x13c] sm:$0xf]
          %v5526 = vld [vmem:[#allocation11 + $0x140] sm:$0xf]
          %v5527 = vld [vmem:[#allocation11 + $0x144] sm:$0xf]
          %v5528 = vld [vmem:[#allocation11 + $0x148] sm:$0xf]
          %v5529 = vld [vmem:[#allocation11 + $0x14c] sm:$0xf]
          %v5530 = vld [vmem:[#allocation11 + $0x150] sm:$0xf]
          %v5531 = vld [vmem:[#allocation11 + $0x154] sm:$0xf]
          %v5532 = vld [vmem:[#allocation11 + $0x158] sm:$0xf]
          %v5533 = vld [vmem:[#allocation11 + $0x15c] sm:$0xf]
          %v5534 = vld [vmem:[#allocation11 + $0x160] sm:$0xf]
          %v5535 = vld [vmem:[#allocation11 + $0x164] sm:$0xf]
          %v5536 = vld [vmem:[#allocation11 + $0x168] sm:$0xf]
          %v5537 = vld [vmem:[#allocation11 + $0x16c] sm:$0xf]
          %v5538 = vld [vmem:[#allocation11 + $0x170] sm:$0xf]
          %v5539 = vld [vmem:[#allocation11 + $0x174] sm:$0xf]
          %v5540 = vld [vmem:[#allocation11 + $0x178] sm:$0xf]
          %v5541 = vld [vmem:[#allocation11 + $0x17c] sm:$0xf]
          %v5542 = vld [vmem:[#allocation11 + $0x180] sm:$0xf]
          %v5543 = vld [vmem:[#allocation11 + $0x184] sm:$0xf]
          %v5544 = vld [vmem:[#allocation11 + $0x188] sm:$0xf]
          %v5545 = vld [vmem:[#allocation11 + $0x18c] sm:$0xf]
          %v5546 = vld [vmem:[#allocation11 + $0x190] sm:$0xf]
          %v5547 = vld [vmem:[#allocation11 + $0x194] sm:$0xf]
          %v5548 = vld [vmem:[#allocation11 + $0x198] sm:$0xf]
          %v5549 = vld [vmem:[#allocation11 + $0x19c] sm:$0xf]
          %v5550 = vld [vmem:[#allocation11 + $0x1a0] sm:$0xf]
          %v5551 = vld [vmem:[#allocation11 + $0x1a4] sm:$0xf]
          %v5552 = vld [vmem:[#allocation11 + $0x1a8] sm:$0xf]
          %v5553 = vld [vmem:[#allocation11 + $0x1ac] sm:$0xf]
          %v5554 = vld [vmem:[#allocation11 + $0x1b0] sm:$0xf]
          %v5555 = vld [vmem:[#allocation11 + $0x1b4] sm:$0xf]
          %v5556 = vld [vmem:[#allocation11 + $0x1b8] sm:$0xf]
          %v5557 = vld [vmem:[#allocation11 + $0x1bc] sm:$0xf]
          %v5558 = vld [vmem:[#allocation11 + $0x1c0] sm:$0xf]
          %v5559 = vld [vmem:[#allocation11 + $0x1c4] sm:$0xf]
          %v5560 = vld [vmem:[#allocation11 + $0x1c8] sm:$0xf]
          %v5561 = vld [vmem:[#allocation11 + $0x1cc] sm:$0xf]
          %v5562 = vld [vmem:[#allocation11 + $0x1d0] sm:$0xf]
          %v5563 = vld [vmem:[#allocation11 + $0x1d4] sm:$0xf]
          %v5564 = vld [vmem:[#allocation11 + $0x1d8] sm:$0xf]
          %v5565 = vld [vmem:[#allocation11 + $0x1dc] sm:$0xf]
          %v5566 = vld [vmem:[#allocation11 + $0x1e0] sm:$0xf]
          %v5567 = vld [vmem:[#allocation11 + $0x1e4] sm:$0xf]
          %v5568 = vld [vmem:[#allocation11 + $0x1e8] sm:$0xf]
          %v5569 = vld [vmem:[#allocation11 + $0x1ec] sm:$0xf]
          %v5570 = vld [vmem:[#allocation11 + $0x1f0] sm:$0xf]
          %v5571 = vld [vmem:[#allocation11 + $0x1f4] sm:$0xf]
          %v5572 = vld [vmem:[#allocation11 + $0x1f8] sm:$0xf]
          %v5573 = vld [vmem:[#allocation11 + $0x1fc] sm:$0xf]
          %v5574 = vld [vmem:[#allocation11 + $0x200] sm:$0xf]
          %v5575 = vld [vmem:[#allocation11 + $0x204] sm:$0xf]
          %v5576 = vld [vmem:[#allocation11 + $0x208] sm:$0xf]
          %v5577 = vld [vmem:[#allocation11 + $0x20c] sm:$0xf]
          %v5578 = vld [vmem:[#allocation11 + $0x210] sm:$0xf]
          %v5579 = vld [vmem:[#allocation11 + $0x214] sm:$0xf]
          %v5580 = vld [vmem:[#allocation11 + $0x218] sm:$0xf]
          %v5581 = vld [vmem:[#allocation11 + $0x21c] sm:$0xf]
          %v5582 = vld [vmem:[#allocation11 + $0x220] sm:$0xf]
          %v5583 = vld [vmem:[#allocation11 + $0x224] sm:$0xf]
          %v5584 = vld [vmem:[#allocation11 + $0x228] sm:$0xf]
          %v5585 = vld [vmem:[#allocation11 + $0x22c] sm:$0xf]
          %v5586 = vld [vmem:[#allocation11 + $0x230] sm:$0xf]
          %v5587 = vld [vmem:[#allocation11 + $0x234] sm:$0xf]
          %v5588 = vld [vmem:[#allocation11 + $0x238] sm:$0xf]
          %v5589 = vld [vmem:[#allocation11 + $0x23c] sm:$0xf]
          %v5590 = vld [vmem:[#allocation11 + $0x240] sm:$0xf]
          %v5591 = vld [vmem:[#allocation11 + $0x244] sm:$0xf]
          %v5592 = vld [vmem:[#allocation11 + $0x248] sm:$0xf]
          %v5593 = vld [vmem:[#allocation11 + $0x24c] sm:$0xf]
          %v5594 = vld [vmem:[#allocation11 + $0x250] sm:$0xf]
          %v5595 = vld [vmem:[#allocation11 + $0x254] sm:$0xf]
          %v5596 = vld [vmem:[#allocation11 + $0x258] sm:$0xf]
          %v5597 = vld [vmem:[#allocation11 + $0x25c] sm:$0xf]
          %v5598 = vld [vmem:[#allocation11 + $0x260] sm:$0xf]
          %v5599 = vld [vmem:[#allocation11 + $0x264] sm:$0xf]
          %v5600 = vld [vmem:[#allocation11 + $0x268] sm:$0xf]
          %v5601 = vld [vmem:[#allocation11 + $0x26c] sm:$0xf]
          %v5602 = vld [vmem:[#allocation11 + $0x270] sm:$0xf]
          %v5603 = vld [vmem:[#allocation11 + $0x274] sm:$0xf]
          %v5604 = vld [vmem:[#allocation11 + $0x278] sm:$0xf]
          %v5605 = vld [vmem:[#allocation11 + $0x27c] sm:$0xf]
          %v5606 = vld [vmem:[#allocation11 + $0x280] sm:$0xf]
          %v5607 = vld [vmem:[#allocation11 + $0x284] sm:$0xf]
          %v5608 = vld [vmem:[#allocation11 + $0x288] sm:$0xf]
          %v5609 = vld [vmem:[#allocation11 + $0x28c] sm:$0xf]
          %v5610 = vld [vmem:[#allocation11 + $0x290] sm:$0xf]
          %v5611 = vld [vmem:[#allocation11 + $0x294] sm:$0xf]
          %v5612 = vld [vmem:[#allocation11 + $0x298] sm:$0xf]
          %v5613 = vld [vmem:[#allocation11 + $0x29c] sm:$0xf]
          %v5614 = vld [vmem:[#allocation11 + $0x2a0] sm:$0xf]
          %v5615 = vld [vmem:[#allocation11 + $0x2a4] sm:$0xf]
          %v5616 = vld [vmem:[#allocation11 + $0x2a8] sm:$0xf]
          %v5617 = vld [vmem:[#allocation11 + $0x2ac] sm:$0xf]
          %v5618 = vld [vmem:[#allocation11 + $0x2b0] sm:$0xf]
          %v5619 = vld [vmem:[#allocation11 + $0x2b4] sm:$0xf]
          %v5620 = vld [vmem:[#allocation11 + $0x2b8] sm:$0xf]
          %v5621 = vld [vmem:[#allocation11 + $0x2bc] sm:$0xf]
          %v5622 = vld [vmem:[#allocation11 + $0x2c0] sm:$0xf]
          %v5623 = vld [vmem:[#allocation11 + $0x2c4] sm:$0xf]
          %v5624 = vld [vmem:[#allocation11 + $0x2c8] sm:$0xf]
          %v5625 = vld [vmem:[#allocation11 + $0x2cc] sm:$0xf]
          %v5626 = vld [vmem:[#allocation11 + $0x2d0] sm:$0xf]
          %v5627 = vld [vmem:[#allocation11 + $0x2d4] sm:$0xf]
          %v5628 = vld [vmem:[#allocation11 + $0x2d8] sm:$0xf]
          %v5629 = vld [vmem:[#allocation11 + $0x2dc] sm:$0xf]
          %v5630 = vld [vmem:[#allocation11 + $0x2e0] sm:$0xf]
          %v5631 = vld [vmem:[#allocation11 + $0x2e4] sm:$0xf]
          %v5632 = vld [vmem:[#allocation11 + $0x2e8] sm:$0xf]
          %v5633 = vld [vmem:[#allocation11 + $0x2ec] sm:$0xf]
          %v5634 = vld [vmem:[#allocation11 + $0x2f0] sm:$0xf]
          %v5635 = vld [vmem:[#allocation11 + $0x2f4] sm:$0xf]
          %v5636 = vld [vmem:[#allocation11 + $0x2f8] sm:$0xf]
          %v5637 = vld [vmem:[#allocation11 + $0x2fc] sm:$0xf]
          %v5638 = vld [vmem:[#allocation11 + $0x300] sm:$0xf]
          %v5639 = vld [vmem:[#allocation11 + $0x304] sm:$0xf]
          %v5640 = vld [vmem:[#allocation11 + $0x308] sm:$0xf]
          %v5641 = vld [vmem:[#allocation11 + $0x30c] sm:$0xf]
          %v5642 = vld [vmem:[#allocation11 + $0x310] sm:$0xf]
          %v5643 = vld [vmem:[#allocation11 + $0x314] sm:$0xf]
          %v5644 = vld [vmem:[#allocation11 + $0x318] sm:$0xf]
          %v5645 = vld [vmem:[#allocation11 + $0x31c] sm:$0xf]
          %v5646 = vld [vmem:[#allocation11 + $0x320] sm:$0xf]
          %v5647 = vld [vmem:[#allocation11 + $0x324] sm:$0xf]
          %v5648 = vld [vmem:[#allocation11 + $0x328] sm:$0xf]
          %v5649 = vld [vmem:[#allocation11 + $0x32c] sm:$0xf]
          %v5650 = vld [vmem:[#allocation11 + $0x330] sm:$0xf]
          %v5651 = vld [vmem:[#allocation11 + $0x334] sm:$0xf]
          %v5652 = vld [vmem:[#allocation11 + $0x338] sm:$0xf]
          %v5653 = vld [vmem:[#allocation11 + $0x33c] sm:$0xf]
          %v5654 = vld [vmem:[#allocation11 + $0x340] sm:$0xf]
          %v5655 = vld [vmem:[#allocation11 + $0x344] sm:$0xf]
          %v5656 = vld [vmem:[#allocation11 + $0x348] sm:$0xf]
          %v5657 = vld [vmem:[#allocation11 + $0x34c] sm:$0xf]
          %v5658 = vld [vmem:[#allocation11 + $0x350] sm:$0xf]
          %v5659 = vld [vmem:[#allocation11 + $0x354] sm:$0xf]
          %v5660 = vld [vmem:[#allocation11 + $0x358] sm:$0xf]
          %v5661 = vld [vmem:[#allocation11 + $0x35c] sm:$0xf]
          %v5662 = vld [vmem:[#allocation11 + $0x360] sm:$0xf]
          %v5663 = vld [vmem:[#allocation11 + $0x364] sm:$0xf]
          %v5664 = vld [vmem:[#allocation11 + $0x368] sm:$0xf]
          %v5665 = vld [vmem:[#allocation11 + $0x36c] sm:$0xf]
          %v5666 = vld [vmem:[#allocation11 + $0x370] sm:$0xf]
          %v5667 = vld [vmem:[#allocation11 + $0x374] sm:$0xf]
          %v5668 = vld [vmem:[#allocation11 + $0x378] sm:$0xf]
          %v5669 = vld [vmem:[#allocation11 + $0x37c] sm:$0xf]
          %v5670 = vld [vmem:[#allocation11 + $0x380] sm:$0xf]
          %v5671 = vld [vmem:[#allocation11 + $0x384] sm:$0xf]
          %v5672 = vld [vmem:[#allocation11 + $0x388] sm:$0xf]
          %v5673 = vld [vmem:[#allocation11 + $0x38c] sm:$0xf]
          %v5674 = vld [vmem:[#allocation11 + $0x390] sm:$0xf]
          %v5675 = vld [vmem:[#allocation11 + $0x394] sm:$0xf]
          %v5676 = vld [vmem:[#allocation11 + $0x398] sm:$0xf]
          %v5677 = vld [vmem:[#allocation11 + $0x39c] sm:$0xf]
          %v5678 = vld [vmem:[#allocation11 + $0x3a0] sm:$0xf]
          %v5679 = vld [vmem:[#allocation11 + $0x3a4] sm:$0xf]
          %v5680 = vld [vmem:[#allocation11 + $0x3a8] sm:$0xf]
          %v5681 = vld [vmem:[#allocation11 + $0x3ac] sm:$0xf]
          %v5682 = vld [vmem:[#allocation11 + $0x3b0] sm:$0xf]
          %v5683 = vld [vmem:[#allocation11 + $0x3b4] sm:$0xf]
          %v5684 = vld [vmem:[#allocation11 + $0x3b8] sm:$0xf]
          %v5685 = vld [vmem:[#allocation11 + $0x3bc] sm:$0xf]
          %v5686 = vld [vmem:[#allocation11 + $0x3c0] sm:$0xf]
          %v5687 = vld [vmem:[#allocation11 + $0x3c4] sm:$0xf]
          %v5688 = vld [vmem:[#allocation11 + $0x3c8] sm:$0xf]
          %v5689 = vld [vmem:[#allocation11 + $0x3cc] sm:$0xf]
          %v5690 = vld [vmem:[#allocation11 + $0x3d0] sm:$0xf]
          %v5691 = vld [vmem:[#allocation11 + $0x3d4] sm:$0xf]
          %v5692 = vld [vmem:[#allocation11 + $0x3d8] sm:$0xf]
          %v5693 = vld [vmem:[#allocation11 + $0x3dc] sm:$0xf]
          %v5694 = vld [vmem:[#allocation11 + $0x3e0] sm:$0xf]
          %v5695 = vld [vmem:[#allocation11 + $0x3e4] sm:$0xf]
          %v5696 = vld [vmem:[#allocation11 + $0x3e8] sm:$0xf]
          %v5697 = vld [vmem:[#allocation11 + $0x3ec] sm:$0xf]
          %v5698 = vld [vmem:[#allocation11 + $0x3f0] sm:$0xf]
          %v5699 = vld [vmem:[#allocation11 + $0x3f4] sm:$0xf]
          %v5700 = vld [vmem:[#allocation11 + $0x3f8] sm:$0xf]
          %v5701 = vld [vmem:[#allocation11 + $0x3fc] sm:$0xf]
          %v5702 = vld [vmem:[#allocation12] sm:$0x1]
          %v5704 = vlaneseq
          %v5705 = vshrl.u32 %v5704, 7
          %v5706 = vsub.s32 0, %v5705
          %v5707 = vrot.slane %v5702, %v5706
          %v5965 = vunpack.c.l.b16 %v5446
          %v5966 = vunpack.c.l.b16 %v5447
          %v5967 = vunpack.c.l.b16 %v5448
          %v5968 = vunpack.c.l.b16 %v5449
          %v5969 = vunpack.c.l.b16 %v5450
          %v5970 = vunpack.c.l.b16 %v5451
          %v5971 = vunpack.c.l.b16 %v5452
          %v5972 = vunpack.c.l.b16 %v5453
          %v5973 = vunpack.c.l.b16 %v5454
          %v5974 = vunpack.c.l.b16 %v5455
          %v5975 = vunpack.c.l.b16 %v5456
          %v5976 = vunpack.c.l.b16 %v5457
          %v5977 = vunpack.c.l.b16 %v5458
          %v5978 = vunpack.c.l.b16 %v5459
          %v5979 = vunpack.c.l.b16 %v5460
          %v5980 = vunpack.c.l.b16 %v5461
          %v5981 = vunpack.c.l.b16 %v5462
          %v5982 = vunpack.c.l.b16 %v5463
          %v5983 = vunpack.c.l.b16 %v5464
          %v5984 = vunpack.c.l.b16 %v5465
          %v5985 = vunpack.c.l.b16 %v5466
          %v5986 = vunpack.c.l.b16 %v5467
          %v5987 = vunpack.c.l.b16 %v5468
          %v5988 = vunpack.c.l.b16 %v5469
          %v5989 = vunpack.c.l.b16 %v5470
          %v5990 = vunpack.c.l.b16 %v5471
          %v5991 = vunpack.c.l.b16 %v5472
          %v5992 = vunpack.c.l.b16 %v5473
          %v5993 = vunpack.c.l.b16 %v5474
          %v5994 = vunpack.c.l.b16 %v5475
          %v5995 = vunpack.c.l.b16 %v5476
          %v5996 = vunpack.c.l.b16 %v5477
          %v5997 = vunpack.c.l.b16 %v5478
          %v5998 = vunpack.c.l.b16 %v5479
          %v5999 = vunpack.c.l.b16 %v5480
          %v6000 = vunpack.c.l.b16 %v5481
          %v6001 = vunpack.c.l.b16 %v5482
          %v6002 = vunpack.c.l.b16 %v5483
          %v6003 = vunpack.c.l.b16 %v5484
          %v6004 = vunpack.c.l.b16 %v5485
          %v6005 = vunpack.c.l.b16 %v5486
          %v6006 = vunpack.c.l.b16 %v5487
          %v6007 = vunpack.c.l.b16 %v5488
          %v6008 = vunpack.c.l.b16 %v5489
          %v6009 = vunpack.c.l.b16 %v5490
          %v6010 = vunpack.c.l.b16 %v5491
          %v6011 = vunpack.c.l.b16 %v5492
          %v6012 = vunpack.c.l.b16 %v5493
          %v6013 = vunpack.c.l.b16 %v5494
          %v6014 = vunpack.c.l.b16 %v5495
          %v6015 = vunpack.c.l.b16 %v5496
          %v6016 = vunpack.c.l.b16 %v5497
          %v6017 = vunpack.c.l.b16 %v5498
          %v6018 = vunpack.c.l.b16 %v5499
          %v6019 = vunpack.c.l.b16 %v5500
          %v6020 = vunpack.c.l.b16 %v5501
          %v6021 = vunpack.c.l.b16 %v5502
          %v6022 = vunpack.c.l.b16 %v5503
          %v6023 = vunpack.c.l.b16 %v5504
          %v6024 = vunpack.c.l.b16 %v5505
          %v6025 = vunpack.c.l.b16 %v5506
          %v6026 = vunpack.c.l.b16 %v5507
          %v6027 = vunpack.c.l.b16 %v5508
          %v6028 = vunpack.c.l.b16 %v5509
          %v6029 = vunpack.c.l.b16 %v5510
          %v6030 = vunpack.c.l.b16 %v5511
          %v6031 = vunpack.c.l.b16 %v5512
          %v6032 = vunpack.c.l.b16 %v5513
          %v6033 = vunpack.c.l.b16 %v5514
          %v6034 = vunpack.c.l.b16 %v5515
          %v6035 = vunpack.c.l.b16 %v5516
          %v6036 = vunpack.c.l.b16 %v5517
          %v6037 = vunpack.c.l.b16 %v5518
          %v6038 = vunpack.c.l.b16 %v5519
          %v6039 = vunpack.c.l.b16 %v5520
          %v6040 = vunpack.c.l.b16 %v5521
          %v6041 = vunpack.c.l.b16 %v5522
          %v6042 = vunpack.c.l.b16 %v5523
          %v6043 = vunpack.c.l.b16 %v5524
          %v6044 = vunpack.c.l.b16 %v5525
          %v6045 = vunpack.c.l.b16 %v5526
          %v6046 = vunpack.c.l.b16 %v5527
          %v6047 = vunpack.c.l.b16 %v5528
          %v6048 = vunpack.c.l.b16 %v5529
          %v6049 = vunpack.c.l.b16 %v5530
          %v6050 = vunpack.c.l.b16 %v5531
          %v6051 = vunpack.c.l.b16 %v5532
          %v6052 = vunpack.c.l.b16 %v5533
          %v6053 = vunpack.c.l.b16 %v5534
          %v6054 = vunpack.c.l.b16 %v5535
          %v6055 = vunpack.c.l.b16 %v5536
          %v6056 = vunpack.c.l.b16 %v5537
          %v6057 = vunpack.c.l.b16 %v5538
          %v6058 = vunpack.c.l.b16 %v5539
          %v6059 = vunpack.c.l.b16 %v5540
          %v6060 = vunpack.c.l.b16 %v5541
          %v6061 = vunpack.c.l.b16 %v5542
          %v6062 = vunpack.c.l.b16 %v5543
          %v6063 = vunpack.c.l.b16 %v5544
          %v6064 = vunpack.c.l.b16 %v5545
          %v6065 = vunpack.c.l.b16 %v5546
          %v6066 = vunpack.c.l.b16 %v5547
          %v6067 = vunpack.c.l.b16 %v5548
          %v6068 = vunpack.c.l.b16 %v5549
          %v6069 = vunpack.c.l.b16 %v5550
          %v6070 = vunpack.c.l.b16 %v5551
          %v6071 = vunpack.c.l.b16 %v5552
          %v6072 = vunpack.c.l.b16 %v5553
          %v6073 = vunpack.c.l.b16 %v5554
          %v6074 = vunpack.c.l.b16 %v5555
          %v6075 = vunpack.c.l.b16 %v5556
          %v6076 = vunpack.c.l.b16 %v5557
          %v6077 = vunpack.c.l.b16 %v5558
          %v6078 = vunpack.c.l.b16 %v5559
          %v6079 = vunpack.c.l.b16 %v5560
          %v6080 = vunpack.c.l.b16 %v5561
          %v6081 = vunpack.c.l.b16 %v5562
          %v6082 = vunpack.c.l.b16 %v5563
          %v6083 = vunpack.c.l.b16 %v5564
          %v6084 = vunpack.c.l.b16 %v5565
          %v6085 = vunpack.c.l.b16 %v5566
          %v6086 = vunpack.c.l.b16 %v5567
          %v6087 = vunpack.c.l.b16 %v5568
          %v6088 = vunpack.c.l.b16 %v5569
          %v6089 = vunpack.c.l.b16 %v5570
          %v6090 = vunpack.c.l.b16 %v5571
          %v6091 = vunpack.c.l.b16 %v5572
          %v6092 = vunpack.c.l.b16 %v5573
          %v6093 = vunpack.c.l.b16 %v5574
          %v6094 = vunpack.c.l.b16 %v5575
          %v6095 = vunpack.c.l.b16 %v5576
          %v6096 = vunpack.c.l.b16 %v5577
          %v6097 = vunpack.c.l.b16 %v5578
          %v6098 = vunpack.c.l.b16 %v5579
          %v6099 = vunpack.c.l.b16 %v5580
          %v6100 = vunpack.c.l.b16 %v5581
          %v6101 = vunpack.c.l.b16 %v5582
          %v6102 = vunpack.c.l.b16 %v5583
          %v6103 = vunpack.c.l.b16 %v5584
          %v6104 = vunpack.c.l.b16 %v5585
          %v6105 = vunpack.c.l.b16 %v5586
          %v6106 = vunpack.c.l.b16 %v5587
          %v6107 = vunpack.c.l.b16 %v5588
          %v6108 = vunpack.c.l.b16 %v5589
          %v6109 = vunpack.c.l.b16 %v5590
          %v6110 = vunpack.c.l.b16 %v5591
          %v6111 = vunpack.c.l.b16 %v5592
          %v6112 = vunpack.c.l.b16 %v5593
          %v6113 = vunpack.c.l.b16 %v5594
          %v6114 = vunpack.c.l.b16 %v5595
          %v6115 = vunpack.c.l.b16 %v5596
          %v6116 = vunpack.c.l.b16 %v5597
          %v6117 = vunpack.c.l.b16 %v5598
          %v6118 = vunpack.c.l.b16 %v5599
          %v6119 = vunpack.c.l.b16 %v5600
          %v6120 = vunpack.c.l.b16 %v5601
          %v6121 = vunpack.c.l.b16 %v5602
          %v6122 = vunpack.c.l.b16 %v5603
          %v6123 = vunpack.c.l.b16 %v5604
          %v6124 = vunpack.c.l.b16 %v5605
          %v6125 = vunpack.c.l.b16 %v5606
          %v6126 = vunpack.c.l.b16 %v5607
          %v6127 = vunpack.c.l.b16 %v5608
          %v6128 = vunpack.c.l.b16 %v5609
          %v6129 = vunpack.c.l.b16 %v5610
          %v6130 = vunpack.c.l.b16 %v5611
          %v6131 = vunpack.c.l.b16 %v5612
          %v6132 = vunpack.c.l.b16 %v5613
          %v6133 = vunpack.c.l.b16 %v5614
          %v6134 = vunpack.c.l.b16 %v5615
          %v6135 = vunpack.c.l.b16 %v5616
          %v6136 = vunpack.c.l.b16 %v5617
          %v6137 = vunpack.c.l.b16 %v5618
          %v6138 = vunpack.c.l.b16 %v5619
          %v6139 = vunpack.c.l.b16 %v5620
          %v6140 = vunpack.c.l.b16 %v5621
          %v6141 = vunpack.c.l.b16 %v5622
          %v6142 = vunpack.c.l.b16 %v5623
          %v6143 = vunpack.c.l.b16 %v5624
          %v6144 = vunpack.c.l.b16 %v5625
          %v6145 = vunpack.c.l.b16 %v5626
          %v6146 = vunpack.c.l.b16 %v5627
          %v6147 = vunpack.c.l.b16 %v5628
          %v6148 = vunpack.c.l.b16 %v5629
          %v6149 = vunpack.c.l.b16 %v5630
          %v6150 = vunpack.c.l.b16 %v5631
          %v6151 = vunpack.c.l.b16 %v5632
          %v6152 = vunpack.c.l.b16 %v5633
          %v6153 = vunpack.c.l.b16 %v5634
          %v6154 = vunpack.c.l.b16 %v5635
          %v6155 = vunpack.c.l.b16 %v5636
          %v6156 = vunpack.c.l.b16 %v5637
          %v6157 = vunpack.c.l.b16 %v5638
          %v6158 = vunpack.c.l.b16 %v5639
          %v6159 = vunpack.c.l.b16 %v5640
          %v6160 = vunpack.c.l.b16 %v5641
          %v6161 = vunpack.c.l.b16 %v5642
          %v6162 = vunpack.c.l.b16 %v5643
          %v6163 = vunpack.c.l.b16 %v5644
          %v6164 = vunpack.c.l.b16 %v5645
          %v6165 = vunpack.c.l.b16 %v5646
          %v6166 = vunpack.c.l.b16 %v5647
          %v6167 = vunpack.c.l.b16 %v5648
          %v6168 = vunpack.c.l.b16 %v5649
          %v6169 = vunpack.c.l.b16 %v5650
          %v6170 = vunpack.c.l.b16 %v5651
          %v6171 = vunpack.c.l.b16 %v5652
          %v6172 = vunpack.c.l.b16 %v5653
          %v6173 = vunpack.c.l.b16 %v5654
          %v6174 = vunpack.c.l.b16 %v5655
          %v6175 = vunpack.c.l.b16 %v5656
          %v6176 = vunpack.c.l.b16 %v5657
          %v6177 = vunpack.c.l.b16 %v5658
          %v6178 = vunpack.c.l.b16 %v5659
          %v6179 = vunpack.c.l.b16 %v5660
          %v6180 = vunpack.c.l.b16 %v5661
          %v6181 = vunpack.c.l.b16 %v5662
          %v6182 = vunpack.c.l.b16 %v5663
          %v6183 = vunpack.c.l.b16 %v5664
          %v6184 = vunpack.c.l.b16 %v5665
          %v6185 = vunpack.c.l.b16 %v5666
          %v6186 = vunpack.c.l.b16 %v5667
          %v6187 = vunpack.c.l.b16 %v5668
          %v6188 = vunpack.c.l.b16 %v5669
          %v6189 = vunpack.c.l.b16 %v5670
          %v6190 = vunpack.c.l.b16 %v5671
          %v6191 = vunpack.c.l.b16 %v5672
          %v6192 = vunpack.c.l.b16 %v5673
          %v6193 = vunpack.c.l.b16 %v5674
          %v6194 = vunpack.c.l.b16 %v5675
          %v6195 = vunpack.c.l.b16 %v5676
          %v6196 = vunpack.c.l.b16 %v5677
          %v6197 = vunpack.c.l.b16 %v5678
          %v6198 = vunpack.c.l.b16 %v5679
          %v6199 = vunpack.c.l.b16 %v5680
          %v6200 = vunpack.c.l.b16 %v5681
          %v6201 = vunpack.c.l.b16 %v5682
          %v6202 = vunpack.c.l.b16 %v5683
          %v6203 = vunpack.c.l.b16 %v5684
          %v6204 = vunpack.c.l.b16 %v5685
          %v6205 = vunpack.c.l.b16 %v5686
          %v6206 = vunpack.c.l.b16 %v5687
          %v6207 = vunpack.c.l.b16 %v5688
          %v6208 = vunpack.c.l.b16 %v5689
          %v6209 = vunpack.c.l.b16 %v5690
          %v6210 = vunpack.c.l.b16 %v5691
          %v6211 = vunpack.c.l.b16 %v5692
          %v6212 = vunpack.c.l.b16 %v5693
          %v6213 = vunpack.c.l.b16 %v5694
          %v6214 = vunpack.c.l.b16 %v5695
          %v6215 = vunpack.c.l.b16 %v5696
          %v6216 = vunpack.c.l.b16 %v5697
          %v6217 = vunpack.c.l.b16 %v5698
          %v6218 = vunpack.c.l.b16 %v5699
          %v6219 = vunpack.c.l.b16 %v5700
          %v6220 = vunpack.c.l.b16 %v5701
          %v6221 = vpack.c.b16 %v5966, %v5965
          %v6222 = vpack.c.b16 %v5968, %v5967
          %v6223 = vpack.c.b16 %v5970, %v5969
          %v6224 = vpack.c.b16 %v5972, %v5971
          %v6225 = vpack.c.b16 %v5974, %v5973
          %v6226 = vpack.c.b16 %v5976, %v5975
          %v6227 = vpack.c.b16 %v5978, %v5977
          %v6228 = vpack.c.b16 %v5980, %v5979
          %v6229 = vpack.c.b16 %v5982, %v5981
          %v6230 = vpack.c.b16 %v5984, %v5983
          %v6231 = vpack.c.b16 %v5986, %v5985
          %v6232 = vpack.c.b16 %v5988, %v5987
          %v6233 = vpack.c.b16 %v5990, %v5989
          %v6234 = vpack.c.b16 %v5992, %v5991
          %v6235 = vpack.c.b16 %v5994, %v5993
          %v6236 = vpack.c.b16 %v5996, %v5995
          %v6237 = vpack.c.b16 %v5998, %v5997
          %v6238 = vpack.c.b16 %v6000, %v5999
          %v6239 = vpack.c.b16 %v6002, %v6001
          %v6240 = vpack.c.b16 %v6004, %v6003
          %v6241 = vpack.c.b16 %v6006, %v6005
          %v6242 = vpack.c.b16 %v6008, %v6007
          %v6243 = vpack.c.b16 %v6010, %v6009
          %v6244 = vpack.c.b16 %v6012, %v6011
          %v6245 = vpack.c.b16 %v6014, %v6013
          %v6246 = vpack.c.b16 %v6016, %v6015
          %v6247 = vpack.c.b16 %v6018, %v6017
          %v6248 = vpack.c.b16 %v6020, %v6019
          %v6249 = vpack.c.b16 %v6022, %v6021
          %v6250 = vpack.c.b16 %v6024, %v6023
          %v6251 = vpack.c.b16 %v6026, %v6025
          %v6252 = vpack.c.b16 %v6028, %v6027
          %v6253 = vpack.c.b16 %v6030, %v6029
          %v6254 = vpack.c.b16 %v6032, %v6031
          %v6255 = vpack.c.b16 %v6034, %v6033
          %v6256 = vpack.c.b16 %v6036, %v6035
          %v6257 = vpack.c.b16 %v6038, %v6037
          %v6258 = vpack.c.b16 %v6040, %v6039
          %v6259 = vpack.c.b16 %v6042, %v6041
          %v6260 = vpack.c.b16 %v6044, %v6043
          %v6261 = vpack.c.b16 %v6046, %v6045
          %v6262 = vpack.c.b16 %v6048, %v6047
          %v6263 = vpack.c.b16 %v6050, %v6049
          %v6264 = vpack.c.b16 %v6052, %v6051
          %v6265 = vpack.c.b16 %v6054, %v6053
          %v6266 = vpack.c.b16 %v6056, %v6055
          %v6267 = vpack.c.b16 %v6058, %v6057
          %v6268 = vpack.c.b16 %v6060, %v6059
          %v6269 = vpack.c.b16 %v6062, %v6061
          %v6270 = vpack.c.b16 %v6064, %v6063
          %v6271 = vpack.c.b16 %v6066, %v6065
          %v6272 = vpack.c.b16 %v6068, %v6067
          %v6273 = vpack.c.b16 %v6070, %v6069
          %v6274 = vpack.c.b16 %v6072, %v6071
          %v6275 = vpack.c.b16 %v6074, %v6073
          %v6276 = vpack.c.b16 %v6076, %v6075
          %v6277 = vpack.c.b16 %v6078, %v6077
          %v6278 = vpack.c.b16 %v6080, %v6079
          %v6279 = vpack.c.b16 %v6082, %v6081
          %v6280 = vpack.c.b16 %v6084, %v6083
          %v6281 = vpack.c.b16 %v6086, %v6085
          %v6282 = vpack.c.b16 %v6088, %v6087
          %v6283 = vpack.c.b16 %v6090, %v6089
          %v6284 = vpack.c.b16 %v6092, %v6091
          %v6285 = vpack.c.b16 %v6094, %v6093
          %v6286 = vpack.c.b16 %v6096, %v6095
          %v6287 = vpack.c.b16 %v6098, %v6097
          %v6288 = vpack.c.b16 %v6100, %v6099
          %v6289 = vpack.c.b16 %v6102, %v6101
          %v6290 = vpack.c.b16 %v6104, %v6103
          %v6291 = vpack.c.b16 %v6106, %v6105
          %v6292 = vpack.c.b16 %v6108, %v6107
          %v6293 = vpack.c.b16 %v6110, %v6109
          %v6294 = vpack.c.b16 %v6112, %v6111
          %v6295 = vpack.c.b16 %v6114, %v6113
          %v6296 = vpack.c.b16 %v6116, %v6115
          %v6297 = vpack.c.b16 %v6118, %v6117
          %v6298 = vpack.c.b16 %v6120, %v6119
          %v6299 = vpack.c.b16 %v6122, %v6121
          %v6300 = vpack.c.b16 %v6124, %v6123
          %v6301 = vpack.c.b16 %v6126, %v6125
          %v6302 = vpack.c.b16 %v6128, %v6127
          %v6303 = vpack.c.b16 %v6130, %v6129
          %v6304 = vpack.c.b16 %v6132, %v6131
          %v6305 = vpack.c.b16 %v6134, %v6133
          %v6306 = vpack.c.b16 %v6136, %v6135
          %v6307 = vpack.c.b16 %v6138, %v6137
          %v6308 = vpack.c.b16 %v6140, %v6139
          %v6309 = vpack.c.b16 %v6142, %v6141
          %v6310 = vpack.c.b16 %v6144, %v6143
          %v6311 = vpack.c.b16 %v6146, %v6145
          %v6312 = vpack.c.b16 %v6148, %v6147
          %v6313 = vpack.c.b16 %v6150, %v6149
          %v6314 = vpack.c.b16 %v6152, %v6151
          %v6315 = vpack.c.b16 %v6154, %v6153
          %v6316 = vpack.c.b16 %v6156, %v6155
          %v6317 = vpack.c.b16 %v6158, %v6157
          %v6318 = vpack.c.b16 %v6160, %v6159
          %v6319 = vpack.c.b16 %v6162, %v6161
          %v6320 = vpack.c.b16 %v6164, %v6163
          %v6321 = vpack.c.b16 %v6166, %v6165
          %v6322 = vpack.c.b16 %v6168, %v6167
          %v6323 = vpack.c.b16 %v6170, %v6169
          %v6324 = vpack.c.b16 %v6172, %v6171
          %v6325 = vpack.c.b16 %v6174, %v6173
          %v6326 = vpack.c.b16 %v6176, %v6175
          %v6327 = vpack.c.b16 %v6178, %v6177
          %v6328 = vpack.c.b16 %v6180, %v6179
          %v6329 = vpack.c.b16 %v6182, %v6181
          %v6330 = vpack.c.b16 %v6184, %v6183
          %v6331 = vpack.c.b16 %v6186, %v6185
          %v6332 = vpack.c.b16 %v6188, %v6187
          %v6333 = vpack.c.b16 %v6190, %v6189
          %v6334 = vpack.c.b16 %v6192, %v6191
          %v6335 = vpack.c.b16 %v6194, %v6193
          %v6336 = vpack.c.b16 %v6196, %v6195
          %v6337 = vpack.c.b16 %v6198, %v6197
          %v6338 = vpack.c.b16 %v6200, %v6199
          %v6339 = vpack.c.b16 %v6202, %v6201
          %v6340 = vpack.c.b16 %v6204, %v6203
          %v6341 = vpack.c.b16 %v6206, %v6205
          %v6342 = vpack.c.b16 %v6208, %v6207
          %v6343 = vpack.c.b16 %v6210, %v6209
          %v6344 = vpack.c.b16 %v6212, %v6211
          %v6345 = vpack.c.b16 %v6214, %v6213
          %v6346 = vpack.c.b16 %v6216, %v6215
          %v6347 = vpack.c.b16 %v6218, %v6217
          %v6348 = vpack.c.b16 %v6220, %v6219
          %6477 = vmatprep.subr.bf16.mxu0 0
          %6478 = vmatpush1.bf16.msra.mxu0 %v6221
          %6479 = vmatprep.subr.bf16.mxu0 0
          %6480 = vmatpush1.bf16.msra.mxu0 %v6222
          %6481 = vmatprep.subr.bf16.mxu0 0
          %6482 = vmatpush1.bf16.msra.mxu0 %v6223
          %6483 = vmatprep.subr.bf16.mxu0 0
          %6484 = vmatpush1.bf16.msra.mxu0 %v6224
          %6485 = vmatprep.subr.bf16.mxu0 0
          %6486 = vmatpush1.bf16.msra.mxu0 %v6225
          %6487 = vmatprep.subr.bf16.mxu0 0
          %6488 = vmatpush1.bf16.msra.mxu0 %v6226
          %6489 = vmatprep.subr.bf16.mxu0 0
          %6490 = vmatpush1.bf16.msra.mxu0 %v6227
          %6491 = vmatprep.subr.bf16.mxu0 0
          %6492 = vmatpush1.bf16.msra.mxu0 %v6228
          %6493 = vmatprep.subr.bf16.mxu0 0
          %6494 = vmatpush1.bf16.msra.mxu0 %v6229
          %6495 = vmatprep.subr.bf16.mxu0 0
          %6496 = vmatpush1.bf16.msra.mxu0 %v6230
          %6497 = vmatprep.subr.bf16.mxu0 0
          %6498 = vmatpush1.bf16.msra.mxu0 %v6231
          %6499 = vmatprep.subr.bf16.mxu0 0
          %6500 = vmatpush1.bf16.msra.mxu0 %v6232
          %6501 = vmatprep.subr.bf16.mxu0 0
          %6502 = vmatpush1.bf16.msra.mxu0 %v6233
          %6503 = vmatprep.subr.bf16.mxu0 0
          %6504 = vmatpush1.bf16.msra.mxu0 %v6234
          %6505 = vmatprep.subr.bf16.mxu0 0
          %6506 = vmatpush1.bf16.msra.mxu0 %v6235
          %6507 = vmatprep.subr.bf16.mxu0 0
          %6508 = vmatpush1.bf16.msra.mxu0 %v6236
          %6509 = vmatprep.mubr.bf16.mxu0 %v5431
          %6510 = vmatmul.mubr.bf16.gmra.mrb[0].mxu0 %v5430
          %v6511 = vpop.f32.mrb[0].mxu0
          %v6512 = vadd.f32 %v5707, %v6511
          %v6513 = vpop.f32.mrb[0].mxu0
          %v6514 = vpop.f32.mrb[0].mxu0
          %v6515 = vpop.f32.mrb[0].mxu0
          %6516 = vdwg.mxu0
          %6517 = vmatprep.subr.bf16.mxu0 0
          %6518 = vmatpush1.bf16.msra.mxu0 %v6237
          %6519 = vmatprep.subr.bf16.mxu0 0
          %6520 = vmatpush1.bf16.msra.mxu0 %v6238
          %6521 = vmatprep.subr.bf16.mxu0 0
          %6522 = vmatpush1.bf16.msra.mxu0 %v6239
          %6523 = vmatprep.subr.bf16.mxu0 0
          %6524 = vmatpush1.bf16.msra.mxu0 %v6240
          %6525 = vmatprep.subr.bf16.mxu0 0
          %6526 = vmatpush1.bf16.msra.mxu0 %v6241
          %6527 = vmatprep.subr.bf16.mxu0 0
          %6528 = vmatpush1.bf16.msra.mxu0 %v6242
          %6529 = vmatprep.subr.bf16.mxu0 0
          %6530 = vmatpush1.bf16.msra.mxu0 %v6243
          %6531 = vmatprep.subr.bf16.mxu0 0
          %6532 = vmatpush1.bf16.msra.mxu0 %v6244
          %6533 = vmatprep.subr.bf16.mxu0 0
          %6534 = vmatpush1.bf16.msra.mxu0 %v6245
          %6535 = vmatprep.subr.bf16.mxu0 0
          %6536 = vmatpush1.bf16.msra.mxu0 %v6246
          %6537 = vmatprep.subr.bf16.mxu0 0
          %6538 = vmatpush1.bf16.msra.mxu0 %v6247
          %6539 = vmatprep.subr.bf16.mxu0 0
          %6540 = vmatpush1.bf16.msra.mxu0 %v6248
          %6541 = vmatprep.subr.bf16.mxu0 0
          %6542 = vmatpush1.bf16.msra.mxu0 %v6249
          %6543 = vmatprep.subr.bf16.mxu0 0
          %6544 = vmatpush1.bf16.msra.mxu0 %v6250
          %6545 = vmatprep.subr.bf16.mxu0 0
          %6546 = vmatpush1.bf16.msra.mxu0 %v6251
          %6547 = vmatprep.subr.bf16.mxu0 0
          %6548 = vmatpush1.bf16.msra.mxu0 %v6252
          %6549 = vmatprep.mubr.bf16.mxu0 %v5433
          %6550 = vmatmul.mubr.bf16.gmra.mrb[0].mxu0 %v5432
          %v6551 = vpop.f32.mrb[0].mxu0
          %v6552 = vadd.f32 %v6512, %v6551
          %v6553 = vpop.f32.mrb[0].mxu0
          %v6554 = vpop.f32.mrb[0].mxu0
          %v6555 = vpop.f32.mrb[0].mxu0
          %6556 = vdwg.mxu0
          %6557 = vmatprep.subr.bf16.mxu0 0
          %6558 = vmatpush1.bf16.msra.mxu0 %v6253
          %6559 = vmatprep.subr.bf16.mxu0 0
          %6560 = vmatpush1.bf16.msra.mxu0 %v6254
          %6561 = vmatprep.subr.bf16.mxu0 0
          %6562 = vmatpush1.bf16.msra.mxu0 %v6255
          %6563 = vmatprep.subr.bf16.mxu0 0
          %6564 = vmatpush1.bf16.msra.mxu0 %v6256
          %6565 = vmatprep.subr.bf16.mxu0 0
          %6566 = vmatpush1.bf16.msra.mxu0 %v6257
          %6567 = vmatprep.subr.bf16.mxu0 0
          %6568 = vmatpush1.bf16.msra.mxu0 %v6258
          %6569 = vmatprep.subr.bf16.mxu0 0
          %6570 = vmatpush1.bf16.msra.mxu0 %v6259
          %6571 = vmatprep.subr.bf16.mxu0 0
          %6572 = vmatpush1.bf16.msra.mxu0 %v6260
          %6573 = vmatprep.subr.bf16.mxu0 0
          %6574 = vmatpush1.bf16.msra.mxu0 %v6261
          %6575 = vmatprep.subr.bf16.mxu0 0
          %6576 = vmatpush1.bf16.msra.mxu0 %v6262
          %6577 = vmatprep.subr.bf16.mxu0 0
          %6578 = vmatpush1.bf16.msra.mxu0 %v6263
          %6579 = vmatprep.subr.bf16.mxu0 0
          %6580 = vmatpush1.bf16.msra.mxu0 %v6264
          %6581 = vmatprep.subr.bf16.mxu0 0
          %6582 = vmatpush1.bf16.msra.mxu0 %v6265
          %6583 = vmatprep.subr.bf16.mxu0 0
          %6584 = vmatpush1.bf16.msra.mxu0 %v6266
          %6585 = vmatprep.subr.bf16.mxu0 0
          %6586 = vmatpush1.bf16.msra.mxu0 %v6267
          %6587 = vmatprep.subr.bf16.mxu0 0
          %6588 = vmatpush1.bf16.msra.mxu0 %v6268
          %6589 = vmatprep.mubr.bf16.mxu0 %v5435
          %6590 = vmatmul.mubr.bf16.gmra.mrb[0].mxu0 %v5434
          %v6591 = vpop.f32.mrb[0].mxu0
          %v6592 = vadd.f32 %v6552, %v6591
          %v6593 = vpop.f32.mrb[0].mxu0
          %v6594 = vpop.f32.mrb[0].mxu0
          %v6595 = vpop.f32.mrb[0].mxu0
          %6596 = vdwg.mxu0
          %6597 = vmatprep.subr.bf16.mxu0 0
          %6598 = vmatpush1.bf16.msra.mxu0 %v6269
          %6599 = vmatprep.subr.bf16.mxu0 0
          %6600 = vmatpush1.bf16.msra.mxu0 %v6270
          %6601 = vmatprep.subr.bf16.mxu0 0
          %6602 = vmatpush1.bf16.msra.mxu0 %v6271
          %6603 = vmatprep.subr.bf16.mxu0 0
          %6604 = vmatpush1.bf16.msra.mxu0 %v6272
          %6605 = vmatprep.subr.bf16.mxu0 0
          %6606 = vmatpush1.bf16.msra.mxu0 %v6273
          %6607 = vmatprep.subr.bf16.mxu0 0
          %6608 = vmatpush1.bf16.msra.mxu0 %v6274
          %6609 = vmatprep.subr.bf16.mxu0 0
          %6610 = vmatpush1.bf16.msra.mxu0 %v6275
          %6611 = vmatprep.subr.bf16.mxu0 0
          %6612 = vmatpush1.bf16.msra.mxu0 %v6276
          %6613 = vmatprep.subr.bf16.mxu0 0
          %6614 = vmatpush1.bf16.msra.mxu0 %v6277
          %6615 = vmatprep.subr.bf16.mxu0 0
          %6616 = vmatpush1.bf16.msra.mxu0 %v6278
          %6617 = vmatprep.subr.bf16.mxu0 0
          %6618 = vmatpush1.bf16.msra.mxu0 %v6279
          %6619 = vmatprep.subr.bf16.mxu0 0
          %6620 = vmatpush1.bf16.msra.mxu0 %v6280
          %6621 = vmatprep.subr.bf16.mxu0 0
          %6622 = vmatpush1.bf16.msra.mxu0 %v6281
          %6623 = vmatprep.subr.bf16.mxu0 0
          %6624 = vmatpush1.bf16.msra.mxu0 %v6282
          %6625 = vmatprep.subr.bf16.mxu0 0
          %6626 = vmatpush1.bf16.msra.mxu0 %v6283
          %6627 = vmatprep.subr.bf16.mxu0 0
          %6628 = vmatpush1.bf16.msra.mxu0 %v6284
          %6629 = vmatprep.mubr.bf16.mxu0 %v5437
          %6630 = vmatmul.mubr.bf16.gmra.mrb[0].mxu0 %v5436
          %v6631 = vpop.f32.mrb[0].mxu0
          %v6632 = vadd.f32 %v6592, %v6631
          %v6633 = vpop.f32.mrb[0].mxu0
          %v6634 = vpop.f32.mrb[0].mxu0
          %v6635 = vpop.f32.mrb[0].mxu0
          %6636 = vdwg.mxu0
          %6637 = vmatprep.subr.bf16.mxu0 0
          %6638 = vmatpush1.bf16.msra.mxu0 %v6285
          %6639 = vmatprep.subr.bf16.mxu0 0
          %6640 = vmatpush1.bf16.msra.mxu0 %v6286
          %6641 = vmatprep.subr.bf16.mxu0 0
          %6642 = vmatpush1.bf16.msra.mxu0 %v6287
          %6643 = vmatprep.subr.bf16.mxu0 0
          %6644 = vmatpush1.bf16.msra.mxu0 %v6288
          %6645 = vmatprep.subr.bf16.mxu0 0
          %6646 = vmatpush1.bf16.msra.mxu0 %v6289
          %6647 = vmatprep.subr.bf16.mxu0 0
          %6648 = vmatpush1.bf16.msra.mxu0 %v6290
          %6649 = vmatprep.subr.bf16.mxu0 0
          %6650 = vmatpush1.bf16.msra.mxu0 %v6291
          %6651 = vmatprep.subr.bf16.mxu0 0
          %6652 = vmatpush1.bf16.msra.mxu0 %v6292
          %6653 = vmatprep.subr.bf16.mxu0 0
          %6654 = vmatpush1.bf16.msra.mxu0 %v6293
          %6655 = vmatprep.subr.bf16.mxu0 0
          %6656 = vmatpush1.bf16.msra.mxu0 %v6294
          %6657 = vmatprep.subr.bf16.mxu0 0
          %6658 = vmatpush1.bf16.msra.mxu0 %v6295
          %6659 = vmatprep.subr.bf16.mxu0 0
          %6660 = vmatpush1.bf16.msra.mxu0 %v6296
          %6661 = vmatprep.subr.bf16.mxu0 0
          %6662 = vmatpush1.bf16.msra.mxu0 %v6297
          %6663 = vmatprep.subr.bf16.mxu0 0
          %6664 = vmatpush1.bf16.msra.mxu0 %v6298
          %6665 = vmatprep.subr.bf16.mxu0 0
          %6666 = vmatpush1.bf16.msra.mxu0 %v6299
          %6667 = vmatprep.subr.bf16.mxu0 0
          %6668 = vmatpush1.bf16.msra.mxu0 %v6300
          %6669 = vmatprep.mubr.bf16.mxu0 %v5439
          %6670 = vmatmul.mubr.bf16.gmra.mrb[0].mxu0 %v5438
          %v6671 = vpop.f32.mrb[0].mxu0
          %v6672 = vadd.f32 %v6632, %v6671
          %v6673 = vpop.f32.mrb[0].mxu0
          %v6674 = vpop.f32.mrb[0].mxu0
          %v6675 = vpop.f32.mrb[0].mxu0
          %6676 = vdwg.mxu0
          %6677 = vmatprep.subr.bf16.mxu0 0
          %6678 = vmatpush1.bf16.msra.mxu0 %v6301
          %6679 = vmatprep.subr.bf16.mxu0 0
          %6680 = vmatpush1.bf16.msra.mxu0 %v6302
          %6681 = vmatprep.subr.bf16.mxu0 0
          %6682 = vmatpush1.bf16.msra.mxu0 %v6303
          %6683 = vmatprep.subr.bf16.mxu0 0
          %6684 = vmatpush1.bf16.msra.mxu0 %v6304
          %6685 = vmatprep.subr.bf16.mxu0 0
          %6686 = vmatpush1.bf16.msra.mxu0 %v6305
          %6687 = vmatprep.subr.bf16.mxu0 0
          %6688 = vmatpush1.bf16.msra.mxu0 %v6306
          %6689 = vmatprep.subr.bf16.mxu0 0
          %6690 = vmatpush1.bf16.msra.mxu0 %v6307
          %6691 = vmatprep.subr.bf16.mxu0 0
          %6692 = vmatpush1.bf16.msra.mxu0 %v6308
          %6693 = vmatprep.subr.bf16.mxu0 0
          %6694 = vmatpush1.bf16.msra.mxu0 %v6309
          %6695 = vmatprep.subr.bf16.mxu0 0
          %6696 = vmatpush1.bf16.msra.mxu0 %v6310
          %6697 = vmatprep.subr.bf16.mxu0 0
          %6698 = vmatpush1.bf16.msra.mxu0 %v6311
          %6699 = vmatprep.subr.bf16.mxu0 0
          %6700 = vmatpush1.bf16.msra.mxu0 %v6312
          %6701 = vmatprep.subr.bf16.mxu0 0
          %6702 = vmatpush1.bf16.msra.mxu0 %v6313
          %6703 = vmatprep.subr.bf16.mxu0 0
          %6704 = vmatpush1.bf16.msra.mxu0 %v6314
          %6705 = vmatprep.subr.bf16.mxu0 0
          %6706 = vmatpush1.bf16.msra.mxu0 %v6315
          %6707 = vmatprep.subr.bf16.mxu0 0
          %6708 = vmatpush1.bf16.msra.mxu0 %v6316
          %6709 = vmatprep.mubr.bf16.mxu0 %v5441
          %6710 = vmatmul.mubr.bf16.gmra.mrb[0].mxu0 %v5440
          %v6711 = vpop.f32.mrb[0].mxu0
          %v6712 = vadd.f32 %v6672, %v6711
          %v6713 = vpop.f32.mrb[0].mxu0
          %v6714 = vpop.f32.mrb[0].mxu0
          %v6715 = vpop.f32.mrb[0].mxu0
          %6716 = vdwg.mxu0
          %6717 = vmatprep.subr.bf16.mxu0 0
          %6718 = vmatpush1.bf16.msra.mxu0 %v6317
          %6719 = vmatprep.subr.bf16.mxu0 0
          %6720 = vmatpush1.bf16.msra.mxu0 %v6318
          %6721 = vmatprep.subr.bf16.mxu0 0
          %6722 = vmatpush1.bf16.msra.mxu0 %v6319
          %6723 = vmatprep.subr.bf16.mxu0 0
          %6724 = vmatpush1.bf16.msra.mxu0 %v6320
          %6725 = vmatprep.subr.bf16.mxu0 0
          %6726 = vmatpush1.bf16.msra.mxu0 %v6321
          %6727 = vmatprep.subr.bf16.mxu0 0
          %6728 = vmatpush1.bf16.msra.mxu0 %v6322
          %6729 = vmatprep.subr.bf16.mxu0 0
          %6730 = vmatpush1.bf16.msra.mxu0 %v6323
          %6731 = vmatprep.subr.bf16.mxu0 0
          %6732 = vmatpush1.bf16.msra.mxu0 %v6324
          %6733 = vmatprep.subr.bf16.mxu0 0
          %6734 = vmatpush1.bf16.msra.mxu0 %v6325
          %6735 = vmatprep.subr.bf16.mxu0 0
          %6736 = vmatpush1.bf16.msra.mxu0 %v6326
          %6737 = vmatprep.subr.bf16.mxu0 0
          %6738 = vmatpush1.bf16.msra.mxu0 %v6327
          %6739 = vmatprep.subr.bf16.mxu0 0
          %6740 = vmatpush1.bf16.msra.mxu0 %v6328
          %6741 = vmatprep.subr.bf16.mxu0 0
          %6742 = vmatpush1.bf16.msra.mxu0 %v6329
          %6743 = vmatprep.subr.bf16.mxu0 0
          %6744 = vmatpush1.bf16.msra.mxu0 %v6330
          %6745 = vmatprep.subr.bf16.mxu0 0
          %6746 = vmatpush1.bf16.msra.mxu0 %v6331
          %6747 = vmatprep.subr.bf16.mxu0 0
          %6748 = vmatpush1.bf16.msra.mxu0 %v6332
          %6749 = vmatprep.mubr.bf16.mxu0 %v5443
          %6750 = vmatmul.mubr.bf16.gmra.mrb[0].mxu0 %v5442
          %v6751 = vpop.f32.mrb[0].mxu0
          %v6752 = vadd.f32 %v6712, %v6751
          %v6753 = vpop.f32.mrb[0].mxu0
          %v6754 = vpop.f32.mrb[0].mxu0
          %v6755 = vpop.f32.mrb[0].mxu0
          %6756 = vdwg.mxu0
          %6757 = vmatprep.subr.bf16.mxu0 0
          %6758 = vmatpush1.bf16.msra.mxu0 %v6333
          %6759 = vmatprep.subr.bf16.mxu0 0
          %6760 = vmatpush1.bf16.msra.mxu0 %v6334
          %6761 = vmatprep.subr.bf16.mxu0 0
          %6762 = vmatpush1.bf16.msra.mxu0 %v6335
          %6763 = vmatprep.subr.bf16.mxu0 0
          %6764 = vmatpush1.bf16.msra.mxu0 %v6336
          %6765 = vmatprep.subr.bf16.mxu0 0
          %6766 = vmatpush1.bf16.msra.mxu0 %v6337
          %6767 = vmatprep.subr.bf16.mxu0 0
          %6768 = vmatpush1.bf16.msra.mxu0 %v6338
          %6769 = vmatprep.subr.bf16.mxu0 0
          %6770 = vmatpush1.bf16.msra.mxu0 %v6339
          %6771 = vmatprep.subr.bf16.mxu0 0
          %6772 = vmatpush1.bf16.msra.mxu0 %v6340
          %6773 = vmatprep.subr.bf16.mxu0 0
          %6774 = vmatpush1.bf16.msra.mxu0 %v6341
          %6775 = vmatprep.subr.bf16.mxu0 0
          %6776 = vmatpush1.bf16.msra.mxu0 %v6342
          %6777 = vmatprep.subr.bf16.mxu0 0
          %6778 = vmatpush1.bf16.msra.mxu0 %v6343
          %6779 = vmatprep.subr.bf16.mxu0 0
          %6780 = vmatpush1.bf16.msra.mxu0 %v6344
          %6781 = vmatprep.subr.bf16.mxu0 0
          %6782 = vmatpush1.bf16.msra.mxu0 %v6345
          %6783 = vmatprep.subr.bf16.mxu0 0
          %6784 = vmatpush1.bf16.msra.mxu0 %v6346
          %6785 = vmatprep.subr.bf16.mxu0 0
          %6786 = vmatpush1.bf16.msra.mxu0 %v6347
          %6787 = vmatprep.subr.bf16.mxu0 0
          %6788 = vmatpush1.bf16.msra.mxu0 %v6348
          %6789 = vmatprep.mubr.bf16.mxu0 %v5445
          %6790 = vmatmul.mubr.bf16.gmra.mrb[0].mxu0 %v5444
          %v6791 = vpop.f32.mrb[0].mxu0
          %v6792 = vadd.f32 %v6752, %v6791
          %v6793 = vpop.f32.mrb[0].mxu0
          %v6794 = vpop.f32.mrb[0].mxu0
          %v6795 = vpop.f32.mrb[0].mxu0
          %6796 = vdwg.mxu0
          %v6797 = vmax.f32 %v6792, 0.0
          %v6798 = vpack.c.bf16 %v6797, %v6797
          %v6799 = vld [vmem:[#allocation14] sm:$0xf]
          %v6800 = vld [vmem:[#allocation14 + $0x4] sm:$0xf]
          %v6801 = vld [vmem:[#allocation14 + $0x8] sm:$0xf]
          %v6802 = vld [vmem:[#allocation14 + $0xc] sm:$0xf]
          %v6803 = vld [vmem:[#allocation14 + $0x10] sm:$0xf]
          %v6804 = vld [vmem:[#allocation14 + $0x14] sm:$0xf]
          %v6805 = vld [vmem:[#allocation14 + $0x18] sm:$0xf]
          %v6806 = vld [vmem:[#allocation14 + $0x1c] sm:$0xf]
          %v6807 = vld [vmem:[#allocation14 + $0x20] sm:$0xf]
          %v6808 = vld [vmem:[#allocation14 + $0x24] sm:$0xf]
          %v6809 = vld [vmem:[#allocation14 + $0x28] sm:$0xf]
          %v6810 = vld [vmem:[#allocation14 + $0x2c] sm:$0xf]
          %v6811 = vld [vmem:[#allocation14 + $0x30] sm:$0xf]
          %v6812 = vld [vmem:[#allocation14 + $0x34] sm:$0xf]
          %v6813 = vld [vmem:[#allocation14 + $0x38] sm:$0xf]
          %v6814 = vld [vmem:[#allocation14 + $0x3c] sm:$0xf]
          %v6815 = vld [vmem:[#allocation15] sm:$0x1]
          %v6817 = vlaneseq
          %v6818 = vshrl.u32 %v6817, 7
          %v6819 = vsub.s32 0, %v6818
          %v6820 = vrot.slane %v6815, %v6819
          %v6838 = vunpack.c.l.b16 %v6799
          %v6839 = vunpack.c.l.b16 %v6800
          %v6840 = vunpack.c.l.b16 %v6801
          %v6841 = vunpack.c.l.b16 %v6802
          %v6842 = vunpack.c.l.b16 %v6803
          %v6843 = vunpack.c.l.b16 %v6804
          %v6844 = vunpack.c.l.b16 %v6805
          %v6845 = vunpack.c.l.b16 %v6806
          %v6846 = vunpack.c.l.b16 %v6807
          %v6847 = vunpack.c.l.b16 %v6808
          %v6848 = vunpack.c.l.b16 %v6809
          %v6849 = vunpack.c.l.b16 %v6810
          %v6850 = vunpack.c.l.b16 %v6811
          %v6851 = vunpack.c.l.b16 %v6812
          %v6852 = vunpack.c.l.b16 %v6813
          %v6853 = vunpack.c.l.b16 %v6814
          %v6854 = vpack.c.b16 %v6839, %v6838
          %v6855 = vpack.c.b16 %v6841, %v6840
          %v6856 = vpack.c.b16 %v6843, %v6842
          %v6857 = vpack.c.b16 %v6845, %v6844
          %v6858 = vpack.c.b16 %v6847, %v6846
          %v6859 = vpack.c.b16 %v6849, %v6848
          %v6860 = vpack.c.b16 %v6851, %v6850
          %v6861 = vpack.c.b16 %v6853, %v6852
          %6870 = vmatprep.subr.bf16.mxu0 0
          %6871 = vmatpush1.bf16.msra.mxu0 %v6854
          %6872 = vmatprep.subr.bf16.mxu0 0
          %6873 = vmatpush1.bf16.msra.mxu0 %v6855
          %6874 = vmatprep.subr.bf16.mxu0 0
          %6875 = vmatpush1.bf16.msra.mxu0 %v6856
          %6876 = vmatprep.subr.bf16.mxu0 0
          %6877 = vmatpush1.bf16.msra.mxu0 %v6857
          %6878 = vmatprep.subr.bf16.mxu0 0
          %6879 = vmatpush1.bf16.msra.mxu0 %v6858
          %6880 = vmatprep.subr.bf16.mxu0 0
          %6881 = vmatpush1.bf16.msra.mxu0 %v6859
          %6882 = vmatprep.subr.bf16.mxu0 0
          %6883 = vmatpush1.bf16.msra.mxu0 %v6860
          %6884 = vmatprep.subr.bf16.mxu0 0
          %6885 = vmatpush1.bf16.msra.mxu0 %v6861
          %6886 = vmatprep.subr.bf16.mxu0 0
          %6887 = vmatpush1.bf16.msra.mxu0 0
          %6888 = vmatprep.subr.bf16.mxu0 0
          %6889 = vmatpush1.bf16.msra.mxu0 0
          %6890 = vmatprep.subr.bf16.mxu0 0
          %6891 = vmatpush1.bf16.msra.mxu0 0
          %6892 = vmatprep.subr.bf16.mxu0 0
          %6893 = vmatpush1.bf16.msra.mxu0 0
          %6894 = vmatprep.subr.bf16.mxu0 0
          %6895 = vmatpush1.bf16.msra.mxu0 0
          %6896 = vmatprep.subr.bf16.mxu0 0
          %6897 = vmatpush1.bf16.msra.mxu0 0
          %6898 = vmatprep.subr.bf16.mxu0 0
          %6899 = vmatpush1.bf16.msra.mxu0 0
          %6900 = vmatprep.subr.bf16.mxu0 0
          %6901 = vmatpush1.bf16.msra.mxu0 0
          %6902 = vmatprep.mubr.bf16.mxu0 0
          %6903 = vmatmul.mubr.bf16.gmra.mrb[0].mxu0 %v6798
          %v6904 = vpop.f32.mrb[0].mxu0
          %v6905 = vadd.f32 %v6820, %v6904
          %v6906 = vpop.f32.mrb[0].mxu0
          %v6907 = vpop.f32.mrb[0].mxu0
          %v6908 = vpop.f32.mrb[0].mxu0
          %6909 = vdwg.mxu0
          %v6910 = vxor.u32 %v6905, 2147483648
          %v6911 = vmul.f32 %v6910, 1.442695
          %v6912 = vpow.pop %v6911
          %v6913 = vadd.f32 %v6912, 1.0
          %v6914 = vrcp.pop %v6913
          %v6915 = vmul.f32 1.0, %v6914
          %6916 = vst [vmem:[%s9] sm:$0xff] %v6915
        $region100: #{ember_nn_forward.1} parent=55 // pred_fallthru
          _
        // Predicated region
        $region101: #{ember_nn_forward.1} parent=55 // pred_check
          %p6917 = pneg %p273
        $region102: #{ember_nn_forward.1} parent=55 // pred_check_branch
          %6919 = sbr.rel (%p6917) target = $region104
        $region103: #{ember_nn_forward.1} parent=55 // pred_region
          _
        $region104: #{ember_nn_forward.1} parent=55 // pred_fallthru
          _
        // Predicated region
        $region105: #{ember_nn_forward.1} parent=55 // pred_check
          %p6920 = pneg %p273
        $region106: #{ember_nn_forward.1} parent=55 // pred_check_branch
          %6922 = sbr.rel (%p6920) target = $region108
        $region107: #{ember_nn_forward.1} parent=55 // pred_region
          _
        $region108: #{ember_nn_forward.1} parent=55 // pred_fallthru
          _
      $region56: #{ember_nn_forward.1} parent=5 // pred_fallthru
        _
      %p6923 = scmp.le.s32.totalorder 2, %s26
      // Predicated region
      $region109: #{ember_nn_forward.1} parent=5 // pred_check
        %p6924 = pneg %p6923
      $region110: #{ember_nn_forward.1} parent=5 // pred_check_branch
        %6926 = sbr.rel (%p6924) target = $region112
      $region111: #{ember_nn_forward.1} parent=5 // pred_region
        %s6927 = ssub.s32 %s26, 2
      $region112: #{ember_nn_forward.1} parent=5 // pred_fallthru
        _
    $region6: #{ember_nn_forward.1} parent=1 // loop_footer
      %s30 = sadd.s32 1, %s26
    $region7: #{ember_nn_forward.1} parent=1 // loop_footer_branch
      %25 = sbr.rel target = $region3
    $region8: #{ember_nn_forward.1} parent=1 // loop_exit
      _
    %6928 = vsyncpa [#allocation5], 1
    %s6929 = scalar_lea.sflag [#allocation5], 1
    %6930 = vsyncpa %s6929, 1
    %6931 = vsyncpa [#allocation7], 1
    %s6932 = scalar_lea.sflag [#allocation7], 1
    %6933 = vsyncpa %s6932, 1
    %6934 = vsyncpa [#allocation10], 1
    %s6935 = scalar_lea.sflag [#allocation10], 1
    %6936 = vsyncpa %s6935, 1
    %6937 = vsyncpa [#allocation13], 1
    %6938 = vsyncpa [#allocation16], 1

</llo_original>
